<compile_context>
chip_gen: v7x
topology: tpu7x:2x2x1
jax: 0.10.0
libtpu: 0.0.40
codegen_flags: <defaults>
</compile_context>

<pallas_src>
import jax
import jax.numpy as jnp
from jax.experimental import pallas as pl
from jax.experimental.pallas import tpu as pltpu

BN_EPS = 1e-5


# ----------------------------------------------------------------------------
# Pallas kernels: whole-batch  W^T @ patches^T  fused with BN+ReLU / bias+Tanh
# ----------------------------------------------------------------------------
def _convt_bn_relu_kernel(pt_ref, wt_ref, g_ref, b_ref, o_ref):
    # pt_ref: (K, M) patches^T   wt_ref: (Cout, K)   g/b: (Cout, 1)   o: (Cout, M)
    y = jnp.dot(wt_ref[...], pt_ref[...], preferred_element_type=jnp.float32)
    # Training-mode BatchNorm2d: per-channel stats over (N, H, W) == the M axis,
    # biased variance, single-pass (sum / sum-of-squares) formulation.
    mean = jnp.mean(y, axis=1, keepdims=True)
    var = jnp.maximum(jnp.mean(y * y, axis=1, keepdims=True) - mean * mean, 0.0)
    y = (y - mean) * jax.lax.rsqrt(var + BN_EPS)
    y = y * g_ref[...] + b_ref[...]
    o_ref[...] = jnp.maximum(y, 0.0).astype(o_ref.dtype)          # ReLU


def _convt_bias_tanh_kernel(pt_ref, wt_ref, b_ref, o_ref):
    y = jnp.dot(wt_ref[...], pt_ref[...], preferred_element_type=jnp.float32)
    y = y + b_ref[...]
    o_ref[...] = jnp.tanh(y).astype(o_ref.dtype)                  # Tanh


def _full_spec(shape):
    nd = len(shape)
    return pl.BlockSpec(shape, lambda i: (0,) * nd)


def _run_layer_kernel(kernel, operands, cout, m):
    return pl.pallas_call(
        kernel,
        out_shape=jax.ShapeDtypeStruct((cout, m), jnp.float32),
        grid_spec=pltpu.PrefetchScalarGridSpec(
            num_scalar_prefetch=0,
            grid=(1,),
            in_specs=[_full_spec(op.shape) for op in operands],
            out_specs=_full_spec((cout, m)),
        ),
        compiler_params=pltpu.CompilerParams(
            dimension_semantics=("arbitrary",)),
    )(*operands)


# ----------------------------------------------------------------------------
# Glue: transposed-conv -> (dilate + pad + tap-stack) in channel-first layout
# ----------------------------------------------------------------------------
def build_patches_cf(a_cf, k, s, p):
    # a_cf: (Cin, N, H, W).  ConvTranspose2d(k, s, p) == stride-1 VALID conv on
    # the s-dilated input padded by (k-1-p) with an HWIO weight.
    Cin, N, H, W = a_cf.shape
    pad = k - 1 - p
    xp = jax.lax.pad(a_cf, jnp.zeros((), a_cf.dtype),
                     ((0, 0, 0), (0, 0, 0), (pad, pad, s - 1), (pad, pad, s - 1)))
    Ho = (H - 1) * s + k - 2 * p
    Wo = (W - 1) * s + k - 2 * p
    M = N * Ho * Wo
    taps = []
    for kh in range(k):
        for kw in range(k):
            tap = jax.lax.slice(xp, (0, 0, kh, kw), (Cin, N, kh + Ho, kw + Wo))
            taps.append(tap.reshape(Cin, M))
    return jnp.concatenate(taps, axis=0), Ho, Wo                  # (k*k*Cin, M)


# ----------------------------------------------------------------------------
# Parameters (mirrors the PyTorch constructor's layer list)
# ----------------------------------------------------------------------------
def make_layer_specs(input_dim, output_channels, dim, n_upsamplings):
    specs = []
    d = min(dim * 2 ** (n_upsamplings - 1), dim * 8)
    specs.append(dict(cin=input_dim, cout=d, k=4, s=1, p=0, norm=True))
    for i in range(n_upsamplings - 1):
        d_last = d
        d = min(dim * 2 ** (n_upsamplings - 2 - i), dim * 8)
        specs.append(dict(cin=d_last, cout=d, k=4, s=2, p=1, norm=True))
    specs.append(dict(cin=d, cout=output_channels, k=4, s=2, p=1, norm=False))
    return specs


def init_params(key, input_dim, output_channels, dim, n_upsamplings):
    params = []
    for spec in make_layer_specs(input_dim, output_channels, dim, n_upsamplings):
        key, k1, k2, k3 = jax.random.split(key, 4)
        k_, cin, cout = spec["k"], spec["cin"], spec["cout"]
        w = jax.random.normal(k1, (k_, k_, cin, cout), jnp.float32)
        w = w / (cin * k_ * k_) ** 0.5                            # HWIO
        lp = dict(spec, w=w)
        if spec["norm"]:
            lp["gamma"] = 1.0 + 0.1 * jax.random.normal(k2, (cout, 1), jnp.float32)
            lp["beta"] = 0.1 * jax.random.normal(k3, (cout, 1), jnp.float32)
        else:
            lp["bias"] = 0.01 * jax.random.normal(k2, (cout, 1), jnp.float32)
        params.append(lp)
    return params


# ----------------------------------------------------------------------------
# Full forward (Pallas path): NCHW in, NCHW out
# ----------------------------------------------------------------------------
def generator_forward(params, z_nchw):
    z = z_nchw.astype(jnp.float32)
    N = z.shape[0]
    a_cf = jnp.transpose(z, (1, 0, 2, 3))                         # (Cin, N, 1, 1)
    ho = wo = 1
    for lp in params:
        pT, ho, wo = build_patches_cf(a_cf, lp["k"], lp["s"], lp["p"])
        wT = jnp.transpose(lp["w"], (3, 0, 1, 2)).reshape(lp["cout"], -1)
        m = pT.shape[1]
        if lp["norm"]:
            y = _run_layer_kernel(_convt_bn_relu_kernel,
                                  (pT, wT, lp["gamma"], lp["beta"]),
                                  lp["cout"], m)
        else:
            y = _run_layer_kernel(_convt_bias_tanh_kernel,
                                  (pT, wT, lp["bias"]),
                                  lp["cout"], m)
        a_cf = y.reshape(lp["cout"], N, ho, wo)
    return jnp.transpose(a_cf, (1, 0, 2, 3))                      # (N, Cout, H, W)


# ----------------------------------------------------------------------------
# Pure-JAX reference (verification only)
# ----------------------------------------------------------------------------
def reference_forward(params, z_nchw):
    x = jnp.transpose(z_nchw, (0, 2, 3, 1)).astype(jnp.float32)   # NHWC
    for lp in params:
        k, s, p = lp["k"], lp["s"], lp["p"]
        pad = k - 1 - p
        y = jax.lax.conv_general_dilated(
            x, lp["w"], window_strides=(1, 1),
            padding=[(pad, pad), (pad, pad)],
            lhs_dilation=(s, s),
            dimension_numbers=("NHWC", "HWIO", "NHWC"),
            precision=jax.lax.Precision.HIGHEST)
        if lp["norm"]:
            mean = jnp.mean(y, axis=(0, 1, 2), keepdims=True)
            var = jnp.mean(jnp.square(y - mean), axis=(0, 1, 2), keepdims=True)
            y = (y - mean) / jnp.sqrt(var + BN_EPS)
            y = y * lp["gamma"].reshape(1, 1, 1, -1) + lp["beta"].reshape(1, 1, 1, -1)
            y = jnp.maximum(y, 0.0)
        else:
            y = jnp.tanh(y + lp["bias"].reshape(1, 1, 1, -1))
        x = y
    return jnp.transpose(x, (0, 3, 1, 2))                         # NCHW


# ----------------------------------------------------------------------------
if __name__ == "__main__":
    # Small but architecture-consistent shapes: z is (N, zdim, 1, 1) as in the
    # DCGAN generator; n_upsamplings=4 -> 64x64 output with 3 channels.
    batch, zdim, out_ch, dim, n_ups = 2, 32, 3, 8, 4

    key = jax.random.PRNGKey(0)
    kz, kp = jax.random.split(key)
    z = jax.random.normal(kz, (batch, zdim, 1, 1), jnp.float32)
    params = init_params(kp, zdim, out_ch, dim, n_ups)

    fwd = jax.jit(lambda zz: generator_forward(params, zz))
    ref_fwd = jax.jit(lambda zz: reference_forward(params, zz))

    out = jax.block_until_ready(fwd(z))
    ref = jax.block_until_ready(ref_fwd(z))

    assert out.shape == (batch, out_ch, 64, 64), out.shape
    assert bool(jnp.all(jnp.isfinite(out)))
    assert bool(jnp.allclose(out, ref, rtol=5e-3, atol=5e-3)), (
        float(jnp.max(jnp.abs(out - ref))))

    print("KERNEL_OK")
</pallas_src>

<mosaic_0001>
module attributes {stable_mosaic.version = 11 : i64} {
  func.func @_convt_bn_relu_kernel(%arg0: i32, %arg1: memref<512x32xf32, #tpu.memory_space<vmem>>, %arg2: memref<64x512xf32, #tpu.memory_space<vmem>>, %arg3: memref<64x1xf32, #tpu.memory_space<vmem>>, %arg4: memref<64x1xf32, #tpu.memory_space<vmem>>, %arg5: memref<64x32xf32, #tpu.memory_space<vmem>>) attributes {dimension_semantics = [#tpu.dimension_semantics<arbitrary>], iteration_bounds = array<i64: 1>, scalar_prefetch = 0 : i64, scratch_operands = 0 : i64, tpu.core_type = #tpu.core_type<tc>, window_params = [{pipeline_mode = #tpu.pipeline_mode<synchronous>, transform_indices = @transform_0, window_bounds = array<i64: 512, 32>}, {pipeline_mode = #tpu.pipeline_mode<synchronous>, transform_indices = @transform_1, window_bounds = array<i64: 64, 512>}, {pipeline_mode = #tpu.pipeline_mode<synchronous>, transform_indices = @transform_2, window_bounds = array<i64: 64, 1>}, {pipeline_mode = #tpu.pipeline_mode<synchronous>, transform_indices = @transform_3, window_bounds = array<i64: 64, 1>}, {pipeline_mode = #tpu.pipeline_mode<synchronous>, transform_indices = @transform_4, window_bounds = array<i64: 64, 32>}]} {
    %c0 = arith.constant 0 : index
    %c0_0 = arith.constant 0 : index
    %0 = vector.load %arg2[%c0, %c0_0] : memref<64x512xf32, #tpu.memory_space<vmem>>, vector<64x512xf32>
    %c0_1 = arith.constant 0 : index
    %c0_2 = arith.constant 0 : index
    %1 = vector.load %arg1[%c0_1, %c0_2] : memref<512x32xf32, #tpu.memory_space<vmem>>, vector<512x32xf32>
    %cst = arith.constant dense<0.000000e+00> : vector<64x32xf32>
    %2 = tpu.matmul %0, %1, %cst {dimension_numbers = #tpu.dot_dimension_numbers<[1], [0], [0], [1], [0, 0, 1, 1], [], []>} : vector<64x512xf32>, vector<512x32xf32>, vector<64x32xf32> -> vector<64x32xf32>
    %cst_3 = arith.constant dense<0.000000e+00> : vector<64xf32>
    %3 = vector.multi_reduction <add>, %2, %cst_3 [1] : vector<64x32xf32> to vector<64xf32>
    %4 = vector.shape_cast %3 : vector<64xf32> to vector<64x1xf32>
    %cst_4 = arith.constant 3.200000e+01 : f32
    %5 = vector.broadcast %cst_4 : f32 to vector<64x1xf32>
    %6 = arith.divf %4, %5 : vector<64x1xf32>
    %7 = arith.mulf %2, %2 : vector<64x32xf32>
    %cst_5 = arith.constant dense<0.000000e+00> : vector<64xf32>
    %8 = vector.multi_reduction <add>, %7, %cst_5 [1] : vector<64x32xf32> to vector<64xf32>
    %9 = vector.shape_cast %8 : vector<64xf32> to vector<64x1xf32>
    %cst_6 = arith.constant 3.200000e+01 : f32
    %10 = vector.broadcast %cst_6 : f32 to vector<64x1xf32>
    %11 = arith.divf %9, %10 : vector<64x1xf32>
    %12 = arith.mulf %6, %6 : vector<64x1xf32>
    %13 = arith.subf %11, %12 : vector<64x1xf32>
    %cst_7 = arith.constant 0.000000e+00 : f32
    %14 = vector.broadcast %cst_7 : f32 to vector<64x1xf32>
    %15 = arith.maximumf %13, %14 : vector<64x1xf32>
    %16 = vector.broadcast %6 : vector<64x1xf32> to vector<64x32xf32>
    %17 = arith.subf %2, %16 : vector<64x32xf32>
    %cst_8 = arith.constant 9.99999974E-6 : f32
    %18 = vector.broadcast %cst_8 : f32 to vector<64x1xf32>
    %19 = arith.addf %15, %18 : vector<64x1xf32>
    %20 = math.rsqrt %19 : vector<64x1xf32>
    %21 = vector.broadcast %20 : vector<64x1xf32> to vector<64x32xf32>
    %22 = arith.mulf %17, %21 : vector<64x32xf32>
    %c0_9 = arith.constant 0 : index
    %c0_10 = arith.constant 0 : index
    %23 = vector.load %arg3[%c0_9, %c0_10] : memref<64x1xf32, #tpu.memory_space<vmem>>, vector<64x1xf32>
    %24 = vector.broadcast %23 : vector<64x1xf32> to vector<64x32xf32>
    %25 = arith.mulf %22, %24 : vector<64x32xf32>
    %c0_11 = arith.constant 0 : index
    %c0_12 = arith.constant 0 : index
    %26 = vector.load %arg4[%c0_11, %c0_12] : memref<64x1xf32, #tpu.memory_space<vmem>>, vector<64x1xf32>
    %27 = vector.broadcast %26 : vector<64x1xf32> to vector<64x32xf32>
    %28 = arith.addf %25, %27 : vector<64x32xf32>
    %cst_13 = arith.constant 0.000000e+00 : f32
    %29 = vector.broadcast %cst_13 : f32 to vector<64x32xf32>
    %30 = arith.maximumf %28, %29 : vector<64x32xf32>
    %c0_14 = arith.constant 0 : index
    %c0_15 = arith.constant 0 : index
    %31 = vector.load %arg5[%c0_14, %c0_15] : memref<64x32xf32, #tpu.memory_space<vmem>>, vector<64x32xf32>
    tpu.vector_store %arg5[%c0_14, %c0_15], %30 {strides = array<i32>} : memref<64x32xf32, #tpu.memory_space<vmem>>, vector<64x32xf32>,
    return
  }
  func.func @transform_0(%arg0: i32) -> (i32, i32) {
    %c0_i32 = arith.constant 0 : i32
    %c0_i32_0 = arith.constant 0 : i32
    %c0_i32_1 = arith.constant 0 : i32
    return %c0_i32, %c0_i32_0 : i32, i32
  }
  func.func @transform_1(%arg0: i32) -> (i32, i32) {
    %c0_i32 = arith.constant 0 : i32
    %c0_i32_0 = arith.constant 0 : i32
    %c0_i32_1 = arith.constant 0 : i32
    return %c0_i32, %c0_i32_0 : i32, i32
  }
  func.func @transform_2(%arg0: i32) -> (i32, i32) {
    %c0_i32 = arith.constant 0 : i32
    %c0_i32_0 = arith.constant 0 : i32
    %c0_i32_1 = arith.constant 0 : i32
    return %c0_i32, %c0_i32_0 : i32, i32
  }
  func.func @transform_3(%arg0: i32) -> (i32, i32) {
    %c0_i32 = arith.constant 0 : i32
    %c0_i32_0 = arith.constant 0 : i32
    %c0_i32_1 = arith.constant 0 : i32
    return %c0_i32, %c0_i32_0 : i32, i32
  }
  func.func @transform_4(%arg0: i32) -> (i32, i32) {
    %c0_i32 = arith.constant 0 : i32
    %c0_i32_0 = arith.constant 0 : i32
    %c0_i32_1 = arith.constant 0 : i32
    return %c0_i32, %c0_i32_0 : i32, i32
  }
}

module attributes {stable_mosaic.version = 11 : i64} {
  func.func @_convt_bn_relu_kernel(%arg0: i32, %arg1: memref<1024x128xf32, #tpu.memory_space<vmem>>, %arg2: memref<32x1024xf32, #tpu.memory_space<vmem>>, %arg3: memref<32x1xf32, #tpu.memory_space<vmem>>, %arg4: memref<32x1xf32, #tpu.memory_space<vmem>>, %arg5: memref<32x128xf32, #tpu.memory_space<vmem>>) attributes {dimension_semantics = [#tpu.dimension_semantics<arbitrary>], iteration_bounds = array<i64: 1>, scalar_prefetch = 0 : i64, scratch_operands = 0 : i64, tpu.core_type = #tpu.core_type<tc>, window_params = [{pipeline_mode = #tpu.pipeline_mode<synchronous>, transform_indices = @transform_0, window_bounds = array<i64: 1024, 128>}, {pipeline_mode = #tpu.pipeline_mode<synchronous>, transform_indices = @transform_1, window_bounds = array<i64: 32, 1024>}, {pipeline_mode = #tpu.pipeline_mode<synchronous>, transform_indices = @transform_2, window_bounds = array<i64: 32, 1>}, {pipeline_mode = #tpu.pipeline_mode<synchronous>, transform_indices = @transform_3, window_bounds = array<i64: 32, 1>}, {pipeline_mode = #tpu.pipeline_mode<synchronous>, transform_indices = @transform_4, window_bounds = array<i64: 32, 128>}]} {
    %c0 = arith.constant 0 : index
    %c0_0 = arith.constant 0 : index
    %0 = vector.load %arg2[%c0, %c0_0] : memref<32x1024xf32, #tpu.memory_space<vmem>>, vector<32x1024xf32>
    %c0_1 = arith.constant 0 : index
    %c0_2 = arith.constant 0 : index
    %1 = vector.load %arg1[%c0_1, %c0_2] : memref<1024x128xf32, #tpu.memory_space<vmem>>, vector<1024x128xf32>
    %cst = arith.constant dense<0.000000e+00> : vector<32x128xf32>
    %2 = tpu.matmul %0, %1, %cst {dimension_numbers = #tpu.dot_dimension_numbers<[1], [0], [0], [1], [0, 0, 1, 1], [], []>} : vector<32x1024xf32>, vector<1024x128xf32>, vector<32x128xf32> -> vector<32x128xf32>
    %cst_3 = arith.constant dense<0.000000e+00> : vector<32xf32>
    %3 = vector.multi_reduction <add>, %2, %cst_3 [1] : vector<32x128xf32> to vector<32xf32>
    %4 = vector.shape_cast %3 : vector<32xf32> to vector<32x1xf32>
    %cst_4 = arith.constant 1.280000e+02 : f32
    %5 = vector.broadcast %cst_4 : f32 to vector<32x1xf32>
    %6 = arith.divf %4, %5 : vector<32x1xf32>
    %7 = arith.mulf %2, %2 : vector<32x128xf32>
    %cst_5 = arith.constant dense<0.000000e+00> : vector<32xf32>
    %8 = vector.multi_reduction <add>, %7, %cst_5 [1] : vector<32x128xf32> to vector<32xf32>
    %9 = vector.shape_cast %8 : vector<32xf32> to vector<32x1xf32>
    %cst_6 = arith.constant 1.280000e+02 : f32
    %10 = vector.broadcast %cst_6 : f32 to vector<32x1xf32>
    %11 = arith.divf %9, %10 : vector<32x1xf32>
    %12 = arith.mulf %6, %6 : vector<32x1xf32>
    %13 = arith.subf %11, %12 : vector<32x1xf32>
    %cst_7 = arith.constant 0.000000e+00 : f32
    %14 = vector.broadcast %cst_7 : f32 to vector<32x1xf32>
    %15 = arith.maximumf %13, %14 : vector<32x1xf32>
    %16 = vector.broadcast %6 : vector<32x1xf32> to vector<32x128xf32>
    %17 = arith.subf %2, %16 : vector<32x128xf32>
    %cst_8 = arith.constant 9.99999974E-6 : f32
    %18 = vector.broadcast %cst_8 : f32 to vector<32x1xf32>
    %19 = arith.addf %15, %18 : vector<32x1xf32>
    %20 = math.rsqrt %19 : vector<32x1xf32>
    %21 = vector.broadcast %20 : vector<32x1xf32> to vector<32x128xf32>
    %22 = arith.mulf %17, %21 : vector<32x128xf32>
    %c0_9 = arith.constant 0 : index
    %c0_10 = arith.constant 0 : index
    %23 = vector.load %arg3[%c0_9, %c0_10] : memref<32x1xf32, #tpu.memory_space<vmem>>, vector<32x1xf32>
    %24 = vector.broadcast %23 : vector<32x1xf32> to vector<32x128xf32>
    %25 = arith.mulf %22, %24 : vector<32x128xf32>
    %c0_11 = arith.constant 0 : index
    %c0_12 = arith.constant 0 : index
    %26 = vector.load %arg4[%c0_11, %c0_12] : memref<32x1xf32, #tpu.memory_space<vmem>>, vector<32x1xf32>
    %27 = vector.broadcast %26 : vector<32x1xf32> to vector<32x128xf32>
    %28 = arith.addf %25, %27 : vector<32x128xf32>
    %cst_13 = arith.constant 0.000000e+00 : f32
    %29 = vector.broadcast %cst_13 : f32 to vector<32x128xf32>
    %30 = arith.maximumf %28, %29 : vector<32x128xf32>
    %c0_14 = arith.constant 0 : index
    %c0_15 = arith.constant 0 : index
    %31 = vector.load %arg5[%c0_14, %c0_15] : memref<32x128xf32, #tpu.memory_space<vmem>>, vector<32x128xf32>
    tpu.vector_store %arg5[%c0_14, %c0_15], %30 {strides = array<i32>} : memref<32x128xf32, #tpu.memory_space<vmem>>, vector<32x128xf32>,
    return
  }
  func.func @transform_0(%arg0: i32) -> (i32, i32) {
    %c0_i32 = arith.constant 0 : i32
    %c0_i32_0 = arith.constant 0 : i32
    %c0_i32_1 = arith.constant 0 : i32
    return %c0_i32, %c0_i32_0 : i32, i32
  }
  func.func @transform_1(%arg0: i32) -> (i32, i32) {
    %c0_i32 = arith.constant 0 : i32
    %c0_i32_0 = arith.constant 0 : i32
    %c0_i32_1 = arith.constant 0 : i32
    return %c0_i32, %c0_i32_0 : i32, i32
  }
  func.func @transform_2(%arg0: i32) -> (i32, i32) {
    %c0_i32 = arith.constant 0 : i32
    %c0_i32_0 = arith.constant 0 : i32
    %c0_i32_1 = arith.constant 0 : i32
    return %c0_i32, %c0_i32_0 : i32, i32
  }
  func.func @transform_3(%arg0: i32) -> (i32, i32) {
    %c0_i32 = arith.constant 0 : i32
    %c0_i32_0 = arith.constant 0 : i32
    %c0_i32_1 = arith.constant 0 : i32
    return %c0_i32, %c0_i32_0 : i32, i32
  }
  func.func @transform_4(%arg0: i32) -> (i32, i32) {
    %c0_i32 = arith.constant 0 : i32
    %c0_i32_0 = arith.constant 0 : i32
    %c0_i32_1 = arith.constant 0 : i32
    return %c0_i32, %c0_i32_0 : i32, i32
  }
}

module attributes {stable_mosaic.version = 11 : i64} {
  func.func @_convt_bn_relu_kernel(%arg0: i32, %arg1: memref<512x512xf32, #tpu.memory_space<vmem>>, %arg2: memref<16x512xf32, #tpu.memory_space<vmem>>, %arg3: memref<16x1xf32, #tpu.memory_space<vmem>>, %arg4: memref<16x1xf32, #tpu.memory_space<vmem>>, %arg5: memref<16x512xf32, #tpu.memory_space<vmem>>) attributes {dimension_semantics = [#tpu.dimension_semantics<arbitrary>], iteration_bounds = array<i64: 1>, scalar_prefetch = 0 : i64, scratch_operands = 0 : i64, tpu.core_type = #tpu.core_type<tc>, window_params = [{pipeline_mode = #tpu.pipeline_mode<synchronous>, transform_indices = @transform_0, window_bounds = array<i64: 512, 512>}, {pipeline_mode = #tpu.pipeline_mode<synchronous>, transform_indices = @transform_1, window_bounds = array<i64: 16, 512>}, {pipeline_mode = #tpu.pipeline_mode<synchronous>, transform_indices = @transform_2, window_bounds = array<i64: 16, 1>}, {pipeline_mode = #tpu.pipeline_mode<synchronous>, transform_indices = @transform_3, window_bounds = array<i64: 16, 1>}, {pipeline_mode = #tpu.pipeline_mode<synchronous>, transform_indices = @transform_4, window_bounds = array<i64: 16, 512>}]} {
    %c0 = arith.constant 0 : index
    %c0_0 = arith.constant 0 : index
    %0 = vector.load %arg2[%c0, %c0_0] : memref<16x512xf32, #tpu.memory_space<vmem>>, vector<16x512xf32>
    %c0_1 = arith.constant 0 : index
    %c0_2 = arith.constant 0 : index
    %1 = vector.load %arg1[%c0_1, %c0_2] : memref<512x512xf32, #tpu.memory_space<vmem>>, vector<512x512xf32>
    %cst = arith.constant dense<0.000000e+00> : vector<16x512xf32>
    %2 = tpu.matmul %0, %1, %cst {dimension_numbers = #tpu.dot_dimension_numbers<[1], [0], [0], [1], [0, 0, 1, 1], [], []>} : vector<16x512xf32>, vector<512x512xf32>, vector<16x512xf32> -> vector<16x512xf32>
    %cst_3 = arith.constant dense<0.000000e+00> : vector<16xf32>
    %3 = vector.multi_reduction <add>, %2, %cst_3 [1] : vector<16x512xf32> to vector<16xf32>
    %4 = vector.shape_cast %3 : vector<16xf32> to vector<16x1xf32>
    %cst_4 = arith.constant 5.120000e+02 : f32
    %5 = vector.broadcast %cst_4 : f32 to vector<16x1xf32>
    %6 = arith.divf %4, %5 : vector<16x1xf32>
    %7 = arith.mulf %2, %2 : vector<16x512xf32>
    %cst_5 = arith.constant dense<0.000000e+00> : vector<16xf32>
    %8 = vector.multi_reduction <add>, %7, %cst_5 [1] : vector<16x512xf32> to vector<16xf32>
    %9 = vector.shape_cast %8 : vector<16xf32> to vector<16x1xf32>
    %cst_6 = arith.constant 5.120000e+02 : f32
    %10 = vector.broadcast %cst_6 : f32 to vector<16x1xf32>
    %11 = arith.divf %9, %10 : vector<16x1xf32>
    %12 = arith.mulf %6, %6 : vector<16x1xf32>
    %13 = arith.subf %11, %12 : vector<16x1xf32>
    %cst_7 = arith.constant 0.000000e+00 : f32
    %14 = vector.broadcast %cst_7 : f32 to vector<16x1xf32>
    %15 = arith.maximumf %13, %14 : vector<16x1xf32>
    %16 = vector.broadcast %6 : vector<16x1xf32> to vector<16x512xf32>
    %17 = arith.subf %2, %16 : vector<16x512xf32>
    %cst_8 = arith.constant 9.99999974E-6 : f32
    %18 = vector.broadcast %cst_8 : f32 to vector<16x1xf32>
    %19 = arith.addf %15, %18 : vector<16x1xf32>
    %20 = math.rsqrt %19 : vector<16x1xf32>
    %21 = vector.broadcast %20 : vector<16x1xf32> to vector<16x512xf32>
    %22 = arith.mulf %17, %21 : vector<16x512xf32>
    %c0_9 = arith.constant 0 : index
    %c0_10 = arith.constant 0 : index
    %23 = vector.load %arg3[%c0_9, %c0_10] : memref<16x1xf32, #tpu.memory_space<vmem>>, vector<16x1xf32>
    %24 = vector.broadcast %23 : vector<16x1xf32> to vector<16x512xf32>
    %25 = arith.mulf %22, %24 : vector<16x512xf32>
    %c0_11 = arith.constant 0 : index
    %c0_12 = arith.constant 0 : index
    %26 = vector.load %arg4[%c0_11, %c0_12] : memref<16x1xf32, #tpu.memory_space<vmem>>, vector<16x1xf32>
    %27 = vector.broadcast %26 : vector<16x1xf32> to vector<16x512xf32>
    %28 = arith.addf %25, %27 : vector<16x512xf32>
    %cst_13 = arith.constant 0.000000e+00 : f32
    %29 = vector.broadcast %cst_13 : f32 to vector<16x512xf32>
    %30 = arith.maximumf %28, %29 : vector<16x512xf32>
    %c0_14 = arith.constant 0 : index
    %c0_15 = arith.constant 0 : index
    %31 = vector.load %arg5[%c0_14, %c0_15] : memref<16x512xf32, #tpu.memory_space<vmem>>, vector<16x512xf32>
    tpu.vector_store %arg5[%c0_14, %c0_15], %30 {strides = array<i32>} : memref<16x512xf32, #tpu.memory_space<vmem>>, vector<16x512xf32>,
    return
  }
  func.func @transform_0(%arg0: i32) -> (i32, i32) {
    %c0_i32 = arith.constant 0 : i32
    %c0_i32_0 = arith.constant 0 : i32
    %c0_i32_1 = arith.constant 0 : i32
    return %c0_i32, %c0_i32_0 : i32, i32
  }
  func.func @transform_1(%arg0: i32) -> (i32, i32) {
    %c0_i32 = arith.constant 0 : i32
    %c0_i32_0 = arith.constant 0 : i32
    %c0_i32_1 = arith.constant 0 : i32
    return %c0_i32, %c0_i32_0 : i32, i32
  }
  func.func @transform_2(%arg0: i32) -> (i32, i32) {
    %c0_i32 = arith.constant 0 : i32
    %c0_i32_0 = arith.constant 0 : i32
    %c0_i32_1 = arith.constant 0 : i32
    return %c0_i32, %c0_i32_0 : i32, i32
  }
  func.func @transform_3(%arg0: i32) -> (i32, i32) {
    %c0_i32 = arith.constant 0 : i32
    %c0_i32_0 = arith.constant 0 : i32
    %c0_i32_1 = arith.constant 0 : i32
    return %c0_i32, %c0_i32_0 : i32, i32
  }
  func.func @transform_4(%arg0: i32) -> (i32, i32) {
    %c0_i32 = arith.constant 0 : i32
    %c0_i32_0 = arith.constant 0 : i32
    %c0_i32_1 = arith.constant 0 : i32
    return %c0_i32, %c0_i32_0 : i32, i32
  }
}

module attributes {stable_mosaic.version = 11 : i64} {
  func.func @_convt_bn_relu_kernel(%arg0: i32, %arg1: memref<256x2048xf32, #tpu.memory_space<vmem>>, %arg2: memref<8x256xf32, #tpu.memory_space<vmem>>, %arg3: memref<8x1xf32, #tpu.memory_space<vmem>>, %arg4: memref<8x1xf32, #tpu.memory_space<vmem>>, %arg5: memref<8x2048xf32, #tpu.memory_space<vmem>>) attributes {dimension_semantics = [#tpu.dimension_semantics<arbitrary>], iteration_bounds = array<i64: 1>, scalar_prefetch = 0 : i64, scratch_operands = 0 : i64, tpu.core_type = #tpu.core_type<tc>, window_params = [{pipeline_mode = #tpu.pipeline_mode<synchronous>, transform_indices = @transform_0, window_bounds = array<i64: 256, 2048>}, {pipeline_mode = #tpu.pipeline_mode<synchronous>, transform_indices = @transform_1, window_bounds = array<i64: 8, 256>}, {pipeline_mode = #tpu.pipeline_mode<synchronous>, transform_indices = @transform_2, window_bounds = array<i64: 8, 1>}, {pipeline_mode = #tpu.pipeline_mode<synchronous>, transform_indices = @transform_3, window_bounds = array<i64: 8, 1>}, {pipeline_mode = #tpu.pipeline_mode<synchronous>, transform_indices = @transform_4, window_bounds = array<i64: 8, 2048>}]} {
    %c0 = arith.constant 0 : index
    %c0_0 = arith.constant 0 : index
    %0 = vector.load %arg2[%c0, %c0_0] : memref<8x256xf32, #tpu.memory_space<vmem>>, vector<8x256xf32>
    %c0_1 = arith.constant 0 : index
    %c0_2 = arith.constant 0 : index
    %1 = vector.load %arg1[%c0_1, %c0_2] : memref<256x2048xf32, #tpu.memory_space<vmem>>, vector<256x2048xf32>
    %cst = arith.constant dense<0.000000e+00> : vector<8x2048xf32>
    %2 = tpu.matmul %0, %1, %cst {dimension_numbers = #tpu.dot_dimension_numbers<[1], [0], [0], [1], [0, 0, 1, 1], [], []>} : vector<8x256xf32>, vector<256x2048xf32>, vector<8x2048xf32> -> vector<8x2048xf32>
    %cst_3 = arith.constant dense<0.000000e+00> : vector<8xf32>
    %3 = vector.multi_reduction <add>, %2, %cst_3 [1] : vector<8x2048xf32> to vector<8xf32>
    %4 = vector.shape_cast %3 : vector<8xf32> to vector<8x1xf32>
    %cst_4 = arith.constant 2.048000e+03 : f32
    %5 = vector.broadcast %cst_4 : f32 to vector<8x1xf32>
    %6 = arith.divf %4, %5 : vector<8x1xf32>
    %7 = arith.mulf %2, %2 : vector<8x2048xf32>
    %cst_5 = arith.constant dense<0.000000e+00> : vector<8xf32>
    %8 = vector.multi_reduction <add>, %7, %cst_5 [1] : vector<8x2048xf32> to vector<8xf32>
    %9 = vector.shape_cast %8 : vector<8xf32> to vector<8x1xf32>
    %cst_6 = arith.constant 2.048000e+03 : f32
    %10 = vector.broadcast %cst_6 : f32 to vector<8x1xf32>
    %11 = arith.divf %9, %10 : vector<8x1xf32>
    %12 = arith.mulf %6, %6 : vector<8x1xf32>
    %13 = arith.subf %11, %12 : vector<8x1xf32>
    %cst_7 = arith.constant 0.000000e+00 : f32
    %14 = vector.broadcast %cst_7 : f32 to vector<8x1xf32>
    %15 = arith.maximumf %13, %14 : vector<8x1xf32>
    %16 = vector.broadcast %6 : vector<8x1xf32> to vector<8x2048xf32>
    %17 = arith.subf %2, %16 : vector<8x2048xf32>
    %cst_8 = arith.constant 9.99999974E-6 : f32
    %18 = vector.broadcast %cst_8 : f32 to vector<8x1xf32>
    %19 = arith.addf %15, %18 : vector<8x1xf32>
    %20 = math.rsqrt %19 : vector<8x1xf32>
    %21 = vector.broadcast %20 : vector<8x1xf32> to vector<8x2048xf32>
    %22 = arith.mulf %17, %21 : vector<8x2048xf32>
    %c0_9 = arith.constant 0 : index
    %c0_10 = arith.constant 0 : index
    %23 = vector.load %arg3[%c0_9, %c0_10] : memref<8x1xf32, #tpu.memory_space<vmem>>, vector<8x1xf32>
    %24 = vector.broadcast %23 : vector<8x1xf32> to vector<8x2048xf32>
    %25 = arith.mulf %22, %24 : vector<8x2048xf32>
    %c0_11 = arith.constant 0 : index
    %c0_12 = arith.constant 0 : index
    %26 = vector.load %arg4[%c0_11, %c0_12] : memref<8x1xf32, #tpu.memory_space<vmem>>, vector<8x1xf32>
    %27 = vector.broadcast %26 : vector<8x1xf32> to vector<8x2048xf32>
    %28 = arith.addf %25, %27 : vector<8x2048xf32>
    %cst_13 = arith.constant 0.000000e+00 : f32
    %29 = vector.broadcast %cst_13 : f32 to vector<8x2048xf32>
    %30 = arith.maximumf %28, %29 : vector<8x2048xf32>
    %c0_14 = arith.constant 0 : index
    %c0_15 = arith.constant 0 : index
    %31 = vector.load %arg5[%c0_14, %c0_15] : memref<8x2048xf32, #tpu.memory_space<vmem>>, vector<8x2048xf32>
    tpu.vector_store %arg5[%c0_14, %c0_15], %30 {strides = array<i32>} : memref<8x2048xf32, #tpu.memory_space<vmem>>, vector<8x2048xf32>,
    return
  }
  func.func @transform_0(%arg0: i32) -> (i32, i32) {
    %c0_i32 = arith.constant 0 : i32
    %c0_i32_0 = arith.constant 0 : i32
    %c0_i32_1 = arith.constant 0 : i32
    return %c0_i32, %c0_i32_0 : i32, i32
  }
  func.func @transform_1(%arg0: i32) -> (i32, i32) {
    %c0_i32 = arith.constant 0 : i32
    %c0_i32_0 = arith.constant 0 : i32
    %c0_i32_1 = arith.constant 0 : i32
    return %c0_i32, %c0_i32_0 : i32, i32
  }
  func.func @transform_2(%arg0: i32) -> (i32, i32) {
    %c0_i32 = arith.constant 0 : i32
    %c0_i32_0 = arith.constant 0 : i32
    %c0_i32_1 = arith.constant 0 : i32
    return %c0_i32, %c0_i32_0 : i32, i32
  }
  func.func @transform_3(%arg0: i32) -> (i32, i32) {
    %c0_i32 = arith.constant 0 : i32
    %c0_i32_0 = arith.constant 0 : i32
    %c0_i32_1 = arith.constant 0 : i32
    return %c0_i32, %c0_i32_0 : i32, i32
  }
  func.func @transform_4(%arg0: i32) -> (i32, i32) {
    %c0_i32 = arith.constant 0 : i32
    %c0_i32_0 = arith.constant 0 : i32
    %c0_i32_1 = arith.constant 0 : i32
    return %c0_i32, %c0_i32_0 : i32, i32
  }
}

module attributes {stable_mosaic.version = 11 : i64} {
  func.func @_convt_bias_tanh_kernel(%arg0: i32, %arg1: memref<128x8192xf32, #tpu.memory_space<vmem>>, %arg2: memref<3x128xf32, #tpu.memory_space<vmem>>, %arg3: memref<3x1xf32, #tpu.memory_space<vmem>>, %arg4: memref<3x8192xf32, #tpu.memory_space<vmem>>) attributes {dimension_semantics = [#tpu.dimension_semantics<arbitrary>], iteration_bounds = array<i64: 1>, scalar_prefetch = 0 : i64, scratch_operands = 0 : i64, tpu.core_type = #tpu.core_type<tc>, window_params = [{pipeline_mode = #tpu.pipeline_mode<synchronous>, transform_indices = @transform_0, window_bounds = array<i64: 128, 8192>}, {pipeline_mode = #tpu.pipeline_mode<synchronous>, transform_indices = @transform_1, window_bounds = array<i64: 3, 128>}, {pipeline_mode = #tpu.pipeline_mode<synchronous>, transform_indices = @transform_2, window_bounds = array<i64: 3, 1>}, {pipeline_mode = #tpu.pipeline_mode<synchronous>, transform_indices = @transform_3, window_bounds = array<i64: 3, 8192>}]} {
    %c0 = arith.constant 0 : index
    %c0_0 = arith.constant 0 : index
    %0 = vector.load %arg2[%c0, %c0_0] : memref<3x128xf32, #tpu.memory_space<vmem>>, vector<3x128xf32>
    %c0_1 = arith.constant 0 : index
    %c0_2 = arith.constant 0 : index
    %1 = vector.load %arg1[%c0_1, %c0_2] : memref<128x8192xf32, #tpu.memory_space<vmem>>, vector<128x8192xf32>
    %cst = arith.constant dense<0.000000e+00> : vector<3x8192xf32>
    %2 = tpu.matmul %0, %1, %cst {dimension_numbers = #tpu.dot_dimension_numbers<[1], [0], [0], [1], [0, 0, 1, 1], [], []>} : vector<3x128xf32>, vector<128x8192xf32>, vector<3x8192xf32> -> vector<3x8192xf32>
    %c0_3 = arith.constant 0 : index
    %c0_4 = arith.constant 0 : index
    %3 = vector.load %arg3[%c0_3, %c0_4] : memref<3x1xf32, #tpu.memory_space<vmem>>, vector<3x1xf32>
    %4 = vector.broadcast %3 : vector<3x1xf32> to vector<3x8192xf32>
    %5 = arith.addf %2, %4 : vector<3x8192xf32>
    %6 = math.tanh %5 : vector<3x8192xf32>
    %c0_5 = arith.constant 0 : index
    %c0_6 = arith.constant 0 : index
    %7 = vector.load %arg4[%c0_5, %c0_6] : memref<3x8192xf32, #tpu.memory_space<vmem>>, vector<3x8192xf32>
    tpu.vector_store %arg4[%c0_5, %c0_6], %6 {strides = array<i32>} : memref<3x8192xf32, #tpu.memory_space<vmem>>, vector<3x8192xf32>,
    return
  }
  func.func @transform_0(%arg0: i32) -> (i32, i32) {
    %c0_i32 = arith.constant 0 : i32
    %c0_i32_0 = arith.constant 0 : i32
    %c0_i32_1 = arith.constant 0 : i32
    return %c0_i32, %c0_i32_0 : i32, i32
  }
  func.func @transform_1(%arg0: i32) -> (i32, i32) {
    %c0_i32 = arith.constant 0 : i32
    %c0_i32_0 = arith.constant 0 : i32
    %c0_i32_1 = arith.constant 0 : i32
    return %c0_i32, %c0_i32_0 : i32, i32
  }
  func.func @transform_2(%arg0: i32) -> (i32, i32) {
    %c0_i32 = arith.constant 0 : i32
    %c0_i32_0 = arith.constant 0 : i32
    %c0_i32_1 = arith.constant 0 : i32
    return %c0_i32, %c0_i32_0 : i32, i32
  }
  func.func @transform_3(%arg0: i32) -> (i32, i32) {
    %c0_i32 = arith.constant 0 : i32
    %c0_i32_0 = arith.constant 0 : i32
    %c0_i32_1 = arith.constant 0 : i32
    return %c0_i32, %c0_i32_0 : i32, i32
  }
}

</mosaic_0001>

<llo_original>
// kernel: _lambda_.5
$region0: #{_lambda_.5}
  #allocation0 [shape = 'u32[]', space=smem, size = 0x4, offset = 0x4, fixed_abs, tag = 'smem constant byte address 0x4 - core index']
  #allocation1 [shape = 'u32[144,128]{1,0:T(1,128)}', space=vmem, size = 0x12000, scoped, tag = 'internal scratch']
  %s0 = inlined_call_operand.vmem [shape: f32[512,32], index: 0, kind: input, shape index: {}]
  %s1 = inlined_call_operand.hbm [shape: f32[64,512], index: 1, kind: input, shape index: {}]
  %s2 = inlined_call_operand.hbm [shape: f32[64,1], index: 2, kind: input, shape index: {}]
  %s3 = inlined_call_operand.hbm [shape: f32[64,1], index: 3, kind: input, shape index: {}]
  %s4 = inlined_call_operand.vmem [shape: f32[64,32], index: 4, kind: output, shape index: {}]
  %s5 = sld [smem:[#allocation0]]
  $region38: #{_lambda_.5} parent=0
    _
  %s7 = ssub.s32 1, %s5
  %s8 = scalar_select 0, %s7, %s5
  $region1: #{_lambda_.5} parent=0
    #allocation2 [shape = 'u8[131072]{0}', space=vmem, size = 0x20000, scoped, tag = 'input window, operand 1, single buffered']
    #allocation3 [shape = 's32[1]{0}', space=sflag, size = 0x4, scoped, tag = 'scoped memory for _lambda_.5']
    #allocation4 [shape = 'u8[32768]{0}', space=vmem, size = 0x8000, scoped, tag = 'input window, operand 2, single buffered']
    #allocation5 [shape = 's32[1]{0}', space=sflag, size = 0x4, scoped, tag = 'scoped memory for _lambda_.5']
    #allocation6 [shape = 'u8[32768]{0}', space=vmem, size = 0x8000, scoped, tag = 'input window, operand 3, single buffered']
    %9 = vsyncpa [#allocation3], 0
    %10 = vsyncpa [#allocation5], 0
    // Predicated region
    $region2: #{_lambda_.5} parent=1 // pred_check
      _
    $region3: #{_lambda_.5} parent=1 // pred_check_branch
      %12 = sbr.rel (0) target = $region5
    $region4: #{_lambda_.5} parent=1 // pred_region
      _
    $region5: #{_lambda_.5} parent=1 // pred_fallthru
      _
    // Predicated region
    $region6: #{_lambda_.5} parent=1 // pred_check
      _
    $region7: #{_lambda_.5} parent=1 // pred_check_branch
      %14 = sbr.rel (0) target = $region9
    $region8: #{_lambda_.5} parent=1 // pred_region
      %s16 = ssub.s32 4096, 4096
      %17 = vsyncadd [#allocation3], %s16
      %s18 = sshll.u32 [#allocation2], 4
      %s19 = int_to_ptr.vmem [resolvable:$true] %s18
      %24 = dma.hbm_to_vmem [thread:$0]  %s1, 4096, %s19, [#allocation3], 512, 512, 32
    $region9: #{_lambda_.5} parent=1 // pred_fallthru
      _
    // Predicated region
    $region10: #{_lambda_.5} parent=1 // pred_check
      _
    $region11: #{_lambda_.5} parent=1 // pred_check_branch
      %26 = sbr.rel (0) target = $region13
    $region12: #{_lambda_.5} parent=1 // pred_region
      %s28 = ssub.s32 1024, 1024
      %29 = vsyncadd [#allocation5], %s28
      %s30 = sshll.u32 [#allocation4], 4
      %s31 = int_to_ptr.vmem [resolvable:$true] %s30
      %36 = dma.hbm_to_vmem [thread:$0]  %s2, 1024, %s31, [#allocation5], 128, 128, 8
    $region13: #{_lambda_.5} parent=1 // pred_fallthru
      _
    // Predicated region
    $region14: #{_lambda_.5} parent=1 // pred_check
      _
    $region15: #{_lambda_.5} parent=1 // pred_check_branch
      %38 = sbr.rel (0) target = $region17
    $region16: #{_lambda_.5} parent=1 // pred_region
      %s40 = ssub.s32 1024, 1024
      %41 = vsyncadd [#allocation5], %s40
      %s42 = sshll.u32 [#allocation6], 4
      %s43 = int_to_ptr.vmem [resolvable:$true] %s42
      %48 = dma.hbm_to_vmem [thread:$0]  %s3, 1024, %s43, [#allocation5], 128, 128, 8
    $region17: #{_lambda_.5} parent=1 // pred_fallthru
      _
    // Predicated region
    $region18: #{_lambda_.5} parent=1 // pred_check
      _
    $region19: #{_lambda_.5} parent=1 // pred_check_branch
      %50 = sbr.rel (0) target = $region21
    $region20: #{_lambda_.5} parent=1 // pred_region
      %51 = dma.done [#allocation3], 4096
    $region21: #{_lambda_.5} parent=1 // pred_fallthru
      _
    // Predicated region
    $region22: #{_lambda_.5} parent=1 // pred_check
      _
    $region23: #{_lambda_.5} parent=1 // pred_check_branch
      %53 = sbr.rel (0) target = $region25
    $region24: #{_lambda_.5} parent=1 // pred_region
      %54 = dma.done [#allocation5], 1024
    $region25: #{_lambda_.5} parent=1 // pred_fallthru
      _
    // Predicated region
    $region26: #{_lambda_.5} parent=1 // pred_check
      _
    $region27: #{_lambda_.5} parent=1 // pred_check_branch
      %56 = sbr.rel (0) target = $region29
    $region28: #{_lambda_.5} parent=1 // pred_region
      %57 = dma.done [#allocation5], 1024
    $region29: #{_lambda_.5} parent=1 // pred_fallthru
      _
    %v58 = vld [vmem:[#allocation2] sm:$0xff]
    %v59 = vld [vmem:[#allocation2 + $0x8] sm:$0xff]
    %v60 = vld [vmem:[#allocation2 + $0x10] sm:$0xff]
    %v61 = vld [vmem:[#allocation2 + $0x18] sm:$0xff]
    %v62 = vld [vmem:[#allocation2 + $0x20] sm:$0xff]
    %v63 = vld [vmem:[#allocation2 + $0x28] sm:$0xff]
    %v64 = vld [vmem:[#allocation2 + $0x30] sm:$0xff]
    %v65 = vld [vmem:[#allocation2 + $0x38] sm:$0xff]
    %v66 = vld [vmem:[#allocation2 + $0x40] sm:$0xff]
    %v67 = vld [vmem:[#allocation2 + $0x48] sm:$0xff]
    %v68 = vld [vmem:[#allocation2 + $0x50] sm:$0xff]
    %v69 = vld [vmem:[#allocation2 + $0x58] sm:$0xff]
    %v70 = vld [vmem:[#allocation2 + $0x60] sm:$0xff]
    %v71 = vld [vmem:[#allocation2 + $0x68] sm:$0xff]
    %v72 = vld [vmem:[#allocation2 + $0x70] sm:$0xff]
    %v73 = vld [vmem:[#allocation2 + $0x78] sm:$0xff]
    %v74 = vld [vmem:[#allocation2 + $0x80] sm:$0xff]
    %v75 = vld [vmem:[#allocation2 + $0x88] sm:$0xff]
    %v76 = vld [vmem:[#allocation2 + $0x90] sm:$0xff]
    %v77 = vld [vmem:[#allocation2 + $0x98] sm:$0xff]
    %v78 = vld [vmem:[#allocation2 + $0xa0] sm:$0xff]
    %v79 = vld [vmem:[#allocation2 + $0xa8] sm:$0xff]
    %v80 = vld [vmem:[#allocation2 + $0xb0] sm:$0xff]
    %v81 = vld [vmem:[#allocation2 + $0xb8] sm:$0xff]
    %v82 = vld [vmem:[#allocation2 + $0xc0] sm:$0xff]
    %v83 = vld [vmem:[#allocation2 + $0xc8] sm:$0xff]
    %v84 = vld [vmem:[#allocation2 + $0xd0] sm:$0xff]
    %v85 = vld [vmem:[#allocation2 + $0xd8] sm:$0xff]
    %v86 = vld [vmem:[#allocation2 + $0xe0] sm:$0xff]
    %v87 = vld [vmem:[#allocation2 + $0xe8] sm:$0xff]
    %v88 = vld [vmem:[#allocation2 + $0xf0] sm:$0xff]
    %v89 = vld [vmem:[#allocation2 + $0xf8] sm:$0xff]
    %v90 = vld [vmem:[%s0] sm:$0xff]
    %v91 = vld [vmem:[%s0 + $0x8] sm:$0xff]
    %v92 = vld [vmem:[%s0 + $0x10] sm:$0xff]
    %v93 = vld [vmem:[%s0 + $0x18] sm:$0xff]
    %v94 = vld [vmem:[%s0 + $0x20] sm:$0xff]
    %v95 = vld [vmem:[%s0 + $0x28] sm:$0xff]
    %v96 = vld [vmem:[%s0 + $0x30] sm:$0xff]
    %v97 = vld [vmem:[%s0 + $0x38] sm:$0xff]
    %v98 = vld [vmem:[%s0 + $0x40] sm:$0xff]
    %v99 = vld [vmem:[%s0 + $0x48] sm:$0xff]
    %v100 = vld [vmem:[%s0 + $0x50] sm:$0xff]
    %v101 = vld [vmem:[%s0 + $0x58] sm:$0xff]
    %v102 = vld [vmem:[%s0 + $0x60] sm:$0xff]
    %v103 = vld [vmem:[%s0 + $0x68] sm:$0xff]
    %v104 = vld [vmem:[%s0 + $0x70] sm:$0xff]
    %v105 = vld [vmem:[%s0 + $0x78] sm:$0xff]
    %v106 = vld [vmem:[%s0 + $0x80] sm:$0xff]
    %v107 = vld [vmem:[%s0 + $0x88] sm:$0xff]
    %v108 = vld [vmem:[%s0 + $0x90] sm:$0xff]
    %v109 = vld [vmem:[%s0 + $0x98] sm:$0xff]
    %v110 = vld [vmem:[%s0 + $0xa0] sm:$0xff]
    %v111 = vld [vmem:[%s0 + $0xa8] sm:$0xff]
    %v112 = vld [vmem:[%s0 + $0xb0] sm:$0xff]
    %v113 = vld [vmem:[%s0 + $0xb8] sm:$0xff]
    %v114 = vld [vmem:[%s0 + $0xc0] sm:$0xff]
    %v115 = vld [vmem:[%s0 + $0xc8] sm:$0xff]
    %v116 = vld [vmem:[%s0 + $0xd0] sm:$0xff]
    %v117 = vld [vmem:[%s0 + $0xd8] sm:$0xff]
    %v118 = vld [vmem:[%s0 + $0xe0] sm:$0xff]
    %v119 = vld [vmem:[%s0 + $0xe8] sm:$0xff]
    %v120 = vld [vmem:[%s0 + $0xf0] sm:$0xff]
    %v121 = vld [vmem:[%s0 + $0xf8] sm:$0xff]
    %v122 = vld [vmem:[%s0 + $0x100] sm:$0xff]
    %v123 = vld [vmem:[%s0 + $0x108] sm:$0xff]
    %v124 = vld [vmem:[%s0 + $0x110] sm:$0xff]
    %v125 = vld [vmem:[%s0 + $0x118] sm:$0xff]
    %v126 = vld [vmem:[%s0 + $0x120] sm:$0xff]
    %v127 = vld [vmem:[%s0 + $0x128] sm:$0xff]
    %v128 = vld [vmem:[%s0 + $0x130] sm:$0xff]
    %v129 = vld [vmem:[%s0 + $0x138] sm:$0xff]
    %v130 = vld [vmem:[%s0 + $0x140] sm:$0xff]
    %v131 = vld [vmem:[%s0 + $0x148] sm:$0xff]
    %v132 = vld [vmem:[%s0 + $0x150] sm:$0xff]
    %v133 = vld [vmem:[%s0 + $0x158] sm:$0xff]
    %v134 = vld [vmem:[%s0 + $0x160] sm:$0xff]
    %v135 = vld [vmem:[%s0 + $0x168] sm:$0xff]
    %v136 = vld [vmem:[%s0 + $0x170] sm:$0xff]
    %v137 = vld [vmem:[%s0 + $0x178] sm:$0xff]
    %v138 = vld [vmem:[%s0 + $0x180] sm:$0xff]
    %v139 = vld [vmem:[%s0 + $0x188] sm:$0xff]
    %v140 = vld [vmem:[%s0 + $0x190] sm:$0xff]
    %v141 = vld [vmem:[%s0 + $0x198] sm:$0xff]
    %v142 = vld [vmem:[%s0 + $0x1a0] sm:$0xff]
    %v143 = vld [vmem:[%s0 + $0x1a8] sm:$0xff]
    %v144 = vld [vmem:[%s0 + $0x1b0] sm:$0xff]
    %v145 = vld [vmem:[%s0 + $0x1b8] sm:$0xff]
    %v146 = vld [vmem:[%s0 + $0x1c0] sm:$0xff]
    %v147 = vld [vmem:[%s0 + $0x1c8] sm:$0xff]
    %v148 = vld [vmem:[%s0 + $0x1d0] sm:$0xff]
    %v149 = vld [vmem:[%s0 + $0x1d8] sm:$0xff]
    %v150 = vld [vmem:[%s0 + $0x1e0] sm:$0xff]
    %v151 = vld [vmem:[%s0 + $0x1e8] sm:$0xff]
    %v152 = vld [vmem:[%s0 + $0x1f0] sm:$0xff]
    %v153 = vld [vmem:[%s0 + $0x1f8] sm:$0xff]
    %154 = vmatprep.subr.mxu0 0.0
    %155 = vmatpush1.msra.mxu0 %v90
    %156 = vmatprep.subr.mxu0 0.0
    %157 = vmatpush1.msra.mxu0 %v91
    %158 = vmatprep.subr.mxu0 0.0
    %159 = vmatpush1.msra.mxu0 %v92
    %160 = vmatprep.subr.mxu0 0.0
    %161 = vmatpush1.msra.mxu0 %v93
    %162 = vmatprep.subr.mxu0 0.0
    %163 = vmatpush1.msra.mxu0 %v94
    %164 = vmatprep.subr.mxu0 0.0
    %165 = vmatpush1.msra.mxu0 %v95
    %166 = vmatprep.subr.mxu0 0.0
    %167 = vmatpush1.msra.mxu0 %v96
    %168 = vmatprep.subr.mxu0 0.0
    %169 = vmatpush1.msra.mxu0 %v97
    %170 = vmatprep.subr.mxu0 0.0
    %171 = vmatpush1.msra.mxu0 %v98
    %172 = vmatprep.subr.mxu0 0.0
    %173 = vmatpush1.msra.mxu0 %v99
    %174 = vmatprep.subr.mxu0 0.0
    %175 = vmatpush1.msra.mxu0 %v100
    %176 = vmatprep.subr.mxu0 0.0
    %177 = vmatpush1.msra.mxu0 %v101
    %178 = vmatprep.subr.mxu0 0.0
    %179 = vmatpush1.msra.mxu0 %v102
    %180 = vmatprep.subr.mxu0 0.0
    %181 = vmatpush1.msra.mxu0 %v103
    %182 = vmatprep.subr.mxu0 0.0
    %183 = vmatpush1.msra.mxu0 %v104
    %184 = vmatprep.subr.mxu0 0.0
    %185 = vmatpush1.msra.mxu0 %v105
    %186 = vmatprep.subr.mxu0 0.0
    %187 = vmatpush1.msra.mxu0 %v106
    %188 = vmatprep.subr.mxu0 0.0
    %189 = vmatpush1.msra.mxu0 %v107
    %190 = vmatprep.subr.mxu0 0.0
    %191 = vmatpush1.msra.mxu0 %v108
    %192 = vmatprep.subr.mxu0 0.0
    %193 = vmatpush1.msra.mxu0 %v109
    %194 = vmatprep.subr.mxu0 0.0
    %195 = vmatpush1.msra.mxu0 %v110
    %196 = vmatprep.subr.mxu0 0.0
    %197 = vmatpush1.msra.mxu0 %v111
    %198 = vmatprep.subr.mxu0 0.0
    %199 = vmatpush1.msra.mxu0 %v112
    %200 = vmatprep.subr.mxu0 0.0
    %201 = vmatpush1.msra.mxu0 %v113
    %202 = vmatprep.subr.mxu0 0.0
    %203 = vmatpush1.msra.mxu0 %v114
    %204 = vmatprep.subr.mxu0 0.0
    %205 = vmatpush1.msra.mxu0 %v115
    %206 = vmatprep.subr.mxu0 0.0
    %207 = vmatpush1.msra.mxu0 %v116
    %208 = vmatprep.subr.mxu0 0.0
    %209 = vmatpush1.msra.mxu0 %v117
    %210 = vmatprep.subr.mxu0 0.0
    %211 = vmatpush1.msra.mxu0 %v118
    %212 = vmatprep.subr.mxu0 0.0
    %213 = vmatpush1.msra.mxu0 %v119
    %214 = vmatprep.subr.mxu0 0.0
    %215 = vmatpush1.msra.mxu0 %v120
    %216 = vmatprep.subr.mxu0 0.0
    %217 = vmatpush1.msra.mxu0 %v121
    %218 = vmatprep.mubr.f32.mxu0 %v59
    %219 = vmatmul.mubr.f32.gmra.mrb[0].mxu0 %v58
    %v220 = vpop.f32.mrb[0].mxu0
    %v221 = vadd.f32 0.0, %v220
    %v222 = vpop.f32.mrb[0].mxu0
    %223 = vmatprep.mubr.f32.mxu0 %v63
    %224 = vmatmul.mubr.f32.gmra.mrb[0].mxu0 %v62
    %v225 = vpop.f32.mrb[0].mxu0
    %v226 = vadd.f32 0.0, %v225
    %v227 = vpop.f32.mrb[0].mxu0
    %228 = vmatprep.mubr.f32.mxu0 %v67
    %229 = vmatmul.mubr.f32.gmra.mrb[0].mxu0 %v66
    %v230 = vpop.f32.mrb[0].mxu0
    %v231 = vadd.f32 0.0, %v230
    %v232 = vpop.f32.mrb[0].mxu0
    %233 = vmatprep.mubr.f32.mxu0 %v71
    %234 = vmatmul.mubr.f32.gmra.mrb[0].mxu0 %v70
    %v235 = vpop.f32.mrb[0].mxu0
    %v236 = vadd.f32 0.0, %v235
    %v237 = vpop.f32.mrb[0].mxu0
    %238 = vmatprep.mubr.f32.mxu0 %v75
    %239 = vmatmul.mubr.f32.gmra.mrb[0].mxu0 %v74
    %v240 = vpop.f32.mrb[0].mxu0
    %v241 = vadd.f32 0.0, %v240
    %v242 = vpop.f32.mrb[0].mxu0
    %243 = vmatprep.mubr.f32.mxu0 %v79
    %244 = vmatmul.mubr.f32.gmra.mrb[0].mxu0 %v78
    %v245 = vpop.f32.mrb[0].mxu0
    %v246 = vadd.f32 0.0, %v245
    %v247 = vpop.f32.mrb[0].mxu0
    %248 = vmatprep.mubr.f32.mxu0 %v83
    %249 = vmatmul.mubr.f32.gmra.mrb[0].mxu0 %v82
    %v250 = vpop.f32.mrb[0].mxu0
    %v251 = vadd.f32 0.0, %v250
    %v252 = vpop.f32.mrb[0].mxu0
    %253 = vmatprep.mubr.f32.mxu0 %v87
    %254 = vmatmul.mubr.f32.gmra.mrb[0].mxu0 %v86
    %v255 = vpop.f32.mrb[0].mxu0
    %v256 = vadd.f32 0.0, %v255
    %v257 = vpop.f32.mrb[0].mxu0
    %258 = vdwg.mxu0
    %259 = vmatprep.subr.mxu0 0.0
    %260 = vmatpush1.msra.mxu0 %v122
    %261 = vmatprep.subr.mxu0 0.0
    %262 = vmatpush1.msra.mxu0 %v123
    %263 = vmatprep.subr.mxu0 0.0
    %264 = vmatpush1.msra.mxu0 %v124
    %265 = vmatprep.subr.mxu0 0.0
    %266 = vmatpush1.msra.mxu0 %v125
    %267 = vmatprep.subr.mxu0 0.0
    %268 = vmatpush1.msra.mxu0 %v126
    %269 = vmatprep.subr.mxu0 0.0
    %270 = vmatpush1.msra.mxu0 %v127
    %271 = vmatprep.subr.mxu0 0.0
    %272 = vmatpush1.msra.mxu0 %v128
    %273 = vmatprep.subr.mxu0 0.0
    %274 = vmatpush1.msra.mxu0 %v129
    %275 = vmatprep.subr.mxu0 0.0
    %276 = vmatpush1.msra.mxu0 %v130
    %277 = vmatprep.subr.mxu0 0.0
    %278 = vmatpush1.msra.mxu0 %v131
    %279 = vmatprep.subr.mxu0 0.0
    %280 = vmatpush1.msra.mxu0 %v132
    %281 = vmatprep.subr.mxu0 0.0
    %282 = vmatpush1.msra.mxu0 %v133
    %283 = vmatprep.subr.mxu0 0.0
    %284 = vmatpush1.msra.mxu0 %v134
    %285 = vmatprep.subr.mxu0 0.0
    %286 = vmatpush1.msra.mxu0 %v135
    %287 = vmatprep.subr.mxu0 0.0
    %288 = vmatpush1.msra.mxu0 %v136
    %289 = vmatprep.subr.mxu0 0.0
    %290 = vmatpush1.msra.mxu0 %v137
    %291 = vmatprep.subr.mxu0 0.0
    %292 = vmatpush1.msra.mxu0 %v138
    %293 = vmatprep.subr.mxu0 0.0
    %294 = vmatpush1.msra.mxu0 %v139
    %295 = vmatprep.subr.mxu0 0.0
    %296 = vmatpush1.msra.mxu0 %v140
    %297 = vmatprep.subr.mxu0 0.0
    %298 = vmatpush1.msra.mxu0 %v141
    %299 = vmatprep.subr.mxu0 0.0
    %300 = vmatpush1.msra.mxu0 %v142
    %301 = vmatprep.subr.mxu0 0.0
    %302 = vmatpush1.msra.mxu0 %v143
    %303 = vmatprep.subr.mxu0 0.0
    %304 = vmatpush1.msra.mxu0 %v144
    %305 = vmatprep.subr.mxu0 0.0
    %306 = vmatpush1.msra.mxu0 %v145
    %307 = vmatprep.subr.mxu0 0.0
    %308 = vmatpush1.msra.mxu0 %v146
    %309 = vmatprep.subr.mxu0 0.0
    %310 = vmatpush1.msra.mxu0 %v147
    %311 = vmatprep.subr.mxu0 0.0
    %312 = vmatpush1.msra.mxu0 %v148
    %313 = vmatprep.subr.mxu0 0.0
    %314 = vmatpush1.msra.mxu0 %v149
    %315 = vmatprep.subr.mxu0 0.0
    %316 = vmatpush1.msra.mxu0 %v150
    %317 = vmatprep.subr.mxu0 0.0
    %318 = vmatpush1.msra.mxu0 %v151
    %319 = vmatprep.subr.mxu0 0.0
    %320 = vmatpush1.msra.mxu0 %v152
    %321 = vmatprep.subr.mxu0 0.0
    %322 = vmatpush1.msra.mxu0 %v153
    %323 = vmatprep.mubr.f32.mxu0 %v61
    %324 = vmatmul.mubr.f32.gmra.mrb[0].mxu0 %v60
    %v325 = vpop.f32.mrb[0].mxu0
    %v326 = vadd.f32 %v221, %v325
    %v327 = vpop.f32.mrb[0].mxu0
    %328 = vmatprep.mubr.f32.mxu0 %v65
    %329 = vmatmul.mubr.f32.gmra.mrb[0].mxu0 %v64
    %v330 = vpop.f32.mrb[0].mxu0
    %v331 = vadd.f32 %v226, %v330
    %v332 = vpop.f32.mrb[0].mxu0
    %333 = vmatprep.mubr.f32.mxu0 %v69
    %334 = vmatmul.mubr.f32.gmra.mrb[0].mxu0 %v68
    %v335 = vpop.f32.mrb[0].mxu0
    %v336 = vadd.f32 %v231, %v335
    %v337 = vpop.f32.mrb[0].mxu0
    %338 = vmatprep.mubr.f32.mxu0 %v73
    %339 = vmatmul.mubr.f32.gmra.mrb[0].mxu0 %v72
    %v340 = vpop.f32.mrb[0].mxu0
    %v341 = vadd.f32 %v236, %v340
    %v342 = vpop.f32.mrb[0].mxu0
    %343 = vmatprep.mubr.f32.mxu0 %v77
    %344 = vmatmul.mubr.f32.gmra.mrb[0].mxu0 %v76
    %v345 = vpop.f32.mrb[0].mxu0
    %v346 = vadd.f32 %v241, %v345
    %v347 = vpop.f32.mrb[0].mxu0
    %348 = vmatprep.mubr.f32.mxu0 %v81
    %349 = vmatmul.mubr.f32.gmra.mrb[0].mxu0 %v80
    %v350 = vpop.f32.mrb[0].mxu0
    %v351 = vadd.f32 %v246, %v350
    %v352 = vpop.f32.mrb[0].mxu0
    %353 = vmatprep.mubr.f32.mxu0 %v85
    %354 = vmatmul.mubr.f32.gmra.mrb[0].mxu0 %v84
    %v355 = vpop.f32.mrb[0].mxu0
    %v356 = vadd.f32 %v251, %v355
    %v357 = vpop.f32.mrb[0].mxu0
    %358 = vmatprep.mubr.f32.mxu0 %v89
    %359 = vmatmul.mubr.f32.gmra.mrb[0].mxu0 %v88
    %v360 = vpop.f32.mrb[0].mxu0
    %v361 = vadd.f32 %v256, %v360
    %v362 = vpop.f32.mrb[0].mxu0
    %363 = vdwg.mxu0
    %vm364 = vcmask 261120
    %v365 = vsel %vm364, %v326, 0.0
    %366 = vadd.xlane.f32.xlu0 %v365
    %v367 = vpop.xlane.xlu0 %366
    %v368 = vsel %vm364, %v331, 0.0
    %369 = vadd.xlane.f32.xlu0 %v368
    %v370 = vpop.xlane.xlu0 %369
    %v371 = vsel %vm364, %v336, 0.0
    %372 = vadd.xlane.f32.xlu0 %v371
    %v373 = vpop.xlane.xlu0 %372
    %v374 = vsel %vm364, %v341, 0.0
    %375 = vadd.xlane.f32.xlu0 %v374
    %v376 = vpop.xlane.xlu0 %375
    %v377 = vsel %vm364, %v346, 0.0
    %378 = vadd.xlane.f32.xlu0 %v377
    %v379 = vpop.xlane.xlu0 %378
    %v380 = vsel %vm364, %v351, 0.0
    %381 = vadd.xlane.f32.xlu0 %v380
    %v382 = vpop.xlane.xlu0 %381
    %v383 = vsel %vm364, %v356, 0.0
    %384 = vadd.xlane.f32.xlu0 %v383
    %v385 = vpop.xlane.xlu0 %384
    %v386 = vsel %vm364, %v361, 0.0
    %387 = vadd.xlane.f32.xlu0 %v386
    %v388 = vpop.xlane.xlu0 %387
    %v389 = vrcp.pop 32.0
    %v390 = vmul.f32 %v367, %v389
    %v391 = vmul.f32 %v370, %v389
    %v392 = vmul.f32 %v373, %v389
    %v393 = vmul.f32 %v376, %v389
    %v394 = vmul.f32 %v379, %v389
    %v395 = vmul.f32 %v382, %v389
    %v396 = vmul.f32 %v385, %v389
    %v397 = vmul.f32 %v388, %v389
    %v398 = vmul.f32 %v326, %v326
    %v399 = vmul.f32 %v331, %v331
    %v400 = vmul.f32 %v336, %v336
    %v401 = vmul.f32 %v341, %v341
    %v402 = vmul.f32 %v346, %v346
    %v403 = vmul.f32 %v351, %v351
    %v404 = vmul.f32 %v356, %v356
    %v405 = vmul.f32 %v361, %v361
    %v406 = vsel %vm364, %v398, 0.0
    %407 = vadd.xlane.f32.xlu0 %v406
    %v408 = vpop.xlane.xlu0 %407
    %v409 = vsel %vm364, %v399, 0.0
    %410 = vadd.xlane.f32.xlu0 %v409
    %v411 = vpop.xlane.xlu0 %410
    %v412 = vsel %vm364, %v400, 0.0
    %413 = vadd.xlane.f32.xlu0 %v412
    %v414 = vpop.xlane.xlu0 %413
    %v415 = vsel %vm364, %v401, 0.0
    %416 = vadd.xlane.f32.xlu0 %v415
    %v417 = vpop.xlane.xlu0 %416
    %v418 = vsel %vm364, %v402, 0.0
    %419 = vadd.xlane.f32.xlu0 %v418
    %v420 = vpop.xlane.xlu0 %419
    %v421 = vsel %vm364, %v403, 0.0
    %422 = vadd.xlane.f32.xlu0 %v421
    %v423 = vpop.xlane.xlu0 %422
    %v424 = vsel %vm364, %v404, 0.0
    %425 = vadd.xlane.f32.xlu0 %v424
    %v426 = vpop.xlane.xlu0 %425
    %v427 = vsel %vm364, %v405, 0.0
    %428 = vadd.xlane.f32.xlu0 %v427
    %v429 = vpop.xlane.xlu0 %428
    %v430 = vmul.f32 %v408, %v389
    %v431 = vmul.f32 %v411, %v389
    %v432 = vmul.f32 %v414, %v389
    %v433 = vmul.f32 %v417, %v389
    %v434 = vmul.f32 %v420, %v389
    %v435 = vmul.f32 %v423, %v389
    %v436 = vmul.f32 %v426, %v389
    %v437 = vmul.f32 %v429, %v389
    %v438 = vmul.f32 %v390, %v390
    %v439 = vmul.f32 %v391, %v391
    %v440 = vmul.f32 %v392, %v392
    %v441 = vmul.f32 %v393, %v393
    %v442 = vmul.f32 %v394, %v394
    %v443 = vmul.f32 %v395, %v395
    %v444 = vmul.f32 %v396, %v396
    %v445 = vmul.f32 %v397, %v397
    %v446 = vsub.f32 %v430, %v438
    %v447 = vsub.f32 %v431, %v439
    %v448 = vsub.f32 %v432, %v440
    %v449 = vsub.f32 %v433, %v441
    %v450 = vsub.f32 %v434, %v442
    %v451 = vsub.f32 %v435, %v443
    %v452 = vsub.f32 %v436, %v444
    %v453 = vsub.f32 %v437, %v445
    %v454 = vmax.f32 %v446, 0.0
    %v455 = vmax.f32 %v447, 0.0
    %v456 = vmax.f32 %v448, 0.0
    %v457 = vmax.f32 %v449, 0.0
    %v458 = vmax.f32 %v450, 0.0
    %v459 = vmax.f32 %v451, 0.0
    %v460 = vmax.f32 %v452, 0.0
    %v461 = vmax.f32 %v453, 0.0
    %v462 = vsub.f32 %v326, %v390
    %v463 = vsub.f32 %v331, %v391
    %v464 = vsub.f32 %v336, %v392
    %v465 = vsub.f32 %v341, %v393
    %v466 = vsub.f32 %v346, %v394
    %v467 = vsub.f32 %v351, %v395
    %v468 = vsub.f32 %v356, %v396
    %v469 = vsub.f32 %v361, %v397
    %v470 = vadd.f32 %v454, 1e-05
    %v471 = vadd.f32 %v455, 1e-05
    %v472 = vadd.f32 %v456, 1e-05
    %v473 = vadd.f32 %v457, 1e-05
    %v474 = vadd.f32 %v458, 1e-05
    %v475 = vadd.f32 %v459, 1e-05
    %v476 = vadd.f32 %v460, 1e-05
    %v477 = vadd.f32 %v461, 1e-05
    %v478 = vrsqrt.pop %v470
    %v479 = vrsqrt.pop %v471
    %v480 = vrsqrt.pop %v472
    %v481 = vrsqrt.pop %v473
    %v482 = vrsqrt.pop %v474
    %v483 = vrsqrt.pop %v475
    %v484 = vrsqrt.pop %v476
    %v485 = vrsqrt.pop %v477
    %v486 = vmul.f32 %v462, %v478
    %v487 = vmul.f32 %v463, %v479
    %v488 = vmul.f32 %v464, %v480
    %v489 = vmul.f32 %v465, %v481
    %v490 = vmul.f32 %v466, %v482
    %v491 = vmul.f32 %v467, %v483
    %v492 = vmul.f32 %v468, %v484
    %v493 = vmul.f32 %v469, %v485
    %v494 = vld [vmem:[#allocation4] sm:$0xff]
    %v495 = vld [vmem:[#allocation4 + $0x8] sm:$0xff]
    %v496 = vld [vmem:[#allocation4 + $0x10] sm:$0xff]
    %v497 = vld [vmem:[#allocation4 + $0x18] sm:$0xff]
    %v498 = vld [vmem:[#allocation4 + $0x20] sm:$0xff]
    %v499 = vld [vmem:[#allocation4 + $0x28] sm:$0xff]
    %v500 = vld [vmem:[#allocation4 + $0x30] sm:$0xff]
    %v501 = vld [vmem:[#allocation4 + $0x38] sm:$0xff]
    %503 = vset.pattern.permute.xlu0 0
    %504 = vperm.xlu0 %503, %v494
    %v505 = vpop.permute.xlu0 %504
    %508 = vset.pattern.permute.xlu0 0
    %509 = vperm.xlu0 %508, %v495
    %v510 = vpop.permute.xlu0 %509
    %513 = vset.pattern.permute.xlu0 0
    %514 = vperm.xlu0 %513, %v496
    %v515 = vpop.permute.xlu0 %514
    %518 = vset.pattern.permute.xlu0 0
    %519 = vperm.xlu0 %518, %v497
    %v520 = vpop.permute.xlu0 %519
    %523 = vset.pattern.permute.xlu0 0
    %524 = vperm.xlu0 %523, %v498
    %v525 = vpop.permute.xlu0 %524
    %528 = vset.pattern.permute.xlu0 0
    %529 = vperm.xlu0 %528, %v499
    %v530 = vpop.permute.xlu0 %529
    %533 = vset.pattern.permute.xlu0 0
    %534 = vperm.xlu0 %533, %v500
    %v535 = vpop.permute.xlu0 %534
    %538 = vset.pattern.permute.xlu0 0
    %539 = vperm.xlu0 %538, %v501
    %v540 = vpop.permute.xlu0 %539
    %v542 = vmul.f32 %v486, %v505
    %v543 = vmul.f32 %v487, %v510
    %v544 = vmul.f32 %v488, %v515
    %v545 = vmul.f32 %v489, %v520
    %v546 = vmul.f32 %v490, %v525
    %v547 = vmul.f32 %v491, %v530
    %v548 = vmul.f32 %v492, %v535
    %v549 = vmul.f32 %v493, %v540
    %v550 = vld [vmem:[#allocation6] sm:$0xff]
    %v551 = vld [vmem:[#allocation6 + $0x8] sm:$0xff]
    %v552 = vld [vmem:[#allocation6 + $0x10] sm:$0xff]
    %v553 = vld [vmem:[#allocation6 + $0x18] sm:$0xff]
    %v554 = vld [vmem:[#allocation6 + $0x20] sm:$0xff]
    %v555 = vld [vmem:[#allocation6 + $0x28] sm:$0xff]
    %v556 = vld [vmem:[#allocation6 + $0x30] sm:$0xff]
    %v557 = vld [vmem:[#allocation6 + $0x38] sm:$0xff]
    %559 = vset.pattern.permute.xlu0 0
    %560 = vperm.xlu0 %559, %v550
    %v561 = vpop.permute.xlu0 %560
    %564 = vset.pattern.permute.xlu0 0
    %565 = vperm.xlu0 %564, %v551
    %v566 = vpop.permute.xlu0 %565
    %569 = vset.pattern.permute.xlu0 0
    %570 = vperm.xlu0 %569, %v552
    %v571 = vpop.permute.xlu0 %570
    %574 = vset.pattern.permute.xlu0 0
    %575 = vperm.xlu0 %574, %v553
    %v576 = vpop.permute.xlu0 %575
    %579 = vset.pattern.permute.xlu0 0
    %580 = vperm.xlu0 %579, %v554
    %v581 = vpop.permute.xlu0 %580
    %584 = vset.pattern.permute.xlu0 0
    %585 = vperm.xlu0 %584, %v555
    %v586 = vpop.permute.xlu0 %585
    %589 = vset.pattern.permute.xlu0 0
    %590 = vperm.xlu0 %589, %v556
    %v591 = vpop.permute.xlu0 %590
    %594 = vset.pattern.permute.xlu0 0
    %595 = vperm.xlu0 %594, %v557
    %v596 = vpop.permute.xlu0 %595
    %v598 = vadd.f32 %v542, %v561
    %v599 = vadd.f32 %v543, %v566
    %v600 = vadd.f32 %v544, %v571
    %v601 = vadd.f32 %v545, %v576
    %v602 = vadd.f32 %v546, %v581
    %v603 = vadd.f32 %v547, %v586
    %v604 = vadd.f32 %v548, %v591
    %v605 = vadd.f32 %v549, %v596
    %v606 = vmax.f32 %v598, 0.0
    %v607 = vmax.f32 %v599, 0.0
    %v608 = vmax.f32 %v600, 0.0
    %v609 = vmax.f32 %v601, 0.0
    %v610 = vmax.f32 %v602, 0.0
    %v611 = vmax.f32 %v603, 0.0
    %v612 = vmax.f32 %v604, 0.0
    %v613 = vmax.f32 %v605, 0.0
    %614 = vst.msk [vmem:[%s4] sm:$0xff] %vm364, %v606
    %615 = vst.msk [vmem:[%s4 + $0x8] sm:$0xff] %vm364, %v607
    %616 = vst.msk [vmem:[%s4 + $0x10] sm:$0xff] %vm364, %v608
    %617 = vst.msk [vmem:[%s4 + $0x18] sm:$0xff] %vm364, %v609
    %618 = vst.msk [vmem:[%s4 + $0x20] sm:$0xff] %vm364, %v610
    %619 = vst.msk [vmem:[%s4 + $0x28] sm:$0xff] %vm364, %v611
    %620 = vst.msk [vmem:[%s4 + $0x30] sm:$0xff] %vm364, %v612
    %621 = vst.msk [vmem:[%s4 + $0x38] sm:$0xff] %vm364, %v613
    // Predicated region
    $region30: #{_lambda_.5} parent=1 // pred_check
      _
    $region31: #{_lambda_.5} parent=1 // pred_check_branch
      %623 = sbr.rel (0) target = $region33
    $region32: #{_lambda_.5} parent=1 // pred_region
      _
    $region33: #{_lambda_.5} parent=1 // pred_fallthru
      _
    // Predicated region
    $region34: #{_lambda_.5} parent=1 // pred_check
      _
    $region35: #{_lambda_.5} parent=1 // pred_check_branch
      %625 = sbr.rel (0) target = $region37
    $region36: #{_lambda_.5} parent=1 // pred_region
      _
    $region37: #{_lambda_.5} parent=1 // pred_fallthru
      _
    %626 = vsyncpa [#allocation3], 1
    %627 = vsyncpa [#allocation5], 1

// kernel: _lambda_.6
$region0: #{_lambda_.6}
  #allocation0 [shape = 'u32[]', space=smem, size = 0x4, offset = 0x4, fixed_abs, tag = 'smem constant byte address 0x4 - core index']
  #allocation1 [shape = 'u32[144,128]{1,0:T(1,128)}', space=vmem, size = 0x12000, scoped, tag = 'internal scratch']
  %s0 = inlined_call_operand.vmem [shape: f32[1024,128], index: 0, kind: input, shape index: {}]
  %s1 = inlined_call_operand.vmem [shape: f32[32,1024], index: 1, kind: input, shape index: {}]
  %s2 = inlined_call_operand.vmem [shape: f32[32,1], index: 2, kind: input, shape index: {}]
  %s3 = inlined_call_operand.vmem [shape: f32[32,1], index: 3, kind: input, shape index: {}]
  %s4 = inlined_call_operand.vmem [shape: f32[32,128], index: 4, kind: output, shape index: {}]
  %s5 = sld [smem:[#allocation0]]
  $region26: #{_lambda_.6} parent=0
    _
  %s7 = ssub.s32 1, %s5
  %s8 = scalar_select 0, %s7, %s5
  // Predicated region
  $region2: #{_lambda_.6} parent=0 // pred_check
    _
  $region3: #{_lambda_.6} parent=0 // pred_check_branch
    %10 = sbr.rel (0) target = $region5
  $region4: #{_lambda_.6} parent=0 // pred_region
    _
  $region5: #{_lambda_.6} parent=0 // pred_fallthru
    _
  // Predicated region
  $region6: #{_lambda_.6} parent=0 // pred_check
    _
  $region7: #{_lambda_.6} parent=0 // pred_check_branch
    %12 = sbr.rel (0) target = $region9
  $region8: #{_lambda_.6} parent=0 // pred_region
    _
  $region9: #{_lambda_.6} parent=0 // pred_fallthru
    _
  // Predicated region
  $region10: #{_lambda_.6} parent=0 // pred_check
    _
  $region11: #{_lambda_.6} parent=0 // pred_check_branch
    %14 = sbr.rel (0) target = $region13
  $region12: #{_lambda_.6} parent=0 // pred_region
    _
  $region13: #{_lambda_.6} parent=0 // pred_fallthru
    _
  // Predicated region
  $region14: #{_lambda_.6} parent=0 // pred_check
    _
  $region15: #{_lambda_.6} parent=0 // pred_check_branch
    %16 = sbr.rel (0) target = $region17
  $region16: #{_lambda_.6} parent=0 // pred_region
    _
  $region17: #{_lambda_.6} parent=0 // pred_fallthru
    _
  %v17 = vld [vmem:[%s1] sm:$0xff]
  %v18 = vld [vmem:[%s1 + $0x8] sm:$0xff]
  %v19 = vld [vmem:[%s1 + $0x10] sm:$0xff]
  %v20 = vld [vmem:[%s1 + $0x18] sm:$0xff]
  %v21 = vld [vmem:[%s1 + $0x20] sm:$0xff]
  %v22 = vld [vmem:[%s1 + $0x28] sm:$0xff]
  %v23 = vld [vmem:[%s1 + $0x30] sm:$0xff]
  %v24 = vld [vmem:[%s1 + $0x38] sm:$0xff]
  %v25 = vld [vmem:[%s1 + $0x40] sm:$0xff]
  %v26 = vld [vmem:[%s1 + $0x48] sm:$0xff]
  %v27 = vld [vmem:[%s1 + $0x50] sm:$0xff]
  %v28 = vld [vmem:[%s1 + $0x58] sm:$0xff]
  %v29 = vld [vmem:[%s1 + $0x60] sm:$0xff]
  %v30 = vld [vmem:[%s1 + $0x68] sm:$0xff]
  %v31 = vld [vmem:[%s1 + $0x70] sm:$0xff]
  %v32 = vld [vmem:[%s1 + $0x78] sm:$0xff]
  %v33 = vld [vmem:[%s1 + $0x80] sm:$0xff]
  %v34 = vld [vmem:[%s1 + $0x88] sm:$0xff]
  %v35 = vld [vmem:[%s1 + $0x90] sm:$0xff]
  %v36 = vld [vmem:[%s1 + $0x98] sm:$0xff]
  %v37 = vld [vmem:[%s1 + $0xa0] sm:$0xff]
  %v38 = vld [vmem:[%s1 + $0xa8] sm:$0xff]
  %v39 = vld [vmem:[%s1 + $0xb0] sm:$0xff]
  %v40 = vld [vmem:[%s1 + $0xb8] sm:$0xff]
  %v41 = vld [vmem:[%s1 + $0xc0] sm:$0xff]
  %v42 = vld [vmem:[%s1 + $0xc8] sm:$0xff]
  %v43 = vld [vmem:[%s1 + $0xd0] sm:$0xff]
  %v44 = vld [vmem:[%s1 + $0xd8] sm:$0xff]
  %v45 = vld [vmem:[%s1 + $0xe0] sm:$0xff]
  %v46 = vld [vmem:[%s1 + $0xe8] sm:$0xff]
  %v47 = vld [vmem:[%s1 + $0xf0] sm:$0xff]
  %v48 = vld [vmem:[%s1 + $0xf8] sm:$0xff]
  %v49 = vld [vmem:[%s0] sm:$0xff]
  %v50 = vld [vmem:[%s0 + $0x8] sm:$0xff]
  %v51 = vld [vmem:[%s0 + $0x10] sm:$0xff]
  %v52 = vld [vmem:[%s0 + $0x18] sm:$0xff]
  %v53 = vld [vmem:[%s0 + $0x20] sm:$0xff]
  %v54 = vld [vmem:[%s0 + $0x28] sm:$0xff]
  %v55 = vld [vmem:[%s0 + $0x30] sm:$0xff]
  %v56 = vld [vmem:[%s0 + $0x38] sm:$0xff]
  %v57 = vld [vmem:[%s0 + $0x40] sm:$0xff]
  %v58 = vld [vmem:[%s0 + $0x48] sm:$0xff]
  %v59 = vld [vmem:[%s0 + $0x50] sm:$0xff]
  %v60 = vld [vmem:[%s0 + $0x58] sm:$0xff]
  %v61 = vld [vmem:[%s0 + $0x60] sm:$0xff]
  %v62 = vld [vmem:[%s0 + $0x68] sm:$0xff]
  %v63 = vld [vmem:[%s0 + $0x70] sm:$0xff]
  %v64 = vld [vmem:[%s0 + $0x78] sm:$0xff]
  %v65 = vld [vmem:[%s0 + $0x80] sm:$0xff]
  %v66 = vld [vmem:[%s0 + $0x88] sm:$0xff]
  %v67 = vld [vmem:[%s0 + $0x90] sm:$0xff]
  %v68 = vld [vmem:[%s0 + $0x98] sm:$0xff]
  %v69 = vld [vmem:[%s0 + $0xa0] sm:$0xff]
  %v70 = vld [vmem:[%s0 + $0xa8] sm:$0xff]
  %v71 = vld [vmem:[%s0 + $0xb0] sm:$0xff]
  %v72 = vld [vmem:[%s0 + $0xb8] sm:$0xff]
  %v73 = vld [vmem:[%s0 + $0xc0] sm:$0xff]
  %v74 = vld [vmem:[%s0 + $0xc8] sm:$0xff]
  %v75 = vld [vmem:[%s0 + $0xd0] sm:$0xff]
  %v76 = vld [vmem:[%s0 + $0xd8] sm:$0xff]
  %v77 = vld [vmem:[%s0 + $0xe0] sm:$0xff]
  %v78 = vld [vmem:[%s0 + $0xe8] sm:$0xff]
  %v79 = vld [vmem:[%s0 + $0xf0] sm:$0xff]
  %v80 = vld [vmem:[%s0 + $0xf8] sm:$0xff]
  %v81 = vld [vmem:[%s0 + $0x100] sm:$0xff]
  %v82 = vld [vmem:[%s0 + $0x108] sm:$0xff]
  %v83 = vld [vmem:[%s0 + $0x110] sm:$0xff]
  %v84 = vld [vmem:[%s0 + $0x118] sm:$0xff]
  %v85 = vld [vmem:[%s0 + $0x120] sm:$0xff]
  %v86 = vld [vmem:[%s0 + $0x128] sm:$0xff]
  %v87 = vld [vmem:[%s0 + $0x130] sm:$0xff]
  %v88 = vld [vmem:[%s0 + $0x138] sm:$0xff]
  %v89 = vld [vmem:[%s0 + $0x140] sm:$0xff]
  %v90 = vld [vmem:[%s0 + $0x148] sm:$0xff]
  %v91 = vld [vmem:[%s0 + $0x150] sm:$0xff]
  %v92 = vld [vmem:[%s0 + $0x158] sm:$0xff]
  %v93 = vld [vmem:[%s0 + $0x160] sm:$0xff]
  %v94 = vld [vmem:[%s0 + $0x168] sm:$0xff]
  %v95 = vld [vmem:[%s0 + $0x170] sm:$0xff]
  %v96 = vld [vmem:[%s0 + $0x178] sm:$0xff]
  %v97 = vld [vmem:[%s0 + $0x180] sm:$0xff]
  %v98 = vld [vmem:[%s0 + $0x188] sm:$0xff]
  %v99 = vld [vmem:[%s0 + $0x190] sm:$0xff]
  %v100 = vld [vmem:[%s0 + $0x198] sm:$0xff]
  %v101 = vld [vmem:[%s0 + $0x1a0] sm:$0xff]
  %v102 = vld [vmem:[%s0 + $0x1a8] sm:$0xff]
  %v103 = vld [vmem:[%s0 + $0x1b0] sm:$0xff]
  %v104 = vld [vmem:[%s0 + $0x1b8] sm:$0xff]
  %v105 = vld [vmem:[%s0 + $0x1c0] sm:$0xff]
  %v106 = vld [vmem:[%s0 + $0x1c8] sm:$0xff]
  %v107 = vld [vmem:[%s0 + $0x1d0] sm:$0xff]
  %v108 = vld [vmem:[%s0 + $0x1d8] sm:$0xff]
  %v109 = vld [vmem:[%s0 + $0x1e0] sm:$0xff]
  %v110 = vld [vmem:[%s0 + $0x1e8] sm:$0xff]
  %v111 = vld [vmem:[%s0 + $0x1f0] sm:$0xff]
  %v112 = vld [vmem:[%s0 + $0x1f8] sm:$0xff]
  %v113 = vld [vmem:[%s0 + $0x200] sm:$0xff]
  %v114 = vld [vmem:[%s0 + $0x208] sm:$0xff]
  %v115 = vld [vmem:[%s0 + $0x210] sm:$0xff]
  %v116 = vld [vmem:[%s0 + $0x218] sm:$0xff]
  %v117 = vld [vmem:[%s0 + $0x220] sm:$0xff]
  %v118 = vld [vmem:[%s0 + $0x228] sm:$0xff]
  %v119 = vld [vmem:[%s0 + $0x230] sm:$0xff]
  %v120 = vld [vmem:[%s0 + $0x238] sm:$0xff]
  %v121 = vld [vmem:[%s0 + $0x240] sm:$0xff]
  %v122 = vld [vmem:[%s0 + $0x248] sm:$0xff]
  %v123 = vld [vmem:[%s0 + $0x250] sm:$0xff]
  %v124 = vld [vmem:[%s0 + $0x258] sm:$0xff]
  %v125 = vld [vmem:[%s0 + $0x260] sm:$0xff]
  %v126 = vld [vmem:[%s0 + $0x268] sm:$0xff]
  %v127 = vld [vmem:[%s0 + $0x270] sm:$0xff]
  %v128 = vld [vmem:[%s0 + $0x278] sm:$0xff]
  %v129 = vld [vmem:[%s0 + $0x280] sm:$0xff]
  %v130 = vld [vmem:[%s0 + $0x288] sm:$0xff]
  %v131 = vld [vmem:[%s0 + $0x290] sm:$0xff]
  %v132 = vld [vmem:[%s0 + $0x298] sm:$0xff]
  %v133 = vld [vmem:[%s0 + $0x2a0] sm:$0xff]
  %v134 = vld [vmem:[%s0 + $0x2a8] sm:$0xff]
  %v135 = vld [vmem:[%s0 + $0x2b0] sm:$0xff]
  %v136 = vld [vmem:[%s0 + $0x2b8] sm:$0xff]
  %v137 = vld [vmem:[%s0 + $0x2c0] sm:$0xff]
  %v138 = vld [vmem:[%s0 + $0x2c8] sm:$0xff]
  %v139 = vld [vmem:[%s0 + $0x2d0] sm:$0xff]
  %v140 = vld [vmem:[%s0 + $0x2d8] sm:$0xff]
  %v141 = vld [vmem:[%s0 + $0x2e0] sm:$0xff]
  %v142 = vld [vmem:[%s0 + $0x2e8] sm:$0xff]
  %v143 = vld [vmem:[%s0 + $0x2f0] sm:$0xff]
  %v144 = vld [vmem:[%s0 + $0x2f8] sm:$0xff]
  %v145 = vld [vmem:[%s0 + $0x300] sm:$0xff]
  %v146 = vld [vmem:[%s0 + $0x308] sm:$0xff]
  %v147 = vld [vmem:[%s0 + $0x310] sm:$0xff]
  %v148 = vld [vmem:[%s0 + $0x318] sm:$0xff]
  %v149 = vld [vmem:[%s0 + $0x320] sm:$0xff]
  %v150 = vld [vmem:[%s0 + $0x328] sm:$0xff]
  %v151 = vld [vmem:[%s0 + $0x330] sm:$0xff]
  %v152 = vld [vmem:[%s0 + $0x338] sm:$0xff]
  %v153 = vld [vmem:[%s0 + $0x340] sm:$0xff]
  %v154 = vld [vmem:[%s0 + $0x348] sm:$0xff]
  %v155 = vld [vmem:[%s0 + $0x350] sm:$0xff]
  %v156 = vld [vmem:[%s0 + $0x358] sm:$0xff]
  %v157 = vld [vmem:[%s0 + $0x360] sm:$0xff]
  %v158 = vld [vmem:[%s0 + $0x368] sm:$0xff]
  %v159 = vld [vmem:[%s0 + $0x370] sm:$0xff]
  %v160 = vld [vmem:[%s0 + $0x378] sm:$0xff]
  %v161 = vld [vmem:[%s0 + $0x380] sm:$0xff]
  %v162 = vld [vmem:[%s0 + $0x388] sm:$0xff]
  %v163 = vld [vmem:[%s0 + $0x390] sm:$0xff]
  %v164 = vld [vmem:[%s0 + $0x398] sm:$0xff]
  %v165 = vld [vmem:[%s0 + $0x3a0] sm:$0xff]
  %v166 = vld [vmem:[%s0 + $0x3a8] sm:$0xff]
  %v167 = vld [vmem:[%s0 + $0x3b0] sm:$0xff]
  %v168 = vld [vmem:[%s0 + $0x3b8] sm:$0xff]
  %v169 = vld [vmem:[%s0 + $0x3c0] sm:$0xff]
  %v170 = vld [vmem:[%s0 + $0x3c8] sm:$0xff]
  %v171 = vld [vmem:[%s0 + $0x3d0] sm:$0xff]
  %v172 = vld [vmem:[%s0 + $0x3d8] sm:$0xff]
  %v173 = vld [vmem:[%s0 + $0x3e0] sm:$0xff]
  %v174 = vld [vmem:[%s0 + $0x3e8] sm:$0xff]
  %v175 = vld [vmem:[%s0 + $0x3f0] sm:$0xff]
  %v176 = vld [vmem:[%s0 + $0x3f8] sm:$0xff]
  %177 = vmatprep.subr.mxu0 0.0
  %178 = vmatpush1.msra.mxu0 %v49
  %179 = vmatprep.subr.mxu0 0.0
  %180 = vmatpush1.msra.mxu0 %v50
  %181 = vmatprep.subr.mxu0 0.0
  %182 = vmatpush1.msra.mxu0 %v51
  %183 = vmatprep.subr.mxu0 0.0
  %184 = vmatpush1.msra.mxu0 %v52
  %185 = vmatprep.subr.mxu0 0.0
  %186 = vmatpush1.msra.mxu0 %v53
  %187 = vmatprep.subr.mxu0 0.0
  %188 = vmatpush1.msra.mxu0 %v54
  %189 = vmatprep.subr.mxu0 0.0
  %190 = vmatpush1.msra.mxu0 %v55
  %191 = vmatprep.subr.mxu0 0.0
  %192 = vmatpush1.msra.mxu0 %v56
  %193 = vmatprep.subr.mxu0 0.0
  %194 = vmatpush1.msra.mxu0 %v57
  %195 = vmatprep.subr.mxu0 0.0
  %196 = vmatpush1.msra.mxu0 %v58
  %197 = vmatprep.subr.mxu0 0.0
  %198 = vmatpush1.msra.mxu0 %v59
  %199 = vmatprep.subr.mxu0 0.0
  %200 = vmatpush1.msra.mxu0 %v60
  %201 = vmatprep.subr.mxu0 0.0
  %202 = vmatpush1.msra.mxu0 %v61
  %203 = vmatprep.subr.mxu0 0.0
  %204 = vmatpush1.msra.mxu0 %v62
  %205 = vmatprep.subr.mxu0 0.0
  %206 = vmatpush1.msra.mxu0 %v63
  %207 = vmatprep.subr.mxu0 0.0
  %208 = vmatpush1.msra.mxu0 %v64
  %209 = vmatprep.subr.mxu0 0.0
  %210 = vmatpush1.msra.mxu0 %v65
  %211 = vmatprep.subr.mxu0 0.0
  %212 = vmatpush1.msra.mxu0 %v66
  %213 = vmatprep.subr.mxu0 0.0
  %214 = vmatpush1.msra.mxu0 %v67
  %215 = vmatprep.subr.mxu0 0.0
  %216 = vmatpush1.msra.mxu0 %v68
  %217 = vmatprep.subr.mxu0 0.0
  %218 = vmatpush1.msra.mxu0 %v69
  %219 = vmatprep.subr.mxu0 0.0
  %220 = vmatpush1.msra.mxu0 %v70
  %221 = vmatprep.subr.mxu0 0.0
  %222 = vmatpush1.msra.mxu0 %v71
  %223 = vmatprep.subr.mxu0 0.0
  %224 = vmatpush1.msra.mxu0 %v72
  %225 = vmatprep.subr.mxu0 0.0
  %226 = vmatpush1.msra.mxu0 %v73
  %227 = vmatprep.subr.mxu0 0.0
  %228 = vmatpush1.msra.mxu0 %v74
  %229 = vmatprep.subr.mxu0 0.0
  %230 = vmatpush1.msra.mxu0 %v75
  %231 = vmatprep.subr.mxu0 0.0
  %232 = vmatpush1.msra.mxu0 %v76
  %233 = vmatprep.subr.mxu0 0.0
  %234 = vmatpush1.msra.mxu0 %v77
  %235 = vmatprep.subr.mxu0 0.0
  %236 = vmatpush1.msra.mxu0 %v78
  %237 = vmatprep.subr.mxu0 0.0
  %238 = vmatpush1.msra.mxu0 %v79
  %239 = vmatprep.subr.mxu0 0.0
  %240 = vmatpush1.msra.mxu0 %v80
  %241 = vmatprep.mubr.f32.mxu0 %v18
  %242 = vmatmul.mubr.f32.gmra.mrb[0].mxu0 %v17
  %v243 = vpop.f32.mrb[0].mxu0
  %v244 = vadd.f32 0.0, %v243
  %v245 = vpop.f32.mrb[0].mxu0
  %246 = vmatprep.mubr.f32.mxu0 %v26
  %247 = vmatmul.mubr.f32.gmra.mrb[0].mxu0 %v25
  %v248 = vpop.f32.mrb[0].mxu0
  %v249 = vadd.f32 0.0, %v248
  %v250 = vpop.f32.mrb[0].mxu0
  %251 = vmatprep.mubr.f32.mxu0 %v34
  %252 = vmatmul.mubr.f32.gmra.mrb[0].mxu0 %v33
  %v253 = vpop.f32.mrb[0].mxu0
  %v254 = vadd.f32 0.0, %v253
  %v255 = vpop.f32.mrb[0].mxu0
  %256 = vmatprep.mubr.f32.mxu0 %v42
  %257 = vmatmul.mubr.f32.gmra.mrb[0].mxu0 %v41
  %v258 = vpop.f32.mrb[0].mxu0
  %v259 = vadd.f32 0.0, %v258
  %v260 = vpop.f32.mrb[0].mxu0
  %261 = vdwg.mxu0
  %262 = vmatprep.subr.mxu0 0.0
  %263 = vmatpush1.msra.mxu0 %v81
  %264 = vmatprep.subr.mxu0 0.0
  %265 = vmatpush1.msra.mxu0 %v82
  %266 = vmatprep.subr.mxu0 0.0
  %267 = vmatpush1.msra.mxu0 %v83
  %268 = vmatprep.subr.mxu0 0.0
  %269 = vmatpush1.msra.mxu0 %v84
  %270 = vmatprep.subr.mxu0 0.0
  %271 = vmatpush1.msra.mxu0 %v85
  %272 = vmatprep.subr.mxu0 0.0
  %273 = vmatpush1.msra.mxu0 %v86
  %274 = vmatprep.subr.mxu0 0.0
  %275 = vmatpush1.msra.mxu0 %v87
  %276 = vmatprep.subr.mxu0 0.0
  %277 = vmatpush1.msra.mxu0 %v88
  %278 = vmatprep.subr.mxu0 0.0
  %279 = vmatpush1.msra.mxu0 %v89
  %280 = vmatprep.subr.mxu0 0.0
  %281 = vmatpush1.msra.mxu0 %v90
  %282 = vmatprep.subr.mxu0 0.0
  %283 = vmatpush1.msra.mxu0 %v91
  %284 = vmatprep.subr.mxu0 0.0
  %285 = vmatpush1.msra.mxu0 %v92
  %286 = vmatprep.subr.mxu0 0.0
  %287 = vmatpush1.msra.mxu0 %v93
  %288 = vmatprep.subr.mxu0 0.0
  %289 = vmatpush1.msra.mxu0 %v94
  %290 = vmatprep.subr.mxu0 0.0
  %291 = vmatpush1.msra.mxu0 %v95
  %292 = vmatprep.subr.mxu0 0.0
  %293 = vmatpush1.msra.mxu0 %v96
  %294 = vmatprep.subr.mxu0 0.0
  %295 = vmatpush1.msra.mxu0 %v97
  %296 = vmatprep.subr.mxu0 0.0
  %297 = vmatpush1.msra.mxu0 %v98
  %298 = vmatprep.subr.mxu0 0.0
  %299 = vmatpush1.msra.mxu0 %v99
  %300 = vmatprep.subr.mxu0 0.0
  %301 = vmatpush1.msra.mxu0 %v100
  %302 = vmatprep.subr.mxu0 0.0
  %303 = vmatpush1.msra.mxu0 %v101
  %304 = vmatprep.subr.mxu0 0.0
  %305 = vmatpush1.msra.mxu0 %v102
  %306 = vmatprep.subr.mxu0 0.0
  %307 = vmatpush1.msra.mxu0 %v103
  %308 = vmatprep.subr.mxu0 0.0
  %309 = vmatpush1.msra.mxu0 %v104
  %310 = vmatprep.subr.mxu0 0.0
  %311 = vmatpush1.msra.mxu0 %v105
  %312 = vmatprep.subr.mxu0 0.0
  %313 = vmatpush1.msra.mxu0 %v106
  %314 = vmatprep.subr.mxu0 0.0
  %315 = vmatpush1.msra.mxu0 %v107
  %316 = vmatprep.subr.mxu0 0.0
  %317 = vmatpush1.msra.mxu0 %v108
  %318 = vmatprep.subr.mxu0 0.0
  %319 = vmatpush1.msra.mxu0 %v109
  %320 = vmatprep.subr.mxu0 0.0
  %321 = vmatpush1.msra.mxu0 %v110
  %322 = vmatprep.subr.mxu0 0.0
  %323 = vmatpush1.msra.mxu0 %v111
  %324 = vmatprep.subr.mxu0 0.0
  %325 = vmatpush1.msra.mxu0 %v112
  %326 = vmatprep.mubr.f32.mxu0 %v20
  %327 = vmatmul.mubr.f32.gmra.mrb[0].mxu0 %v19
  %v328 = vpop.f32.mrb[0].mxu0
  %v329 = vadd.f32 %v244, %v328
  %v330 = vpop.f32.mrb[0].mxu0
  %331 = vmatprep.mubr.f32.mxu0 %v28
  %332 = vmatmul.mubr.f32.gmra.mrb[0].mxu0 %v27
  %v333 = vpop.f32.mrb[0].mxu0
  %v334 = vadd.f32 %v249, %v333
  %v335 = vpop.f32.mrb[0].mxu0
  %336 = vmatprep.mubr.f32.mxu0 %v36
  %337 = vmatmul.mubr.f32.gmra.mrb[0].mxu0 %v35
  %v338 = vpop.f32.mrb[0].mxu0
  %v339 = vadd.f32 %v254, %v338
  %v340 = vpop.f32.mrb[0].mxu0
  %341 = vmatprep.mubr.f32.mxu0 %v44
  %342 = vmatmul.mubr.f32.gmra.mrb[0].mxu0 %v43
  %v343 = vpop.f32.mrb[0].mxu0
  %v344 = vadd.f32 %v259, %v343
  %v345 = vpop.f32.mrb[0].mxu0
  %346 = vdwg.mxu0
  %347 = vmatprep.subr.mxu0 0.0
  %348 = vmatpush1.msra.mxu0 %v113
  %349 = vmatprep.subr.mxu0 0.0
  %350 = vmatpush1.msra.mxu0 %v114
  %351 = vmatprep.subr.mxu0 0.0
  %352 = vmatpush1.msra.mxu0 %v115
  %353 = vmatprep.subr.mxu0 0.0
  %354 = vmatpush1.msra.mxu0 %v116
  %355 = vmatprep.subr.mxu0 0.0
  %356 = vmatpush1.msra.mxu0 %v117
  %357 = vmatprep.subr.mxu0 0.0
  %358 = vmatpush1.msra.mxu0 %v118
  %359 = vmatprep.subr.mxu0 0.0
  %360 = vmatpush1.msra.mxu0 %v119
  %361 = vmatprep.subr.mxu0 0.0
  %362 = vmatpush1.msra.mxu0 %v120
  %363 = vmatprep.subr.mxu0 0.0
  %364 = vmatpush1.msra.mxu0 %v121
  %365 = vmatprep.subr.mxu0 0.0
  %366 = vmatpush1.msra.mxu0 %v122
  %367 = vmatprep.subr.mxu0 0.0
  %368 = vmatpush1.msra.mxu0 %v123
  %369 = vmatprep.subr.mxu0 0.0
  %370 = vmatpush1.msra.mxu0 %v124
  %371 = vmatprep.subr.mxu0 0.0
  %372 = vmatpush1.msra.mxu0 %v125
  %373 = vmatprep.subr.mxu0 0.0
  %374 = vmatpush1.msra.mxu0 %v126
  %375 = vmatprep.subr.mxu0 0.0
  %376 = vmatpush1.msra.mxu0 %v127
  %377 = vmatprep.subr.mxu0 0.0
  %378 = vmatpush1.msra.mxu0 %v128
  %379 = vmatprep.subr.mxu0 0.0
  %380 = vmatpush1.msra.mxu0 %v129
  %381 = vmatprep.subr.mxu0 0.0
  %382 = vmatpush1.msra.mxu0 %v130
  %383 = vmatprep.subr.mxu0 0.0
  %384 = vmatpush1.msra.mxu0 %v131
  %385 = vmatprep.subr.mxu0 0.0
  %386 = vmatpush1.msra.mxu0 %v132
  %387 = vmatprep.subr.mxu0 0.0
  %388 = vmatpush1.msra.mxu0 %v133
  %389 = vmatprep.subr.mxu0 0.0
  %390 = vmatpush1.msra.mxu0 %v134
  %391 = vmatprep.subr.mxu0 0.0
  %392 = vmatpush1.msra.mxu0 %v135
  %393 = vmatprep.subr.mxu0 0.0
  %394 = vmatpush1.msra.mxu0 %v136
  %395 = vmatprep.subr.mxu0 0.0
  %396 = vmatpush1.msra.mxu0 %v137
  %397 = vmatprep.subr.mxu0 0.0
  %398 = vmatpush1.msra.mxu0 %v138
  %399 = vmatprep.subr.mxu0 0.0
  %400 = vmatpush1.msra.mxu0 %v139
  %401 = vmatprep.subr.mxu0 0.0
  %402 = vmatpush1.msra.mxu0 %v140
  %403 = vmatprep.subr.mxu0 0.0
  %404 = vmatpush1.msra.mxu0 %v141
  %405 = vmatprep.subr.mxu0 0.0
  %406 = vmatpush1.msra.mxu0 %v142
  %407 = vmatprep.subr.mxu0 0.0
  %408 = vmatpush1.msra.mxu0 %v143
  %409 = vmatprep.subr.mxu0 0.0
  %410 = vmatpush1.msra.mxu0 %v144
  %411 = vmatprep.mubr.f32.mxu0 %v22
  %412 = vmatmul.mubr.f32.gmra.mrb[0].mxu0 %v21
  %v413 = vpop.f32.mrb[0].mxu0
  %v414 = vadd.f32 %v329, %v413
  %v415 = vpop.f32.mrb[0].mxu0
  %416 = vmatprep.mubr.f32.mxu0 %v30
  %417 = vmatmul.mubr.f32.gmra.mrb[0].mxu0 %v29
  %v418 = vpop.f32.mrb[0].mxu0
  %v419 = vadd.f32 %v334, %v418
  %v420 = vpop.f32.mrb[0].mxu0
  %421 = vmatprep.mubr.f32.mxu0 %v38
  %422 = vmatmul.mubr.f32.gmra.mrb[0].mxu0 %v37
  %v423 = vpop.f32.mrb[0].mxu0
  %v424 = vadd.f32 %v339, %v423
  %v425 = vpop.f32.mrb[0].mxu0
  %426 = vmatprep.mubr.f32.mxu0 %v46
  %427 = vmatmul.mubr.f32.gmra.mrb[0].mxu0 %v45
  %v428 = vpop.f32.mrb[0].mxu0
  %v429 = vadd.f32 %v344, %v428
  %v430 = vpop.f32.mrb[0].mxu0
  %431 = vdwg.mxu0
  %432 = vmatprep.subr.mxu0 0.0
  %433 = vmatpush1.msra.mxu0 %v145
  %434 = vmatprep.subr.mxu0 0.0
  %435 = vmatpush1.msra.mxu0 %v146
  %436 = vmatprep.subr.mxu0 0.0
  %437 = vmatpush1.msra.mxu0 %v147
  %438 = vmatprep.subr.mxu0 0.0
  %439 = vmatpush1.msra.mxu0 %v148
  %440 = vmatprep.subr.mxu0 0.0
  %441 = vmatpush1.msra.mxu0 %v149
  %442 = vmatprep.subr.mxu0 0.0
  %443 = vmatpush1.msra.mxu0 %v150
  %444 = vmatprep.subr.mxu0 0.0
  %445 = vmatpush1.msra.mxu0 %v151
  %446 = vmatprep.subr.mxu0 0.0
  %447 = vmatpush1.msra.mxu0 %v152
  %448 = vmatprep.subr.mxu0 0.0
  %449 = vmatpush1.msra.mxu0 %v153
  %450 = vmatprep.subr.mxu0 0.0
  %451 = vmatpush1.msra.mxu0 %v154
  %452 = vmatprep.subr.mxu0 0.0
  %453 = vmatpush1.msra.mxu0 %v155
  %454 = vmatprep.subr.mxu0 0.0
  %455 = vmatpush1.msra.mxu0 %v156
  %456 = vmatprep.subr.mxu0 0.0
  %457 = vmatpush1.msra.mxu0 %v157
  %458 = vmatprep.subr.mxu0 0.0
  %459 = vmatpush1.msra.mxu0 %v158
  %460 = vmatprep.subr.mxu0 0.0
  %461 = vmatpush1.msra.mxu0 %v159
  %462 = vmatprep.subr.mxu0 0.0
  %463 = vmatpush1.msra.mxu0 %v160
  %464 = vmatprep.subr.mxu0 0.0
  %465 = vmatpush1.msra.mxu0 %v161
  %466 = vmatprep.subr.mxu0 0.0
  %467 = vmatpush1.msra.mxu0 %v162
  %468 = vmatprep.subr.mxu0 0.0
  %469 = vmatpush1.msra.mxu0 %v163
  %470 = vmatprep.subr.mxu0 0.0
  %471 = vmatpush1.msra.mxu0 %v164
  %472 = vmatprep.subr.mxu0 0.0
  %473 = vmatpush1.msra.mxu0 %v165
  %474 = vmatprep.subr.mxu0 0.0
  %475 = vmatpush1.msra.mxu0 %v166
  %476 = vmatprep.subr.mxu0 0.0
  %477 = vmatpush1.msra.mxu0 %v167
  %478 = vmatprep.subr.mxu0 0.0
  %479 = vmatpush1.msra.mxu0 %v168
  %480 = vmatprep.subr.mxu0 0.0
  %481 = vmatpush1.msra.mxu0 %v169
  %482 = vmatprep.subr.mxu0 0.0
  %483 = vmatpush1.msra.mxu0 %v170
  %484 = vmatprep.subr.mxu0 0.0
  %485 = vmatpush1.msra.mxu0 %v171
  %486 = vmatprep.subr.mxu0 0.0
  %487 = vmatpush1.msra.mxu0 %v172
  %488 = vmatprep.subr.mxu0 0.0
  %489 = vmatpush1.msra.mxu0 %v173
  %490 = vmatprep.subr.mxu0 0.0
  %491 = vmatpush1.msra.mxu0 %v174
  %492 = vmatprep.subr.mxu0 0.0
  %493 = vmatpush1.msra.mxu0 %v175
  %494 = vmatprep.subr.mxu0 0.0
  %495 = vmatpush1.msra.mxu0 %v176
  %496 = vmatprep.mubr.f32.mxu0 %v24
  %497 = vmatmul.mubr.f32.gmra.mrb[0].mxu0 %v23
  %v498 = vpop.f32.mrb[0].mxu0
  %v499 = vadd.f32 %v414, %v498
  %v500 = vpop.f32.mrb[0].mxu0
  %501 = vmatprep.mubr.f32.mxu0 %v32
  %502 = vmatmul.mubr.f32.gmra.mrb[0].mxu0 %v31
  %v503 = vpop.f32.mrb[0].mxu0
  %v504 = vadd.f32 %v419, %v503
  %v505 = vpop.f32.mrb[0].mxu0
  %506 = vmatprep.mubr.f32.mxu0 %v40
  %507 = vmatmul.mubr.f32.gmra.mrb[0].mxu0 %v39
  %v508 = vpop.f32.mrb[0].mxu0
  %v509 = vadd.f32 %v424, %v508
  %v510 = vpop.f32.mrb[0].mxu0
  %511 = vmatprep.mubr.f32.mxu0 %v48
  %512 = vmatmul.mubr.f32.gmra.mrb[0].mxu0 %v47
  %v513 = vpop.f32.mrb[0].mxu0
  %v514 = vadd.f32 %v429, %v513
  %v515 = vpop.f32.mrb[0].mxu0
  %516 = vdwg.mxu0
  %517 = vadd.xlane.f32.xlu0 %v499
  %v518 = vpop.xlane.xlu0 %517
  %519 = vadd.xlane.f32.xlu0 %v504
  %v520 = vpop.xlane.xlu0 %519
  %521 = vadd.xlane.f32.xlu0 %v509
  %v522 = vpop.xlane.xlu0 %521
  %523 = vadd.xlane.f32.xlu0 %v514
  %v524 = vpop.xlane.xlu0 %523
  %v525 = vrcp.pop 128.0
  %v526 = vmul.f32 %v518, %v525
  %v527 = vmul.f32 %v520, %v525
  %v528 = vmul.f32 %v522, %v525
  %v529 = vmul.f32 %v524, %v525
  %v530 = vmul.f32 %v499, %v499
  %v531 = vmul.f32 %v504, %v504
  %v532 = vmul.f32 %v509, %v509
  %v533 = vmul.f32 %v514, %v514
  %534 = vadd.xlane.f32.xlu0 %v530
  %v535 = vpop.xlane.xlu0 %534
  %536 = vadd.xlane.f32.xlu0 %v531
  %v537 = vpop.xlane.xlu0 %536
  %538 = vadd.xlane.f32.xlu0 %v532
  %v539 = vpop.xlane.xlu0 %538
  %540 = vadd.xlane.f32.xlu0 %v533
  %v541 = vpop.xlane.xlu0 %540
  %v542 = vmul.f32 %v535, %v525
  %v543 = vmul.f32 %v537, %v525
  %v544 = vmul.f32 %v539, %v525
  %v545 = vmul.f32 %v541, %v525
  %v546 = vmul.f32 %v526, %v526
  %v547 = vmul.f32 %v527, %v527
  %v548 = vmul.f32 %v528, %v528
  %v549 = vmul.f32 %v529, %v529
  %v550 = vsub.f32 %v542, %v546
  %v551 = vsub.f32 %v543, %v547
  %v552 = vsub.f32 %v544, %v548
  %v553 = vsub.f32 %v545, %v549
  %v554 = vmax.f32 %v550, 0.0
  %v555 = vmax.f32 %v551, 0.0
  %v556 = vmax.f32 %v552, 0.0
  %v557 = vmax.f32 %v553, 0.0
  %v558 = vsub.f32 %v499, %v526
  %v559 = vsub.f32 %v504, %v527
  %v560 = vsub.f32 %v509, %v528
  %v561 = vsub.f32 %v514, %v529
  %v562 = vadd.f32 %v554, 1e-05
  %v563 = vadd.f32 %v555, 1e-05
  %v564 = vadd.f32 %v556, 1e-05
  %v565 = vadd.f32 %v557, 1e-05
  %v566 = vrsqrt.pop %v562
  %v567 = vrsqrt.pop %v563
  %v568 = vrsqrt.pop %v564
  %v569 = vrsqrt.pop %v565
  %v570 = vmul.f32 %v558, %v566
  %v571 = vmul.f32 %v559, %v567
  %v572 = vmul.f32 %v560, %v568
  %v573 = vmul.f32 %v561, %v569
  %v574 = vld [vmem:[%s2] sm:$0xff]
  %v575 = vld [vmem:[%s2 + $0x8] sm:$0xff]
  %v576 = vld [vmem:[%s2 + $0x10] sm:$0xff]
  %v577 = vld [vmem:[%s2 + $0x18] sm:$0xff]
  %579 = vset.pattern.permute.xlu0 0
  %580 = vperm.xlu0 %579, %v574
  %v581 = vpop.permute.xlu0 %580
  %584 = vset.pattern.permute.xlu0 0
  %585 = vperm.xlu0 %584, %v575
  %v586 = vpop.permute.xlu0 %585
  %589 = vset.pattern.permute.xlu0 0
  %590 = vperm.xlu0 %589, %v576
  %v591 = vpop.permute.xlu0 %590
  %594 = vset.pattern.permute.xlu0 0
  %595 = vperm.xlu0 %594, %v577
  %v596 = vpop.permute.xlu0 %595
  %v598 = vmul.f32 %v570, %v581
  %v599 = vmul.f32 %v571, %v586
  %v600 = vmul.f32 %v572, %v591
  %v601 = vmul.f32 %v573, %v596
  %v602 = vld [vmem:[%s3] sm:$0xff]
  %v603 = vld [vmem:[%s3 + $0x8] sm:$0xff]
  %v604 = vld [vmem:[%s3 + $0x10] sm:$0xff]
  %v605 = vld [vmem:[%s3 + $0x18] sm:$0xff]
  %607 = vset.pattern.permute.xlu0 0
  %608 = vperm.xlu0 %607, %v602
  %v609 = vpop.permute.xlu0 %608
  %612 = vset.pattern.permute.xlu0 0
  %613 = vperm.xlu0 %612, %v603
  %v614 = vpop.permute.xlu0 %613
  %617 = vset.pattern.permute.xlu0 0
  %618 = vperm.xlu0 %617, %v604
  %v619 = vpop.permute.xlu0 %618
  %622 = vset.pattern.permute.xlu0 0
  %623 = vperm.xlu0 %622, %v605
  %v624 = vpop.permute.xlu0 %623
  %v626 = vadd.f32 %v598, %v609
  %v627 = vadd.f32 %v599, %v614
  %v628 = vadd.f32 %v600, %v619
  %v629 = vadd.f32 %v601, %v624
  %v630 = vmax.f32 %v626, 0.0
  %v631 = vmax.f32 %v627, 0.0
  %v632 = vmax.f32 %v628, 0.0
  %v633 = vmax.f32 %v629, 0.0
  %634 = vst [vmem:[%s4] sm:$0xff] %v630
  %635 = vst [vmem:[%s4 + $0x8] sm:$0xff] %v631
  %636 = vst [vmem:[%s4 + $0x10] sm:$0xff] %v632
  %637 = vst [vmem:[%s4 + $0x18] sm:$0xff] %v633
  // Predicated region
  $region18: #{_lambda_.6} parent=0 // pred_check
    _
  $region19: #{_lambda_.6} parent=0 // pred_check_branch
    %639 = sbr.rel (0) target = $region21
  $region20: #{_lambda_.6} parent=0 // pred_region
    _
  $region21: #{_lambda_.6} parent=0 // pred_fallthru
    _
  // Predicated region
  $region22: #{_lambda_.6} parent=0 // pred_check
    _
  $region23: #{_lambda_.6} parent=0 // pred_check_branch
    %641 = sbr.rel (0) target = $region25
  $region24: #{_lambda_.6} parent=0 // pred_region
    _
  $region25: #{_lambda_.6} parent=0 // pred_fallthru
    _

// kernel: _lambda_.7
$region0: #{_lambda_.7}
  #allocation0 [shape = 'u32[]', space=smem, size = 0x4, offset = 0x4, fixed_abs, tag = 'smem constant byte address 0x4 - core index']
  #allocation1 [shape = 'u32[144,128]{1,0:T(1,128)}', space=vmem, size = 0x12000, scoped, tag = 'internal scratch']
  %s0 = inlined_call_operand.vmem [shape: f32[512,512], index: 0, kind: input, shape index: {}]
  %s1 = inlined_call_operand.vmem [shape: f32[16,512], index: 1, kind: input, shape index: {}]
  %s2 = inlined_call_operand.vmem [shape: f32[16,1], index: 2, kind: input, shape index: {}]
  %s3 = inlined_call_operand.vmem [shape: f32[16,1], index: 3, kind: input, shape index: {}]
  %s4 = inlined_call_operand.vmem [shape: f32[16,512], index: 4, kind: output, shape index: {}]
  %s5 = sld [smem:[#allocation0]]
  $region26: #{_lambda_.7} parent=0
    _
  %s7 = ssub.s32 1, %s5
  %s8 = scalar_select 0, %s7, %s5
  // Predicated region
  $region2: #{_lambda_.7} parent=0 // pred_check
    _
  $region3: #{_lambda_.7} parent=0 // pred_check_branch
    %10 = sbr.rel (0) target = $region5
  $region4: #{_lambda_.7} parent=0 // pred_region
    _
  $region5: #{_lambda_.7} parent=0 // pred_fallthru
    _
  // Predicated region
  $region6: #{_lambda_.7} parent=0 // pred_check
    _
  $region7: #{_lambda_.7} parent=0 // pred_check_branch
    %12 = sbr.rel (0) target = $region9
  $region8: #{_lambda_.7} parent=0 // pred_region
    _
  $region9: #{_lambda_.7} parent=0 // pred_fallthru
    _
  // Predicated region
  $region10: #{_lambda_.7} parent=0 // pred_check
    _
  $region11: #{_lambda_.7} parent=0 // pred_check_branch
    %14 = sbr.rel (0) target = $region13
  $region12: #{_lambda_.7} parent=0 // pred_region
    _
  $region13: #{_lambda_.7} parent=0 // pred_fallthru
    _
  // Predicated region
  $region14: #{_lambda_.7} parent=0 // pred_check
    _
  $region15: #{_lambda_.7} parent=0 // pred_check_branch
    %16 = sbr.rel (0) target = $region17
  $region16: #{_lambda_.7} parent=0 // pred_region
    _
  $region17: #{_lambda_.7} parent=0 // pred_fallthru
    _
  %v17 = vld [vmem:[%s1] sm:$0xff]
  %v18 = vld [vmem:[%s1 + $0x8] sm:$0xff]
  %v19 = vld [vmem:[%s1 + $0x10] sm:$0xff]
  %v20 = vld [vmem:[%s1 + $0x18] sm:$0xff]
  %v21 = vld [vmem:[%s1 + $0x20] sm:$0xff]
  %v22 = vld [vmem:[%s1 + $0x28] sm:$0xff]
  %v23 = vld [vmem:[%s1 + $0x30] sm:$0xff]
  %v24 = vld [vmem:[%s1 + $0x38] sm:$0xff]
  %v25 = vld [vmem:[%s0] sm:$0xff]
  %v26 = vld [vmem:[%s0 + $0x8] sm:$0xff]
  %v27 = vld [vmem:[%s0 + $0x10] sm:$0xff]
  %v28 = vld [vmem:[%s0 + $0x18] sm:$0xff]
  %v29 = vld [vmem:[%s0 + $0x20] sm:$0xff]
  %v30 = vld [vmem:[%s0 + $0x28] sm:$0xff]
  %v31 = vld [vmem:[%s0 + $0x30] sm:$0xff]
  %v32 = vld [vmem:[%s0 + $0x38] sm:$0xff]
  %v33 = vld [vmem:[%s0 + $0x40] sm:$0xff]
  %v34 = vld [vmem:[%s0 + $0x48] sm:$0xff]
  %v35 = vld [vmem:[%s0 + $0x50] sm:$0xff]
  %v36 = vld [vmem:[%s0 + $0x58] sm:$0xff]
  %v37 = vld [vmem:[%s0 + $0x60] sm:$0xff]
  %v38 = vld [vmem:[%s0 + $0x68] sm:$0xff]
  %v39 = vld [vmem:[%s0 + $0x70] sm:$0xff]
  %v40 = vld [vmem:[%s0 + $0x78] sm:$0xff]
  %v41 = vld [vmem:[%s0 + $0x80] sm:$0xff]
  %v42 = vld [vmem:[%s0 + $0x88] sm:$0xff]
  %v43 = vld [vmem:[%s0 + $0x90] sm:$0xff]
  %v44 = vld [vmem:[%s0 + $0x98] sm:$0xff]
  %v45 = vld [vmem:[%s0 + $0xa0] sm:$0xff]
  %v46 = vld [vmem:[%s0 + $0xa8] sm:$0xff]
  %v47 = vld [vmem:[%s0 + $0xb0] sm:$0xff]
  %v48 = vld [vmem:[%s0 + $0xb8] sm:$0xff]
  %v49 = vld [vmem:[%s0 + $0xc0] sm:$0xff]
  %v50 = vld [vmem:[%s0 + $0xc8] sm:$0xff]
  %v51 = vld [vmem:[%s0 + $0xd0] sm:$0xff]
  %v52 = vld [vmem:[%s0 + $0xd8] sm:$0xff]
  %v53 = vld [vmem:[%s0 + $0xe0] sm:$0xff]
  %v54 = vld [vmem:[%s0 + $0xe8] sm:$0xff]
  %v55 = vld [vmem:[%s0 + $0xf0] sm:$0xff]
  %v56 = vld [vmem:[%s0 + $0xf8] sm:$0xff]
  %v57 = vld [vmem:[%s0 + $0x100] sm:$0xff]
  %v58 = vld [vmem:[%s0 + $0x108] sm:$0xff]
  %v59 = vld [vmem:[%s0 + $0x110] sm:$0xff]
  %v60 = vld [vmem:[%s0 + $0x118] sm:$0xff]
  %v61 = vld [vmem:[%s0 + $0x120] sm:$0xff]
  %v62 = vld [vmem:[%s0 + $0x128] sm:$0xff]
  %v63 = vld [vmem:[%s0 + $0x130] sm:$0xff]
  %v64 = vld [vmem:[%s0 + $0x138] sm:$0xff]
  %v65 = vld [vmem:[%s0 + $0x140] sm:$0xff]
  %v66 = vld [vmem:[%s0 + $0x148] sm:$0xff]
  %v67 = vld [vmem:[%s0 + $0x150] sm:$0xff]
  %v68 = vld [vmem:[%s0 + $0x158] sm:$0xff]
  %v69 = vld [vmem:[%s0 + $0x160] sm:$0xff]
  %v70 = vld [vmem:[%s0 + $0x168] sm:$0xff]
  %v71 = vld [vmem:[%s0 + $0x170] sm:$0xff]
  %v72 = vld [vmem:[%s0 + $0x178] sm:$0xff]
  %v73 = vld [vmem:[%s0 + $0x180] sm:$0xff]
  %v74 = vld [vmem:[%s0 + $0x188] sm:$0xff]
  %v75 = vld [vmem:[%s0 + $0x190] sm:$0xff]
  %v76 = vld [vmem:[%s0 + $0x198] sm:$0xff]
  %v77 = vld [vmem:[%s0 + $0x1a0] sm:$0xff]
  %v78 = vld [vmem:[%s0 + $0x1a8] sm:$0xff]
  %v79 = vld [vmem:[%s0 + $0x1b0] sm:$0xff]
  %v80 = vld [vmem:[%s0 + $0x1b8] sm:$0xff]
  %v81 = vld [vmem:[%s0 + $0x1c0] sm:$0xff]
  %v82 = vld [vmem:[%s0 + $0x1c8] sm:$0xff]
  %v83 = vld [vmem:[%s0 + $0x1d0] sm:$0xff]
  %v84 = vld [vmem:[%s0 + $0x1d8] sm:$0xff]
  %v85 = vld [vmem:[%s0 + $0x1e0] sm:$0xff]
  %v86 = vld [vmem:[%s0 + $0x1e8] sm:$0xff]
  %v87 = vld [vmem:[%s0 + $0x1f0] sm:$0xff]
  %v88 = vld [vmem:[%s0 + $0x1f8] sm:$0xff]
  %v89 = vld [vmem:[%s0 + $0x200] sm:$0xff]
  %v90 = vld [vmem:[%s0 + $0x208] sm:$0xff]
  %v91 = vld [vmem:[%s0 + $0x210] sm:$0xff]
  %v92 = vld [vmem:[%s0 + $0x218] sm:$0xff]
  %v93 = vld [vmem:[%s0 + $0x220] sm:$0xff]
  %v94 = vld [vmem:[%s0 + $0x228] sm:$0xff]
  %v95 = vld [vmem:[%s0 + $0x230] sm:$0xff]
  %v96 = vld [vmem:[%s0 + $0x238] sm:$0xff]
  %v97 = vld [vmem:[%s0 + $0x240] sm:$0xff]
  %v98 = vld [vmem:[%s0 + $0x248] sm:$0xff]
  %v99 = vld [vmem:[%s0 + $0x250] sm:$0xff]
  %v100 = vld [vmem:[%s0 + $0x258] sm:$0xff]
  %v101 = vld [vmem:[%s0 + $0x260] sm:$0xff]
  %v102 = vld [vmem:[%s0 + $0x268] sm:$0xff]
  %v103 = vld [vmem:[%s0 + $0x270] sm:$0xff]
  %v104 = vld [vmem:[%s0 + $0x278] sm:$0xff]
  %v105 = vld [vmem:[%s0 + $0x280] sm:$0xff]
  %v106 = vld [vmem:[%s0 + $0x288] sm:$0xff]
  %v107 = vld [vmem:[%s0 + $0x290] sm:$0xff]
  %v108 = vld [vmem:[%s0 + $0x298] sm:$0xff]
  %v109 = vld [vmem:[%s0 + $0x2a0] sm:$0xff]
  %v110 = vld [vmem:[%s0 + $0x2a8] sm:$0xff]
  %v111 = vld [vmem:[%s0 + $0x2b0] sm:$0xff]
  %v112 = vld [vmem:[%s0 + $0x2b8] sm:$0xff]
  %v113 = vld [vmem:[%s0 + $0x2c0] sm:$0xff]
  %v114 = vld [vmem:[%s0 + $0x2c8] sm:$0xff]
  %v115 = vld [vmem:[%s0 + $0x2d0] sm:$0xff]
  %v116 = vld [vmem:[%s0 + $0x2d8] sm:$0xff]
  %v117 = vld [vmem:[%s0 + $0x2e0] sm:$0xff]
  %v118 = vld [vmem:[%s0 + $0x2e8] sm:$0xff]
  %v119 = vld [vmem:[%s0 + $0x2f0] sm:$0xff]
  %v120 = vld [vmem:[%s0 + $0x2f8] sm:$0xff]
  %v121 = vld [vmem:[%s0 + $0x300] sm:$0xff]
  %v122 = vld [vmem:[%s0 + $0x308] sm:$0xff]
  %v123 = vld [vmem:[%s0 + $0x310] sm:$0xff]
  %v124 = vld [vmem:[%s0 + $0x318] sm:$0xff]
  %v125 = vld [vmem:[%s0 + $0x320] sm:$0xff]
  %v126 = vld [vmem:[%s0 + $0x328] sm:$0xff]
  %v127 = vld [vmem:[%s0 + $0x330] sm:$0xff]
  %v128 = vld [vmem:[%s0 + $0x338] sm:$0xff]
  %v129 = vld [vmem:[%s0 + $0x340] sm:$0xff]
  %v130 = vld [vmem:[%s0 + $0x348] sm:$0xff]
  %v131 = vld [vmem:[%s0 + $0x350] sm:$0xff]
  %v132 = vld [vmem:[%s0 + $0x358] sm:$0xff]
  %v133 = vld [vmem:[%s0 + $0x360] sm:$0xff]
  %v134 = vld [vmem:[%s0 + $0x368] sm:$0xff]
  %v135 = vld [vmem:[%s0 + $0x370] sm:$0xff]
  %v136 = vld [vmem:[%s0 + $0x378] sm:$0xff]
  %v137 = vld [vmem:[%s0 + $0x380] sm:$0xff]
  %v138 = vld [vmem:[%s0 + $0x388] sm:$0xff]
  %v139 = vld [vmem:[%s0 + $0x390] sm:$0xff]
  %v140 = vld [vmem:[%s0 + $0x398] sm:$0xff]
  %v141 = vld [vmem:[%s0 + $0x3a0] sm:$0xff]
  %v142 = vld [vmem:[%s0 + $0x3a8] sm:$0xff]
  %v143 = vld [vmem:[%s0 + $0x3b0] sm:$0xff]
  %v144 = vld [vmem:[%s0 + $0x3b8] sm:$0xff]
  %v145 = vld [vmem:[%s0 + $0x3c0] sm:$0xff]
  %v146 = vld [vmem:[%s0 + $0x3c8] sm:$0xff]
  %v147 = vld [vmem:[%s0 + $0x3d0] sm:$0xff]
  %v148 = vld [vmem:[%s0 + $0x3d8] sm:$0xff]
  %v149 = vld [vmem:[%s0 + $0x3e0] sm:$0xff]
  %v150 = vld [vmem:[%s0 + $0x3e8] sm:$0xff]
  %v151 = vld [vmem:[%s0 + $0x3f0] sm:$0xff]
  %v152 = vld [vmem:[%s0 + $0x3f8] sm:$0xff]
  %v153 = vld [vmem:[%s0 + $0x400] sm:$0xff]
  %v154 = vld [vmem:[%s0 + $0x408] sm:$0xff]
  %v155 = vld [vmem:[%s0 + $0x410] sm:$0xff]
  %v156 = vld [vmem:[%s0 + $0x418] sm:$0xff]
  %v157 = vld [vmem:[%s0 + $0x420] sm:$0xff]
  %v158 = vld [vmem:[%s0 + $0x428] sm:$0xff]
  %v159 = vld [vmem:[%s0 + $0x430] sm:$0xff]
  %v160 = vld [vmem:[%s0 + $0x438] sm:$0xff]
  %v161 = vld [vmem:[%s0 + $0x440] sm:$0xff]
  %v162 = vld [vmem:[%s0 + $0x448] sm:$0xff]
  %v163 = vld [vmem:[%s0 + $0x450] sm:$0xff]
  %v164 = vld [vmem:[%s0 + $0x458] sm:$0xff]
  %v165 = vld [vmem:[%s0 + $0x460] sm:$0xff]
  %v166 = vld [vmem:[%s0 + $0x468] sm:$0xff]
  %v167 = vld [vmem:[%s0 + $0x470] sm:$0xff]
  %v168 = vld [vmem:[%s0 + $0x478] sm:$0xff]
  %v169 = vld [vmem:[%s0 + $0x480] sm:$0xff]
  %v170 = vld [vmem:[%s0 + $0x488] sm:$0xff]
  %v171 = vld [vmem:[%s0 + $0x490] sm:$0xff]
  %v172 = vld [vmem:[%s0 + $0x498] sm:$0xff]
  %v173 = vld [vmem:[%s0 + $0x4a0] sm:$0xff]
  %v174 = vld [vmem:[%s0 + $0x4a8] sm:$0xff]
  %v175 = vld [vmem:[%s0 + $0x4b0] sm:$0xff]
  %v176 = vld [vmem:[%s0 + $0x4b8] sm:$0xff]
  %v177 = vld [vmem:[%s0 + $0x4c0] sm:$0xff]
  %v178 = vld [vmem:[%s0 + $0x4c8] sm:$0xff]
  %v179 = vld [vmem:[%s0 + $0x4d0] sm:$0xff]
  %v180 = vld [vmem:[%s0 + $0x4d8] sm:$0xff]
  %v181 = vld [vmem:[%s0 + $0x4e0] sm:$0xff]
  %v182 = vld [vmem:[%s0 + $0x4e8] sm:$0xff]
  %v183 = vld [vmem:[%s0 + $0x4f0] sm:$0xff]
  %v184 = vld [vmem:[%s0 + $0x4f8] sm:$0xff]
  %v185 = vld [vmem:[%s0 + $0x500] sm:$0xff]
  %v186 = vld [vmem:[%s0 + $0x508] sm:$0xff]
  %v187 = vld [vmem:[%s0 + $0x510] sm:$0xff]
  %v188 = vld [vmem:[%s0 + $0x518] sm:$0xff]
  %v189 = vld [vmem:[%s0 + $0x520] sm:$0xff]
  %v190 = vld [vmem:[%s0 + $0x528] sm:$0xff]
  %v191 = vld [vmem:[%s0 + $0x530] sm:$0xff]
  %v192 = vld [vmem:[%s0 + $0x538] sm:$0xff]
  %v193 = vld [vmem:[%s0 + $0x540] sm:$0xff]
  %v194 = vld [vmem:[%s0 + $0x548] sm:$0xff]
  %v195 = vld [vmem:[%s0 + $0x550] sm:$0xff]
  %v196 = vld [vmem:[%s0 + $0x558] sm:$0xff]
  %v197 = vld [vmem:[%s0 + $0x560] sm:$0xff]
  %v198 = vld [vmem:[%s0 + $0x568] sm:$0xff]
  %v199 = vld [vmem:[%s0 + $0x570] sm:$0xff]
  %v200 = vld [vmem:[%s0 + $0x578] sm:$0xff]
  %v201 = vld [vmem:[%s0 + $0x580] sm:$0xff]
  %v202 = vld [vmem:[%s0 + $0x588] sm:$0xff]
  %v203 = vld [vmem:[%s0 + $0x590] sm:$0xff]
  %v204 = vld [vmem:[%s0 + $0x598] sm:$0xff]
  %v205 = vld [vmem:[%s0 + $0x5a0] sm:$0xff]
  %v206 = vld [vmem:[%s0 + $0x5a8] sm:$0xff]
  %v207 = vld [vmem:[%s0 + $0x5b0] sm:$0xff]
  %v208 = vld [vmem:[%s0 + $0x5b8] sm:$0xff]
  %v209 = vld [vmem:[%s0 + $0x5c0] sm:$0xff]
  %v210 = vld [vmem:[%s0 + $0x5c8] sm:$0xff]
  %v211 = vld [vmem:[%s0 + $0x5d0] sm:$0xff]
  %v212 = vld [vmem:[%s0 + $0x5d8] sm:$0xff]
  %v213 = vld [vmem:[%s0 + $0x5e0] sm:$0xff]
  %v214 = vld [vmem:[%s0 + $0x5e8] sm:$0xff]
  %v215 = vld [vmem:[%s0 + $0x5f0] sm:$0xff]
  %v216 = vld [vmem:[%s0 + $0x5f8] sm:$0xff]
  %v217 = vld [vmem:[%s0 + $0x600] sm:$0xff]
  %v218 = vld [vmem:[%s0 + $0x608] sm:$0xff]
  %v219 = vld [vmem:[%s0 + $0x610] sm:$0xff]
  %v220 = vld [vmem:[%s0 + $0x618] sm:$0xff]
  %v221 = vld [vmem:[%s0 + $0x620] sm:$0xff]
  %v222 = vld [vmem:[%s0 + $0x628] sm:$0xff]
  %v223 = vld [vmem:[%s0 + $0x630] sm:$0xff]
  %v224 = vld [vmem:[%s0 + $0x638] sm:$0xff]
  %v225 = vld [vmem:[%s0 + $0x640] sm:$0xff]
  %v226 = vld [vmem:[%s0 + $0x648] sm:$0xff]
  %v227 = vld [vmem:[%s0 + $0x650] sm:$0xff]
  %v228 = vld [vmem:[%s0 + $0x658] sm:$0xff]
  %v229 = vld [vmem:[%s0 + $0x660] sm:$0xff]
  %v230 = vld [vmem:[%s0 + $0x668] sm:$0xff]
  %v231 = vld [vmem:[%s0 + $0x670] sm:$0xff]
  %v232 = vld [vmem:[%s0 + $0x678] sm:$0xff]
  %v233 = vld [vmem:[%s0 + $0x680] sm:$0xff]
  %v234 = vld [vmem:[%s0 + $0x688] sm:$0xff]
  %v235 = vld [vmem:[%s0 + $0x690] sm:$0xff]
  %v236 = vld [vmem:[%s0 + $0x698] sm:$0xff]
  %v237 = vld [vmem:[%s0 + $0x6a0] sm:$0xff]
  %v238 = vld [vmem:[%s0 + $0x6a8] sm:$0xff]
  %v239 = vld [vmem:[%s0 + $0x6b0] sm:$0xff]
  %v240 = vld [vmem:[%s0 + $0x6b8] sm:$0xff]
  %v241 = vld [vmem:[%s0 + $0x6c0] sm:$0xff]
  %v242 = vld [vmem:[%s0 + $0x6c8] sm:$0xff]
  %v243 = vld [vmem:[%s0 + $0x6d0] sm:$0xff]
  %v244 = vld [vmem:[%s0 + $0x6d8] sm:$0xff]
  %v245 = vld [vmem:[%s0 + $0x6e0] sm:$0xff]
  %v246 = vld [vmem:[%s0 + $0x6e8] sm:$0xff]
  %v247 = vld [vmem:[%s0 + $0x6f0] sm:$0xff]
  %v248 = vld [vmem:[%s0 + $0x6f8] sm:$0xff]
  %v249 = vld [vmem:[%s0 + $0x700] sm:$0xff]
  %v250 = vld [vmem:[%s0 + $0x708] sm:$0xff]
  %v251 = vld [vmem:[%s0 + $0x710] sm:$0xff]
  %v252 = vld [vmem:[%s0 + $0x718] sm:$0xff]
  %v253 = vld [vmem:[%s0 + $0x720] sm:$0xff]
  %v254 = vld [vmem:[%s0 + $0x728] sm:$0xff]
  %v255 = vld [vmem:[%s0 + $0x730] sm:$0xff]
  %v256 = vld [vmem:[%s0 + $0x738] sm:$0xff]
  %v257 = vld [vmem:[%s0 + $0x740] sm:$0xff]
  %v258 = vld [vmem:[%s0 + $0x748] sm:$0xff]
  %v259 = vld [vmem:[%s0 + $0x750] sm:$0xff]
  %v260 = vld [vmem:[%s0 + $0x758] sm:$0xff]
  %v261 = vld [vmem:[%s0 + $0x760] sm:$0xff]
  %v262 = vld [vmem:[%s0 + $0x768] sm:$0xff]
  %v263 = vld [vmem:[%s0 + $0x770] sm:$0xff]
  %v264 = vld [vmem:[%s0 + $0x778] sm:$0xff]
  %v265 = vld [vmem:[%s0 + $0x780] sm:$0xff]
  %v266 = vld [vmem:[%s0 + $0x788] sm:$0xff]
  %v267 = vld [vmem:[%s0 + $0x790] sm:$0xff]
  %v268 = vld [vmem:[%s0 + $0x798] sm:$0xff]
  %v269 = vld [vmem:[%s0 + $0x7a0] sm:$0xff]
  %v270 = vld [vmem:[%s0 + $0x7a8] sm:$0xff]
  %v271 = vld [vmem:[%s0 + $0x7b0] sm:$0xff]
  %v272 = vld [vmem:[%s0 + $0x7b8] sm:$0xff]
  %v273 = vld [vmem:[%s0 + $0x7c0] sm:$0xff]
  %v274 = vld [vmem:[%s0 + $0x7c8] sm:$0xff]
  %v275 = vld [vmem:[%s0 + $0x7d0] sm:$0xff]
  %v276 = vld [vmem:[%s0 + $0x7d8] sm:$0xff]
  %v277 = vld [vmem:[%s0 + $0x7e0] sm:$0xff]
  %v278 = vld [vmem:[%s0 + $0x7e8] sm:$0xff]
  %v279 = vld [vmem:[%s0 + $0x7f0] sm:$0xff]
  %v280 = vld [vmem:[%s0 + $0x7f8] sm:$0xff]
  %281 = vmatprep.subr.mxu0 %v26
  %282 = vmatpush1.msra.mxu0 %v25
  %283 = vmatprep.subr.mxu0 %v30
  %284 = vmatpush1.msra.mxu0 %v29
  %285 = vmatprep.subr.mxu0 %v34
  %286 = vmatpush1.msra.mxu0 %v33
  %287 = vmatprep.subr.mxu0 %v38
  %288 = vmatpush1.msra.mxu0 %v37
  %289 = vmatprep.subr.mxu0 %v42
  %290 = vmatpush1.msra.mxu0 %v41
  %291 = vmatprep.subr.mxu0 %v46
  %292 = vmatpush1.msra.mxu0 %v45
  %293 = vmatprep.subr.mxu0 %v50
  %294 = vmatpush1.msra.mxu0 %v49
  %295 = vmatprep.subr.mxu0 %v54
  %296 = vmatpush1.msra.mxu0 %v53
  %297 = vmatprep.subr.mxu0 %v58
  %298 = vmatpush1.msra.mxu0 %v57
  %299 = vmatprep.subr.mxu0 %v62
  %300 = vmatpush1.msra.mxu0 %v61
  %301 = vmatprep.subr.mxu0 %v66
  %302 = vmatpush1.msra.mxu0 %v65
  %303 = vmatprep.subr.mxu0 %v70
  %304 = vmatpush1.msra.mxu0 %v69
  %305 = vmatprep.subr.mxu0 %v74
  %306 = vmatpush1.msra.mxu0 %v73
  %307 = vmatprep.subr.mxu0 %v78
  %308 = vmatpush1.msra.mxu0 %v77
  %309 = vmatprep.subr.mxu0 %v82
  %310 = vmatpush1.msra.mxu0 %v81
  %311 = vmatprep.subr.mxu0 %v86
  %312 = vmatpush1.msra.mxu0 %v85
  %313 = vmatprep.subr.mxu0 %v90
  %314 = vmatpush1.msra.mxu0 %v89
  %315 = vmatprep.subr.mxu0 %v94
  %316 = vmatpush1.msra.mxu0 %v93
  %317 = vmatprep.subr.mxu0 %v98
  %318 = vmatpush1.msra.mxu0 %v97
  %319 = vmatprep.subr.mxu0 %v102
  %320 = vmatpush1.msra.mxu0 %v101
  %321 = vmatprep.subr.mxu0 %v106
  %322 = vmatpush1.msra.mxu0 %v105
  %323 = vmatprep.subr.mxu0 %v110
  %324 = vmatpush1.msra.mxu0 %v109
  %325 = vmatprep.subr.mxu0 %v114
  %326 = vmatpush1.msra.mxu0 %v113
  %327 = vmatprep.subr.mxu0 %v118
  %328 = vmatpush1.msra.mxu0 %v117
  %329 = vmatprep.subr.mxu0 %v122
  %330 = vmatpush1.msra.mxu0 %v121
  %331 = vmatprep.subr.mxu0 %v126
  %332 = vmatpush1.msra.mxu0 %v125
  %333 = vmatprep.subr.mxu0 %v130
  %334 = vmatpush1.msra.mxu0 %v129
  %335 = vmatprep.subr.mxu0 %v134
  %336 = vmatpush1.msra.mxu0 %v133
  %337 = vmatprep.subr.mxu0 %v138
  %338 = vmatpush1.msra.mxu0 %v137
  %339 = vmatprep.subr.mxu0 %v142
  %340 = vmatpush1.msra.mxu0 %v141
  %341 = vmatprep.subr.mxu0 %v146
  %342 = vmatpush1.msra.mxu0 %v145
  %343 = vmatprep.subr.mxu0 %v150
  %344 = vmatpush1.msra.mxu0 %v149
  %345 = vmatprep.mubr.f32.mxu0 %v18
  %346 = vmatmul.mubr.f32.gmra.mrb[0].mxu0 %v17
  %v347 = vpop.f32.mrb[0].mxu0
  %v348 = vadd.f32 0.0, %v347
  %v349 = vpop.f32.mrb[0].mxu0
  %v350 = vadd.f32 0.0, %v349
  %351 = vmatprep.mubr.f32.mxu0 %v22
  %352 = vmatmul.mubr.f32.gmra.mrb[0].mxu0 %v21
  %v353 = vpop.f32.mrb[0].mxu0
  %v354 = vadd.f32 0.0, %v353
  %v355 = vpop.f32.mrb[0].mxu0
  %v356 = vadd.f32 0.0, %v355
  %357 = vdwg.mxu0
  %358 = vmatprep.subr.mxu0 %v154
  %359 = vmatpush1.msra.mxu0 %v153
  %360 = vmatprep.subr.mxu0 %v158
  %361 = vmatpush1.msra.mxu0 %v157
  %362 = vmatprep.subr.mxu0 %v162
  %363 = vmatpush1.msra.mxu0 %v161
  %364 = vmatprep.subr.mxu0 %v166
  %365 = vmatpush1.msra.mxu0 %v165
  %366 = vmatprep.subr.mxu0 %v170
  %367 = vmatpush1.msra.mxu0 %v169
  %368 = vmatprep.subr.mxu0 %v174
  %369 = vmatpush1.msra.mxu0 %v173
  %370 = vmatprep.subr.mxu0 %v178
  %371 = vmatpush1.msra.mxu0 %v177
  %372 = vmatprep.subr.mxu0 %v182
  %373 = vmatpush1.msra.mxu0 %v181
  %374 = vmatprep.subr.mxu0 %v186
  %375 = vmatpush1.msra.mxu0 %v185
  %376 = vmatprep.subr.mxu0 %v190
  %377 = vmatpush1.msra.mxu0 %v189
  %378 = vmatprep.subr.mxu0 %v194
  %379 = vmatpush1.msra.mxu0 %v193
  %380 = vmatprep.subr.mxu0 %v198
  %381 = vmatpush1.msra.mxu0 %v197
  %382 = vmatprep.subr.mxu0 %v202
  %383 = vmatpush1.msra.mxu0 %v201
  %384 = vmatprep.subr.mxu0 %v206
  %385 = vmatpush1.msra.mxu0 %v205
  %386 = vmatprep.subr.mxu0 %v210
  %387 = vmatpush1.msra.mxu0 %v209
  %388 = vmatprep.subr.mxu0 %v214
  %389 = vmatpush1.msra.mxu0 %v213
  %390 = vmatprep.subr.mxu0 %v218
  %391 = vmatpush1.msra.mxu0 %v217
  %392 = vmatprep.subr.mxu0 %v222
  %393 = vmatpush1.msra.mxu0 %v221
  %394 = vmatprep.subr.mxu0 %v226
  %395 = vmatpush1.msra.mxu0 %v225
  %396 = vmatprep.subr.mxu0 %v230
  %397 = vmatpush1.msra.mxu0 %v229
  %398 = vmatprep.subr.mxu0 %v234
  %399 = vmatpush1.msra.mxu0 %v233
  %400 = vmatprep.subr.mxu0 %v238
  %401 = vmatpush1.msra.mxu0 %v237
  %402 = vmatprep.subr.mxu0 %v242
  %403 = vmatpush1.msra.mxu0 %v241
  %404 = vmatprep.subr.mxu0 %v246
  %405 = vmatpush1.msra.mxu0 %v245
  %406 = vmatprep.subr.mxu0 %v250
  %407 = vmatpush1.msra.mxu0 %v249
  %408 = vmatprep.subr.mxu0 %v254
  %409 = vmatpush1.msra.mxu0 %v253
  %410 = vmatprep.subr.mxu0 %v258
  %411 = vmatpush1.msra.mxu0 %v257
  %412 = vmatprep.subr.mxu0 %v262
  %413 = vmatpush1.msra.mxu0 %v261
  %414 = vmatprep.subr.mxu0 %v266
  %415 = vmatpush1.msra.mxu0 %v265
  %416 = vmatprep.subr.mxu0 %v270
  %417 = vmatpush1.msra.mxu0 %v269
  %418 = vmatprep.subr.mxu0 %v274
  %419 = vmatpush1.msra.mxu0 %v273
  %420 = vmatprep.subr.mxu0 %v278
  %421 = vmatpush1.msra.mxu0 %v277
  %422 = vmatprep.mubr.f32.mxu0 %v20
  %423 = vmatmul.mubr.f32.gmra.mrb[0].mxu0 %v19
  %v424 = vpop.f32.mrb[0].mxu0
  %v425 = vadd.f32 %v348, %v424
  %v426 = vpop.f32.mrb[0].mxu0
  %v427 = vadd.f32 %v350, %v426
  %428 = vmatprep.mubr.f32.mxu0 %v24
  %429 = vmatmul.mubr.f32.gmra.mrb[0].mxu0 %v23
  %v430 = vpop.f32.mrb[0].mxu0
  %v431 = vadd.f32 %v354, %v430
  %v432 = vpop.f32.mrb[0].mxu0
  %v433 = vadd.f32 %v356, %v432
  %434 = vdwg.mxu0
  %435 = vmatprep.subr.mxu0 %v28
  %436 = vmatpush1.msra.mxu0 %v27
  %437 = vmatprep.subr.mxu0 %v32
  %438 = vmatpush1.msra.mxu0 %v31
  %439 = vmatprep.subr.mxu0 %v36
  %440 = vmatpush1.msra.mxu0 %v35
  %441 = vmatprep.subr.mxu0 %v40
  %442 = vmatpush1.msra.mxu0 %v39
  %443 = vmatprep.subr.mxu0 %v44
  %444 = vmatpush1.msra.mxu0 %v43
  %445 = vmatprep.subr.mxu0 %v48
  %446 = vmatpush1.msra.mxu0 %v47
  %447 = vmatprep.subr.mxu0 %v52
  %448 = vmatpush1.msra.mxu0 %v51
  %449 = vmatprep.subr.mxu0 %v56
  %450 = vmatpush1.msra.mxu0 %v55
  %451 = vmatprep.subr.mxu0 %v60
  %452 = vmatpush1.msra.mxu0 %v59
  %453 = vmatprep.subr.mxu0 %v64
  %454 = vmatpush1.msra.mxu0 %v63
  %455 = vmatprep.subr.mxu0 %v68
  %456 = vmatpush1.msra.mxu0 %v67
  %457 = vmatprep.subr.mxu0 %v72
  %458 = vmatpush1.msra.mxu0 %v71
  %459 = vmatprep.subr.mxu0 %v76
  %460 = vmatpush1.msra.mxu0 %v75
  %461 = vmatprep.subr.mxu0 %v80
  %462 = vmatpush1.msra.mxu0 %v79
  %463 = vmatprep.subr.mxu0 %v84
  %464 = vmatpush1.msra.mxu0 %v83
  %465 = vmatprep.subr.mxu0 %v88
  %466 = vmatpush1.msra.mxu0 %v87
  %467 = vmatprep.subr.mxu0 %v92
  %468 = vmatpush1.msra.mxu0 %v91
  %469 = vmatprep.subr.mxu0 %v96
  %470 = vmatpush1.msra.mxu0 %v95
  %471 = vmatprep.subr.mxu0 %v100
  %472 = vmatpush1.msra.mxu0 %v99
  %473 = vmatprep.subr.mxu0 %v104
  %474 = vmatpush1.msra.mxu0 %v103
  %475 = vmatprep.subr.mxu0 %v108
  %476 = vmatpush1.msra.mxu0 %v107
  %477 = vmatprep.subr.mxu0 %v112
  %478 = vmatpush1.msra.mxu0 %v111
  %479 = vmatprep.subr.mxu0 %v116
  %480 = vmatpush1.msra.mxu0 %v115
  %481 = vmatprep.subr.mxu0 %v120
  %482 = vmatpush1.msra.mxu0 %v119
  %483 = vmatprep.subr.mxu0 %v124
  %484 = vmatpush1.msra.mxu0 %v123
  %485 = vmatprep.subr.mxu0 %v128
  %486 = vmatpush1.msra.mxu0 %v127
  %487 = vmatprep.subr.mxu0 %v132
  %488 = vmatpush1.msra.mxu0 %v131
  %489 = vmatprep.subr.mxu0 %v136
  %490 = vmatpush1.msra.mxu0 %v135
  %491 = vmatprep.subr.mxu0 %v140
  %492 = vmatpush1.msra.mxu0 %v139
  %493 = vmatprep.subr.mxu0 %v144
  %494 = vmatpush1.msra.mxu0 %v143
  %495 = vmatprep.subr.mxu0 %v148
  %496 = vmatpush1.msra.mxu0 %v147
  %497 = vmatprep.subr.mxu0 %v152
  %498 = vmatpush1.msra.mxu0 %v151
  %499 = vmatprep.mubr.f32.mxu0 %v18
  %500 = vmatmul.mubr.f32.gmra.mrb[0].mxu0 %v17
  %v501 = vpop.f32.mrb[0].mxu0
  %v502 = vadd.f32 0.0, %v501
  %v503 = vpop.f32.mrb[0].mxu0
  %v504 = vadd.f32 0.0, %v503
  %505 = vmatprep.mubr.f32.mxu0 %v22
  %506 = vmatmul.mubr.f32.gmra.mrb[0].mxu0 %v21
  %v507 = vpop.f32.mrb[0].mxu0
  %v508 = vadd.f32 0.0, %v507
  %v509 = vpop.f32.mrb[0].mxu0
  %v510 = vadd.f32 0.0, %v509
  %511 = vdwg.mxu0
  %512 = vmatprep.subr.mxu0 %v156
  %513 = vmatpush1.msra.mxu0 %v155
  %514 = vmatprep.subr.mxu0 %v160
  %515 = vmatpush1.msra.mxu0 %v159
  %516 = vmatprep.subr.mxu0 %v164
  %517 = vmatpush1.msra.mxu0 %v163
  %518 = vmatprep.subr.mxu0 %v168
  %519 = vmatpush1.msra.mxu0 %v167
  %520 = vmatprep.subr.mxu0 %v172
  %521 = vmatpush1.msra.mxu0 %v171
  %522 = vmatprep.subr.mxu0 %v176
  %523 = vmatpush1.msra.mxu0 %v175
  %524 = vmatprep.subr.mxu0 %v180
  %525 = vmatpush1.msra.mxu0 %v179
  %526 = vmatprep.subr.mxu0 %v184
  %527 = vmatpush1.msra.mxu0 %v183
  %528 = vmatprep.subr.mxu0 %v188
  %529 = vmatpush1.msra.mxu0 %v187
  %530 = vmatprep.subr.mxu0 %v192
  %531 = vmatpush1.msra.mxu0 %v191
  %532 = vmatprep.subr.mxu0 %v196
  %533 = vmatpush1.msra.mxu0 %v195
  %534 = vmatprep.subr.mxu0 %v200
  %535 = vmatpush1.msra.mxu0 %v199
  %536 = vmatprep.subr.mxu0 %v204
  %537 = vmatpush1.msra.mxu0 %v203
  %538 = vmatprep.subr.mxu0 %v208
  %539 = vmatpush1.msra.mxu0 %v207
  %540 = vmatprep.subr.mxu0 %v212
  %541 = vmatpush1.msra.mxu0 %v211
  %542 = vmatprep.subr.mxu0 %v216
  %543 = vmatpush1.msra.mxu0 %v215
  %544 = vmatprep.subr.mxu0 %v220
  %545 = vmatpush1.msra.mxu0 %v219
  %546 = vmatprep.subr.mxu0 %v224
  %547 = vmatpush1.msra.mxu0 %v223
  %548 = vmatprep.subr.mxu0 %v228
  %549 = vmatpush1.msra.mxu0 %v227
  %550 = vmatprep.subr.mxu0 %v232
  %551 = vmatpush1.msra.mxu0 %v231
  %552 = vmatprep.subr.mxu0 %v236
  %553 = vmatpush1.msra.mxu0 %v235
  %554 = vmatprep.subr.mxu0 %v240
  %555 = vmatpush1.msra.mxu0 %v239
  %556 = vmatprep.subr.mxu0 %v244
  %557 = vmatpush1.msra.mxu0 %v243
  %558 = vmatprep.subr.mxu0 %v248
  %559 = vmatpush1.msra.mxu0 %v247
  %560 = vmatprep.subr.mxu0 %v252
  %561 = vmatpush1.msra.mxu0 %v251
  %562 = vmatprep.subr.mxu0 %v256
  %563 = vmatpush1.msra.mxu0 %v255
  %564 = vmatprep.subr.mxu0 %v260
  %565 = vmatpush1.msra.mxu0 %v259
  %566 = vmatprep.subr.mxu0 %v264
  %567 = vmatpush1.msra.mxu0 %v263
  %568 = vmatprep.subr.mxu0 %v268
  %569 = vmatpush1.msra.mxu0 %v267
  %570 = vmatprep.subr.mxu0 %v272
  %571 = vmatpush1.msra.mxu0 %v271
  %572 = vmatprep.subr.mxu0 %v276
  %573 = vmatpush1.msra.mxu0 %v275
  %574 = vmatprep.subr.mxu0 %v280
  %575 = vmatpush1.msra.mxu0 %v279
  %576 = vmatprep.mubr.f32.mxu0 %v20
  %577 = vmatmul.mubr.f32.gmra.mrb[0].mxu0 %v19
  %v578 = vpop.f32.mrb[0].mxu0
  %v579 = vadd.f32 %v502, %v578
  %v580 = vpop.f32.mrb[0].mxu0
  %v581 = vadd.f32 %v504, %v580
  %582 = vmatprep.mubr.f32.mxu0 %v24
  %583 = vmatmul.mubr.f32.gmra.mrb[0].mxu0 %v23
  %v584 = vpop.f32.mrb[0].mxu0
  %v585 = vadd.f32 %v508, %v584
  %v586 = vpop.f32.mrb[0].mxu0
  %v587 = vadd.f32 %v510, %v586
  %588 = vdwg.mxu0
  %v589 = vadd.f32 %v425, %v427
  %v590 = vadd.f32 %v589, %v579
  %v591 = vadd.f32 %v590, %v581
  %592 = vadd.xlane.f32.xlu0 %v591
  %v593 = vpop.xlane.xlu0 %592
  %v594 = vadd.f32 %v431, %v433
  %v595 = vadd.f32 %v594, %v585
  %v596 = vadd.f32 %v595, %v587
  %597 = vadd.xlane.f32.xlu0 %v596
  %v598 = vpop.xlane.xlu0 %597
  %v599 = vrcp.pop 512.0
  %v600 = vmul.f32 %v593, %v599
  %v601 = vmul.f32 %v598, %v599
  %v602 = vmul.f32 %v425, %v425
  %v603 = vmul.f32 %v427, %v427
  %v604 = vmul.f32 %v579, %v579
  %v605 = vmul.f32 %v581, %v581
  %v606 = vmul.f32 %v431, %v431
  %v607 = vmul.f32 %v433, %v433
  %v608 = vmul.f32 %v585, %v585
  %v609 = vmul.f32 %v587, %v587
  %v610 = vadd.f32 %v602, %v603
  %v611 = vadd.f32 %v610, %v604
  %v612 = vadd.f32 %v611, %v605
  %613 = vadd.xlane.f32.xlu0 %v612
  %v614 = vpop.xlane.xlu0 %613
  %v615 = vadd.f32 %v606, %v607
  %v616 = vadd.f32 %v615, %v608
  %v617 = vadd.f32 %v616, %v609
  %618 = vadd.xlane.f32.xlu0 %v617
  %v619 = vpop.xlane.xlu0 %618
  %v620 = vmul.f32 %v614, %v599
  %v621 = vmul.f32 %v619, %v599
  %v622 = vmul.f32 %v600, %v600
  %v623 = vmul.f32 %v601, %v601
  %v624 = vsub.f32 %v620, %v622
  %v625 = vsub.f32 %v621, %v623
  %v626 = vmax.f32 %v624, 0.0
  %v627 = vmax.f32 %v625, 0.0
  %v628 = vsub.f32 %v425, %v600
  %v629 = vsub.f32 %v427, %v600
  %v630 = vsub.f32 %v579, %v600
  %v631 = vsub.f32 %v581, %v600
  %v632 = vsub.f32 %v431, %v601
  %v633 = vsub.f32 %v433, %v601
  %v634 = vsub.f32 %v585, %v601
  %v635 = vsub.f32 %v587, %v601
  %v636 = vadd.f32 %v626, 1e-05
  %v637 = vadd.f32 %v627, 1e-05
  %v638 = vrsqrt.pop %v636
  %v639 = vrsqrt.pop %v637
  %v640 = vmul.f32 %v628, %v638
  %v641 = vmul.f32 %v629, %v638
  %v642 = vmul.f32 %v630, %v638
  %v643 = vmul.f32 %v631, %v638
  %v644 = vmul.f32 %v632, %v639
  %v645 = vmul.f32 %v633, %v639
  %v646 = vmul.f32 %v634, %v639
  %v647 = vmul.f32 %v635, %v639
  %v648 = vld [vmem:[%s2] sm:$0xff]
  %v649 = vld [vmem:[%s2 + $0x8] sm:$0xff]
  %651 = vset.pattern.permute.xlu0 0
  %652 = vperm.xlu0 %651, %v648
  %v653 = vpop.permute.xlu0 %652
  %656 = vset.pattern.permute.xlu0 0
  %657 = vperm.xlu0 %656, %v649
  %v658 = vpop.permute.xlu0 %657
  %v660 = vmul.f32 %v640, %v653
  %v661 = vmul.f32 %v641, %v653
  %v662 = vmul.f32 %v642, %v653
  %v663 = vmul.f32 %v643, %v653
  %v664 = vmul.f32 %v644, %v658
  %v665 = vmul.f32 %v645, %v658
  %v666 = vmul.f32 %v646, %v658
  %v667 = vmul.f32 %v647, %v658
  %v668 = vld [vmem:[%s3] sm:$0xff]
  %v669 = vld [vmem:[%s3 + $0x8] sm:$0xff]
  %671 = vset.pattern.permute.xlu0 0
  %672 = vperm.xlu0 %671, %v668
  %v673 = vpop.permute.xlu0 %672
  %676 = vset.pattern.permute.xlu0 0
  %677 = vperm.xlu0 %676, %v669
  %v678 = vpop.permute.xlu0 %677
  %v680 = vadd.f32 %v660, %v673
  %v681 = vadd.f32 %v661, %v673
  %v682 = vadd.f32 %v662, %v673
  %v683 = vadd.f32 %v663, %v673
  %v684 = vadd.f32 %v664, %v678
  %v685 = vadd.f32 %v665, %v678
  %v686 = vadd.f32 %v666, %v678
  %v687 = vadd.f32 %v667, %v678
  %v688 = vmax.f32 %v680, 0.0
  %v689 = vmax.f32 %v681, 0.0
  %v690 = vmax.f32 %v682, 0.0
  %v691 = vmax.f32 %v683, 0.0
  %v692 = vmax.f32 %v684, 0.0
  %v693 = vmax.f32 %v685, 0.0
  %v694 = vmax.f32 %v686, 0.0
  %v695 = vmax.f32 %v687, 0.0
  %696 = vst [vmem:[%s4] sm:$0xff] %v688
  %697 = vst [vmem:[%s4 + $0x8] sm:$0xff] %v689
  %698 = vst [vmem:[%s4 + $0x10] sm:$0xff] %v690
  %699 = vst [vmem:[%s4 + $0x18] sm:$0xff] %v691
  %700 = vst [vmem:[%s4 + $0x20] sm:$0xff] %v692
  %701 = vst [vmem:[%s4 + $0x28] sm:$0xff] %v693
  %702 = vst [vmem:[%s4 + $0x30] sm:$0xff] %v694
  %703 = vst [vmem:[%s4 + $0x38] sm:$0xff] %v695
  // Predicated region
  $region18: #{_lambda_.7} parent=0 // pred_check
    _
  $region19: #{_lambda_.7} parent=0 // pred_check_branch
    %705 = sbr.rel (0) target = $region21
  $region20: #{_lambda_.7} parent=0 // pred_region
    _
  $region21: #{_lambda_.7} parent=0 // pred_fallthru
    _
  // Predicated region
  $region22: #{_lambda_.7} parent=0 // pred_check
    _
  $region23: #{_lambda_.7} parent=0 // pred_check_branch
    %707 = sbr.rel (0) target = $region25
  $region24: #{_lambda_.7} parent=0 // pred_region
    _
  $region25: #{_lambda_.7} parent=0 // pred_fallthru
    _

// kernel: _lambda_.8
$region0: #{_lambda_.8}
  #allocation0 [shape = 'u32[]', space=smem, size = 0x4, offset = 0x4, fixed_abs, tag = 'smem constant byte address 0x4 - core index']
  #allocation1 [shape = 'u32[144,128]{1,0:T(1,128)}', space=vmem, size = 0x12000, scoped, tag = 'internal scratch']
  %s0 = inlined_call_operand.vmem [shape: f32[256,2048], index: 0, kind: input, shape index: {}]
  %s1 = inlined_call_operand.vmem [shape: f32[8,256], index: 1, kind: input, shape index: {}]
  %s2 = inlined_call_operand.vmem [shape: f32[8,1], index: 2, kind: input, shape index: {}]
  %s3 = inlined_call_operand.vmem [shape: f32[8,1], index: 3, kind: input, shape index: {}]
  %s4 = inlined_call_operand.vmem [shape: f32[8,2048], index: 4, kind: output, shape index: {}]
  %s5 = sld [smem:[#allocation0]]
  $region26: #{_lambda_.8} parent=0
    _
  %s7 = ssub.s32 1, %s5
  %s8 = scalar_select 0, %s7, %s5
  // Predicated region
  $region2: #{_lambda_.8} parent=0 // pred_check
    _
  $region3: #{_lambda_.8} parent=0 // pred_check_branch
    %10 = sbr.rel (0) target = $region5
  $region4: #{_lambda_.8} parent=0 // pred_region
    _
  $region5: #{_lambda_.8} parent=0 // pred_fallthru
    _
  // Predicated region
  $region6: #{_lambda_.8} parent=0 // pred_check
    _
  $region7: #{_lambda_.8} parent=0 // pred_check_branch
    %12 = sbr.rel (0) target = $region9
  $region8: #{_lambda_.8} parent=0 // pred_region
    _
  $region9: #{_lambda_.8} parent=0 // pred_fallthru
    _
  // Predicated region
  $region10: #{_lambda_.8} parent=0 // pred_check
    _
  $region11: #{_lambda_.8} parent=0 // pred_check_branch
    %14 = sbr.rel (0) target = $region13
  $region12: #{_lambda_.8} parent=0 // pred_region
    _
  $region13: #{_lambda_.8} parent=0 // pred_fallthru
    _
  // Predicated region
  $region14: #{_lambda_.8} parent=0 // pred_check
    _
  $region15: #{_lambda_.8} parent=0 // pred_check_branch
    %16 = sbr.rel (0) target = $region17
  $region16: #{_lambda_.8} parent=0 // pred_region
    _
  $region17: #{_lambda_.8} parent=0 // pred_fallthru
    _
  %v17 = vld [vmem:[%s1] sm:$0xff]
  %v18 = vld [vmem:[%s1 + $0x8] sm:$0xff]
  %v19 = vld [vmem:[%s0] sm:$0xff]
  %v20 = vld [vmem:[%s0 + $0x8] sm:$0xff]
  %v21 = vld [vmem:[%s0 + $0x10] sm:$0xff]
  %v22 = vld [vmem:[%s0 + $0x18] sm:$0xff]
  %v23 = vld [vmem:[%s0 + $0x20] sm:$0xff]
  %v24 = vld [vmem:[%s0 + $0x28] sm:$0xff]
  %v25 = vld [vmem:[%s0 + $0x30] sm:$0xff]
  %v26 = vld [vmem:[%s0 + $0x38] sm:$0xff]
  %v27 = vld [vmem:[%s0 + $0x40] sm:$0xff]
  %v28 = vld [vmem:[%s0 + $0x48] sm:$0xff]
  %v29 = vld [vmem:[%s0 + $0x50] sm:$0xff]
  %v30 = vld [vmem:[%s0 + $0x58] sm:$0xff]
  %v31 = vld [vmem:[%s0 + $0x60] sm:$0xff]
  %v32 = vld [vmem:[%s0 + $0x68] sm:$0xff]
  %v33 = vld [vmem:[%s0 + $0x70] sm:$0xff]
  %v34 = vld [vmem:[%s0 + $0x78] sm:$0xff]
  %v35 = vld [vmem:[%s0 + $0x80] sm:$0xff]
  %v36 = vld [vmem:[%s0 + $0x88] sm:$0xff]
  %v37 = vld [vmem:[%s0 + $0x90] sm:$0xff]
  %v38 = vld [vmem:[%s0 + $0x98] sm:$0xff]
  %v39 = vld [vmem:[%s0 + $0xa0] sm:$0xff]
  %v40 = vld [vmem:[%s0 + $0xa8] sm:$0xff]
  %v41 = vld [vmem:[%s0 + $0xb0] sm:$0xff]
  %v42 = vld [vmem:[%s0 + $0xb8] sm:$0xff]
  %v43 = vld [vmem:[%s0 + $0xc0] sm:$0xff]
  %v44 = vld [vmem:[%s0 + $0xc8] sm:$0xff]
  %v45 = vld [vmem:[%s0 + $0xd0] sm:$0xff]
  %v46 = vld [vmem:[%s0 + $0xd8] sm:$0xff]
  %v47 = vld [vmem:[%s0 + $0xe0] sm:$0xff]
  %v48 = vld [vmem:[%s0 + $0xe8] sm:$0xff]
  %v49 = vld [vmem:[%s0 + $0xf0] sm:$0xff]
  %v50 = vld [vmem:[%s0 + $0xf8] sm:$0xff]
  %v51 = vld [vmem:[%s0 + $0x100] sm:$0xff]
  %v52 = vld [vmem:[%s0 + $0x108] sm:$0xff]
  %v53 = vld [vmem:[%s0 + $0x110] sm:$0xff]
  %v54 = vld [vmem:[%s0 + $0x118] sm:$0xff]
  %v55 = vld [vmem:[%s0 + $0x120] sm:$0xff]
  %v56 = vld [vmem:[%s0 + $0x128] sm:$0xff]
  %v57 = vld [vmem:[%s0 + $0x130] sm:$0xff]
  %v58 = vld [vmem:[%s0 + $0x138] sm:$0xff]
  %v59 = vld [vmem:[%s0 + $0x140] sm:$0xff]
  %v60 = vld [vmem:[%s0 + $0x148] sm:$0xff]
  %v61 = vld [vmem:[%s0 + $0x150] sm:$0xff]
  %v62 = vld [vmem:[%s0 + $0x158] sm:$0xff]
  %v63 = vld [vmem:[%s0 + $0x160] sm:$0xff]
  %v64 = vld [vmem:[%s0 + $0x168] sm:$0xff]
  %v65 = vld [vmem:[%s0 + $0x170] sm:$0xff]
  %v66 = vld [vmem:[%s0 + $0x178] sm:$0xff]
  %v67 = vld [vmem:[%s0 + $0x180] sm:$0xff]
  %v68 = vld [vmem:[%s0 + $0x188] sm:$0xff]
  %v69 = vld [vmem:[%s0 + $0x190] sm:$0xff]
  %v70 = vld [vmem:[%s0 + $0x198] sm:$0xff]
  %v71 = vld [vmem:[%s0 + $0x1a0] sm:$0xff]
  %v72 = vld [vmem:[%s0 + $0x1a8] sm:$0xff]
  %v73 = vld [vmem:[%s0 + $0x1b0] sm:$0xff]
  %v74 = vld [vmem:[%s0 + $0x1b8] sm:$0xff]
  %v75 = vld [vmem:[%s0 + $0x1c0] sm:$0xff]
  %v76 = vld [vmem:[%s0 + $0x1c8] sm:$0xff]
  %v77 = vld [vmem:[%s0 + $0x1d0] sm:$0xff]
  %v78 = vld [vmem:[%s0 + $0x1d8] sm:$0xff]
  %v79 = vld [vmem:[%s0 + $0x1e0] sm:$0xff]
  %v80 = vld [vmem:[%s0 + $0x1e8] sm:$0xff]
  %v81 = vld [vmem:[%s0 + $0x1f0] sm:$0xff]
  %v82 = vld [vmem:[%s0 + $0x1f8] sm:$0xff]
  %v83 = vld [vmem:[%s0 + $0x200] sm:$0xff]
  %v84 = vld [vmem:[%s0 + $0x208] sm:$0xff]
  %v85 = vld [vmem:[%s0 + $0x210] sm:$0xff]
  %v86 = vld [vmem:[%s0 + $0x218] sm:$0xff]
  %v87 = vld [vmem:[%s0 + $0x220] sm:$0xff]
  %v88 = vld [vmem:[%s0 + $0x228] sm:$0xff]
  %v89 = vld [vmem:[%s0 + $0x230] sm:$0xff]
  %v90 = vld [vmem:[%s0 + $0x238] sm:$0xff]
  %v91 = vld [vmem:[%s0 + $0x240] sm:$0xff]
  %v92 = vld [vmem:[%s0 + $0x248] sm:$0xff]
  %v93 = vld [vmem:[%s0 + $0x250] sm:$0xff]
  %v94 = vld [vmem:[%s0 + $0x258] sm:$0xff]
  %v95 = vld [vmem:[%s0 + $0x260] sm:$0xff]
  %v96 = vld [vmem:[%s0 + $0x268] sm:$0xff]
  %v97 = vld [vmem:[%s0 + $0x270] sm:$0xff]
  %v98 = vld [vmem:[%s0 + $0x278] sm:$0xff]
  %v99 = vld [vmem:[%s0 + $0x280] sm:$0xff]
  %v100 = vld [vmem:[%s0 + $0x288] sm:$0xff]
  %v101 = vld [vmem:[%s0 + $0x290] sm:$0xff]
  %v102 = vld [vmem:[%s0 + $0x298] sm:$0xff]
  %v103 = vld [vmem:[%s0 + $0x2a0] sm:$0xff]
  %v104 = vld [vmem:[%s0 + $0x2a8] sm:$0xff]
  %v105 = vld [vmem:[%s0 + $0x2b0] sm:$0xff]
  %v106 = vld [vmem:[%s0 + $0x2b8] sm:$0xff]
  %v107 = vld [vmem:[%s0 + $0x2c0] sm:$0xff]
  %v108 = vld [vmem:[%s0 + $0x2c8] sm:$0xff]
  %v109 = vld [vmem:[%s0 + $0x2d0] sm:$0xff]
  %v110 = vld [vmem:[%s0 + $0x2d8] sm:$0xff]
  %v111 = vld [vmem:[%s0 + $0x2e0] sm:$0xff]
  %v112 = vld [vmem:[%s0 + $0x2e8] sm:$0xff]
  %v113 = vld [vmem:[%s0 + $0x2f0] sm:$0xff]
  %v114 = vld [vmem:[%s0 + $0x2f8] sm:$0xff]
  %v115 = vld [vmem:[%s0 + $0x300] sm:$0xff]
  %v116 = vld [vmem:[%s0 + $0x308] sm:$0xff]
  %v117 = vld [vmem:[%s0 + $0x310] sm:$0xff]
  %v118 = vld [vmem:[%s0 + $0x318] sm:$0xff]
  %v119 = vld [vmem:[%s0 + $0x320] sm:$0xff]
  %v120 = vld [vmem:[%s0 + $0x328] sm:$0xff]
  %v121 = vld [vmem:[%s0 + $0x330] sm:$0xff]
  %v122 = vld [vmem:[%s0 + $0x338] sm:$0xff]
  %v123 = vld [vmem:[%s0 + $0x340] sm:$0xff]
  %v124 = vld [vmem:[%s0 + $0x348] sm:$0xff]
  %v125 = vld [vmem:[%s0 + $0x350] sm:$0xff]
  %v126 = vld [vmem:[%s0 + $0x358] sm:$0xff]
  %v127 = vld [vmem:[%s0 + $0x360] sm:$0xff]
  %v128 = vld [vmem:[%s0 + $0x368] sm:$0xff]
  %v129 = vld [vmem:[%s0 + $0x370] sm:$0xff]
  %v130 = vld [vmem:[%s0 + $0x378] sm:$0xff]
  %v131 = vld [vmem:[%s0 + $0x380] sm:$0xff]
  %v132 = vld [vmem:[%s0 + $0x388] sm:$0xff]
  %v133 = vld [vmem:[%s0 + $0x390] sm:$0xff]
  %v134 = vld [vmem:[%s0 + $0x398] sm:$0xff]
  %v135 = vld [vmem:[%s0 + $0x3a0] sm:$0xff]
  %v136 = vld [vmem:[%s0 + $0x3a8] sm:$0xff]
  %v137 = vld [vmem:[%s0 + $0x3b0] sm:$0xff]
  %v138 = vld [vmem:[%s0 + $0x3b8] sm:$0xff]
  %v139 = vld [vmem:[%s0 + $0x3c0] sm:$0xff]
  %v140 = vld [vmem:[%s0 + $0x3c8] sm:$0xff]
  %v141 = vld [vmem:[%s0 + $0x3d0] sm:$0xff]
  %v142 = vld [vmem:[%s0 + $0x3d8] sm:$0xff]
  %v143 = vld [vmem:[%s0 + $0x3e0] sm:$0xff]
  %v144 = vld [vmem:[%s0 + $0x3e8] sm:$0xff]
  %v145 = vld [vmem:[%s0 + $0x3f0] sm:$0xff]
  %v146 = vld [vmem:[%s0 + $0x3f8] sm:$0xff]
  %v147 = vld [vmem:[%s0 + $0x400] sm:$0xff]
  %v148 = vld [vmem:[%s0 + $0x408] sm:$0xff]
  %v149 = vld [vmem:[%s0 + $0x410] sm:$0xff]
  %v150 = vld [vmem:[%s0 + $0x418] sm:$0xff]
  %v151 = vld [vmem:[%s0 + $0x420] sm:$0xff]
  %v152 = vld [vmem:[%s0 + $0x428] sm:$0xff]
  %v153 = vld [vmem:[%s0 + $0x430] sm:$0xff]
  %v154 = vld [vmem:[%s0 + $0x438] sm:$0xff]
  %v155 = vld [vmem:[%s0 + $0x440] sm:$0xff]
  %v156 = vld [vmem:[%s0 + $0x448] sm:$0xff]
  %v157 = vld [vmem:[%s0 + $0x450] sm:$0xff]
  %v158 = vld [vmem:[%s0 + $0x458] sm:$0xff]
  %v159 = vld [vmem:[%s0 + $0x460] sm:$0xff]
  %v160 = vld [vmem:[%s0 + $0x468] sm:$0xff]
  %v161 = vld [vmem:[%s0 + $0x470] sm:$0xff]
  %v162 = vld [vmem:[%s0 + $0x478] sm:$0xff]
  %v163 = vld [vmem:[%s0 + $0x480] sm:$0xff]
  %v164 = vld [vmem:[%s0 + $0x488] sm:$0xff]
  %v165 = vld [vmem:[%s0 + $0x490] sm:$0xff]
  %v166 = vld [vmem:[%s0 + $0x498] sm:$0xff]
  %v167 = vld [vmem:[%s0 + $0x4a0] sm:$0xff]
  %v168 = vld [vmem:[%s0 + $0x4a8] sm:$0xff]
  %v169 = vld [vmem:[%s0 + $0x4b0] sm:$0xff]
  %v170 = vld [vmem:[%s0 + $0x4b8] sm:$0xff]
  %v171 = vld [vmem:[%s0 + $0x4c0] sm:$0xff]
  %v172 = vld [vmem:[%s0 + $0x4c8] sm:$0xff]
  %v173 = vld [vmem:[%s0 + $0x4d0] sm:$0xff]
  %v174 = vld [vmem:[%s0 + $0x4d8] sm:$0xff]
  %v175 = vld [vmem:[%s0 + $0x4e0] sm:$0xff]
  %v176 = vld [vmem:[%s0 + $0x4e8] sm:$0xff]
  %v177 = vld [vmem:[%s0 + $0x4f0] sm:$0xff]
  %v178 = vld [vmem:[%s0 + $0x4f8] sm:$0xff]
  %v179 = vld [vmem:[%s0 + $0x500] sm:$0xff]
  %v180 = vld [vmem:[%s0 + $0x508] sm:$0xff]
  %v181 = vld [vmem:[%s0 + $0x510] sm:$0xff]
  %v182 = vld [vmem:[%s0 + $0x518] sm:$0xff]
  %v183 = vld [vmem:[%s0 + $0x520] sm:$0xff]
  %v184 = vld [vmem:[%s0 + $0x528] sm:$0xff]
  %v185 = vld [vmem:[%s0 + $0x530] sm:$0xff]
  %v186 = vld [vmem:[%s0 + $0x538] sm:$0xff]
  %v187 = vld [vmem:[%s0 + $0x540] sm:$0xff]
  %v188 = vld [vmem:[%s0 + $0x548] sm:$0xff]
  %v189 = vld [vmem:[%s0 + $0x550] sm:$0xff]
  %v190 = vld [vmem:[%s0 + $0x558] sm:$0xff]
  %v191 = vld [vmem:[%s0 + $0x560] sm:$0xff]
  %v192 = vld [vmem:[%s0 + $0x568] sm:$0xff]
  %v193 = vld [vmem:[%s0 + $0x570] sm:$0xff]
  %v194 = vld [vmem:[%s0 + $0x578] sm:$0xff]
  %v195 = vld [vmem:[%s0 + $0x580] sm:$0xff]
  %v196 = vld [vmem:[%s0 + $0x588] sm:$0xff]
  %v197 = vld [vmem:[%s0 + $0x590] sm:$0xff]
  %v198 = vld [vmem:[%s0 + $0x598] sm:$0xff]
  %v199 = vld [vmem:[%s0 + $0x5a0] sm:$0xff]
  %v200 = vld [vmem:[%s0 + $0x5a8] sm:$0xff]
  %v201 = vld [vmem:[%s0 + $0x5b0] sm:$0xff]
  %v202 = vld [vmem:[%s0 + $0x5b8] sm:$0xff]
  %v203 = vld [vmem:[%s0 + $0x5c0] sm:$0xff]
  %v204 = vld [vmem:[%s0 + $0x5c8] sm:$0xff]
  %v205 = vld [vmem:[%s0 + $0x5d0] sm:$0xff]
  %v206 = vld [vmem:[%s0 + $0x5d8] sm:$0xff]
  %v207 = vld [vmem:[%s0 + $0x5e0] sm:$0xff]
  %v208 = vld [vmem:[%s0 + $0x5e8] sm:$0xff]
  %v209 = vld [vmem:[%s0 + $0x5f0] sm:$0xff]
  %v210 = vld [vmem:[%s0 + $0x5f8] sm:$0xff]
  %v211 = vld [vmem:[%s0 + $0x600] sm:$0xff]
  %v212 = vld [vmem:[%s0 + $0x608] sm:$0xff]
  %v213 = vld [vmem:[%s0 + $0x610] sm:$0xff]
  %v214 = vld [vmem:[%s0 + $0x618] sm:$0xff]
  %v215 = vld [vmem:[%s0 + $0x620] sm:$0xff]
  %v216 = vld [vmem:[%s0 + $0x628] sm:$0xff]
  %v217 = vld [vmem:[%s0 + $0x630] sm:$0xff]
  %v218 = vld [vmem:[%s0 + $0x638] sm:$0xff]
  %v219 = vld [vmem:[%s0 + $0x640] sm:$0xff]
  %v220 = vld [vmem:[%s0 + $0x648] sm:$0xff]
  %v221 = vld [vmem:[%s0 + $0x650] sm:$0xff]
  %v222 = vld [vmem:[%s0 + $0x658] sm:$0xff]
  %v223 = vld [vmem:[%s0 + $0x660] sm:$0xff]
  %v224 = vld [vmem:[%s0 + $0x668] sm:$0xff]
  %v225 = vld [vmem:[%s0 + $0x670] sm:$0xff]
  %v226 = vld [vmem:[%s0 + $0x678] sm:$0xff]
  %v227 = vld [vmem:[%s0 + $0x680] sm:$0xff]
  %v228 = vld [vmem:[%s0 + $0x688] sm:$0xff]
  %v229 = vld [vmem:[%s0 + $0x690] sm:$0xff]
  %v230 = vld [vmem:[%s0 + $0x698] sm:$0xff]
  %v231 = vld [vmem:[%s0 + $0x6a0] sm:$0xff]
  %v232 = vld [vmem:[%s0 + $0x6a8] sm:$0xff]
  %v233 = vld [vmem:[%s0 + $0x6b0] sm:$0xff]
  %v234 = vld [vmem:[%s0 + $0x6b8] sm:$0xff]
  %v235 = vld [vmem:[%s0 + $0x6c0] sm:$0xff]
  %v236 = vld [vmem:[%s0 + $0x6c8] sm:$0xff]
  %v237 = vld [vmem:[%s0 + $0x6d0] sm:$0xff]
  %v238 = vld [vmem:[%s0 + $0x6d8] sm:$0xff]
  %v239 = vld [vmem:[%s0 + $0x6e0] sm:$0xff]
  %v240 = vld [vmem:[%s0 + $0x6e8] sm:$0xff]
  %v241 = vld [vmem:[%s0 + $0x6f0] sm:$0xff]
  %v242 = vld [vmem:[%s0 + $0x6f8] sm:$0xff]
  %v243 = vld [vmem:[%s0 + $0x700] sm:$0xff]
  %v244 = vld [vmem:[%s0 + $0x708] sm:$0xff]
  %v245 = vld [vmem:[%s0 + $0x710] sm:$0xff]
  %v246 = vld [vmem:[%s0 + $0x718] sm:$0xff]
  %v247 = vld [vmem:[%s0 + $0x720] sm:$0xff]
  %v248 = vld [vmem:[%s0 + $0x728] sm:$0xff]
  %v249 = vld [vmem:[%s0 + $0x730] sm:$0xff]
  %v250 = vld [vmem:[%s0 + $0x738] sm:$0xff]
  %v251 = vld [vmem:[%s0 + $0x740] sm:$0xff]
  %v252 = vld [vmem:[%s0 + $0x748] sm:$0xff]
  %v253 = vld [vmem:[%s0 + $0x750] sm:$0xff]
  %v254 = vld [vmem:[%s0 + $0x758] sm:$0xff]
  %v255 = vld [vmem:[%s0 + $0x760] sm:$0xff]
  %v256 = vld [vmem:[%s0 + $0x768] sm:$0xff]
  %v257 = vld [vmem:[%s0 + $0x770] sm:$0xff]
  %v258 = vld [vmem:[%s0 + $0x778] sm:$0xff]
  %v259 = vld [vmem:[%s0 + $0x780] sm:$0xff]
  %v260 = vld [vmem:[%s0 + $0x788] sm:$0xff]
  %v261 = vld [vmem:[%s0 + $0x790] sm:$0xff]
  %v262 = vld [vmem:[%s0 + $0x798] sm:$0xff]
  %v263 = vld [vmem:[%s0 + $0x7a0] sm:$0xff]
  %v264 = vld [vmem:[%s0 + $0x7a8] sm:$0xff]
  %v265 = vld [vmem:[%s0 + $0x7b0] sm:$0xff]
  %v266 = vld [vmem:[%s0 + $0x7b8] sm:$0xff]
  %v267 = vld [vmem:[%s0 + $0x7c0] sm:$0xff]
  %v268 = vld [vmem:[%s0 + $0x7c8] sm:$0xff]
  %v269 = vld [vmem:[%s0 + $0x7d0] sm:$0xff]
  %v270 = vld [vmem:[%s0 + $0x7d8] sm:$0xff]
  %v271 = vld [vmem:[%s0 + $0x7e0] sm:$0xff]
  %v272 = vld [vmem:[%s0 + $0x7e8] sm:$0xff]
  %v273 = vld [vmem:[%s0 + $0x7f0] sm:$0xff]
  %v274 = vld [vmem:[%s0 + $0x7f8] sm:$0xff]
  %v275 = vld [vmem:[%s0 + $0x800] sm:$0xff]
  %v276 = vld [vmem:[%s0 + $0x808] sm:$0xff]
  %v277 = vld [vmem:[%s0 + $0x810] sm:$0xff]
  %v278 = vld [vmem:[%s0 + $0x818] sm:$0xff]
  %v279 = vld [vmem:[%s0 + $0x820] sm:$0xff]
  %v280 = vld [vmem:[%s0 + $0x828] sm:$0xff]
  %v281 = vld [vmem:[%s0 + $0x830] sm:$0xff]
  %v282 = vld [vmem:[%s0 + $0x838] sm:$0xff]
  %v283 = vld [vmem:[%s0 + $0x840] sm:$0xff]
  %v284 = vld [vmem:[%s0 + $0x848] sm:$0xff]
  %v285 = vld [vmem:[%s0 + $0x850] sm:$0xff]
  %v286 = vld [vmem:[%s0 + $0x858] sm:$0xff]
  %v287 = vld [vmem:[%s0 + $0x860] sm:$0xff]
  %v288 = vld [vmem:[%s0 + $0x868] sm:$0xff]
  %v289 = vld [vmem:[%s0 + $0x870] sm:$0xff]
  %v290 = vld [vmem:[%s0 + $0x878] sm:$0xff]
  %v291 = vld [vmem:[%s0 + $0x880] sm:$0xff]
  %v292 = vld [vmem:[%s0 + $0x888] sm:$0xff]
  %v293 = vld [vmem:[%s0 + $0x890] sm:$0xff]
  %v294 = vld [vmem:[%s0 + $0x898] sm:$0xff]
  %v295 = vld [vmem:[%s0 + $0x8a0] sm:$0xff]
  %v296 = vld [vmem:[%s0 + $0x8a8] sm:$0xff]
  %v297 = vld [vmem:[%s0 + $0x8b0] sm:$0xff]
  %v298 = vld [vmem:[%s0 + $0x8b8] sm:$0xff]
  %v299 = vld [vmem:[%s0 + $0x8c0] sm:$0xff]
  %v300 = vld [vmem:[%s0 + $0x8c8] sm:$0xff]
  %v301 = vld [vmem:[%s0 + $0x8d0] sm:$0xff]
  %v302 = vld [vmem:[%s0 + $0x8d8] sm:$0xff]
  %v303 = vld [vmem:[%s0 + $0x8e0] sm:$0xff]
  %v304 = vld [vmem:[%s0 + $0x8e8] sm:$0xff]
  %v305 = vld [vmem:[%s0 + $0x8f0] sm:$0xff]
  %v306 = vld [vmem:[%s0 + $0x8f8] sm:$0xff]
  %v307 = vld [vmem:[%s0 + $0x900] sm:$0xff]
  %v308 = vld [vmem:[%s0 + $0x908] sm:$0xff]
  %v309 = vld [vmem:[%s0 + $0x910] sm:$0xff]
  %v310 = vld [vmem:[%s0 + $0x918] sm:$0xff]
  %v311 = vld [vmem:[%s0 + $0x920] sm:$0xff]
  %v312 = vld [vmem:[%s0 + $0x928] sm:$0xff]
  %v313 = vld [vmem:[%s0 + $0x930] sm:$0xff]
  %v314 = vld [vmem:[%s0 + $0x938] sm:$0xff]
  %v315 = vld [vmem:[%s0 + $0x940] sm:$0xff]
  %v316 = vld [vmem:[%s0 + $0x948] sm:$0xff]
  %v317 = vld [vmem:[%s0 + $0x950] sm:$0xff]
  %v318 = vld [vmem:[%s0 + $0x958] sm:$0xff]
  %v319 = vld [vmem:[%s0 + $0x960] sm:$0xff]
  %v320 = vld [vmem:[%s0 + $0x968] sm:$0xff]
  %v321 = vld [vmem:[%s0 + $0x970] sm:$0xff]
  %v322 = vld [vmem:[%s0 + $0x978] sm:$0xff]
  %v323 = vld [vmem:[%s0 + $0x980] sm:$0xff]
  %v324 = vld [vmem:[%s0 + $0x988] sm:$0xff]
  %v325 = vld [vmem:[%s0 + $0x990] sm:$0xff]
  %v326 = vld [vmem:[%s0 + $0x998] sm:$0xff]
  %v327 = vld [vmem:[%s0 + $0x9a0] sm:$0xff]
  %v328 = vld [vmem:[%s0 + $0x9a8] sm:$0xff]
  %v329 = vld [vmem:[%s0 + $0x9b0] sm:$0xff]
  %v330 = vld [vmem:[%s0 + $0x9b8] sm:$0xff]
  %v331 = vld [vmem:[%s0 + $0x9c0] sm:$0xff]
  %v332 = vld [vmem:[%s0 + $0x9c8] sm:$0xff]
  %v333 = vld [vmem:[%s0 + $0x9d0] sm:$0xff]
  %v334 = vld [vmem:[%s0 + $0x9d8] sm:$0xff]
  %v335 = vld [vmem:[%s0 + $0x9e0] sm:$0xff]
  %v336 = vld [vmem:[%s0 + $0x9e8] sm:$0xff]
  %v337 = vld [vmem:[%s0 + $0x9f0] sm:$0xff]
  %v338 = vld [vmem:[%s0 + $0x9f8] sm:$0xff]
  %v339 = vld [vmem:[%s0 + $0xa00] sm:$0xff]
  %v340 = vld [vmem:[%s0 + $0xa08] sm:$0xff]
  %v341 = vld [vmem:[%s0 + $0xa10] sm:$0xff]
  %v342 = vld [vmem:[%s0 + $0xa18] sm:$0xff]
  %v343 = vld [vmem:[%s0 + $0xa20] sm:$0xff]
  %v344 = vld [vmem:[%s0 + $0xa28] sm:$0xff]
  %v345 = vld [vmem:[%s0 + $0xa30] sm:$0xff]
  %v346 = vld [vmem:[%s0 + $0xa38] sm:$0xff]
  %v347 = vld [vmem:[%s0 + $0xa40] sm:$0xff]
  %v348 = vld [vmem:[%s0 + $0xa48] sm:$0xff]
  %v349 = vld [vmem:[%s0 + $0xa50] sm:$0xff]
  %v350 = vld [vmem:[%s0 + $0xa58] sm:$0xff]
  %v351 = vld [vmem:[%s0 + $0xa60] sm:$0xff]
  %v352 = vld [vmem:[%s0 + $0xa68] sm:$0xff]
  %v353 = vld [vmem:[%s0 + $0xa70] sm:$0xff]
  %v354 = vld [vmem:[%s0 + $0xa78] sm:$0xff]
  %v355 = vld [vmem:[%s0 + $0xa80] sm:$0xff]
  %v356 = vld [vmem:[%s0 + $0xa88] sm:$0xff]
  %v357 = vld [vmem:[%s0 + $0xa90] sm:$0xff]
  %v358 = vld [vmem:[%s0 + $0xa98] sm:$0xff]
  %v359 = vld [vmem:[%s0 + $0xaa0] sm:$0xff]
  %v360 = vld [vmem:[%s0 + $0xaa8] sm:$0xff]
  %v361 = vld [vmem:[%s0 + $0xab0] sm:$0xff]
  %v362 = vld [vmem:[%s0 + $0xab8] sm:$0xff]
  %v363 = vld [vmem:[%s0 + $0xac0] sm:$0xff]
  %v364 = vld [vmem:[%s0 + $0xac8] sm:$0xff]
  %v365 = vld [vmem:[%s0 + $0xad0] sm:$0xff]
  %v366 = vld [vmem:[%s0 + $0xad8] sm:$0xff]
  %v367 = vld [vmem:[%s0 + $0xae0] sm:$0xff]
  %v368 = vld [vmem:[%s0 + $0xae8] sm:$0xff]
  %v369 = vld [vmem:[%s0 + $0xaf0] sm:$0xff]
  %v370 = vld [vmem:[%s0 + $0xaf8] sm:$0xff]
  %v371 = vld [vmem:[%s0 + $0xb00] sm:$0xff]
  %v372 = vld [vmem:[%s0 + $0xb08] sm:$0xff]
  %v373 = vld [vmem:[%s0 + $0xb10] sm:$0xff]
  %v374 = vld [vmem:[%s0 + $0xb18] sm:$0xff]
  %v375 = vld [vmem:[%s0 + $0xb20] sm:$0xff]
  %v376 = vld [vmem:[%s0 + $0xb28] sm:$0xff]
  %v377 = vld [vmem:[%s0 + $0xb30] sm:$0xff]
  %v378 = vld [vmem:[%s0 + $0xb38] sm:$0xff]
  %v379 = vld [vmem:[%s0 + $0xb40] sm:$0xff]
  %v380 = vld [vmem:[%s0 + $0xb48] sm:$0xff]
  %v381 = vld [vmem:[%s0 + $0xb50] sm:$0xff]
  %v382 = vld [vmem:[%s0 + $0xb58] sm:$0xff]
  %v383 = vld [vmem:[%s0 + $0xb60] sm:$0xff]
  %v384 = vld [vmem:[%s0 + $0xb68] sm:$0xff]
  %v385 = vld [vmem:[%s0 + $0xb70] sm:$0xff]
  %v386 = vld [vmem:[%s0 + $0xb78] sm:$0xff]
  %v387 = vld [vmem:[%s0 + $0xb80] sm:$0xff]
  %v388 = vld [vmem:[%s0 + $0xb88] sm:$0xff]
  %v389 = vld [vmem:[%s0 + $0xb90] sm:$0xff]
  %v390 = vld [vmem:[%s0 + $0xb98] sm:$0xff]
  %v391 = vld [vmem:[%s0 + $0xba0] sm:$0xff]
  %v392 = vld [vmem:[%s0 + $0xba8] sm:$0xff]
  %v393 = vld [vmem:[%s0 + $0xbb0] sm:$0xff]
  %v394 = vld [vmem:[%s0 + $0xbb8] sm:$0xff]
  %v395 = vld [vmem:[%s0 + $0xbc0] sm:$0xff]
  %v396 = vld [vmem:[%s0 + $0xbc8] sm:$0xff]
  %v397 = vld [vmem:[%s0 + $0xbd0] sm:$0xff]
  %v398 = vld [vmem:[%s0 + $0xbd8] sm:$0xff]
  %v399 = vld [vmem:[%s0 + $0xbe0] sm:$0xff]
  %v400 = vld [vmem:[%s0 + $0xbe8] sm:$0xff]
  %v401 = vld [vmem:[%s0 + $0xbf0] sm:$0xff]
  %v402 = vld [vmem:[%s0 + $0xbf8] sm:$0xff]
  %v403 = vld [vmem:[%s0 + $0xc00] sm:$0xff]
  %v404 = vld [vmem:[%s0 + $0xc08] sm:$0xff]
  %v405 = vld [vmem:[%s0 + $0xc10] sm:$0xff]
  %v406 = vld [vmem:[%s0 + $0xc18] sm:$0xff]
  %v407 = vld [vmem:[%s0 + $0xc20] sm:$0xff]
  %v408 = vld [vmem:[%s0 + $0xc28] sm:$0xff]
  %v409 = vld [vmem:[%s0 + $0xc30] sm:$0xff]
  %v410 = vld [vmem:[%s0 + $0xc38] sm:$0xff]
  %v411 = vld [vmem:[%s0 + $0xc40] sm:$0xff]
  %v412 = vld [vmem:[%s0 + $0xc48] sm:$0xff]
  %v413 = vld [vmem:[%s0 + $0xc50] sm:$0xff]
  %v414 = vld [vmem:[%s0 + $0xc58] sm:$0xff]
  %v415 = vld [vmem:[%s0 + $0xc60] sm:$0xff]
  %v416 = vld [vmem:[%s0 + $0xc68] sm:$0xff]
  %v417 = vld [vmem:[%s0 + $0xc70] sm:$0xff]
  %v418 = vld [vmem:[%s0 + $0xc78] sm:$0xff]
  %v419 = vld [vmem:[%s0 + $0xc80] sm:$0xff]
  %v420 = vld [vmem:[%s0 + $0xc88] sm:$0xff]
  %v421 = vld [vmem:[%s0 + $0xc90] sm:$0xff]
  %v422 = vld [vmem:[%s0 + $0xc98] sm:$0xff]
  %v423 = vld [vmem:[%s0 + $0xca0] sm:$0xff]
  %v424 = vld [vmem:[%s0 + $0xca8] sm:$0xff]
  %v425 = vld [vmem:[%s0 + $0xcb0] sm:$0xff]
  %v426 = vld [vmem:[%s0 + $0xcb8] sm:$0xff]
  %v427 = vld [vmem:[%s0 + $0xcc0] sm:$0xff]
  %v428 = vld [vmem:[%s0 + $0xcc8] sm:$0xff]
  %v429 = vld [vmem:[%s0 + $0xcd0] sm:$0xff]
  %v430 = vld [vmem:[%s0 + $0xcd8] sm:$0xff]
  %v431 = vld [vmem:[%s0 + $0xce0] sm:$0xff]
  %v432 = vld [vmem:[%s0 + $0xce8] sm:$0xff]
  %v433 = vld [vmem:[%s0 + $0xcf0] sm:$0xff]
  %v434 = vld [vmem:[%s0 + $0xcf8] sm:$0xff]
  %v435 = vld [vmem:[%s0 + $0xd00] sm:$0xff]
  %v436 = vld [vmem:[%s0 + $0xd08] sm:$0xff]
  %v437 = vld [vmem:[%s0 + $0xd10] sm:$0xff]
  %v438 = vld [vmem:[%s0 + $0xd18] sm:$0xff]
  %v439 = vld [vmem:[%s0 + $0xd20] sm:$0xff]
  %v440 = vld [vmem:[%s0 + $0xd28] sm:$0xff]
  %v441 = vld [vmem:[%s0 + $0xd30] sm:$0xff]
  %v442 = vld [vmem:[%s0 + $0xd38] sm:$0xff]
  %v443 = vld [vmem:[%s0 + $0xd40] sm:$0xff]
  %v444 = vld [vmem:[%s0 + $0xd48] sm:$0xff]
  %v445 = vld [vmem:[%s0 + $0xd50] sm:$0xff]
  %v446 = vld [vmem:[%s0 + $0xd58] sm:$0xff]
  %v447 = vld [vmem:[%s0 + $0xd60] sm:$0xff]
  %v448 = vld [vmem:[%s0 + $0xd68] sm:$0xff]
  %v449 = vld [vmem:[%s0 + $0xd70] sm:$0xff]
  %v450 = vld [vmem:[%s0 + $0xd78] sm:$0xff]
  %v451 = vld [vmem:[%s0 + $0xd80] sm:$0xff]
  %v452 = vld [vmem:[%s0 + $0xd88] sm:$0xff]
  %v453 = vld [vmem:[%s0 + $0xd90] sm:$0xff]
  %v454 = vld [vmem:[%s0 + $0xd98] sm:$0xff]
  %v455 = vld [vmem:[%s0 + $0xda0] sm:$0xff]
  %v456 = vld [vmem:[%s0 + $0xda8] sm:$0xff]
  %v457 = vld [vmem:[%s0 + $0xdb0] sm:$0xff]
  %v458 = vld [vmem:[%s0 + $0xdb8] sm:$0xff]
  %v459 = vld [vmem:[%s0 + $0xdc0] sm:$0xff]
  %v460 = vld [vmem:[%s0 + $0xdc8] sm:$0xff]
  %v461 = vld [vmem:[%s0 + $0xdd0] sm:$0xff]
  %v462 = vld [vmem:[%s0 + $0xdd8] sm:$0xff]
  %v463 = vld [vmem:[%s0 + $0xde0] sm:$0xff]
  %v464 = vld [vmem:[%s0 + $0xde8] sm:$0xff]
  %v465 = vld [vmem:[%s0 + $0xdf0] sm:$0xff]
  %v466 = vld [vmem:[%s0 + $0xdf8] sm:$0xff]
  %v467 = vld [vmem:[%s0 + $0xe00] sm:$0xff]
  %v468 = vld [vmem:[%s0 + $0xe08] sm:$0xff]
  %v469 = vld [vmem:[%s0 + $0xe10] sm:$0xff]
  %v470 = vld [vmem:[%s0 + $0xe18] sm:$0xff]
  %v471 = vld [vmem:[%s0 + $0xe20] sm:$0xff]
  %v472 = vld [vmem:[%s0 + $0xe28] sm:$0xff]
  %v473 = vld [vmem:[%s0 + $0xe30] sm:$0xff]
  %v474 = vld [vmem:[%s0 + $0xe38] sm:$0xff]
  %v475 = vld [vmem:[%s0 + $0xe40] sm:$0xff]
  %v476 = vld [vmem:[%s0 + $0xe48] sm:$0xff]
  %v477 = vld [vmem:[%s0 + $0xe50] sm:$0xff]
  %v478 = vld [vmem:[%s0 + $0xe58] sm:$0xff]
  %v479 = vld [vmem:[%s0 + $0xe60] sm:$0xff]
  %v480 = vld [vmem:[%s0 + $0xe68] sm:$0xff]
  %v481 = vld [vmem:[%s0 + $0xe70] sm:$0xff]
  %v482 = vld [vmem:[%s0 + $0xe78] sm:$0xff]
  %v483 = vld [vmem:[%s0 + $0xe80] sm:$0xff]
  %v484 = vld [vmem:[%s0 + $0xe88] sm:$0xff]
  %v485 = vld [vmem:[%s0 + $0xe90] sm:$0xff]
  %v486 = vld [vmem:[%s0 + $0xe98] sm:$0xff]
  %v487 = vld [vmem:[%s0 + $0xea0] sm:$0xff]
  %v488 = vld [vmem:[%s0 + $0xea8] sm:$0xff]
  %v489 = vld [vmem:[%s0 + $0xeb0] sm:$0xff]
  %v490 = vld [vmem:[%s0 + $0xeb8] sm:$0xff]
  %v491 = vld [vmem:[%s0 + $0xec0] sm:$0xff]
  %v492 = vld [vmem:[%s0 + $0xec8] sm:$0xff]
  %v493 = vld [vmem:[%s0 + $0xed0] sm:$0xff]
  %v494 = vld [vmem:[%s0 + $0xed8] sm:$0xff]
  %v495 = vld [vmem:[%s0 + $0xee0] sm:$0xff]
  %v496 = vld [vmem:[%s0 + $0xee8] sm:$0xff]
  %v497 = vld [vmem:[%s0 + $0xef0] sm:$0xff]
  %v498 = vld [vmem:[%s0 + $0xef8] sm:$0xff]
  %v499 = vld [vmem:[%s0 + $0xf00] sm:$0xff]
  %v500 = vld [vmem:[%s0 + $0xf08] sm:$0xff]
  %v501 = vld [vmem:[%s0 + $0xf10] sm:$0xff]
  %v502 = vld [vmem:[%s0 + $0xf18] sm:$0xff]
  %v503 = vld [vmem:[%s0 + $0xf20] sm:$0xff]
  %v504 = vld [vmem:[%s0 + $0xf28] sm:$0xff]
  %v505 = vld [vmem:[%s0 + $0xf30] sm:$0xff]
  %v506 = vld [vmem:[%s0 + $0xf38] sm:$0xff]
  %v507 = vld [vmem:[%s0 + $0xf40] sm:$0xff]
  %v508 = vld [vmem:[%s0 + $0xf48] sm:$0xff]
  %v509 = vld [vmem:[%s0 + $0xf50] sm:$0xff]
  %v510 = vld [vmem:[%s0 + $0xf58] sm:$0xff]
  %v511 = vld [vmem:[%s0 + $0xf60] sm:$0xff]
  %v512 = vld [vmem:[%s0 + $0xf68] sm:$0xff]
  %v513 = vld [vmem:[%s0 + $0xf70] sm:$0xff]
  %v514 = vld [vmem:[%s0 + $0xf78] sm:$0xff]
  %v515 = vld [vmem:[%s0 + $0xf80] sm:$0xff]
  %v516 = vld [vmem:[%s0 + $0xf88] sm:$0xff]
  %v517 = vld [vmem:[%s0 + $0xf90] sm:$0xff]
  %v518 = vld [vmem:[%s0 + $0xf98] sm:$0xff]
  %v519 = vld [vmem:[%s0 + $0xfa0] sm:$0xff]
  %v520 = vld [vmem:[%s0 + $0xfa8] sm:$0xff]
  %v521 = vld [vmem:[%s0 + $0xfb0] sm:$0xff]
  %v522 = vld [vmem:[%s0 + $0xfb8] sm:$0xff]
  %v523 = vld [vmem:[%s0 + $0xfc0] sm:$0xff]
  %v524 = vld [vmem:[%s0 + $0xfc8] sm:$0xff]
  %v525 = vld [vmem:[%s0 + $0xfd0] sm:$0xff]
  %v526 = vld [vmem:[%s0 + $0xfd8] sm:$0xff]
  %v527 = vld [vmem:[%s0 + $0xfe0] sm:$0xff]
  %v528 = vld [vmem:[%s0 + $0xfe8] sm:$0xff]
  %v529 = vld [vmem:[%s0 + $0xff0] sm:$0xff]
  %v530 = vld [vmem:[%s0 + $0xff8] sm:$0xff]
  %531 = vmatprep.subr.mxu0 %v20
  %532 = vmatpush1.msra.mxu0 %v19
  %533 = vmatprep.subr.mxu0 %v36
  %534 = vmatpush1.msra.mxu0 %v35
  %535 = vmatprep.subr.mxu0 %v52
  %536 = vmatpush1.msra.mxu0 %v51
  %537 = vmatprep.subr.mxu0 %v68
  %538 = vmatpush1.msra.mxu0 %v67
  %539 = vmatprep.subr.mxu0 %v84
  %540 = vmatpush1.msra.mxu0 %v83
  %541 = vmatprep.subr.mxu0 %v100
  %542 = vmatpush1.msra.mxu0 %v99
  %543 = vmatprep.subr.mxu0 %v116
  %544 = vmatpush1.msra.mxu0 %v115
  %545 = vmatprep.subr.mxu0 %v132
  %546 = vmatpush1.msra.mxu0 %v131
  %547 = vmatprep.subr.mxu0 %v148
  %548 = vmatpush1.msra.mxu0 %v147
  %549 = vmatprep.subr.mxu0 %v164
  %550 = vmatpush1.msra.mxu0 %v163
  %551 = vmatprep.subr.mxu0 %v180
  %552 = vmatpush1.msra.mxu0 %v179
  %553 = vmatprep.subr.mxu0 %v196
  %554 = vmatpush1.msra.mxu0 %v195
  %555 = vmatprep.subr.mxu0 %v212
  %556 = vmatpush1.msra.mxu0 %v211
  %557 = vmatprep.subr.mxu0 %v228
  %558 = vmatpush1.msra.mxu0 %v227
  %559 = vmatprep.subr.mxu0 %v244
  %560 = vmatpush1.msra.mxu0 %v243
  %561 = vmatprep.subr.mxu0 %v260
  %562 = vmatpush1.msra.mxu0 %v259
  %563 = vmatprep.subr.mxu0 %v276
  %564 = vmatpush1.msra.mxu0 %v275
  %565 = vmatprep.subr.mxu0 %v292
  %566 = vmatpush1.msra.mxu0 %v291
  %567 = vmatprep.subr.mxu0 %v308
  %568 = vmatpush1.msra.mxu0 %v307
  %569 = vmatprep.subr.mxu0 %v324
  %570 = vmatpush1.msra.mxu0 %v323
  %571 = vmatprep.subr.mxu0 %v340
  %572 = vmatpush1.msra.mxu0 %v339
  %573 = vmatprep.subr.mxu0 %v356
  %574 = vmatpush1.msra.mxu0 %v355
  %575 = vmatprep.subr.mxu0 %v372
  %576 = vmatpush1.msra.mxu0 %v371
  %577 = vmatprep.subr.mxu0 %v388
  %578 = vmatpush1.msra.mxu0 %v387
  %579 = vmatprep.subr.mxu0 %v404
  %580 = vmatpush1.msra.mxu0 %v403
  %581 = vmatprep.subr.mxu0 %v420
  %582 = vmatpush1.msra.mxu0 %v419
  %583 = vmatprep.subr.mxu0 %v436
  %584 = vmatpush1.msra.mxu0 %v435
  %585 = vmatprep.subr.mxu0 %v452
  %586 = vmatpush1.msra.mxu0 %v451
  %587 = vmatprep.subr.mxu0 %v468
  %588 = vmatpush1.msra.mxu0 %v467
  %589 = vmatprep.subr.mxu0 %v484
  %590 = vmatpush1.msra.mxu0 %v483
  %591 = vmatprep.subr.mxu0 %v500
  %592 = vmatpush1.msra.mxu0 %v499
  %593 = vmatprep.subr.mxu0 %v516
  %594 = vmatpush1.msra.mxu0 %v515
  %595 = vmatprep.mubr.f32.mxu0 %v18
  %596 = vmatmul.mubr.f32.gmra.mrb[0].mxu0 %v17
  %v597 = vpop.f32.mrb[0].mxu0
  %v598 = vadd.f32 0.0, %v597
  %v599 = vpop.f32.mrb[0].mxu0
  %v600 = vadd.f32 0.0, %v599
  %601 = vdwg.mxu0
  %602 = vmatprep.subr.mxu0 %v22
  %603 = vmatpush1.msra.mxu0 %v21
  %604 = vmatprep.subr.mxu0 %v38
  %605 = vmatpush1.msra.mxu0 %v37
  %606 = vmatprep.subr.mxu0 %v54
  %607 = vmatpush1.msra.mxu0 %v53
  %608 = vmatprep.subr.mxu0 %v70
  %609 = vmatpush1.msra.mxu0 %v69
  %610 = vmatprep.subr.mxu0 %v86
  %611 = vmatpush1.msra.mxu0 %v85
  %612 = vmatprep.subr.mxu0 %v102
  %613 = vmatpush1.msra.mxu0 %v101
  %614 = vmatprep.subr.mxu0 %v118
  %615 = vmatpush1.msra.mxu0 %v117
  %616 = vmatprep.subr.mxu0 %v134
  %617 = vmatpush1.msra.mxu0 %v133
  %618 = vmatprep.subr.mxu0 %v150
  %619 = vmatpush1.msra.mxu0 %v149
  %620 = vmatprep.subr.mxu0 %v166
  %621 = vmatpush1.msra.mxu0 %v165
  %622 = vmatprep.subr.mxu0 %v182
  %623 = vmatpush1.msra.mxu0 %v181
  %624 = vmatprep.subr.mxu0 %v198
  %625 = vmatpush1.msra.mxu0 %v197
  %626 = vmatprep.subr.mxu0 %v214
  %627 = vmatpush1.msra.mxu0 %v213
  %628 = vmatprep.subr.mxu0 %v230
  %629 = vmatpush1.msra.mxu0 %v229
  %630 = vmatprep.subr.mxu0 %v246
  %631 = vmatpush1.msra.mxu0 %v245
  %632 = vmatprep.subr.mxu0 %v262
  %633 = vmatpush1.msra.mxu0 %v261
  %634 = vmatprep.subr.mxu0 %v278
  %635 = vmatpush1.msra.mxu0 %v277
  %636 = vmatprep.subr.mxu0 %v294
  %637 = vmatpush1.msra.mxu0 %v293
  %638 = vmatprep.subr.mxu0 %v310
  %639 = vmatpush1.msra.mxu0 %v309
  %640 = vmatprep.subr.mxu0 %v326
  %641 = vmatpush1.msra.mxu0 %v325
  %642 = vmatprep.subr.mxu0 %v342
  %643 = vmatpush1.msra.mxu0 %v341
  %644 = vmatprep.subr.mxu0 %v358
  %645 = vmatpush1.msra.mxu0 %v357
  %646 = vmatprep.subr.mxu0 %v374
  %647 = vmatpush1.msra.mxu0 %v373
  %648 = vmatprep.subr.mxu0 %v390
  %649 = vmatpush1.msra.mxu0 %v389
  %650 = vmatprep.subr.mxu0 %v406
  %651 = vmatpush1.msra.mxu0 %v405
  %652 = vmatprep.subr.mxu0 %v422
  %653 = vmatpush1.msra.mxu0 %v421
  %654 = vmatprep.subr.mxu0 %v438
  %655 = vmatpush1.msra.mxu0 %v437
  %656 = vmatprep.subr.mxu0 %v454
  %657 = vmatpush1.msra.mxu0 %v453
  %658 = vmatprep.subr.mxu0 %v470
  %659 = vmatpush1.msra.mxu0 %v469
  %660 = vmatprep.subr.mxu0 %v486
  %661 = vmatpush1.msra.mxu0 %v485
  %662 = vmatprep.subr.mxu0 %v502
  %663 = vmatpush1.msra.mxu0 %v501
  %664 = vmatprep.subr.mxu0 %v518
  %665 = vmatpush1.msra.mxu0 %v517
  %666 = vmatprep.mubr.f32.mxu0 %v18
  %667 = vmatmul.mubr.f32.gmra.mrb[0].mxu0 %v17
  %v668 = vpop.f32.mrb[0].mxu0
  %v669 = vadd.f32 0.0, %v668
  %v670 = vpop.f32.mrb[0].mxu0
  %v671 = vadd.f32 0.0, %v670
  %672 = vdwg.mxu0
  %673 = vmatprep.subr.mxu0 %v24
  %674 = vmatpush1.msra.mxu0 %v23
  %675 = vmatprep.subr.mxu0 %v40
  %676 = vmatpush1.msra.mxu0 %v39
  %677 = vmatprep.subr.mxu0 %v56
  %678 = vmatpush1.msra.mxu0 %v55
  %679 = vmatprep.subr.mxu0 %v72
  %680 = vmatpush1.msra.mxu0 %v71
  %681 = vmatprep.subr.mxu0 %v88
  %682 = vmatpush1.msra.mxu0 %v87
  %683 = vmatprep.subr.mxu0 %v104
  %684 = vmatpush1.msra.mxu0 %v103
  %685 = vmatprep.subr.mxu0 %v120
  %686 = vmatpush1.msra.mxu0 %v119
  %687 = vmatprep.subr.mxu0 %v136
  %688 = vmatpush1.msra.mxu0 %v135
  %689 = vmatprep.subr.mxu0 %v152
  %690 = vmatpush1.msra.mxu0 %v151
  %691 = vmatprep.subr.mxu0 %v168
  %692 = vmatpush1.msra.mxu0 %v167
  %693 = vmatprep.subr.mxu0 %v184
  %694 = vmatpush1.msra.mxu0 %v183
  %695 = vmatprep.subr.mxu0 %v200
  %696 = vmatpush1.msra.mxu0 %v199
  %697 = vmatprep.subr.mxu0 %v216
  %698 = vmatpush1.msra.mxu0 %v215
  %699 = vmatprep.subr.mxu0 %v232
  %700 = vmatpush1.msra.mxu0 %v231
  %701 = vmatprep.subr.mxu0 %v248
  %702 = vmatpush1.msra.mxu0 %v247
  %703 = vmatprep.subr.mxu0 %v264
  %704 = vmatpush1.msra.mxu0 %v263
  %705 = vmatprep.subr.mxu0 %v280
  %706 = vmatpush1.msra.mxu0 %v279
  %707 = vmatprep.subr.mxu0 %v296
  %708 = vmatpush1.msra.mxu0 %v295
  %709 = vmatprep.subr.mxu0 %v312
  %710 = vmatpush1.msra.mxu0 %v311
  %711 = vmatprep.subr.mxu0 %v328
  %712 = vmatpush1.msra.mxu0 %v327
  %713 = vmatprep.subr.mxu0 %v344
  %714 = vmatpush1.msra.mxu0 %v343
  %715 = vmatprep.subr.mxu0 %v360
  %716 = vmatpush1.msra.mxu0 %v359
  %717 = vmatprep.subr.mxu0 %v376
  %718 = vmatpush1.msra.mxu0 %v375
  %719 = vmatprep.subr.mxu0 %v392
  %720 = vmatpush1.msra.mxu0 %v391
  %721 = vmatprep.subr.mxu0 %v408
  %722 = vmatpush1.msra.mxu0 %v407
  %723 = vmatprep.subr.mxu0 %v424
  %724 = vmatpush1.msra.mxu0 %v423
  %725 = vmatprep.subr.mxu0 %v440
  %726 = vmatpush1.msra.mxu0 %v439
  %727 = vmatprep.subr.mxu0 %v456
  %728 = vmatpush1.msra.mxu0 %v455
  %729 = vmatprep.subr.mxu0 %v472
  %730 = vmatpush1.msra.mxu0 %v471
  %731 = vmatprep.subr.mxu0 %v488
  %732 = vmatpush1.msra.mxu0 %v487
  %733 = vmatprep.subr.mxu0 %v504
  %734 = vmatpush1.msra.mxu0 %v503
  %735 = vmatprep.subr.mxu0 %v520
  %736 = vmatpush1.msra.mxu0 %v519
  %737 = vmatprep.mubr.f32.mxu0 %v18
  %738 = vmatmul.mubr.f32.gmra.mrb[0].mxu0 %v17
  %v739 = vpop.f32.mrb[0].mxu0
  %v740 = vadd.f32 0.0, %v739
  %v741 = vpop.f32.mrb[0].mxu0
  %v742 = vadd.f32 0.0, %v741
  %743 = vdwg.mxu0
  %744 = vmatprep.subr.mxu0 %v26
  %745 = vmatpush1.msra.mxu0 %v25
  %746 = vmatprep.subr.mxu0 %v42
  %747 = vmatpush1.msra.mxu0 %v41
  %748 = vmatprep.subr.mxu0 %v58
  %749 = vmatpush1.msra.mxu0 %v57
  %750 = vmatprep.subr.mxu0 %v74
  %751 = vmatpush1.msra.mxu0 %v73
  %752 = vmatprep.subr.mxu0 %v90
  %753 = vmatpush1.msra.mxu0 %v89
  %754 = vmatprep.subr.mxu0 %v106
  %755 = vmatpush1.msra.mxu0 %v105
  %756 = vmatprep.subr.mxu0 %v122
  %757 = vmatpush1.msra.mxu0 %v121
  %758 = vmatprep.subr.mxu0 %v138
  %759 = vmatpush1.msra.mxu0 %v137
  %760 = vmatprep.subr.mxu0 %v154
  %761 = vmatpush1.msra.mxu0 %v153
  %762 = vmatprep.subr.mxu0 %v170
  %763 = vmatpush1.msra.mxu0 %v169
  %764 = vmatprep.subr.mxu0 %v186
  %765 = vmatpush1.msra.mxu0 %v185
  %766 = vmatprep.subr.mxu0 %v202
  %767 = vmatpush1.msra.mxu0 %v201
  %768 = vmatprep.subr.mxu0 %v218
  %769 = vmatpush1.msra.mxu0 %v217
  %770 = vmatprep.subr.mxu0 %v234
  %771 = vmatpush1.msra.mxu0 %v233
  %772 = vmatprep.subr.mxu0 %v250
  %773 = vmatpush1.msra.mxu0 %v249
  %774 = vmatprep.subr.mxu0 %v266
  %775 = vmatpush1.msra.mxu0 %v265
  %776 = vmatprep.subr.mxu0 %v282
  %777 = vmatpush1.msra.mxu0 %v281
  %778 = vmatprep.subr.mxu0 %v298
  %779 = vmatpush1.msra.mxu0 %v297
  %780 = vmatprep.subr.mxu0 %v314
  %781 = vmatpush1.msra.mxu0 %v313
  %782 = vmatprep.subr.mxu0 %v330
  %783 = vmatpush1.msra.mxu0 %v329
  %784 = vmatprep.subr.mxu0 %v346
  %785 = vmatpush1.msra.mxu0 %v345
  %786 = vmatprep.subr.mxu0 %v362
  %787 = vmatpush1.msra.mxu0 %v361
  %788 = vmatprep.subr.mxu0 %v378
  %789 = vmatpush1.msra.mxu0 %v377
  %790 = vmatprep.subr.mxu0 %v394
  %791 = vmatpush1.msra.mxu0 %v393
  %792 = vmatprep.subr.mxu0 %v410
  %793 = vmatpush1.msra.mxu0 %v409
  %794 = vmatprep.subr.mxu0 %v426
  %795 = vmatpush1.msra.mxu0 %v425
  %796 = vmatprep.subr.mxu0 %v442
  %797 = vmatpush1.msra.mxu0 %v441
  %798 = vmatprep.subr.mxu0 %v458
  %799 = vmatpush1.msra.mxu0 %v457
  %800 = vmatprep.subr.mxu0 %v474
  %801 = vmatpush1.msra.mxu0 %v473
  %802 = vmatprep.subr.mxu0 %v490
  %803 = vmatpush1.msra.mxu0 %v489
  %804 = vmatprep.subr.mxu0 %v506
  %805 = vmatpush1.msra.mxu0 %v505
  %806 = vmatprep.subr.mxu0 %v522
  %807 = vmatpush1.msra.mxu0 %v521
  %808 = vmatprep.mubr.f32.mxu0 %v18
  %809 = vmatmul.mubr.f32.gmra.mrb[0].mxu0 %v17
  %v810 = vpop.f32.mrb[0].mxu0
  %v811 = vadd.f32 0.0, %v810
  %v812 = vpop.f32.mrb[0].mxu0
  %v813 = vadd.f32 0.0, %v812
  %814 = vdwg.mxu0
  %815 = vmatprep.subr.mxu0 %v28
  %816 = vmatpush1.msra.mxu0 %v27
  %817 = vmatprep.subr.mxu0 %v44
  %818 = vmatpush1.msra.mxu0 %v43
  %819 = vmatprep.subr.mxu0 %v60
  %820 = vmatpush1.msra.mxu0 %v59
  %821 = vmatprep.subr.mxu0 %v76
  %822 = vmatpush1.msra.mxu0 %v75
  %823 = vmatprep.subr.mxu0 %v92
  %824 = vmatpush1.msra.mxu0 %v91
  %825 = vmatprep.subr.mxu0 %v108
  %826 = vmatpush1.msra.mxu0 %v107
  %827 = vmatprep.subr.mxu0 %v124
  %828 = vmatpush1.msra.mxu0 %v123
  %829 = vmatprep.subr.mxu0 %v140
  %830 = vmatpush1.msra.mxu0 %v139
  %831 = vmatprep.subr.mxu0 %v156
  %832 = vmatpush1.msra.mxu0 %v155
  %833 = vmatprep.subr.mxu0 %v172
  %834 = vmatpush1.msra.mxu0 %v171
  %835 = vmatprep.subr.mxu0 %v188
  %836 = vmatpush1.msra.mxu0 %v187
  %837 = vmatprep.subr.mxu0 %v204
  %838 = vmatpush1.msra.mxu0 %v203
  %839 = vmatprep.subr.mxu0 %v220
  %840 = vmatpush1.msra.mxu0 %v219
  %841 = vmatprep.subr.mxu0 %v236
  %842 = vmatpush1.msra.mxu0 %v235
  %843 = vmatprep.subr.mxu0 %v252
  %844 = vmatpush1.msra.mxu0 %v251
  %845 = vmatprep.subr.mxu0 %v268
  %846 = vmatpush1.msra.mxu0 %v267
  %847 = vmatprep.subr.mxu0 %v284
  %848 = vmatpush1.msra.mxu0 %v283
  %849 = vmatprep.subr.mxu0 %v300
  %850 = vmatpush1.msra.mxu0 %v299
  %851 = vmatprep.subr.mxu0 %v316
  %852 = vmatpush1.msra.mxu0 %v315
  %853 = vmatprep.subr.mxu0 %v332
  %854 = vmatpush1.msra.mxu0 %v331
  %855 = vmatprep.subr.mxu0 %v348
  %856 = vmatpush1.msra.mxu0 %v347
  %857 = vmatprep.subr.mxu0 %v364
  %858 = vmatpush1.msra.mxu0 %v363
  %859 = vmatprep.subr.mxu0 %v380
  %860 = vmatpush1.msra.mxu0 %v379
  %861 = vmatprep.subr.mxu0 %v396
  %862 = vmatpush1.msra.mxu0 %v395
  %863 = vmatprep.subr.mxu0 %v412
  %864 = vmatpush1.msra.mxu0 %v411
  %865 = vmatprep.subr.mxu0 %v428
  %866 = vmatpush1.msra.mxu0 %v427
  %867 = vmatprep.subr.mxu0 %v444
  %868 = vmatpush1.msra.mxu0 %v443
  %869 = vmatprep.subr.mxu0 %v460
  %870 = vmatpush1.msra.mxu0 %v459
  %871 = vmatprep.subr.mxu0 %v476
  %872 = vmatpush1.msra.mxu0 %v475
  %873 = vmatprep.subr.mxu0 %v492
  %874 = vmatpush1.msra.mxu0 %v491
  %875 = vmatprep.subr.mxu0 %v508
  %876 = vmatpush1.msra.mxu0 %v507
  %877 = vmatprep.subr.mxu0 %v524
  %878 = vmatpush1.msra.mxu0 %v523
  %879 = vmatprep.mubr.f32.mxu0 %v18
  %880 = vmatmul.mubr.f32.gmra.mrb[0].mxu0 %v17
  %v881 = vpop.f32.mrb[0].mxu0
  %v882 = vadd.f32 0.0, %v881
  %v883 = vpop.f32.mrb[0].mxu0
  %v884 = vadd.f32 0.0, %v883
  %885 = vdwg.mxu0
  %886 = vmatprep.subr.mxu0 %v30
  %887 = vmatpush1.msra.mxu0 %v29
  %888 = vmatprep.subr.mxu0 %v46
  %889 = vmatpush1.msra.mxu0 %v45
  %890 = vmatprep.subr.mxu0 %v62
  %891 = vmatpush1.msra.mxu0 %v61
  %892 = vmatprep.subr.mxu0 %v78
  %893 = vmatpush1.msra.mxu0 %v77
  %894 = vmatprep.subr.mxu0 %v94
  %895 = vmatpush1.msra.mxu0 %v93
  %896 = vmatprep.subr.mxu0 %v110
  %897 = vmatpush1.msra.mxu0 %v109
  %898 = vmatprep.subr.mxu0 %v126
  %899 = vmatpush1.msra.mxu0 %v125
  %900 = vmatprep.subr.mxu0 %v142
  %901 = vmatpush1.msra.mxu0 %v141
  %902 = vmatprep.subr.mxu0 %v158
  %903 = vmatpush1.msra.mxu0 %v157
  %904 = vmatprep.subr.mxu0 %v174
  %905 = vmatpush1.msra.mxu0 %v173
  %906 = vmatprep.subr.mxu0 %v190
  %907 = vmatpush1.msra.mxu0 %v189
  %908 = vmatprep.subr.mxu0 %v206
  %909 = vmatpush1.msra.mxu0 %v205
  %910 = vmatprep.subr.mxu0 %v222
  %911 = vmatpush1.msra.mxu0 %v221
  %912 = vmatprep.subr.mxu0 %v238
  %913 = vmatpush1.msra.mxu0 %v237
  %914 = vmatprep.subr.mxu0 %v254
  %915 = vmatpush1.msra.mxu0 %v253
  %916 = vmatprep.subr.mxu0 %v270
  %917 = vmatpush1.msra.mxu0 %v269
  %918 = vmatprep.subr.mxu0 %v286
  %919 = vmatpush1.msra.mxu0 %v285
  %920 = vmatprep.subr.mxu0 %v302
  %921 = vmatpush1.msra.mxu0 %v301
  %922 = vmatprep.subr.mxu0 %v318
  %923 = vmatpush1.msra.mxu0 %v317
  %924 = vmatprep.subr.mxu0 %v334
  %925 = vmatpush1.msra.mxu0 %v333
  %926 = vmatprep.subr.mxu0 %v350
  %927 = vmatpush1.msra.mxu0 %v349
  %928 = vmatprep.subr.mxu0 %v366
  %929 = vmatpush1.msra.mxu0 %v365
  %930 = vmatprep.subr.mxu0 %v382
  %931 = vmatpush1.msra.mxu0 %v381
  %932 = vmatprep.subr.mxu0 %v398
  %933 = vmatpush1.msra.mxu0 %v397
  %934 = vmatprep.subr.mxu0 %v414
  %935 = vmatpush1.msra.mxu0 %v413
  %936 = vmatprep.subr.mxu0 %v430
  %937 = vmatpush1.msra.mxu0 %v429
  %938 = vmatprep.subr.mxu0 %v446
  %939 = vmatpush1.msra.mxu0 %v445
  %940 = vmatprep.subr.mxu0 %v462
  %941 = vmatpush1.msra.mxu0 %v461
  %942 = vmatprep.subr.mxu0 %v478
  %943 = vmatpush1.msra.mxu0 %v477
  %944 = vmatprep.subr.mxu0 %v494
  %945 = vmatpush1.msra.mxu0 %v493
  %946 = vmatprep.subr.mxu0 %v510
  %947 = vmatpush1.msra.mxu0 %v509
  %948 = vmatprep.subr.mxu0 %v526
  %949 = vmatpush1.msra.mxu0 %v525
  %950 = vmatprep.mubr.f32.mxu0 %v18
  %951 = vmatmul.mubr.f32.gmra.mrb[0].mxu0 %v17
  %v952 = vpop.f32.mrb[0].mxu0
  %v953 = vadd.f32 0.0, %v952
  %v954 = vpop.f32.mrb[0].mxu0
  %v955 = vadd.f32 0.0, %v954
  %956 = vdwg.mxu0
  %957 = vmatprep.subr.mxu0 %v32
  %958 = vmatpush1.msra.mxu0 %v31
  %959 = vmatprep.subr.mxu0 %v48
  %960 = vmatpush1.msra.mxu0 %v47
  %961 = vmatprep.subr.mxu0 %v64
  %962 = vmatpush1.msra.mxu0 %v63
  %963 = vmatprep.subr.mxu0 %v80
  %964 = vmatpush1.msra.mxu0 %v79
  %965 = vmatprep.subr.mxu0 %v96
  %966 = vmatpush1.msra.mxu0 %v95
  %967 = vmatprep.subr.mxu0 %v112
  %968 = vmatpush1.msra.mxu0 %v111
  %969 = vmatprep.subr.mxu0 %v128
  %970 = vmatpush1.msra.mxu0 %v127
  %971 = vmatprep.subr.mxu0 %v144
  %972 = vmatpush1.msra.mxu0 %v143
  %973 = vmatprep.subr.mxu0 %v160
  %974 = vmatpush1.msra.mxu0 %v159
  %975 = vmatprep.subr.mxu0 %v176
  %976 = vmatpush1.msra.mxu0 %v175
  %977 = vmatprep.subr.mxu0 %v192
  %978 = vmatpush1.msra.mxu0 %v191
  %979 = vmatprep.subr.mxu0 %v208
  %980 = vmatpush1.msra.mxu0 %v207
  %981 = vmatprep.subr.mxu0 %v224
  %982 = vmatpush1.msra.mxu0 %v223
  %983 = vmatprep.subr.mxu0 %v240
  %984 = vmatpush1.msra.mxu0 %v239
  %985 = vmatprep.subr.mxu0 %v256
  %986 = vmatpush1.msra.mxu0 %v255
  %987 = vmatprep.subr.mxu0 %v272
  %988 = vmatpush1.msra.mxu0 %v271
  %989 = vmatprep.subr.mxu0 %v288
  %990 = vmatpush1.msra.mxu0 %v287
  %991 = vmatprep.subr.mxu0 %v304
  %992 = vmatpush1.msra.mxu0 %v303
  %993 = vmatprep.subr.mxu0 %v320
  %994 = vmatpush1.msra.mxu0 %v319
  %995 = vmatprep.subr.mxu0 %v336
  %996 = vmatpush1.msra.mxu0 %v335
  %997 = vmatprep.subr.mxu0 %v352
  %998 = vmatpush1.msra.mxu0 %v351
  %999 = vmatprep.subr.mxu0 %v368
  %1000 = vmatpush1.msra.mxu0 %v367
  %1001 = vmatprep.subr.mxu0 %v384
  %1002 = vmatpush1.msra.mxu0 %v383
  %1003 = vmatprep.subr.mxu0 %v400
  %1004 = vmatpush1.msra.mxu0 %v399
  %1005 = vmatprep.subr.mxu0 %v416
  %1006 = vmatpush1.msra.mxu0 %v415
  %1007 = vmatprep.subr.mxu0 %v432
  %1008 = vmatpush1.msra.mxu0 %v431
  %1009 = vmatprep.subr.mxu0 %v448
  %1010 = vmatpush1.msra.mxu0 %v447
  %1011 = vmatprep.subr.mxu0 %v464
  %1012 = vmatpush1.msra.mxu0 %v463
  %1013 = vmatprep.subr.mxu0 %v480
  %1014 = vmatpush1.msra.mxu0 %v479
  %1015 = vmatprep.subr.mxu0 %v496
  %1016 = vmatpush1.msra.mxu0 %v495
  %1017 = vmatprep.subr.mxu0 %v512
  %1018 = vmatpush1.msra.mxu0 %v511
  %1019 = vmatprep.subr.mxu0 %v528
  %1020 = vmatpush1.msra.mxu0 %v527
  %1021 = vmatprep.mubr.f32.mxu0 %v18
  %1022 = vmatmul.mubr.f32.gmra.mrb[0].mxu0 %v17
  %v1023 = vpop.f32.mrb[0].mxu0
  %v1024 = vadd.f32 0.0, %v1023
  %v1025 = vpop.f32.mrb[0].mxu0
  %v1026 = vadd.f32 0.0, %v1025
  %1027 = vdwg.mxu0
  %1028 = vmatprep.subr.mxu0 %v34
  %1029 = vmatpush1.msra.mxu0 %v33
  %1030 = vmatprep.subr.mxu0 %v50
  %1031 = vmatpush1.msra.mxu0 %v49
  %1032 = vmatprep.subr.mxu0 %v66
  %1033 = vmatpush1.msra.mxu0 %v65
  %1034 = vmatprep.subr.mxu0 %v82
  %1035 = vmatpush1.msra.mxu0 %v81
  %1036 = vmatprep.subr.mxu0 %v98
  %1037 = vmatpush1.msra.mxu0 %v97
  %1038 = vmatprep.subr.mxu0 %v114
  %1039 = vmatpush1.msra.mxu0 %v113
  %1040 = vmatprep.subr.mxu0 %v130
  %1041 = vmatpush1.msra.mxu0 %v129
  %1042 = vmatprep.subr.mxu0 %v146
  %1043 = vmatpush1.msra.mxu0 %v145
  %1044 = vmatprep.subr.mxu0 %v162
  %1045 = vmatpush1.msra.mxu0 %v161
  %1046 = vmatprep.subr.mxu0 %v178
  %1047 = vmatpush1.msra.mxu0 %v177
  %1048 = vmatprep.subr.mxu0 %v194
  %1049 = vmatpush1.msra.mxu0 %v193
  %1050 = vmatprep.subr.mxu0 %v210
  %1051 = vmatpush1.msra.mxu0 %v209
  %1052 = vmatprep.subr.mxu0 %v226
  %1053 = vmatpush1.msra.mxu0 %v225
  %1054 = vmatprep.subr.mxu0 %v242
  %1055 = vmatpush1.msra.mxu0 %v241
  %1056 = vmatprep.subr.mxu0 %v258
  %1057 = vmatpush1.msra.mxu0 %v257
  %1058 = vmatprep.subr.mxu0 %v274
  %1059 = vmatpush1.msra.mxu0 %v273
  %1060 = vmatprep.subr.mxu0 %v290
  %1061 = vmatpush1.msra.mxu0 %v289
  %1062 = vmatprep.subr.mxu0 %v306
  %1063 = vmatpush1.msra.mxu0 %v305
  %1064 = vmatprep.subr.mxu0 %v322
  %1065 = vmatpush1.msra.mxu0 %v321
  %1066 = vmatprep.subr.mxu0 %v338
  %1067 = vmatpush1.msra.mxu0 %v337
  %1068 = vmatprep.subr.mxu0 %v354
  %1069 = vmatpush1.msra.mxu0 %v353
  %1070 = vmatprep.subr.mxu0 %v370
  %1071 = vmatpush1.msra.mxu0 %v369
  %1072 = vmatprep.subr.mxu0 %v386
  %1073 = vmatpush1.msra.mxu0 %v385
  %1074 = vmatprep.subr.mxu0 %v402
  %1075 = vmatpush1.msra.mxu0 %v401
  %1076 = vmatprep.subr.mxu0 %v418
  %1077 = vmatpush1.msra.mxu0 %v417
  %1078 = vmatprep.subr.mxu0 %v434
  %1079 = vmatpush1.msra.mxu0 %v433
  %1080 = vmatprep.subr.mxu0 %v450
  %1081 = vmatpush1.msra.mxu0 %v449
  %1082 = vmatprep.subr.mxu0 %v466
  %1083 = vmatpush1.msra.mxu0 %v465
  %1084 = vmatprep.subr.mxu0 %v482
  %1085 = vmatpush1.msra.mxu0 %v481
  %1086 = vmatprep.subr.mxu0 %v498
  %1087 = vmatpush1.msra.mxu0 %v497
  %1088 = vmatprep.subr.mxu0 %v514
  %1089 = vmatpush1.msra.mxu0 %v513
  %1090 = vmatprep.subr.mxu0 %v530
  %1091 = vmatpush1.msra.mxu0 %v529
  %1092 = vmatprep.mubr.f32.mxu0 %v18
  %1093 = vmatmul.mubr.f32.gmra.mrb[0].mxu0 %v17
  %v1094 = vpop.f32.mrb[0].mxu0
  %v1095 = vadd.f32 0.0, %v1094
  %v1096 = vpop.f32.mrb[0].mxu0
  %v1097 = vadd.f32 0.0, %v1096
  %1098 = vdwg.mxu0
  %v1099 = vadd.f32 %v598, %v600
  %v1100 = vadd.f32 %v1099, %v669
  %v1101 = vadd.f32 %v1100, %v671
  %v1102 = vadd.f32 %v1101, %v740
  %v1103 = vadd.f32 %v1102, %v742
  %v1104 = vadd.f32 %v1103, %v811
  %v1105 = vadd.f32 %v1104, %v813
  %v1106 = vadd.f32 %v1105, %v882
  %v1107 = vadd.f32 %v1106, %v884
  %v1108 = vadd.f32 %v1107, %v953
  %v1109 = vadd.f32 %v1108, %v955
  %v1110 = vadd.f32 %v1109, %v1024
  %v1111 = vadd.f32 %v1110, %v1026
  %v1112 = vadd.f32 %v1111, %v1095
  %v1113 = vadd.f32 %v1112, %v1097
  %1114 = vadd.xlane.f32.xlu0 %v1113
  %v1115 = vpop.xlane.xlu0 %1114
  %v1116 = vrcp.pop 2048.0
  %v1117 = vmul.f32 %v1115, %v1116
  %v1118 = vmul.f32 %v598, %v598
  %v1119 = vmul.f32 %v600, %v600
  %v1120 = vmul.f32 %v669, %v669
  %v1121 = vmul.f32 %v671, %v671
  %v1122 = vmul.f32 %v740, %v740
  %v1123 = vmul.f32 %v742, %v742
  %v1124 = vmul.f32 %v811, %v811
  %v1125 = vmul.f32 %v813, %v813
  %v1126 = vmul.f32 %v882, %v882
  %v1127 = vmul.f32 %v884, %v884
  %v1128 = vmul.f32 %v953, %v953
  %v1129 = vmul.f32 %v955, %v955
  %v1130 = vmul.f32 %v1024, %v1024
  %v1131 = vmul.f32 %v1026, %v1026
  %v1132 = vmul.f32 %v1095, %v1095
  %v1133 = vmul.f32 %v1097, %v1097
  %v1134 = vadd.f32 %v1118, %v1119
  %v1135 = vadd.f32 %v1134, %v1120
  %v1136 = vadd.f32 %v1135, %v1121
  %v1137 = vadd.f32 %v1136, %v1122
  %v1138 = vadd.f32 %v1137, %v1123
  %v1139 = vadd.f32 %v1138, %v1124
  %v1140 = vadd.f32 %v1139, %v1125
  %v1141 = vadd.f32 %v1140, %v1126
  %v1142 = vadd.f32 %v1141, %v1127
  %v1143 = vadd.f32 %v1142, %v1128
  %v1144 = vadd.f32 %v1143, %v1129
  %v1145 = vadd.f32 %v1144, %v1130
  %v1146 = vadd.f32 %v1145, %v1131
  %v1147 = vadd.f32 %v1146, %v1132
  %v1148 = vadd.f32 %v1147, %v1133
  %1149 = vadd.xlane.f32.xlu0 %v1148
  %v1150 = vpop.xlane.xlu0 %1149
  %v1151 = vmul.f32 %v1150, %v1116
  %v1152 = vmul.f32 %v1117, %v1117
  %v1153 = vsub.f32 %v1151, %v1152
  %v1154 = vmax.f32 %v1153, 0.0
  %v1155 = vsub.f32 %v598, %v1117
  %v1156 = vsub.f32 %v600, %v1117
  %v1157 = vsub.f32 %v669, %v1117
  %v1158 = vsub.f32 %v671, %v1117
  %v1159 = vsub.f32 %v740, %v1117
  %v1160 = vsub.f32 %v742, %v1117
  %v1161 = vsub.f32 %v811, %v1117
  %v1162 = vsub.f32 %v813, %v1117
  %v1163 = vsub.f32 %v882, %v1117
  %v1164 = vsub.f32 %v884, %v1117
  %v1165 = vsub.f32 %v953, %v1117
  %v1166 = vsub.f32 %v955, %v1117
  %v1167 = vsub.f32 %v1024, %v1117
  %v1168 = vsub.f32 %v1026, %v1117
  %v1169 = vsub.f32 %v1095, %v1117
  %v1170 = vsub.f32 %v1097, %v1117
  %v1171 = vadd.f32 %v1154, 1e-05
  %v1172 = vrsqrt.pop %v1171
  %v1173 = vmul.f32 %v1155, %v1172
  %v1174 = vmul.f32 %v1156, %v1172
  %v1175 = vmul.f32 %v1157, %v1172
  %v1176 = vmul.f32 %v1158, %v1172
  %v1177 = vmul.f32 %v1159, %v1172
  %v1178 = vmul.f32 %v1160, %v1172
  %v1179 = vmul.f32 %v1161, %v1172
  %v1180 = vmul.f32 %v1162, %v1172
  %v1181 = vmul.f32 %v1163, %v1172
  %v1182 = vmul.f32 %v1164, %v1172
  %v1183 = vmul.f32 %v1165, %v1172
  %v1184 = vmul.f32 %v1166, %v1172
  %v1185 = vmul.f32 %v1167, %v1172
  %v1186 = vmul.f32 %v1168, %v1172
  %v1187 = vmul.f32 %v1169, %v1172
  %v1188 = vmul.f32 %v1170, %v1172
  %v1189 = vld [vmem:[%s2] sm:$0xff]
  %1191 = vset.pattern.permute.xlu0 0
  %1192 = vperm.xlu0 %1191, %v1189
  %v1193 = vpop.permute.xlu0 %1192
  %v1195 = vmul.f32 %v1173, %v1193
  %v1196 = vmul.f32 %v1174, %v1193
  %v1197 = vmul.f32 %v1175, %v1193
  %v1198 = vmul.f32 %v1176, %v1193
  %v1199 = vmul.f32 %v1177, %v1193
  %v1200 = vmul.f32 %v1178, %v1193
  %v1201 = vmul.f32 %v1179, %v1193
  %v1202 = vmul.f32 %v1180, %v1193
  %v1203 = vmul.f32 %v1181, %v1193
  %v1204 = vmul.f32 %v1182, %v1193
  %v1205 = vmul.f32 %v1183, %v1193
  %v1206 = vmul.f32 %v1184, %v1193
  %v1207 = vmul.f32 %v1185, %v1193
  %v1208 = vmul.f32 %v1186, %v1193
  %v1209 = vmul.f32 %v1187, %v1193
  %v1210 = vmul.f32 %v1188, %v1193
  %v1211 = vld [vmem:[%s3] sm:$0xff]
  %1213 = vset.pattern.permute.xlu0 0
  %1214 = vperm.xlu0 %1213, %v1211
  %v1215 = vpop.permute.xlu0 %1214
  %v1217 = vadd.f32 %v1195, %v1215
  %v1218 = vadd.f32 %v1196, %v1215
  %v1219 = vadd.f32 %v1197, %v1215
  %v1220 = vadd.f32 %v1198, %v1215
  %v1221 = vadd.f32 %v1199, %v1215
  %v1222 = vadd.f32 %v1200, %v1215
  %v1223 = vadd.f32 %v1201, %v1215
  %v1224 = vadd.f32 %v1202, %v1215
  %v1225 = vadd.f32 %v1203, %v1215
  %v1226 = vadd.f32 %v1204, %v1215
  %v1227 = vadd.f32 %v1205, %v1215
  %v1228 = vadd.f32 %v1206, %v1215
  %v1229 = vadd.f32 %v1207, %v1215
  %v1230 = vadd.f32 %v1208, %v1215
  %v1231 = vadd.f32 %v1209, %v1215
  %v1232 = vadd.f32 %v1210, %v1215
  %v1233 = vmax.f32 %v1217, 0.0
  %v1234 = vmax.f32 %v1218, 0.0
  %v1235 = vmax.f32 %v1219, 0.0
  %v1236 = vmax.f32 %v1220, 0.0
  %v1237 = vmax.f32 %v1221, 0.0
  %v1238 = vmax.f32 %v1222, 0.0
  %v1239 = vmax.f32 %v1223, 0.0
  %v1240 = vmax.f32 %v1224, 0.0
  %v1241 = vmax.f32 %v1225, 0.0
  %v1242 = vmax.f32 %v1226, 0.0
  %v1243 = vmax.f32 %v1227, 0.0
  %v1244 = vmax.f32 %v1228, 0.0
  %v1245 = vmax.f32 %v1229, 0.0
  %v1246 = vmax.f32 %v1230, 0.0
  %v1247 = vmax.f32 %v1231, 0.0
  %v1248 = vmax.f32 %v1232, 0.0
  %1249 = vst [vmem:[%s4] sm:$0xff] %v1233
  %1250 = vst [vmem:[%s4 + $0x8] sm:$0xff] %v1234
  %1251 = vst [vmem:[%s4 + $0x10] sm:$0xff] %v1235
  %1252 = vst [vmem:[%s4 + $0x18] sm:$0xff] %v1236
  %1253 = vst [vmem:[%s4 + $0x20] sm:$0xff] %v1237
  %1254 = vst [vmem:[%s4 + $0x28] sm:$0xff] %v1238
  %1255 = vst [vmem:[%s4 + $0x30] sm:$0xff] %v1239
  %1256 = vst [vmem:[%s4 + $0x38] sm:$0xff] %v1240
  %1257 = vst [vmem:[%s4 + $0x40] sm:$0xff] %v1241
  %1258 = vst [vmem:[%s4 + $0x48] sm:$0xff] %v1242
  %1259 = vst [vmem:[%s4 + $0x50] sm:$0xff] %v1243
  %1260 = vst [vmem:[%s4 + $0x58] sm:$0xff] %v1244
  %1261 = vst [vmem:[%s4 + $0x60] sm:$0xff] %v1245
  %1262 = vst [vmem:[%s4 + $0x68] sm:$0xff] %v1246
  %1263 = vst [vmem:[%s4 + $0x70] sm:$0xff] %v1247
  %1264 = vst [vmem:[%s4 + $0x78] sm:$0xff] %v1248
  // Predicated region
  $region18: #{_lambda_.8} parent=0 // pred_check
    _
  $region19: #{_lambda_.8} parent=0 // pred_check_branch
    %1266 = sbr.rel (0) target = $region21
  $region20: #{_lambda_.8} parent=0 // pred_region
    _
  $region21: #{_lambda_.8} parent=0 // pred_fallthru
    _
  // Predicated region
  $region22: #{_lambda_.8} parent=0 // pred_check
    _
  $region23: #{_lambda_.8} parent=0 // pred_check_branch
    %1268 = sbr.rel (0) target = $region25
  $region24: #{_lambda_.8} parent=0 // pred_region
    _
  $region25: #{_lambda_.8} parent=0 // pred_fallthru
    _

// kernel: _lambda_.9
$region0: #{_lambda_.9}
  #allocation0 [shape = 'u32[]', space=smem, size = 0x4, offset = 0x4, fixed_abs, tag = 'smem constant byte address 0x4 - core index']
  #allocation1 [shape = 'u32[144,128]{1,0:T(1,128)}', space=vmem, size = 0x12000, scoped, tag = 'internal scratch']
  %s0 = inlined_call_operand.vmem [shape: f32[128,8192], index: 0, kind: input, shape index: {}]
  %s1 = inlined_call_operand.vmem [shape: f32[3,128], index: 1, kind: input, shape index: {}]
  %s2 = inlined_call_operand.vmem [shape: f32[3,1], index: 2, kind: input, shape index: {}]
  %s3 = inlined_call_operand.vmem [shape: f32[3,8192], index: 3, kind: output, shape index: {}]
  %s4 = sld [smem:[#allocation0]]
  $region22: #{_lambda_.9} parent=0
    _
  %s6 = ssub.s32 1, %s4
  %s7 = scalar_select 0, %s6, %s4
  // Predicated region
  $region2: #{_lambda_.9} parent=0 // pred_check
    _
  $region3: #{_lambda_.9} parent=0 // pred_check_branch
    %9 = sbr.rel (0) target = $region5
  $region4: #{_lambda_.9} parent=0 // pred_region
    _
  $region5: #{_lambda_.9} parent=0 // pred_fallthru
    _
  // Predicated region
  $region6: #{_lambda_.9} parent=0 // pred_check
    _
  $region7: #{_lambda_.9} parent=0 // pred_check_branch
    %11 = sbr.rel (0) target = $region9
  $region8: #{_lambda_.9} parent=0 // pred_region
    _
  $region9: #{_lambda_.9} parent=0 // pred_fallthru
    _
  // Predicated region
  $region10: #{_lambda_.9} parent=0 // pred_check
    _
  $region11: #{_lambda_.9} parent=0 // pred_check_branch
    %13 = sbr.rel (0) target = $region13
  $region12: #{_lambda_.9} parent=0 // pred_region
    _
  $region13: #{_lambda_.9} parent=0 // pred_fallthru
    _
  %v14 = vld [vmem:[%s1] sm:$0x7]
  %v15 = vld [vmem:[%s0] sm:$0xff]
  %v16 = vld [vmem:[%s0 + $0x8] sm:$0xff]
  %v17 = vld [vmem:[%s0 + $0x10] sm:$0xff]
  %v18 = vld [vmem:[%s0 + $0x18] sm:$0xff]
  %v19 = vld [vmem:[%s0 + $0x20] sm:$0xff]
  %v20 = vld [vmem:[%s0 + $0x28] sm:$0xff]
  %v21 = vld [vmem:[%s0 + $0x30] sm:$0xff]
  %v22 = vld [vmem:[%s0 + $0x38] sm:$0xff]
  %v23 = vld [vmem:[%s0 + $0x40] sm:$0xff]
  %v24 = vld [vmem:[%s0 + $0x48] sm:$0xff]
  %v25 = vld [vmem:[%s0 + $0x50] sm:$0xff]
  %v26 = vld [vmem:[%s0 + $0x58] sm:$0xff]
  %v27 = vld [vmem:[%s0 + $0x60] sm:$0xff]
  %v28 = vld [vmem:[%s0 + $0x68] sm:$0xff]
  %v29 = vld [vmem:[%s0 + $0x70] sm:$0xff]
  %v30 = vld [vmem:[%s0 + $0x78] sm:$0xff]
  %v31 = vld [vmem:[%s0 + $0x80] sm:$0xff]
  %v32 = vld [vmem:[%s0 + $0x88] sm:$0xff]
  %v33 = vld [vmem:[%s0 + $0x90] sm:$0xff]
  %v34 = vld [vmem:[%s0 + $0x98] sm:$0xff]
  %v35 = vld [vmem:[%s0 + $0xa0] sm:$0xff]
  %v36 = vld [vmem:[%s0 + $0xa8] sm:$0xff]
  %v37 = vld [vmem:[%s0 + $0xb0] sm:$0xff]
  %v38 = vld [vmem:[%s0 + $0xb8] sm:$0xff]
  %v39 = vld [vmem:[%s0 + $0xc0] sm:$0xff]
  %v40 = vld [vmem:[%s0 + $0xc8] sm:$0xff]
  %v41 = vld [vmem:[%s0 + $0xd0] sm:$0xff]
  %v42 = vld [vmem:[%s0 + $0xd8] sm:$0xff]
  %v43 = vld [vmem:[%s0 + $0xe0] sm:$0xff]
  %v44 = vld [vmem:[%s0 + $0xe8] sm:$0xff]
  %v45 = vld [vmem:[%s0 + $0xf0] sm:$0xff]
  %v46 = vld [vmem:[%s0 + $0xf8] sm:$0xff]
  %v47 = vld [vmem:[%s0 + $0x100] sm:$0xff]
  %v48 = vld [vmem:[%s0 + $0x108] sm:$0xff]
  %v49 = vld [vmem:[%s0 + $0x110] sm:$0xff]
  %v50 = vld [vmem:[%s0 + $0x118] sm:$0xff]
  %v51 = vld [vmem:[%s0 + $0x120] sm:$0xff]
  %v52 = vld [vmem:[%s0 + $0x128] sm:$0xff]
  %v53 = vld [vmem:[%s0 + $0x130] sm:$0xff]
  %v54 = vld [vmem:[%s0 + $0x138] sm:$0xff]
  %v55 = vld [vmem:[%s0 + $0x140] sm:$0xff]
  %v56 = vld [vmem:[%s0 + $0x148] sm:$0xff]
  %v57 = vld [vmem:[%s0 + $0x150] sm:$0xff]
  %v58 = vld [vmem:[%s0 + $0x158] sm:$0xff]
  %v59 = vld [vmem:[%s0 + $0x160] sm:$0xff]
  %v60 = vld [vmem:[%s0 + $0x168] sm:$0xff]
  %v61 = vld [vmem:[%s0 + $0x170] sm:$0xff]
  %v62 = vld [vmem:[%s0 + $0x178] sm:$0xff]
  %v63 = vld [vmem:[%s0 + $0x180] sm:$0xff]
  %v64 = vld [vmem:[%s0 + $0x188] sm:$0xff]
  %v65 = vld [vmem:[%s0 + $0x190] sm:$0xff]
  %v66 = vld [vmem:[%s0 + $0x198] sm:$0xff]
  %v67 = vld [vmem:[%s0 + $0x1a0] sm:$0xff]
  %v68 = vld [vmem:[%s0 + $0x1a8] sm:$0xff]
  %v69 = vld [vmem:[%s0 + $0x1b0] sm:$0xff]
  %v70 = vld [vmem:[%s0 + $0x1b8] sm:$0xff]
  %v71 = vld [vmem:[%s0 + $0x1c0] sm:$0xff]
  %v72 = vld [vmem:[%s0 + $0x1c8] sm:$0xff]
  %v73 = vld [vmem:[%s0 + $0x1d0] sm:$0xff]
  %v74 = vld [vmem:[%s0 + $0x1d8] sm:$0xff]
  %v75 = vld [vmem:[%s0 + $0x1e0] sm:$0xff]
  %v76 = vld [vmem:[%s0 + $0x1e8] sm:$0xff]
  %v77 = vld [vmem:[%s0 + $0x1f0] sm:$0xff]
  %v78 = vld [vmem:[%s0 + $0x1f8] sm:$0xff]
  %v79 = vld [vmem:[%s0 + $0x200] sm:$0xff]
  %v80 = vld [vmem:[%s0 + $0x208] sm:$0xff]
  %v81 = vld [vmem:[%s0 + $0x210] sm:$0xff]
  %v82 = vld [vmem:[%s0 + $0x218] sm:$0xff]
  %v83 = vld [vmem:[%s0 + $0x220] sm:$0xff]
  %v84 = vld [vmem:[%s0 + $0x228] sm:$0xff]
  %v85 = vld [vmem:[%s0 + $0x230] sm:$0xff]
  %v86 = vld [vmem:[%s0 + $0x238] sm:$0xff]
  %v87 = vld [vmem:[%s0 + $0x240] sm:$0xff]
  %v88 = vld [vmem:[%s0 + $0x248] sm:$0xff]
  %v89 = vld [vmem:[%s0 + $0x250] sm:$0xff]
  %v90 = vld [vmem:[%s0 + $0x258] sm:$0xff]
  %v91 = vld [vmem:[%s0 + $0x260] sm:$0xff]
  %v92 = vld [vmem:[%s0 + $0x268] sm:$0xff]
  %v93 = vld [vmem:[%s0 + $0x270] sm:$0xff]
  %v94 = vld [vmem:[%s0 + $0x278] sm:$0xff]
  %v95 = vld [vmem:[%s0 + $0x280] sm:$0xff]
  %v96 = vld [vmem:[%s0 + $0x288] sm:$0xff]
  %v97 = vld [vmem:[%s0 + $0x290] sm:$0xff]
  %v98 = vld [vmem:[%s0 + $0x298] sm:$0xff]
  %v99 = vld [vmem:[%s0 + $0x2a0] sm:$0xff]
  %v100 = vld [vmem:[%s0 + $0x2a8] sm:$0xff]
  %v101 = vld [vmem:[%s0 + $0x2b0] sm:$0xff]
  %v102 = vld [vmem:[%s0 + $0x2b8] sm:$0xff]
  %v103 = vld [vmem:[%s0 + $0x2c0] sm:$0xff]
  %v104 = vld [vmem:[%s0 + $0x2c8] sm:$0xff]
  %v105 = vld [vmem:[%s0 + $0x2d0] sm:$0xff]
  %v106 = vld [vmem:[%s0 + $0x2d8] sm:$0xff]
  %v107 = vld [vmem:[%s0 + $0x2e0] sm:$0xff]
  %v108 = vld [vmem:[%s0 + $0x2e8] sm:$0xff]
  %v109 = vld [vmem:[%s0 + $0x2f0] sm:$0xff]
  %v110 = vld [vmem:[%s0 + $0x2f8] sm:$0xff]
  %v111 = vld [vmem:[%s0 + $0x300] sm:$0xff]
  %v112 = vld [vmem:[%s0 + $0x308] sm:$0xff]
  %v113 = vld [vmem:[%s0 + $0x310] sm:$0xff]
  %v114 = vld [vmem:[%s0 + $0x318] sm:$0xff]
  %v115 = vld [vmem:[%s0 + $0x320] sm:$0xff]
  %v116 = vld [vmem:[%s0 + $0x328] sm:$0xff]
  %v117 = vld [vmem:[%s0 + $0x330] sm:$0xff]
  %v118 = vld [vmem:[%s0 + $0x338] sm:$0xff]
  %v119 = vld [vmem:[%s0 + $0x340] sm:$0xff]
  %v120 = vld [vmem:[%s0 + $0x348] sm:$0xff]
  %v121 = vld [vmem:[%s0 + $0x350] sm:$0xff]
  %v122 = vld [vmem:[%s0 + $0x358] sm:$0xff]
  %v123 = vld [vmem:[%s0 + $0x360] sm:$0xff]
  %v124 = vld [vmem:[%s0 + $0x368] sm:$0xff]
  %v125 = vld [vmem:[%s0 + $0x370] sm:$0xff]
  %v126 = vld [vmem:[%s0 + $0x378] sm:$0xff]
  %v127 = vld [vmem:[%s0 + $0x380] sm:$0xff]
  %v128 = vld [vmem:[%s0 + $0x388] sm:$0xff]
  %v129 = vld [vmem:[%s0 + $0x390] sm:$0xff]
  %v130 = vld [vmem:[%s0 + $0x398] sm:$0xff]
  %v131 = vld [vmem:[%s0 + $0x3a0] sm:$0xff]
  %v132 = vld [vmem:[%s0 + $0x3a8] sm:$0xff]
  %v133 = vld [vmem:[%s0 + $0x3b0] sm:$0xff]
  %v134 = vld [vmem:[%s0 + $0x3b8] sm:$0xff]
  %v135 = vld [vmem:[%s0 + $0x3c0] sm:$0xff]
  %v136 = vld [vmem:[%s0 + $0x3c8] sm:$0xff]
  %v137 = vld [vmem:[%s0 + $0x3d0] sm:$0xff]
  %v138 = vld [vmem:[%s0 + $0x3d8] sm:$0xff]
  %v139 = vld [vmem:[%s0 + $0x3e0] sm:$0xff]
  %v140 = vld [vmem:[%s0 + $0x3e8] sm:$0xff]
  %v141 = vld [vmem:[%s0 + $0x3f0] sm:$0xff]
  %v142 = vld [vmem:[%s0 + $0x3f8] sm:$0xff]
  %v143 = vld [vmem:[%s0 + $0x400] sm:$0xff]
  %v144 = vld [vmem:[%s0 + $0x408] sm:$0xff]
  %v145 = vld [vmem:[%s0 + $0x410] sm:$0xff]
  %v146 = vld [vmem:[%s0 + $0x418] sm:$0xff]
  %v147 = vld [vmem:[%s0 + $0x420] sm:$0xff]
  %v148 = vld [vmem:[%s0 + $0x428] sm:$0xff]
  %v149 = vld [vmem:[%s0 + $0x430] sm:$0xff]
  %v150 = vld [vmem:[%s0 + $0x438] sm:$0xff]
  %v151 = vld [vmem:[%s0 + $0x440] sm:$0xff]
  %v152 = vld [vmem:[%s0 + $0x448] sm:$0xff]
  %v153 = vld [vmem:[%s0 + $0x450] sm:$0xff]
  %v154 = vld [vmem:[%s0 + $0x458] sm:$0xff]
  %v155 = vld [vmem:[%s0 + $0x460] sm:$0xff]
  %v156 = vld [vmem:[%s0 + $0x468] sm:$0xff]
  %v157 = vld [vmem:[%s0 + $0x470] sm:$0xff]
  %v158 = vld [vmem:[%s0 + $0x478] sm:$0xff]
  %v159 = vld [vmem:[%s0 + $0x480] sm:$0xff]
  %v160 = vld [vmem:[%s0 + $0x488] sm:$0xff]
  %v161 = vld [vmem:[%s0 + $0x490] sm:$0xff]
  %v162 = vld [vmem:[%s0 + $0x498] sm:$0xff]
  %v163 = vld [vmem:[%s0 + $0x4a0] sm:$0xff]
  %v164 = vld [vmem:[%s0 + $0x4a8] sm:$0xff]
  %v165 = vld [vmem:[%s0 + $0x4b0] sm:$0xff]
  %v166 = vld [vmem:[%s0 + $0x4b8] sm:$0xff]
  %v167 = vld [vmem:[%s0 + $0x4c0] sm:$0xff]
  %v168 = vld [vmem:[%s0 + $0x4c8] sm:$0xff]
  %v169 = vld [vmem:[%s0 + $0x4d0] sm:$0xff]
  %v170 = vld [vmem:[%s0 + $0x4d8] sm:$0xff]
  %v171 = vld [vmem:[%s0 + $0x4e0] sm:$0xff]
  %v172 = vld [vmem:[%s0 + $0x4e8] sm:$0xff]
  %v173 = vld [vmem:[%s0 + $0x4f0] sm:$0xff]
  %v174 = vld [vmem:[%s0 + $0x4f8] sm:$0xff]
  %v175 = vld [vmem:[%s0 + $0x500] sm:$0xff]
  %v176 = vld [vmem:[%s0 + $0x508] sm:$0xff]
  %v177 = vld [vmem:[%s0 + $0x510] sm:$0xff]
  %v178 = vld [vmem:[%s0 + $0x518] sm:$0xff]
  %v179 = vld [vmem:[%s0 + $0x520] sm:$0xff]
  %v180 = vld [vmem:[%s0 + $0x528] sm:$0xff]
  %v181 = vld [vmem:[%s0 + $0x530] sm:$0xff]
  %v182 = vld [vmem:[%s0 + $0x538] sm:$0xff]
  %v183 = vld [vmem:[%s0 + $0x540] sm:$0xff]
  %v184 = vld [vmem:[%s0 + $0x548] sm:$0xff]
  %v185 = vld [vmem:[%s0 + $0x550] sm:$0xff]
  %v186 = vld [vmem:[%s0 + $0x558] sm:$0xff]
  %v187 = vld [vmem:[%s0 + $0x560] sm:$0xff]
  %v188 = vld [vmem:[%s0 + $0x568] sm:$0xff]
  %v189 = vld [vmem:[%s0 + $0x570] sm:$0xff]
  %v190 = vld [vmem:[%s0 + $0x578] sm:$0xff]
  %v191 = vld [vmem:[%s0 + $0x580] sm:$0xff]
  %v192 = vld [vmem:[%s0 + $0x588] sm:$0xff]
  %v193 = vld [vmem:[%s0 + $0x590] sm:$0xff]
  %v194 = vld [vmem:[%s0 + $0x598] sm:$0xff]
  %v195 = vld [vmem:[%s0 + $0x5a0] sm:$0xff]
  %v196 = vld [vmem:[%s0 + $0x5a8] sm:$0xff]
  %v197 = vld [vmem:[%s0 + $0x5b0] sm:$0xff]
  %v198 = vld [vmem:[%s0 + $0x5b8] sm:$0xff]
  %v199 = vld [vmem:[%s0 + $0x5c0] sm:$0xff]
  %v200 = vld [vmem:[%s0 + $0x5c8] sm:$0xff]
  %v201 = vld [vmem:[%s0 + $0x5d0] sm:$0xff]
  %v202 = vld [vmem:[%s0 + $0x5d8] sm:$0xff]
  %v203 = vld [vmem:[%s0 + $0x5e0] sm:$0xff]
  %v204 = vld [vmem:[%s0 + $0x5e8] sm:$0xff]
  %v205 = vld [vmem:[%s0 + $0x5f0] sm:$0xff]
  %v206 = vld [vmem:[%s0 + $0x5f8] sm:$0xff]
  %v207 = vld [vmem:[%s0 + $0x600] sm:$0xff]
  %v208 = vld [vmem:[%s0 + $0x608] sm:$0xff]
  %v209 = vld [vmem:[%s0 + $0x610] sm:$0xff]
  %v210 = vld [vmem:[%s0 + $0x618] sm:$0xff]
  %v211 = vld [vmem:[%s0 + $0x620] sm:$0xff]
  %v212 = vld [vmem:[%s0 + $0x628] sm:$0xff]
  %v213 = vld [vmem:[%s0 + $0x630] sm:$0xff]
  %v214 = vld [vmem:[%s0 + $0x638] sm:$0xff]
  %v215 = vld [vmem:[%s0 + $0x640] sm:$0xff]
  %v216 = vld [vmem:[%s0 + $0x648] sm:$0xff]
  %v217 = vld [vmem:[%s0 + $0x650] sm:$0xff]
  %v218 = vld [vmem:[%s0 + $0x658] sm:$0xff]
  %v219 = vld [vmem:[%s0 + $0x660] sm:$0xff]
  %v220 = vld [vmem:[%s0 + $0x668] sm:$0xff]
  %v221 = vld [vmem:[%s0 + $0x670] sm:$0xff]
  %v222 = vld [vmem:[%s0 + $0x678] sm:$0xff]
  %v223 = vld [vmem:[%s0 + $0x680] sm:$0xff]
  %v224 = vld [vmem:[%s0 + $0x688] sm:$0xff]
  %v225 = vld [vmem:[%s0 + $0x690] sm:$0xff]
  %v226 = vld [vmem:[%s0 + $0x698] sm:$0xff]
  %v227 = vld [vmem:[%s0 + $0x6a0] sm:$0xff]
  %v228 = vld [vmem:[%s0 + $0x6a8] sm:$0xff]
  %v229 = vld [vmem:[%s0 + $0x6b0] sm:$0xff]
  %v230 = vld [vmem:[%s0 + $0x6b8] sm:$0xff]
  %v231 = vld [vmem:[%s0 + $0x6c0] sm:$0xff]
  %v232 = vld [vmem:[%s0 + $0x6c8] sm:$0xff]
  %v233 = vld [vmem:[%s0 + $0x6d0] sm:$0xff]
  %v234 = vld [vmem:[%s0 + $0x6d8] sm:$0xff]
  %v235 = vld [vmem:[%s0 + $0x6e0] sm:$0xff]
  %v236 = vld [vmem:[%s0 + $0x6e8] sm:$0xff]
  %v237 = vld [vmem:[%s0 + $0x6f0] sm:$0xff]
  %v238 = vld [vmem:[%s0 + $0x6f8] sm:$0xff]
  %v239 = vld [vmem:[%s0 + $0x700] sm:$0xff]
  %v240 = vld [vmem:[%s0 + $0x708] sm:$0xff]
  %v241 = vld [vmem:[%s0 + $0x710] sm:$0xff]
  %v242 = vld [vmem:[%s0 + $0x718] sm:$0xff]
  %v243 = vld [vmem:[%s0 + $0x720] sm:$0xff]
  %v244 = vld [vmem:[%s0 + $0x728] sm:$0xff]
  %v245 = vld [vmem:[%s0 + $0x730] sm:$0xff]
  %v246 = vld [vmem:[%s0 + $0x738] sm:$0xff]
  %v247 = vld [vmem:[%s0 + $0x740] sm:$0xff]
  %v248 = vld [vmem:[%s0 + $0x748] sm:$0xff]
  %v249 = vld [vmem:[%s0 + $0x750] sm:$0xff]
  %v250 = vld [vmem:[%s0 + $0x758] sm:$0xff]
  %v251 = vld [vmem:[%s0 + $0x760] sm:$0xff]
  %v252 = vld [vmem:[%s0 + $0x768] sm:$0xff]
  %v253 = vld [vmem:[%s0 + $0x770] sm:$0xff]
  %v254 = vld [vmem:[%s0 + $0x778] sm:$0xff]
  %v255 = vld [vmem:[%s0 + $0x780] sm:$0xff]
  %v256 = vld [vmem:[%s0 + $0x788] sm:$0xff]
  %v257 = vld [vmem:[%s0 + $0x790] sm:$0xff]
  %v258 = vld [vmem:[%s0 + $0x798] sm:$0xff]
  %v259 = vld [vmem:[%s0 + $0x7a0] sm:$0xff]
  %v260 = vld [vmem:[%s0 + $0x7a8] sm:$0xff]
  %v261 = vld [vmem:[%s0 + $0x7b0] sm:$0xff]
  %v262 = vld [vmem:[%s0 + $0x7b8] sm:$0xff]
  %v263 = vld [vmem:[%s0 + $0x7c0] sm:$0xff]
  %v264 = vld [vmem:[%s0 + $0x7c8] sm:$0xff]
  %v265 = vld [vmem:[%s0 + $0x7d0] sm:$0xff]
  %v266 = vld [vmem:[%s0 + $0x7d8] sm:$0xff]
  %v267 = vld [vmem:[%s0 + $0x7e0] sm:$0xff]
  %v268 = vld [vmem:[%s0 + $0x7e8] sm:$0xff]
  %v269 = vld [vmem:[%s0 + $0x7f0] sm:$0xff]
  %v270 = vld [vmem:[%s0 + $0x7f8] sm:$0xff]
  %v271 = vld [vmem:[%s0 + $0x800] sm:$0xff]
  %v272 = vld [vmem:[%s0 + $0x808] sm:$0xff]
  %v273 = vld [vmem:[%s0 + $0x810] sm:$0xff]
  %v274 = vld [vmem:[%s0 + $0x818] sm:$0xff]
  %v275 = vld [vmem:[%s0 + $0x820] sm:$0xff]
  %v276 = vld [vmem:[%s0 + $0x828] sm:$0xff]
  %v277 = vld [vmem:[%s0 + $0x830] sm:$0xff]
  %v278 = vld [vmem:[%s0 + $0x838] sm:$0xff]
  %v279 = vld [vmem:[%s0 + $0x840] sm:$0xff]
  %v280 = vld [vmem:[%s0 + $0x848] sm:$0xff]
  %v281 = vld [vmem:[%s0 + $0x850] sm:$0xff]
  %v282 = vld [vmem:[%s0 + $0x858] sm:$0xff]
  %v283 = vld [vmem:[%s0 + $0x860] sm:$0xff]
  %v284 = vld [vmem:[%s0 + $0x868] sm:$0xff]
  %v285 = vld [vmem:[%s0 + $0x870] sm:$0xff]
  %v286 = vld [vmem:[%s0 + $0x878] sm:$0xff]
  %v287 = vld [vmem:[%s0 + $0x880] sm:$0xff]
  %v288 = vld [vmem:[%s0 + $0x888] sm:$0xff]
  %v289 = vld [vmem:[%s0 + $0x890] sm:$0xff]
  %v290 = vld [vmem:[%s0 + $0x898] sm:$0xff]
  %v291 = vld [vmem:[%s0 + $0x8a0] sm:$0xff]
  %v292 = vld [vmem:[%s0 + $0x8a8] sm:$0xff]
  %v293 = vld [vmem:[%s0 + $0x8b0] sm:$0xff]
  %v294 = vld [vmem:[%s0 + $0x8b8] sm:$0xff]
  %v295 = vld [vmem:[%s0 + $0x8c0] sm:$0xff]
  %v296 = vld [vmem:[%s0 + $0x8c8] sm:$0xff]
  %v297 = vld [vmem:[%s0 + $0x8d0] sm:$0xff]
  %v298 = vld [vmem:[%s0 + $0x8d8] sm:$0xff]
  %v299 = vld [vmem:[%s0 + $0x8e0] sm:$0xff]
  %v300 = vld [vmem:[%s0 + $0x8e8] sm:$0xff]
  %v301 = vld [vmem:[%s0 + $0x8f0] sm:$0xff]
  %v302 = vld [vmem:[%s0 + $0x8f8] sm:$0xff]
  %v303 = vld [vmem:[%s0 + $0x900] sm:$0xff]
  %v304 = vld [vmem:[%s0 + $0x908] sm:$0xff]
  %v305 = vld [vmem:[%s0 + $0x910] sm:$0xff]
  %v306 = vld [vmem:[%s0 + $0x918] sm:$0xff]
  %v307 = vld [vmem:[%s0 + $0x920] sm:$0xff]
  %v308 = vld [vmem:[%s0 + $0x928] sm:$0xff]
  %v309 = vld [vmem:[%s0 + $0x930] sm:$0xff]
  %v310 = vld [vmem:[%s0 + $0x938] sm:$0xff]
  %v311 = vld [vmem:[%s0 + $0x940] sm:$0xff]
  %v312 = vld [vmem:[%s0 + $0x948] sm:$0xff]
  %v313 = vld [vmem:[%s0 + $0x950] sm:$0xff]
  %v314 = vld [vmem:[%s0 + $0x958] sm:$0xff]
  %v315 = vld [vmem:[%s0 + $0x960] sm:$0xff]
  %v316 = vld [vmem:[%s0 + $0x968] sm:$0xff]
  %v317 = vld [vmem:[%s0 + $0x970] sm:$0xff]
  %v318 = vld [vmem:[%s0 + $0x978] sm:$0xff]
  %v319 = vld [vmem:[%s0 + $0x980] sm:$0xff]
  %v320 = vld [vmem:[%s0 + $0x988] sm:$0xff]
  %v321 = vld [vmem:[%s0 + $0x990] sm:$0xff]
  %v322 = vld [vmem:[%s0 + $0x998] sm:$0xff]
  %v323 = vld [vmem:[%s0 + $0x9a0] sm:$0xff]
  %v324 = vld [vmem:[%s0 + $0x9a8] sm:$0xff]
  %v325 = vld [vmem:[%s0 + $0x9b0] sm:$0xff]
  %v326 = vld [vmem:[%s0 + $0x9b8] sm:$0xff]
  %v327 = vld [vmem:[%s0 + $0x9c0] sm:$0xff]
  %v328 = vld [vmem:[%s0 + $0x9c8] sm:$0xff]
  %v329 = vld [vmem:[%s0 + $0x9d0] sm:$0xff]
  %v330 = vld [vmem:[%s0 + $0x9d8] sm:$0xff]
  %v331 = vld [vmem:[%s0 + $0x9e0] sm:$0xff]
  %v332 = vld [vmem:[%s0 + $0x9e8] sm:$0xff]
  %v333 = vld [vmem:[%s0 + $0x9f0] sm:$0xff]
  %v334 = vld [vmem:[%s0 + $0x9f8] sm:$0xff]
  %v335 = vld [vmem:[%s0 + $0xa00] sm:$0xff]
  %v336 = vld [vmem:[%s0 + $0xa08] sm:$0xff]
  %v337 = vld [vmem:[%s0 + $0xa10] sm:$0xff]
  %v338 = vld [vmem:[%s0 + $0xa18] sm:$0xff]
  %v339 = vld [vmem:[%s0 + $0xa20] sm:$0xff]
  %v340 = vld [vmem:[%s0 + $0xa28] sm:$0xff]
  %v341 = vld [vmem:[%s0 + $0xa30] sm:$0xff]
  %v342 = vld [vmem:[%s0 + $0xa38] sm:$0xff]
  %v343 = vld [vmem:[%s0 + $0xa40] sm:$0xff]
  %v344 = vld [vmem:[%s0 + $0xa48] sm:$0xff]
  %v345 = vld [vmem:[%s0 + $0xa50] sm:$0xff]
  %v346 = vld [vmem:[%s0 + $0xa58] sm:$0xff]
  %v347 = vld [vmem:[%s0 + $0xa60] sm:$0xff]
  %v348 = vld [vmem:[%s0 + $0xa68] sm:$0xff]
  %v349 = vld [vmem:[%s0 + $0xa70] sm:$0xff]
  %v350 = vld [vmem:[%s0 + $0xa78] sm:$0xff]
  %v351 = vld [vmem:[%s0 + $0xa80] sm:$0xff]
  %v352 = vld [vmem:[%s0 + $0xa88] sm:$0xff]
  %v353 = vld [vmem:[%s0 + $0xa90] sm:$0xff]
  %v354 = vld [vmem:[%s0 + $0xa98] sm:$0xff]
  %v355 = vld [vmem:[%s0 + $0xaa0] sm:$0xff]
  %v356 = vld [vmem:[%s0 + $0xaa8] sm:$0xff]
  %v357 = vld [vmem:[%s0 + $0xab0] sm:$0xff]
  %v358 = vld [vmem:[%s0 + $0xab8] sm:$0xff]
  %v359 = vld [vmem:[%s0 + $0xac0] sm:$0xff]
  %v360 = vld [vmem:[%s0 + $0xac8] sm:$0xff]
  %v361 = vld [vmem:[%s0 + $0xad0] sm:$0xff]
  %v362 = vld [vmem:[%s0 + $0xad8] sm:$0xff]
  %v363 = vld [vmem:[%s0 + $0xae0] sm:$0xff]
  %v364 = vld [vmem:[%s0 + $0xae8] sm:$0xff]
  %v365 = vld [vmem:[%s0 + $0xaf0] sm:$0xff]
  %v366 = vld [vmem:[%s0 + $0xaf8] sm:$0xff]
  %v367 = vld [vmem:[%s0 + $0xb00] sm:$0xff]
  %v368 = vld [vmem:[%s0 + $0xb08] sm:$0xff]
  %v369 = vld [vmem:[%s0 + $0xb10] sm:$0xff]
  %v370 = vld [vmem:[%s0 + $0xb18] sm:$0xff]
  %v371 = vld [vmem:[%s0 + $0xb20] sm:$0xff]
  %v372 = vld [vmem:[%s0 + $0xb28] sm:$0xff]
  %v373 = vld [vmem:[%s0 + $0xb30] sm:$0xff]
  %v374 = vld [vmem:[%s0 + $0xb38] sm:$0xff]
  %v375 = vld [vmem:[%s0 + $0xb40] sm:$0xff]
  %v376 = vld [vmem:[%s0 + $0xb48] sm:$0xff]
  %v377 = vld [vmem:[%s0 + $0xb50] sm:$0xff]
  %v378 = vld [vmem:[%s0 + $0xb58] sm:$0xff]
  %v379 = vld [vmem:[%s0 + $0xb60] sm:$0xff]
  %v380 = vld [vmem:[%s0 + $0xb68] sm:$0xff]
  %v381 = vld [vmem:[%s0 + $0xb70] sm:$0xff]
  %v382 = vld [vmem:[%s0 + $0xb78] sm:$0xff]
  %v383 = vld [vmem:[%s0 + $0xb80] sm:$0xff]
  %v384 = vld [vmem:[%s0 + $0xb88] sm:$0xff]
  %v385 = vld [vmem:[%s0 + $0xb90] sm:$0xff]
  %v386 = vld [vmem:[%s0 + $0xb98] sm:$0xff]
  %v387 = vld [vmem:[%s0 + $0xba0] sm:$0xff]
  %v388 = vld [vmem:[%s0 + $0xba8] sm:$0xff]
  %v389 = vld [vmem:[%s0 + $0xbb0] sm:$0xff]
  %v390 = vld [vmem:[%s0 + $0xbb8] sm:$0xff]
  %v391 = vld [vmem:[%s0 + $0xbc0] sm:$0xff]
  %v392 = vld [vmem:[%s0 + $0xbc8] sm:$0xff]
  %v393 = vld [vmem:[%s0 + $0xbd0] sm:$0xff]
  %v394 = vld [vmem:[%s0 + $0xbd8] sm:$0xff]
  %v395 = vld [vmem:[%s0 + $0xbe0] sm:$0xff]
  %v396 = vld [vmem:[%s0 + $0xbe8] sm:$0xff]
  %v397 = vld [vmem:[%s0 + $0xbf0] sm:$0xff]
  %v398 = vld [vmem:[%s0 + $0xbf8] sm:$0xff]
  %v399 = vld [vmem:[%s0 + $0xc00] sm:$0xff]
  %v400 = vld [vmem:[%s0 + $0xc08] sm:$0xff]
  %v401 = vld [vmem:[%s0 + $0xc10] sm:$0xff]
  %v402 = vld [vmem:[%s0 + $0xc18] sm:$0xff]
  %v403 = vld [vmem:[%s0 + $0xc20] sm:$0xff]
  %v404 = vld [vmem:[%s0 + $0xc28] sm:$0xff]
  %v405 = vld [vmem:[%s0 + $0xc30] sm:$0xff]
  %v406 = vld [vmem:[%s0 + $0xc38] sm:$0xff]
  %v407 = vld [vmem:[%s0 + $0xc40] sm:$0xff]
  %v408 = vld [vmem:[%s0 + $0xc48] sm:$0xff]
  %v409 = vld [vmem:[%s0 + $0xc50] sm:$0xff]
  %v410 = vld [vmem:[%s0 + $0xc58] sm:$0xff]
  %v411 = vld [vmem:[%s0 + $0xc60] sm:$0xff]
  %v412 = vld [vmem:[%s0 + $0xc68] sm:$0xff]
  %v413 = vld [vmem:[%s0 + $0xc70] sm:$0xff]
  %v414 = vld [vmem:[%s0 + $0xc78] sm:$0xff]
  %v415 = vld [vmem:[%s0 + $0xc80] sm:$0xff]
  %v416 = vld [vmem:[%s0 + $0xc88] sm:$0xff]
  %v417 = vld [vmem:[%s0 + $0xc90] sm:$0xff]
  %v418 = vld [vmem:[%s0 + $0xc98] sm:$0xff]
  %v419 = vld [vmem:[%s0 + $0xca0] sm:$0xff]
  %v420 = vld [vmem:[%s0 + $0xca8] sm:$0xff]
  %v421 = vld [vmem:[%s0 + $0xcb0] sm:$0xff]
  %v422 = vld [vmem:[%s0 + $0xcb8] sm:$0xff]
  %v423 = vld [vmem:[%s0 + $0xcc0] sm:$0xff]
  %v424 = vld [vmem:[%s0 + $0xcc8] sm:$0xff]
  %v425 = vld [vmem:[%s0 + $0xcd0] sm:$0xff]
  %v426 = vld [vmem:[%s0 + $0xcd8] sm:$0xff]
  %v427 = vld [vmem:[%s0 + $0xce0] sm:$0xff]
  %v428 = vld [vmem:[%s0 + $0xce8] sm:$0xff]
  %v429 = vld [vmem:[%s0 + $0xcf0] sm:$0xff]
  %v430 = vld [vmem:[%s0 + $0xcf8] sm:$0xff]
  %v431 = vld [vmem:[%s0 + $0xd00] sm:$0xff]
  %v432 = vld [vmem:[%s0 + $0xd08] sm:$0xff]
  %v433 = vld [vmem:[%s0 + $0xd10] sm:$0xff]
  %v434 = vld [vmem:[%s0 + $0xd18] sm:$0xff]
  %v435 = vld [vmem:[%s0 + $0xd20] sm:$0xff]
  %v436 = vld [vmem:[%s0 + $0xd28] sm:$0xff]
  %v437 = vld [vmem:[%s0 + $0xd30] sm:$0xff]
  %v438 = vld [vmem:[%s0 + $0xd38] sm:$0xff]
  %v439 = vld [vmem:[%s0 + $0xd40] sm:$0xff]
  %v440 = vld [vmem:[%s0 + $0xd48] sm:$0xff]
  %v441 = vld [vmem:[%s0 + $0xd50] sm:$0xff]
  %v442 = vld [vmem:[%s0 + $0xd58] sm:$0xff]
  %v443 = vld [vmem:[%s0 + $0xd60] sm:$0xff]
  %v444 = vld [vmem:[%s0 + $0xd68] sm:$0xff]
  %v445 = vld [vmem:[%s0 + $0xd70] sm:$0xff]
  %v446 = vld [vmem:[%s0 + $0xd78] sm:$0xff]
  %v447 = vld [vmem:[%s0 + $0xd80] sm:$0xff]
  %v448 = vld [vmem:[%s0 + $0xd88] sm:$0xff]
  %v449 = vld [vmem:[%s0 + $0xd90] sm:$0xff]
  %v450 = vld [vmem:[%s0 + $0xd98] sm:$0xff]
  %v451 = vld [vmem:[%s0 + $0xda0] sm:$0xff]
  %v452 = vld [vmem:[%s0 + $0xda8] sm:$0xff]
  %v453 = vld [vmem:[%s0 + $0xdb0] sm:$0xff]
  %v454 = vld [vmem:[%s0 + $0xdb8] sm:$0xff]
  %v455 = vld [vmem:[%s0 + $0xdc0] sm:$0xff]
  %v456 = vld [vmem:[%s0 + $0xdc8] sm:$0xff]
  %v457 = vld [vmem:[%s0 + $0xdd0] sm:$0xff]
  %v458 = vld [vmem:[%s0 + $0xdd8] sm:$0xff]
  %v459 = vld [vmem:[%s0 + $0xde0] sm:$0xff]
  %v460 = vld [vmem:[%s0 + $0xde8] sm:$0xff]
  %v461 = vld [vmem:[%s0 + $0xdf0] sm:$0xff]
  %v462 = vld [vmem:[%s0 + $0xdf8] sm:$0xff]
  %v463 = vld [vmem:[%s0 + $0xe00] sm:$0xff]
  %v464 = vld [vmem:[%s0 + $0xe08] sm:$0xff]
  %v465 = vld [vmem:[%s0 + $0xe10] sm:$0xff]
  %v466 = vld [vmem:[%s0 + $0xe18] sm:$0xff]
  %v467 = vld [vmem:[%s0 + $0xe20] sm:$0xff]
  %v468 = vld [vmem:[%s0 + $0xe28] sm:$0xff]
  %v469 = vld [vmem:[%s0 + $0xe30] sm:$0xff]
  %v470 = vld [vmem:[%s0 + $0xe38] sm:$0xff]
  %v471 = vld [vmem:[%s0 + $0xe40] sm:$0xff]
  %v472 = vld [vmem:[%s0 + $0xe48] sm:$0xff]
  %v473 = vld [vmem:[%s0 + $0xe50] sm:$0xff]
  %v474 = vld [vmem:[%s0 + $0xe58] sm:$0xff]
  %v475 = vld [vmem:[%s0 + $0xe60] sm:$0xff]
  %v476 = vld [vmem:[%s0 + $0xe68] sm:$0xff]
  %v477 = vld [vmem:[%s0 + $0xe70] sm:$0xff]
  %v478 = vld [vmem:[%s0 + $0xe78] sm:$0xff]
  %v479 = vld [vmem:[%s0 + $0xe80] sm:$0xff]
  %v480 = vld [vmem:[%s0 + $0xe88] sm:$0xff]
  %v481 = vld [vmem:[%s0 + $0xe90] sm:$0xff]
  %v482 = vld [vmem:[%s0 + $0xe98] sm:$0xff]
  %v483 = vld [vmem:[%s0 + $0xea0] sm:$0xff]
  %v484 = vld [vmem:[%s0 + $0xea8] sm:$0xff]
  %v485 = vld [vmem:[%s0 + $0xeb0] sm:$0xff]
  %v486 = vld [vmem:[%s0 + $0xeb8] sm:$0xff]
  %v487 = vld [vmem:[%s0 + $0xec0] sm:$0xff]
  %v488 = vld [vmem:[%s0 + $0xec8] sm:$0xff]
  %v489 = vld [vmem:[%s0 + $0xed0] sm:$0xff]
  %v490 = vld [vmem:[%s0 + $0xed8] sm:$0xff]
  %v491 = vld [vmem:[%s0 + $0xee0] sm:$0xff]
  %v492 = vld [vmem:[%s0 + $0xee8] sm:$0xff]
  %v493 = vld [vmem:[%s0 + $0xef0] sm:$0xff]
  %v494 = vld [vmem:[%s0 + $0xef8] sm:$0xff]
  %v495 = vld [vmem:[%s0 + $0xf00] sm:$0xff]
  %v496 = vld [vmem:[%s0 + $0xf08] sm:$0xff]
  %v497 = vld [vmem:[%s0 + $0xf10] sm:$0xff]
  %v498 = vld [vmem:[%s0 + $0xf18] sm:$0xff]
  %v499 = vld [vmem:[%s0 + $0xf20] sm:$0xff]
  %v500 = vld [vmem:[%s0 + $0xf28] sm:$0xff]
  %v501 = vld [vmem:[%s0 + $0xf30] sm:$0xff]
  %v502 = vld [vmem:[%s0 + $0xf38] sm:$0xff]
  %v503 = vld [vmem:[%s0 + $0xf40] sm:$0xff]
  %v504 = vld [vmem:[%s0 + $0xf48] sm:$0xff]
  %v505 = vld [vmem:[%s0 + $0xf50] sm:$0xff]
  %v506 = vld [vmem:[%s0 + $0xf58] sm:$0xff]
  %v507 = vld [vmem:[%s0 + $0xf60] sm:$0xff]
  %v508 = vld [vmem:[%s0 + $0xf68] sm:$0xff]
  %v509 = vld [vmem:[%s0 + $0xf70] sm:$0xff]
  %v510 = vld [vmem:[%s0 + $0xf78] sm:$0xff]
  %v511 = vld [vmem:[%s0 + $0xf80] sm:$0xff]
  %v512 = vld [vmem:[%s0 + $0xf88] sm:$0xff]
  %v513 = vld [vmem:[%s0 + $0xf90] sm:$0xff]
  %v514 = vld [vmem:[%s0 + $0xf98] sm:$0xff]
  %v515 = vld [vmem:[%s0 + $0xfa0] sm:$0xff]
  %v516 = vld [vmem:[%s0 + $0xfa8] sm:$0xff]
  %v517 = vld [vmem:[%s0 + $0xfb0] sm:$0xff]
  %v518 = vld [vmem:[%s0 + $0xfb8] sm:$0xff]
  %v519 = vld [vmem:[%s0 + $0xfc0] sm:$0xff]
  %v520 = vld [vmem:[%s0 + $0xfc8] sm:$0xff]
  %v521 = vld [vmem:[%s0 + $0xfd0] sm:$0xff]
  %v522 = vld [vmem:[%s0 + $0xfd8] sm:$0xff]
  %v523 = vld [vmem:[%s0 + $0xfe0] sm:$0xff]
  %v524 = vld [vmem:[%s0 + $0xfe8] sm:$0xff]
  %v525 = vld [vmem:[%s0 + $0xff0] sm:$0xff]
  %v526 = vld [vmem:[%s0 + $0xff8] sm:$0xff]
  %v527 = vld [vmem:[%s0 + $0x1000] sm:$0xff]
  %v528 = vld [vmem:[%s0 + $0x1008] sm:$0xff]
  %v529 = vld [vmem:[%s0 + $0x1010] sm:$0xff]
  %v530 = vld [vmem:[%s0 + $0x1018] sm:$0xff]
  %v531 = vld [vmem:[%s0 + $0x1020] sm:$0xff]
  %v532 = vld [vmem:[%s0 + $0x1028] sm:$0xff]
  %v533 = vld [vmem:[%s0 + $0x1030] sm:$0xff]
  %v534 = vld [vmem:[%s0 + $0x1038] sm:$0xff]
  %v535 = vld [vmem:[%s0 + $0x1040] sm:$0xff]
  %v536 = vld [vmem:[%s0 + $0x1048] sm:$0xff]
  %v537 = vld [vmem:[%s0 + $0x1050] sm:$0xff]
  %v538 = vld [vmem:[%s0 + $0x1058] sm:$0xff]
  %v539 = vld [vmem:[%s0 + $0x1060] sm:$0xff]
  %v540 = vld [vmem:[%s0 + $0x1068] sm:$0xff]
  %v541 = vld [vmem:[%s0 + $0x1070] sm:$0xff]
  %v542 = vld [vmem:[%s0 + $0x1078] sm:$0xff]
  %v543 = vld [vmem:[%s0 + $0x1080] sm:$0xff]
  %v544 = vld [vmem:[%s0 + $0x1088] sm:$0xff]
  %v545 = vld [vmem:[%s0 + $0x1090] sm:$0xff]
  %v546 = vld [vmem:[%s0 + $0x1098] sm:$0xff]
  %v547 = vld [vmem:[%s0 + $0x10a0] sm:$0xff]
  %v548 = vld [vmem:[%s0 + $0x10a8] sm:$0xff]
  %v549 = vld [vmem:[%s0 + $0x10b0] sm:$0xff]
  %v550 = vld [vmem:[%s0 + $0x10b8] sm:$0xff]
  %v551 = vld [vmem:[%s0 + $0x10c0] sm:$0xff]
  %v552 = vld [vmem:[%s0 + $0x10c8] sm:$0xff]
  %v553 = vld [vmem:[%s0 + $0x10d0] sm:$0xff]
  %v554 = vld [vmem:[%s0 + $0x10d8] sm:$0xff]
  %v555 = vld [vmem:[%s0 + $0x10e0] sm:$0xff]
  %v556 = vld [vmem:[%s0 + $0x10e8] sm:$0xff]
  %v557 = vld [vmem:[%s0 + $0x10f0] sm:$0xff]
  %v558 = vld [vmem:[%s0 + $0x10f8] sm:$0xff]
  %v559 = vld [vmem:[%s0 + $0x1100] sm:$0xff]
  %v560 = vld [vmem:[%s0 + $0x1108] sm:$0xff]
  %v561 = vld [vmem:[%s0 + $0x1110] sm:$0xff]
  %v562 = vld [vmem:[%s0 + $0x1118] sm:$0xff]
  %v563 = vld [vmem:[%s0 + $0x1120] sm:$0xff]
  %v564 = vld [vmem:[%s0 + $0x1128] sm:$0xff]
  %v565 = vld [vmem:[%s0 + $0x1130] sm:$0xff]
  %v566 = vld [vmem:[%s0 + $0x1138] sm:$0xff]
  %v567 = vld [vmem:[%s0 + $0x1140] sm:$0xff]
  %v568 = vld [vmem:[%s0 + $0x1148] sm:$0xff]
  %v569 = vld [vmem:[%s0 + $0x1150] sm:$0xff]
  %v570 = vld [vmem:[%s0 + $0x1158] sm:$0xff]
  %v571 = vld [vmem:[%s0 + $0x1160] sm:$0xff]
  %v572 = vld [vmem:[%s0 + $0x1168] sm:$0xff]
  %v573 = vld [vmem:[%s0 + $0x1170] sm:$0xff]
  %v574 = vld [vmem:[%s0 + $0x1178] sm:$0xff]
  %v575 = vld [vmem:[%s0 + $0x1180] sm:$0xff]
  %v576 = vld [vmem:[%s0 + $0x1188] sm:$0xff]
  %v577 = vld [vmem:[%s0 + $0x1190] sm:$0xff]
  %v578 = vld [vmem:[%s0 + $0x1198] sm:$0xff]
  %v579 = vld [vmem:[%s0 + $0x11a0] sm:$0xff]
  %v580 = vld [vmem:[%s0 + $0x11a8] sm:$0xff]
  %v581 = vld [vmem:[%s0 + $0x11b0] sm:$0xff]
  %v582 = vld [vmem:[%s0 + $0x11b8] sm:$0xff]
  %v583 = vld [vmem:[%s0 + $0x11c0] sm:$0xff]
  %v584 = vld [vmem:[%s0 + $0x11c8] sm:$0xff]
  %v585 = vld [vmem:[%s0 + $0x11d0] sm:$0xff]
  %v586 = vld [vmem:[%s0 + $0x11d8] sm:$0xff]
  %v587 = vld [vmem:[%s0 + $0x11e0] sm:$0xff]
  %v588 = vld [vmem:[%s0 + $0x11e8] sm:$0xff]
  %v589 = vld [vmem:[%s0 + $0x11f0] sm:$0xff]
  %v590 = vld [vmem:[%s0 + $0x11f8] sm:$0xff]
  %v591 = vld [vmem:[%s0 + $0x1200] sm:$0xff]
  %v592 = vld [vmem:[%s0 + $0x1208] sm:$0xff]
  %v593 = vld [vmem:[%s0 + $0x1210] sm:$0xff]
  %v594 = vld [vmem:[%s0 + $0x1218] sm:$0xff]
  %v595 = vld [vmem:[%s0 + $0x1220] sm:$0xff]
  %v596 = vld [vmem:[%s0 + $0x1228] sm:$0xff]
  %v597 = vld [vmem:[%s0 + $0x1230] sm:$0xff]
  %v598 = vld [vmem:[%s0 + $0x1238] sm:$0xff]
  %v599 = vld [vmem:[%s0 + $0x1240] sm:$0xff]
  %v600 = vld [vmem:[%s0 + $0x1248] sm:$0xff]
  %v601 = vld [vmem:[%s0 + $0x1250] sm:$0xff]
  %v602 = vld [vmem:[%s0 + $0x1258] sm:$0xff]
  %v603 = vld [vmem:[%s0 + $0x1260] sm:$0xff]
  %v604 = vld [vmem:[%s0 + $0x1268] sm:$0xff]
  %v605 = vld [vmem:[%s0 + $0x1270] sm:$0xff]
  %v606 = vld [vmem:[%s0 + $0x1278] sm:$0xff]
  %v607 = vld [vmem:[%s0 + $0x1280] sm:$0xff]
  %v608 = vld [vmem:[%s0 + $0x1288] sm:$0xff]
  %v609 = vld [vmem:[%s0 + $0x1290] sm:$0xff]
  %v610 = vld [vmem:[%s0 + $0x1298] sm:$0xff]
  %v611 = vld [vmem:[%s0 + $0x12a0] sm:$0xff]
  %v612 = vld [vmem:[%s0 + $0x12a8] sm:$0xff]
  %v613 = vld [vmem:[%s0 + $0x12b0] sm:$0xff]
  %v614 = vld [vmem:[%s0 + $0x12b8] sm:$0xff]
  %v615 = vld [vmem:[%s0 + $0x12c0] sm:$0xff]
  %v616 = vld [vmem:[%s0 + $0x12c8] sm:$0xff]
  %v617 = vld [vmem:[%s0 + $0x12d0] sm:$0xff]
  %v618 = vld [vmem:[%s0 + $0x12d8] sm:$0xff]
  %v619 = vld [vmem:[%s0 + $0x12e0] sm:$0xff]
  %v620 = vld [vmem:[%s0 + $0x12e8] sm:$0xff]
  %v621 = vld [vmem:[%s0 + $0x12f0] sm:$0xff]
  %v622 = vld [vmem:[%s0 + $0x12f8] sm:$0xff]
  %v623 = vld [vmem:[%s0 + $0x1300] sm:$0xff]
  %v624 = vld [vmem:[%s0 + $0x1308] sm:$0xff]
  %v625 = vld [vmem:[%s0 + $0x1310] sm:$0xff]
  %v626 = vld [vmem:[%s0 + $0x1318] sm:$0xff]
  %v627 = vld [vmem:[%s0 + $0x1320] sm:$0xff]
  %v628 = vld [vmem:[%s0 + $0x1328] sm:$0xff]
  %v629 = vld [vmem:[%s0 + $0x1330] sm:$0xff]
  %v630 = vld [vmem:[%s0 + $0x1338] sm:$0xff]
  %v631 = vld [vmem:[%s0 + $0x1340] sm:$0xff]
  %v632 = vld [vmem:[%s0 + $0x1348] sm:$0xff]
  %v633 = vld [vmem:[%s0 + $0x1350] sm:$0xff]
  %v634 = vld [vmem:[%s0 + $0x1358] sm:$0xff]
  %v635 = vld [vmem:[%s0 + $0x1360] sm:$0xff]
  %v636 = vld [vmem:[%s0 + $0x1368] sm:$0xff]
  %v637 = vld [vmem:[%s0 + $0x1370] sm:$0xff]
  %v638 = vld [vmem:[%s0 + $0x1378] sm:$0xff]
  %v639 = vld [vmem:[%s0 + $0x1380] sm:$0xff]
  %v640 = vld [vmem:[%s0 + $0x1388] sm:$0xff]
  %v641 = vld [vmem:[%s0 + $0x1390] sm:$0xff]
  %v642 = vld [vmem:[%s0 + $0x1398] sm:$0xff]
  %v643 = vld [vmem:[%s0 + $0x13a0] sm:$0xff]
  %v644 = vld [vmem:[%s0 + $0x13a8] sm:$0xff]
  %v645 = vld [vmem:[%s0 + $0x13b0] sm:$0xff]
  %v646 = vld [vmem:[%s0 + $0x13b8] sm:$0xff]
  %v647 = vld [vmem:[%s0 + $0x13c0] sm:$0xff]
  %v648 = vld [vmem:[%s0 + $0x13c8] sm:$0xff]
  %v649 = vld [vmem:[%s0 + $0x13d0] sm:$0xff]
  %v650 = vld [vmem:[%s0 + $0x13d8] sm:$0xff]
  %v651 = vld [vmem:[%s0 + $0x13e0] sm:$0xff]
  %v652 = vld [vmem:[%s0 + $0x13e8] sm:$0xff]
  %v653 = vld [vmem:[%s0 + $0x13f0] sm:$0xff]
  %v654 = vld [vmem:[%s0 + $0x13f8] sm:$0xff]
  %v655 = vld [vmem:[%s0 + $0x1400] sm:$0xff]
  %v656 = vld [vmem:[%s0 + $0x1408] sm:$0xff]
  %v657 = vld [vmem:[%s0 + $0x1410] sm:$0xff]
  %v658 = vld [vmem:[%s0 + $0x1418] sm:$0xff]
  %v659 = vld [vmem:[%s0 + $0x1420] sm:$0xff]
  %v660 = vld [vmem:[%s0 + $0x1428] sm:$0xff]
  %v661 = vld [vmem:[%s0 + $0x1430] sm:$0xff]
  %v662 = vld [vmem:[%s0 + $0x1438] sm:$0xff]
  %v663 = vld [vmem:[%s0 + $0x1440] sm:$0xff]
  %v664 = vld [vmem:[%s0 + $0x1448] sm:$0xff]
  %v665 = vld [vmem:[%s0 + $0x1450] sm:$0xff]
  %v666 = vld [vmem:[%s0 + $0x1458] sm:$0xff]
  %v667 = vld [vmem:[%s0 + $0x1460] sm:$0xff]
  %v668 = vld [vmem:[%s0 + $0x1468] sm:$0xff]
  %v669 = vld [vmem:[%s0 + $0x1470] sm:$0xff]
  %v670 = vld [vmem:[%s0 + $0x1478] sm:$0xff]
  %v671 = vld [vmem:[%s0 + $0x1480] sm:$0xff]
  %v672 = vld [vmem:[%s0 + $0x1488] sm:$0xff]
  %v673 = vld [vmem:[%s0 + $0x1490] sm:$0xff]
  %v674 = vld [vmem:[%s0 + $0x1498] sm:$0xff]
  %v675 = vld [vmem:[%s0 + $0x14a0] sm:$0xff]
  %v676 = vld [vmem:[%s0 + $0x14a8] sm:$0xff]
  %v677 = vld [vmem:[%s0 + $0x14b0] sm:$0xff]
  %v678 = vld [vmem:[%s0 + $0x14b8] sm:$0xff]
  %v679 = vld [vmem:[%s0 + $0x14c0] sm:$0xff]
  %v680 = vld [vmem:[%s0 + $0x14c8] sm:$0xff]
  %v681 = vld [vmem:[%s0 + $0x14d0] sm:$0xff]
  %v682 = vld [vmem:[%s0 + $0x14d8] sm:$0xff]
  %v683 = vld [vmem:[%s0 + $0x14e0] sm:$0xff]
  %v684 = vld [vmem:[%s0 + $0x14e8] sm:$0xff]
  %v685 = vld [vmem:[%s0 + $0x14f0] sm:$0xff]
  %v686 = vld [vmem:[%s0 + $0x14f8] sm:$0xff]
  %v687 = vld [vmem:[%s0 + $0x1500] sm:$0xff]
  %v688 = vld [vmem:[%s0 + $0x1508] sm:$0xff]
  %v689 = vld [vmem:[%s0 + $0x1510] sm:$0xff]
  %v690 = vld [vmem:[%s0 + $0x1518] sm:$0xff]
  %v691 = vld [vmem:[%s0 + $0x1520] sm:$0xff]
  %v692 = vld [vmem:[%s0 + $0x1528] sm:$0xff]
  %v693 = vld [vmem:[%s0 + $0x1530] sm:$0xff]
  %v694 = vld [vmem:[%s0 + $0x1538] sm:$0xff]
  %v695 = vld [vmem:[%s0 + $0x1540] sm:$0xff]
  %v696 = vld [vmem:[%s0 + $0x1548] sm:$0xff]
  %v697 = vld [vmem:[%s0 + $0x1550] sm:$0xff]
  %v698 = vld [vmem:[%s0 + $0x1558] sm:$0xff]
  %v699 = vld [vmem:[%s0 + $0x1560] sm:$0xff]
  %v700 = vld [vmem:[%s0 + $0x1568] sm:$0xff]
  %v701 = vld [vmem:[%s0 + $0x1570] sm:$0xff]
  %v702 = vld [vmem:[%s0 + $0x1578] sm:$0xff]
  %v703 = vld [vmem:[%s0 + $0x1580] sm:$0xff]
  %v704 = vld [vmem:[%s0 + $0x1588] sm:$0xff]
  %v705 = vld [vmem:[%s0 + $0x1590] sm:$0xff]
  %v706 = vld [vmem:[%s0 + $0x1598] sm:$0xff]
  %v707 = vld [vmem:[%s0 + $0x15a0] sm:$0xff]
  %v708 = vld [vmem:[%s0 + $0x15a8] sm:$0xff]
  %v709 = vld [vmem:[%s0 + $0x15b0] sm:$0xff]
  %v710 = vld [vmem:[%s0 + $0x15b8] sm:$0xff]
  %v711 = vld [vmem:[%s0 + $0x15c0] sm:$0xff]
  %v712 = vld [vmem:[%s0 + $0x15c8] sm:$0xff]
  %v713 = vld [vmem:[%s0 + $0x15d0] sm:$0xff]
  %v714 = vld [vmem:[%s0 + $0x15d8] sm:$0xff]
  %v715 = vld [vmem:[%s0 + $0x15e0] sm:$0xff]
  %v716 = vld [vmem:[%s0 + $0x15e8] sm:$0xff]
  %v717 = vld [vmem:[%s0 + $0x15f0] sm:$0xff]
  %v718 = vld [vmem:[%s0 + $0x15f8] sm:$0xff]
  %v719 = vld [vmem:[%s0 + $0x1600] sm:$0xff]
  %v720 = vld [vmem:[%s0 + $0x1608] sm:$0xff]
  %v721 = vld [vmem:[%s0 + $0x1610] sm:$0xff]
  %v722 = vld [vmem:[%s0 + $0x1618] sm:$0xff]
  %v723 = vld [vmem:[%s0 + $0x1620] sm:$0xff]
  %v724 = vld [vmem:[%s0 + $0x1628] sm:$0xff]
  %v725 = vld [vmem:[%s0 + $0x1630] sm:$0xff]
  %v726 = vld [vmem:[%s0 + $0x1638] sm:$0xff]
  %v727 = vld [vmem:[%s0 + $0x1640] sm:$0xff]
  %v728 = vld [vmem:[%s0 + $0x1648] sm:$0xff]
  %v729 = vld [vmem:[%s0 + $0x1650] sm:$0xff]
  %v730 = vld [vmem:[%s0 + $0x1658] sm:$0xff]
  %v731 = vld [vmem:[%s0 + $0x1660] sm:$0xff]
  %v732 = vld [vmem:[%s0 + $0x1668] sm:$0xff]
  %v733 = vld [vmem:[%s0 + $0x1670] sm:$0xff]
  %v734 = vld [vmem:[%s0 + $0x1678] sm:$0xff]
  %v735 = vld [vmem:[%s0 + $0x1680] sm:$0xff]
  %v736 = vld [vmem:[%s0 + $0x1688] sm:$0xff]
  %v737 = vld [vmem:[%s0 + $0x1690] sm:$0xff]
  %v738 = vld [vmem:[%s0 + $0x1698] sm:$0xff]
  %v739 = vld [vmem:[%s0 + $0x16a0] sm:$0xff]
  %v740 = vld [vmem:[%s0 + $0x16a8] sm:$0xff]
  %v741 = vld [vmem:[%s0 + $0x16b0] sm:$0xff]
  %v742 = vld [vmem:[%s0 + $0x16b8] sm:$0xff]
  %v743 = vld [vmem:[%s0 + $0x16c0] sm:$0xff]
  %v744 = vld [vmem:[%s0 + $0x16c8] sm:$0xff]
  %v745 = vld [vmem:[%s0 + $0x16d0] sm:$0xff]
  %v746 = vld [vmem:[%s0 + $0x16d8] sm:$0xff]
  %v747 = vld [vmem:[%s0 + $0x16e0] sm:$0xff]
  %v748 = vld [vmem:[%s0 + $0x16e8] sm:$0xff]
  %v749 = vld [vmem:[%s0 + $0x16f0] sm:$0xff]
  %v750 = vld [vmem:[%s0 + $0x16f8] sm:$0xff]
  %v751 = vld [vmem:[%s0 + $0x1700] sm:$0xff]
  %v752 = vld [vmem:[%s0 + $0x1708] sm:$0xff]
  %v753 = vld [vmem:[%s0 + $0x1710] sm:$0xff]
  %v754 = vld [vmem:[%s0 + $0x1718] sm:$0xff]
  %v755 = vld [vmem:[%s0 + $0x1720] sm:$0xff]
  %v756 = vld [vmem:[%s0 + $0x1728] sm:$0xff]
  %v757 = vld [vmem:[%s0 + $0x1730] sm:$0xff]
  %v758 = vld [vmem:[%s0 + $0x1738] sm:$0xff]
  %v759 = vld [vmem:[%s0 + $0x1740] sm:$0xff]
  %v760 = vld [vmem:[%s0 + $0x1748] sm:$0xff]
  %v761 = vld [vmem:[%s0 + $0x1750] sm:$0xff]
  %v762 = vld [vmem:[%s0 + $0x1758] sm:$0xff]
  %v763 = vld [vmem:[%s0 + $0x1760] sm:$0xff]
  %v764 = vld [vmem:[%s0 + $0x1768] sm:$0xff]
  %v765 = vld [vmem:[%s0 + $0x1770] sm:$0xff]
  %v766 = vld [vmem:[%s0 + $0x1778] sm:$0xff]
  %v767 = vld [vmem:[%s0 + $0x1780] sm:$0xff]
  %v768 = vld [vmem:[%s0 + $0x1788] sm:$0xff]
  %v769 = vld [vmem:[%s0 + $0x1790] sm:$0xff]
  %v770 = vld [vmem:[%s0 + $0x1798] sm:$0xff]
  %v771 = vld [vmem:[%s0 + $0x17a0] sm:$0xff]
  %v772 = vld [vmem:[%s0 + $0x17a8] sm:$0xff]
  %v773 = vld [vmem:[%s0 + $0x17b0] sm:$0xff]
  %v774 = vld [vmem:[%s0 + $0x17b8] sm:$0xff]
  %v775 = vld [vmem:[%s0 + $0x17c0] sm:$0xff]
  %v776 = vld [vmem:[%s0 + $0x17c8] sm:$0xff]
  %v777 = vld [vmem:[%s0 + $0x17d0] sm:$0xff]
  %v778 = vld [vmem:[%s0 + $0x17d8] sm:$0xff]
  %v779 = vld [vmem:[%s0 + $0x17e0] sm:$0xff]
  %v780 = vld [vmem:[%s0 + $0x17e8] sm:$0xff]
  %v781 = vld [vmem:[%s0 + $0x17f0] sm:$0xff]
  %v782 = vld [vmem:[%s0 + $0x17f8] sm:$0xff]
  %v783 = vld [vmem:[%s0 + $0x1800] sm:$0xff]
  %v784 = vld [vmem:[%s0 + $0x1808] sm:$0xff]
  %v785 = vld [vmem:[%s0 + $0x1810] sm:$0xff]
  %v786 = vld [vmem:[%s0 + $0x1818] sm:$0xff]
  %v787 = vld [vmem:[%s0 + $0x1820] sm:$0xff]
  %v788 = vld [vmem:[%s0 + $0x1828] sm:$0xff]
  %v789 = vld [vmem:[%s0 + $0x1830] sm:$0xff]
  %v790 = vld [vmem:[%s0 + $0x1838] sm:$0xff]
  %v791 = vld [vmem:[%s0 + $0x1840] sm:$0xff]
  %v792 = vld [vmem:[%s0 + $0x1848] sm:$0xff]
  %v793 = vld [vmem:[%s0 + $0x1850] sm:$0xff]
  %v794 = vld [vmem:[%s0 + $0x1858] sm:$0xff]
  %v795 = vld [vmem:[%s0 + $0x1860] sm:$0xff]
  %v796 = vld [vmem:[%s0 + $0x1868] sm:$0xff]
  %v797 = vld [vmem:[%s0 + $0x1870] sm:$0xff]
  %v798 = vld [vmem:[%s0 + $0x1878] sm:$0xff]
  %v799 = vld [vmem:[%s0 + $0x1880] sm:$0xff]
  %v800 = vld [vmem:[%s0 + $0x1888] sm:$0xff]
  %v801 = vld [vmem:[%s0 + $0x1890] sm:$0xff]
  %v802 = vld [vmem:[%s0 + $0x1898] sm:$0xff]
  %v803 = vld [vmem:[%s0 + $0x18a0] sm:$0xff]
  %v804 = vld [vmem:[%s0 + $0x18a8] sm:$0xff]
  %v805 = vld [vmem:[%s0 + $0x18b0] sm:$0xff]
  %v806 = vld [vmem:[%s0 + $0x18b8] sm:$0xff]
  %v807 = vld [vmem:[%s0 + $0x18c0] sm:$0xff]
  %v808 = vld [vmem:[%s0 + $0x18c8] sm:$0xff]
  %v809 = vld [vmem:[%s0 + $0x18d0] sm:$0xff]
  %v810 = vld [vmem:[%s0 + $0x18d8] sm:$0xff]
  %v811 = vld [vmem:[%s0 + $0x18e0] sm:$0xff]
  %v812 = vld [vmem:[%s0 + $0x18e8] sm:$0xff]
  %v813 = vld [vmem:[%s0 + $0x18f0] sm:$0xff]
  %v814 = vld [vmem:[%s0 + $0x18f8] sm:$0xff]
  %v815 = vld [vmem:[%s0 + $0x1900] sm:$0xff]
  %v816 = vld [vmem:[%s0 + $0x1908] sm:$0xff]
  %v817 = vld [vmem:[%s0 + $0x1910] sm:$0xff]
  %v818 = vld [vmem:[%s0 + $0x1918] sm:$0xff]
  %v819 = vld [vmem:[%s0 + $0x1920] sm:$0xff]
  %v820 = vld [vmem:[%s0 + $0x1928] sm:$0xff]
  %v821 = vld [vmem:[%s0 + $0x1930] sm:$0xff]
  %v822 = vld [vmem:[%s0 + $0x1938] sm:$0xff]
  %v823 = vld [vmem:[%s0 + $0x1940] sm:$0xff]
  %v824 = vld [vmem:[%s0 + $0x1948] sm:$0xff]
  %v825 = vld [vmem:[%s0 + $0x1950] sm:$0xff]
  %v826 = vld [vmem:[%s0 + $0x1958] sm:$0xff]
  %v827 = vld [vmem:[%s0 + $0x1960] sm:$0xff]
  %v828 = vld [vmem:[%s0 + $0x1968] sm:$0xff]
  %v829 = vld [vmem:[%s0 + $0x1970] sm:$0xff]
  %v830 = vld [vmem:[%s0 + $0x1978] sm:$0xff]
  %v831 = vld [vmem:[%s0 + $0x1980] sm:$0xff]
  %v832 = vld [vmem:[%s0 + $0x1988] sm:$0xff]
  %v833 = vld [vmem:[%s0 + $0x1990] sm:$0xff]
  %v834 = vld [vmem:[%s0 + $0x1998] sm:$0xff]
  %v835 = vld [vmem:[%s0 + $0x19a0] sm:$0xff]
  %v836 = vld [vmem:[%s0 + $0x19a8] sm:$0xff]
  %v837 = vld [vmem:[%s0 + $0x19b0] sm:$0xff]
  %v838 = vld [vmem:[%s0 + $0x19b8] sm:$0xff]
  %v839 = vld [vmem:[%s0 + $0x19c0] sm:$0xff]
  %v840 = vld [vmem:[%s0 + $0x19c8] sm:$0xff]
  %v841 = vld [vmem:[%s0 + $0x19d0] sm:$0xff]
  %v842 = vld [vmem:[%s0 + $0x19d8] sm:$0xff]
  %v843 = vld [vmem:[%s0 + $0x19e0] sm:$0xff]
  %v844 = vld [vmem:[%s0 + $0x19e8] sm:$0xff]
  %v845 = vld [vmem:[%s0 + $0x19f0] sm:$0xff]
  %v846 = vld [vmem:[%s0 + $0x19f8] sm:$0xff]
  %v847 = vld [vmem:[%s0 + $0x1a00] sm:$0xff]
  %v848 = vld [vmem:[%s0 + $0x1a08] sm:$0xff]
  %v849 = vld [vmem:[%s0 + $0x1a10] sm:$0xff]
  %v850 = vld [vmem:[%s0 + $0x1a18] sm:$0xff]
  %v851 = vld [vmem:[%s0 + $0x1a20] sm:$0xff]
  %v852 = vld [vmem:[%s0 + $0x1a28] sm:$0xff]
  %v853 = vld [vmem:[%s0 + $0x1a30] sm:$0xff]
  %v854 = vld [vmem:[%s0 + $0x1a38] sm:$0xff]
  %v855 = vld [vmem:[%s0 + $0x1a40] sm:$0xff]
  %v856 = vld [vmem:[%s0 + $0x1a48] sm:$0xff]
  %v857 = vld [vmem:[%s0 + $0x1a50] sm:$0xff]
  %v858 = vld [vmem:[%s0 + $0x1a58] sm:$0xff]
  %v859 = vld [vmem:[%s0 + $0x1a60] sm:$0xff]
  %v860 = vld [vmem:[%s0 + $0x1a68] sm:$0xff]
  %v861 = vld [vmem:[%s0 + $0x1a70] sm:$0xff]
  %v862 = vld [vmem:[%s0 + $0x1a78] sm:$0xff]
  %v863 = vld [vmem:[%s0 + $0x1a80] sm:$0xff]
  %v864 = vld [vmem:[%s0 + $0x1a88] sm:$0xff]
  %v865 = vld [vmem:[%s0 + $0x1a90] sm:$0xff]
  %v866 = vld [vmem:[%s0 + $0x1a98] sm:$0xff]
  %v867 = vld [vmem:[%s0 + $0x1aa0] sm:$0xff]
  %v868 = vld [vmem:[%s0 + $0x1aa8] sm:$0xff]
  %v869 = vld [vmem:[%s0 + $0x1ab0] sm:$0xff]
  %v870 = vld [vmem:[%s0 + $0x1ab8] sm:$0xff]
  %v871 = vld [vmem:[%s0 + $0x1ac0] sm:$0xff]
  %v872 = vld [vmem:[%s0 + $0x1ac8] sm:$0xff]
  %v873 = vld [vmem:[%s0 + $0x1ad0] sm:$0xff]
  %v874 = vld [vmem:[%s0 + $0x1ad8] sm:$0xff]
  %v875 = vld [vmem:[%s0 + $0x1ae0] sm:$0xff]
  %v876 = vld [vmem:[%s0 + $0x1ae8] sm:$0xff]
  %v877 = vld [vmem:[%s0 + $0x1af0] sm:$0xff]
  %v878 = vld [vmem:[%s0 + $0x1af8] sm:$0xff]
  %v879 = vld [vmem:[%s0 + $0x1b00] sm:$0xff]
  %v880 = vld [vmem:[%s0 + $0x1b08] sm:$0xff]
  %v881 = vld [vmem:[%s0 + $0x1b10] sm:$0xff]
  %v882 = vld [vmem:[%s0 + $0x1b18] sm:$0xff]
  %v883 = vld [vmem:[%s0 + $0x1b20] sm:$0xff]
  %v884 = vld [vmem:[%s0 + $0x1b28] sm:$0xff]
  %v885 = vld [vmem:[%s0 + $0x1b30] sm:$0xff]
  %v886 = vld [vmem:[%s0 + $0x1b38] sm:$0xff]
  %v887 = vld [vmem:[%s0 + $0x1b40] sm:$0xff]
  %v888 = vld [vmem:[%s0 + $0x1b48] sm:$0xff]
  %v889 = vld [vmem:[%s0 + $0x1b50] sm:$0xff]
  %v890 = vld [vmem:[%s0 + $0x1b58] sm:$0xff]
  %v891 = vld [vmem:[%s0 + $0x1b60] sm:$0xff]
  %v892 = vld [vmem:[%s0 + $0x1b68] sm:$0xff]
  %v893 = vld [vmem:[%s0 + $0x1b70] sm:$0xff]
  %v894 = vld [vmem:[%s0 + $0x1b78] sm:$0xff]
  %v895 = vld [vmem:[%s0 + $0x1b80] sm:$0xff]
  %v896 = vld [vmem:[%s0 + $0x1b88] sm:$0xff]
  %v897 = vld [vmem:[%s0 + $0x1b90] sm:$0xff]
  %v898 = vld [vmem:[%s0 + $0x1b98] sm:$0xff]
  %v899 = vld [vmem:[%s0 + $0x1ba0] sm:$0xff]
  %v900 = vld [vmem:[%s0 + $0x1ba8] sm:$0xff]
  %v901 = vld [vmem:[%s0 + $0x1bb0] sm:$0xff]
  %v902 = vld [vmem:[%s0 + $0x1bb8] sm:$0xff]
  %v903 = vld [vmem:[%s0 + $0x1bc0] sm:$0xff]
  %v904 = vld [vmem:[%s0 + $0x1bc8] sm:$0xff]
  %v905 = vld [vmem:[%s0 + $0x1bd0] sm:$0xff]
  %v906 = vld [vmem:[%s0 + $0x1bd8] sm:$0xff]
  %v907 = vld [vmem:[%s0 + $0x1be0] sm:$0xff]
  %v908 = vld [vmem:[%s0 + $0x1be8] sm:$0xff]
  %v909 = vld [vmem:[%s0 + $0x1bf0] sm:$0xff]
  %v910 = vld [vmem:[%s0 + $0x1bf8] sm:$0xff]
  %v911 = vld [vmem:[%s0 + $0x1c00] sm:$0xff]
  %v912 = vld [vmem:[%s0 + $0x1c08] sm:$0xff]
  %v913 = vld [vmem:[%s0 + $0x1c10] sm:$0xff]
  %v914 = vld [vmem:[%s0 + $0x1c18] sm:$0xff]
  %v915 = vld [vmem:[%s0 + $0x1c20] sm:$0xff]
  %v916 = vld [vmem:[%s0 + $0x1c28] sm:$0xff]
  %v917 = vld [vmem:[%s0 + $0x1c30] sm:$0xff]
  %v918 = vld [vmem:[%s0 + $0x1c38] sm:$0xff]
  %v919 = vld [vmem:[%s0 + $0x1c40] sm:$0xff]
  %v920 = vld [vmem:[%s0 + $0x1c48] sm:$0xff]
  %v921 = vld [vmem:[%s0 + $0x1c50] sm:$0xff]
  %v922 = vld [vmem:[%s0 + $0x1c58] sm:$0xff]
  %v923 = vld [vmem:[%s0 + $0x1c60] sm:$0xff]
  %v924 = vld [vmem:[%s0 + $0x1c68] sm:$0xff]
  %v925 = vld [vmem:[%s0 + $0x1c70] sm:$0xff]
  %v926 = vld [vmem:[%s0 + $0x1c78] sm:$0xff]
  %v927 = vld [vmem:[%s0 + $0x1c80] sm:$0xff]
  %v928 = vld [vmem:[%s0 + $0x1c88] sm:$0xff]
  %v929 = vld [vmem:[%s0 + $0x1c90] sm:$0xff]
  %v930 = vld [vmem:[%s0 + $0x1c98] sm:$0xff]
  %v931 = vld [vmem:[%s0 + $0x1ca0] sm:$0xff]
  %v932 = vld [vmem:[%s0 + $0x1ca8] sm:$0xff]
  %v933 = vld [vmem:[%s0 + $0x1cb0] sm:$0xff]
  %v934 = vld [vmem:[%s0 + $0x1cb8] sm:$0xff]
  %v935 = vld [vmem:[%s0 + $0x1cc0] sm:$0xff]
  %v936 = vld [vmem:[%s0 + $0x1cc8] sm:$0xff]
  %v937 = vld [vmem:[%s0 + $0x1cd0] sm:$0xff]
  %v938 = vld [vmem:[%s0 + $0x1cd8] sm:$0xff]
  %v939 = vld [vmem:[%s0 + $0x1ce0] sm:$0xff]
  %v940 = vld [vmem:[%s0 + $0x1ce8] sm:$0xff]
  %v941 = vld [vmem:[%s0 + $0x1cf0] sm:$0xff]
  %v942 = vld [vmem:[%s0 + $0x1cf8] sm:$0xff]
  %v943 = vld [vmem:[%s0 + $0x1d00] sm:$0xff]
  %v944 = vld [vmem:[%s0 + $0x1d08] sm:$0xff]
  %v945 = vld [vmem:[%s0 + $0x1d10] sm:$0xff]
  %v946 = vld [vmem:[%s0 + $0x1d18] sm:$0xff]
  %v947 = vld [vmem:[%s0 + $0x1d20] sm:$0xff]
  %v948 = vld [vmem:[%s0 + $0x1d28] sm:$0xff]
  %v949 = vld [vmem:[%s0 + $0x1d30] sm:$0xff]
  %v950 = vld [vmem:[%s0 + $0x1d38] sm:$0xff]
  %v951 = vld [vmem:[%s0 + $0x1d40] sm:$0xff]
  %v952 = vld [vmem:[%s0 + $0x1d48] sm:$0xff]
  %v953 = vld [vmem:[%s0 + $0x1d50] sm:$0xff]
  %v954 = vld [vmem:[%s0 + $0x1d58] sm:$0xff]
  %v955 = vld [vmem:[%s0 + $0x1d60] sm:$0xff]
  %v956 = vld [vmem:[%s0 + $0x1d68] sm:$0xff]
  %v957 = vld [vmem:[%s0 + $0x1d70] sm:$0xff]
  %v958 = vld [vmem:[%s0 + $0x1d78] sm:$0xff]
  %v959 = vld [vmem:[%s0 + $0x1d80] sm:$0xff]
  %v960 = vld [vmem:[%s0 + $0x1d88] sm:$0xff]
  %v961 = vld [vmem:[%s0 + $0x1d90] sm:$0xff]
  %v962 = vld [vmem:[%s0 + $0x1d98] sm:$0xff]
  %v963 = vld [vmem:[%s0 + $0x1da0] sm:$0xff]
  %v964 = vld [vmem:[%s0 + $0x1da8] sm:$0xff]
  %v965 = vld [vmem:[%s0 + $0x1db0] sm:$0xff]
  %v966 = vld [vmem:[%s0 + $0x1db8] sm:$0xff]
  %v967 = vld [vmem:[%s0 + $0x1dc0] sm:$0xff]
  %v968 = vld [vmem:[%s0 + $0x1dc8] sm:$0xff]
  %v969 = vld [vmem:[%s0 + $0x1dd0] sm:$0xff]
  %v970 = vld [vmem:[%s0 + $0x1dd8] sm:$0xff]
  %v971 = vld [vmem:[%s0 + $0x1de0] sm:$0xff]
  %v972 = vld [vmem:[%s0 + $0x1de8] sm:$0xff]
  %v973 = vld [vmem:[%s0 + $0x1df0] sm:$0xff]
  %v974 = vld [vmem:[%s0 + $0x1df8] sm:$0xff]
  %v975 = vld [vmem:[%s0 + $0x1e00] sm:$0xff]
  %v976 = vld [vmem:[%s0 + $0x1e08] sm:$0xff]
  %v977 = vld [vmem:[%s0 + $0x1e10] sm:$0xff]
  %v978 = vld [vmem:[%s0 + $0x1e18] sm:$0xff]
  %v979 = vld [vmem:[%s0 + $0x1e20] sm:$0xff]
  %v980 = vld [vmem:[%s0 + $0x1e28] sm:$0xff]
  %v981 = vld [vmem:[%s0 + $0x1e30] sm:$0xff]
  %v982 = vld [vmem:[%s0 + $0x1e38] sm:$0xff]
  %v983 = vld [vmem:[%s0 + $0x1e40] sm:$0xff]
  %v984 = vld [vmem:[%s0 + $0x1e48] sm:$0xff]
  %v985 = vld [vmem:[%s0 + $0x1e50] sm:$0xff]
  %v986 = vld [vmem:[%s0 + $0x1e58] sm:$0xff]
  %v987 = vld [vmem:[%s0 + $0x1e60] sm:$0xff]
  %v988 = vld [vmem:[%s0 + $0x1e68] sm:$0xff]
  %v989 = vld [vmem:[%s0 + $0x1e70] sm:$0xff]
  %v990 = vld [vmem:[%s0 + $0x1e78] sm:$0xff]
  %v991 = vld [vmem:[%s0 + $0x1e80] sm:$0xff]
  %v992 = vld [vmem:[%s0 + $0x1e88] sm:$0xff]
  %v993 = vld [vmem:[%s0 + $0x1e90] sm:$0xff]
  %v994 = vld [vmem:[%s0 + $0x1e98] sm:$0xff]
  %v995 = vld [vmem:[%s0 + $0x1ea0] sm:$0xff]
  %v996 = vld [vmem:[%s0 + $0x1ea8] sm:$0xff]
  %v997 = vld [vmem:[%s0 + $0x1eb0] sm:$0xff]
  %v998 = vld [vmem:[%s0 + $0x1eb8] sm:$0xff]
  %v999 = vld [vmem:[%s0 + $0x1ec0] sm:$0xff]
  %v1000 = vld [vmem:[%s0 + $0x1ec8] sm:$0xff]
  %v1001 = vld [vmem:[%s0 + $0x1ed0] sm:$0xff]
  %v1002 = vld [vmem:[%s0 + $0x1ed8] sm:$0xff]
  %v1003 = vld [vmem:[%s0 + $0x1ee0] sm:$0xff]
  %v1004 = vld [vmem:[%s0 + $0x1ee8] sm:$0xff]
  %v1005 = vld [vmem:[%s0 + $0x1ef0] sm:$0xff]
  %v1006 = vld [vmem:[%s0 + $0x1ef8] sm:$0xff]
  %v1007 = vld [vmem:[%s0 + $0x1f00] sm:$0xff]
  %v1008 = vld [vmem:[%s0 + $0x1f08] sm:$0xff]
  %v1009 = vld [vmem:[%s0 + $0x1f10] sm:$0xff]
  %v1010 = vld [vmem:[%s0 + $0x1f18] sm:$0xff]
  %v1011 = vld [vmem:[%s0 + $0x1f20] sm:$0xff]
  %v1012 = vld [vmem:[%s0 + $0x1f28] sm:$0xff]
  %v1013 = vld [vmem:[%s0 + $0x1f30] sm:$0xff]
  %v1014 = vld [vmem:[%s0 + $0x1f38] sm:$0xff]
  %v1015 = vld [vmem:[%s0 + $0x1f40] sm:$0xff]
  %v1016 = vld [vmem:[%s0 + $0x1f48] sm:$0xff]
  %v1017 = vld [vmem:[%s0 + $0x1f50] sm:$0xff]
  %v1018 = vld [vmem:[%s0 + $0x1f58] sm:$0xff]
  %v1019 = vld [vmem:[%s0 + $0x1f60] sm:$0xff]
  %v1020 = vld [vmem:[%s0 + $0x1f68] sm:$0xff]
  %v1021 = vld [vmem:[%s0 + $0x1f70] sm:$0xff]
  %v1022 = vld [vmem:[%s0 + $0x1f78] sm:$0xff]
  %v1023 = vld [vmem:[%s0 + $0x1f80] sm:$0xff]
  %v1024 = vld [vmem:[%s0 + $0x1f88] sm:$0xff]
  %v1025 = vld [vmem:[%s0 + $0x1f90] sm:$0xff]
  %v1026 = vld [vmem:[%s0 + $0x1f98] sm:$0xff]
  %v1027 = vld [vmem:[%s0 + $0x1fa0] sm:$0xff]
  %v1028 = vld [vmem:[%s0 + $0x1fa8] sm:$0xff]
  %v1029 = vld [vmem:[%s0 + $0x1fb0] sm:$0xff]
  %v1030 = vld [vmem:[%s0 + $0x1fb8] sm:$0xff]
  %v1031 = vld [vmem:[%s0 + $0x1fc0] sm:$0xff]
  %v1032 = vld [vmem:[%s0 + $0x1fc8] sm:$0xff]
  %v1033 = vld [vmem:[%s0 + $0x1fd0] sm:$0xff]
  %v1034 = vld [vmem:[%s0 + $0x1fd8] sm:$0xff]
  %v1035 = vld [vmem:[%s0 + $0x1fe0] sm:$0xff]
  %v1036 = vld [vmem:[%s0 + $0x1fe8] sm:$0xff]
  %v1037 = vld [vmem:[%s0 + $0x1ff0] sm:$0xff]
  %v1038 = vld [vmem:[%s0 + $0x1ff8] sm:$0xff]
  %v1039 = vld [vmem:[%s2] sm:$0x7]
  %1041 = vset.pattern.permute.xlu0 0
  %1042 = vperm.xlu0 %1041, %v1039
  %v1043 = vpop.permute.xlu0 %1042
  %1045 = vmatprep.subr.mxu0 %v16
  %1046 = vmatpush1.msra.mxu0 %v15
  %1047 = vmatprep.subr.mxu0 %v80
  %1048 = vmatpush1.msra.mxu0 %v79
  %1049 = vmatprep.subr.mxu0 %v144
  %1050 = vmatpush1.msra.mxu0 %v143
  %1051 = vmatprep.subr.mxu0 %v208
  %1052 = vmatpush1.msra.mxu0 %v207
  %1053 = vmatprep.subr.mxu0 %v272
  %1054 = vmatpush1.msra.mxu0 %v271
  %1055 = vmatprep.subr.mxu0 %v336
  %1056 = vmatpush1.msra.mxu0 %v335
  %1057 = vmatprep.subr.mxu0 %v400
  %1058 = vmatpush1.msra.mxu0 %v399
  %1059 = vmatprep.subr.mxu0 %v464
  %1060 = vmatpush1.msra.mxu0 %v463
  %1061 = vmatprep.subr.mxu0 %v528
  %1062 = vmatpush1.msra.mxu0 %v527
  %1063 = vmatprep.subr.mxu0 %v592
  %1064 = vmatpush1.msra.mxu0 %v591
  %1065 = vmatprep.subr.mxu0 %v656
  %1066 = vmatpush1.msra.mxu0 %v655
  %1067 = vmatprep.subr.mxu0 %v720
  %1068 = vmatpush1.msra.mxu0 %v719
  %1069 = vmatprep.subr.mxu0 %v784
  %1070 = vmatpush1.msra.mxu0 %v783
  %1071 = vmatprep.subr.mxu0 %v848
  %1072 = vmatpush1.msra.mxu0 %v847
  %1073 = vmatprep.subr.mxu0 %v912
  %1074 = vmatpush1.msra.mxu0 %v911
  %1075 = vmatprep.subr.mxu0 %v976
  %1076 = vmatpush1.msra.mxu0 %v975
  %1077 = vmatprep.subr.mxu0 0.0
  %1078 = vmatpush1.msra.mxu0 0.0
  %1079 = vmatprep.subr.mxu0 0.0
  %1080 = vmatpush1.msra.mxu0 0.0
  %1081 = vmatprep.subr.mxu0 0.0
  %1082 = vmatpush1.msra.mxu0 0.0
  %1083 = vmatprep.subr.mxu0 0.0
  %1084 = vmatpush1.msra.mxu0 0.0
  %1085 = vmatprep.subr.mxu0 0.0
  %1086 = vmatpush1.msra.mxu0 0.0
  %1087 = vmatprep.subr.mxu0 0.0
  %1088 = vmatpush1.msra.mxu0 0.0
  %1089 = vmatprep.subr.mxu0 0.0
  %1090 = vmatpush1.msra.mxu0 0.0
  %1091 = vmatprep.subr.mxu0 0.0
  %1092 = vmatpush1.msra.mxu0 0.0
  %1093 = vmatprep.subr.mxu0 0.0
  %1094 = vmatpush1.msra.mxu0 0.0
  %1095 = vmatprep.subr.mxu0 0.0
  %1096 = vmatpush1.msra.mxu0 0.0
  %1097 = vmatprep.subr.mxu0 0.0
  %1098 = vmatpush1.msra.mxu0 0.0
  %1099 = vmatprep.subr.mxu0 0.0
  %1100 = vmatpush1.msra.mxu0 0.0
  %1101 = vmatprep.subr.mxu0 0.0
  %1102 = vmatpush1.msra.mxu0 0.0
  %1103 = vmatprep.subr.mxu0 0.0
  %1104 = vmatpush1.msra.mxu0 0.0
  %1105 = vmatprep.subr.mxu0 0.0
  %1106 = vmatpush1.msra.mxu0 0.0
  %1107 = vmatprep.subr.mxu0 0.0
  %1108 = vmatpush1.msra.mxu0 0.0
  %1109 = vmatprep.mubr.f32.mxu0 0.0
  %1110 = vmatmul.mubr.f32.gmra.mrb[0].mxu0 %v14
  %v1111 = vpop.f32.mrb[0].mxu0
  %v1112 = vadd.f32 %v1043, %v1111
  %v1113 = vpop.f32.mrb[0].mxu0
  %v1114 = vadd.f32 %v1043, %v1113
  %1115 = vdwg.mxu0
  %1116 = vmatprep.subr.mxu0 %v18
  %1117 = vmatpush1.msra.mxu0 %v17
  %1118 = vmatprep.subr.mxu0 %v82
  %1119 = vmatpush1.msra.mxu0 %v81
  %1120 = vmatprep.subr.mxu0 %v146
  %1121 = vmatpush1.msra.mxu0 %v145
  %1122 = vmatprep.subr.mxu0 %v210
  %1123 = vmatpush1.msra.mxu0 %v209
  %1124 = vmatprep.subr.mxu0 %v274
  %1125 = vmatpush1.msra.mxu0 %v273
  %1126 = vmatprep.subr.mxu0 %v338
  %1127 = vmatpush1.msra.mxu0 %v337
  %1128 = vmatprep.subr.mxu0 %v402
  %1129 = vmatpush1.msra.mxu0 %v401
  %1130 = vmatprep.subr.mxu0 %v466
  %1131 = vmatpush1.msra.mxu0 %v465
  %1132 = vmatprep.subr.mxu0 %v530
  %1133 = vmatpush1.msra.mxu0 %v529
  %1134 = vmatprep.subr.mxu0 %v594
  %1135 = vmatpush1.msra.mxu0 %v593
  %1136 = vmatprep.subr.mxu0 %v658
  %1137 = vmatpush1.msra.mxu0 %v657
  %1138 = vmatprep.subr.mxu0 %v722
  %1139 = vmatpush1.msra.mxu0 %v721
  %1140 = vmatprep.subr.mxu0 %v786
  %1141 = vmatpush1.msra.mxu0 %v785
  %1142 = vmatprep.subr.mxu0 %v850
  %1143 = vmatpush1.msra.mxu0 %v849
  %1144 = vmatprep.subr.mxu0 %v914
  %1145 = vmatpush1.msra.mxu0 %v913
  %1146 = vmatprep.subr.mxu0 %v978
  %1147 = vmatpush1.msra.mxu0 %v977
  %1148 = vmatprep.subr.mxu0 0.0
  %1149 = vmatpush1.msra.mxu0 0.0
  %1150 = vmatprep.subr.mxu0 0.0
  %1151 = vmatpush1.msra.mxu0 0.0
  %1152 = vmatprep.subr.mxu0 0.0
  %1153 = vmatpush1.msra.mxu0 0.0
  %1154 = vmatprep.subr.mxu0 0.0
  %1155 = vmatpush1.msra.mxu0 0.0
  %1156 = vmatprep.subr.mxu0 0.0
  %1157 = vmatpush1.msra.mxu0 0.0
  %1158 = vmatprep.subr.mxu0 0.0
  %1159 = vmatpush1.msra.mxu0 0.0
  %1160 = vmatprep.subr.mxu0 0.0
  %1161 = vmatpush1.msra.mxu0 0.0
  %1162 = vmatprep.subr.mxu0 0.0
  %1163 = vmatpush1.msra.mxu0 0.0
  %1164 = vmatprep.subr.mxu0 0.0
  %1165 = vmatpush1.msra.mxu0 0.0
  %1166 = vmatprep.subr.mxu0 0.0
  %1167 = vmatpush1.msra.mxu0 0.0
  %1168 = vmatprep.subr.mxu0 0.0
  %1169 = vmatpush1.msra.mxu0 0.0
  %1170 = vmatprep.subr.mxu0 0.0
  %1171 = vmatpush1.msra.mxu0 0.0
  %1172 = vmatprep.subr.mxu0 0.0
  %1173 = vmatpush1.msra.mxu0 0.0
  %1174 = vmatprep.subr.mxu0 0.0
  %1175 = vmatpush1.msra.mxu0 0.0
  %1176 = vmatprep.subr.mxu0 0.0
  %1177 = vmatpush1.msra.mxu0 0.0
  %1178 = vmatprep.subr.mxu0 0.0
  %1179 = vmatpush1.msra.mxu0 0.0
  %1180 = vmatprep.mubr.f32.mxu0 0.0
  %1181 = vmatmul.mubr.f32.gmra.mrb[0].mxu0 %v14
  %v1182 = vpop.f32.mrb[0].mxu0
  %v1183 = vadd.f32 %v1043, %v1182
  %v1184 = vpop.f32.mrb[0].mxu0
  %v1185 = vadd.f32 %v1043, %v1184
  %1186 = vdwg.mxu0
  %1187 = vmatprep.subr.mxu0 %v20
  %1188 = vmatpush1.msra.mxu0 %v19
  %1189 = vmatprep.subr.mxu0 %v84
  %1190 = vmatpush1.msra.mxu0 %v83
  %1191 = vmatprep.subr.mxu0 %v148
  %1192 = vmatpush1.msra.mxu0 %v147
  %1193 = vmatprep.subr.mxu0 %v212
  %1194 = vmatpush1.msra.mxu0 %v211
  %1195 = vmatprep.subr.mxu0 %v276
  %1196 = vmatpush1.msra.mxu0 %v275
  %1197 = vmatprep.subr.mxu0 %v340
  %1198 = vmatpush1.msra.mxu0 %v339
  %1199 = vmatprep.subr.mxu0 %v404
  %1200 = vmatpush1.msra.mxu0 %v403
  %1201 = vmatprep.subr.mxu0 %v468
  %1202 = vmatpush1.msra.mxu0 %v467
  %1203 = vmatprep.subr.mxu0 %v532
  %1204 = vmatpush1.msra.mxu0 %v531
  %1205 = vmatprep.subr.mxu0 %v596
  %1206 = vmatpush1.msra.mxu0 %v595
  %1207 = vmatprep.subr.mxu0 %v660
  %1208 = vmatpush1.msra.mxu0 %v659
  %1209 = vmatprep.subr.mxu0 %v724
  %1210 = vmatpush1.msra.mxu0 %v723
  %1211 = vmatprep.subr.mxu0 %v788
  %1212 = vmatpush1.msra.mxu0 %v787
  %1213 = vmatprep.subr.mxu0 %v852
  %1214 = vmatpush1.msra.mxu0 %v851
  %1215 = vmatprep.subr.mxu0 %v916
  %1216 = vmatpush1.msra.mxu0 %v915
  %1217 = vmatprep.subr.mxu0 %v980
  %1218 = vmatpush1.msra.mxu0 %v979
  %1219 = vmatprep.subr.mxu0 0.0
  %1220 = vmatpush1.msra.mxu0 0.0
  %1221 = vmatprep.subr.mxu0 0.0
  %1222 = vmatpush1.msra.mxu0 0.0
  %1223 = vmatprep.subr.mxu0 0.0
  %1224 = vmatpush1.msra.mxu0 0.0
  %1225 = vmatprep.subr.mxu0 0.0
  %1226 = vmatpush1.msra.mxu0 0.0
  %1227 = vmatprep.subr.mxu0 0.0
  %1228 = vmatpush1.msra.mxu0 0.0
  %1229 = vmatprep.subr.mxu0 0.0
  %1230 = vmatpush1.msra.mxu0 0.0
  %1231 = vmatprep.subr.mxu0 0.0
  %1232 = vmatpush1.msra.mxu0 0.0
  %1233 = vmatprep.subr.mxu0 0.0
  %1234 = vmatpush1.msra.mxu0 0.0
  %1235 = vmatprep.subr.mxu0 0.0
  %1236 = vmatpush1.msra.mxu0 0.0
  %1237 = vmatprep.subr.mxu0 0.0
  %1238 = vmatpush1.msra.mxu0 0.0
  %1239 = vmatprep.subr.mxu0 0.0
  %1240 = vmatpush1.msra.mxu0 0.0
  %1241 = vmatprep.subr.mxu0 0.0
  %1242 = vmatpush1.msra.mxu0 0.0
  %1243 = vmatprep.subr.mxu0 0.0
  %1244 = vmatpush1.msra.mxu0 0.0
  %1245 = vmatprep.subr.mxu0 0.0
  %1246 = vmatpush1.msra.mxu0 0.0
  %1247 = vmatprep.subr.mxu0 0.0
  %1248 = vmatpush1.msra.mxu0 0.0
  %1249 = vmatprep.subr.mxu0 0.0
  %1250 = vmatpush1.msra.mxu0 0.0
  %1251 = vmatprep.mubr.f32.mxu0 0.0
  %1252 = vmatmul.mubr.f32.gmra.mrb[0].mxu0 %v14
  %v1253 = vpop.f32.mrb[0].mxu0
  %v1254 = vadd.f32 %v1043, %v1253
  %v1255 = vpop.f32.mrb[0].mxu0
  %v1256 = vadd.f32 %v1043, %v1255
  %1257 = vdwg.mxu0
  %1258 = vmatprep.subr.mxu0 %v22
  %1259 = vmatpush1.msra.mxu0 %v21
  %1260 = vmatprep.subr.mxu0 %v86
  %1261 = vmatpush1.msra.mxu0 %v85
  %1262 = vmatprep.subr.mxu0 %v150
  %1263 = vmatpush1.msra.mxu0 %v149
  %1264 = vmatprep.subr.mxu0 %v214
  %1265 = vmatpush1.msra.mxu0 %v213
  %1266 = vmatprep.subr.mxu0 %v278
  %1267 = vmatpush1.msra.mxu0 %v277
  %1268 = vmatprep.subr.mxu0 %v342
  %1269 = vmatpush1.msra.mxu0 %v341
  %1270 = vmatprep.subr.mxu0 %v406
  %1271 = vmatpush1.msra.mxu0 %v405
  %1272 = vmatprep.subr.mxu0 %v470
  %1273 = vmatpush1.msra.mxu0 %v469
  %1274 = vmatprep.subr.mxu0 %v534
  %1275 = vmatpush1.msra.mxu0 %v533
  %1276 = vmatprep.subr.mxu0 %v598
  %1277 = vmatpush1.msra.mxu0 %v597
  %1278 = vmatprep.subr.mxu0 %v662
  %1279 = vmatpush1.msra.mxu0 %v661
  %1280 = vmatprep.subr.mxu0 %v726
  %1281 = vmatpush1.msra.mxu0 %v725
  %1282 = vmatprep.subr.mxu0 %v790
  %1283 = vmatpush1.msra.mxu0 %v789
  %1284 = vmatprep.subr.mxu0 %v854
  %1285 = vmatpush1.msra.mxu0 %v853
  %1286 = vmatprep.subr.mxu0 %v918
  %1287 = vmatpush1.msra.mxu0 %v917
  %1288 = vmatprep.subr.mxu0 %v982
  %1289 = vmatpush1.msra.mxu0 %v981
  %1290 = vmatprep.subr.mxu0 0.0
  %1291 = vmatpush1.msra.mxu0 0.0
  %1292 = vmatprep.subr.mxu0 0.0
  %1293 = vmatpush1.msra.mxu0 0.0
  %1294 = vmatprep.subr.mxu0 0.0
  %1295 = vmatpush1.msra.mxu0 0.0
  %1296 = vmatprep.subr.mxu0 0.0
  %1297 = vmatpush1.msra.mxu0 0.0
  %1298 = vmatprep.subr.mxu0 0.0
  %1299 = vmatpush1.msra.mxu0 0.0
  %1300 = vmatprep.subr.mxu0 0.0
  %1301 = vmatpush1.msra.mxu0 0.0
  %1302 = vmatprep.subr.mxu0 0.0
  %1303 = vmatpush1.msra.mxu0 0.0
  %1304 = vmatprep.subr.mxu0 0.0
  %1305 = vmatpush1.msra.mxu0 0.0
  %1306 = vmatprep.subr.mxu0 0.0
  %1307 = vmatpush1.msra.mxu0 0.0
  %1308 = vmatprep.subr.mxu0 0.0
  %1309 = vmatpush1.msra.mxu0 0.0
  %1310 = vmatprep.subr.mxu0 0.0
  %1311 = vmatpush1.msra.mxu0 0.0
  %1312 = vmatprep.subr.mxu0 0.0
  %1313 = vmatpush1.msra.mxu0 0.0
  %1314 = vmatprep.subr.mxu0 0.0
  %1315 = vmatpush1.msra.mxu0 0.0
  %1316 = vmatprep.subr.mxu0 0.0
  %1317 = vmatpush1.msra.mxu0 0.0
  %1318 = vmatprep.subr.mxu0 0.0
  %1319 = vmatpush1.msra.mxu0 0.0
  %1320 = vmatprep.subr.mxu0 0.0
  %1321 = vmatpush1.msra.mxu0 0.0
  %1322 = vmatprep.mubr.f32.mxu0 0.0
  %1323 = vmatmul.mubr.f32.gmra.mrb[0].mxu0 %v14
  %v1324 = vpop.f32.mrb[0].mxu0
  %v1325 = vadd.f32 %v1043, %v1324
  %v1326 = vpop.f32.mrb[0].mxu0
  %v1327 = vadd.f32 %v1043, %v1326
  %1328 = vdwg.mxu0
  %1329 = vmatprep.subr.mxu0 %v24
  %1330 = vmatpush1.msra.mxu0 %v23
  %1331 = vmatprep.subr.mxu0 %v88
  %1332 = vmatpush1.msra.mxu0 %v87
  %1333 = vmatprep.subr.mxu0 %v152
  %1334 = vmatpush1.msra.mxu0 %v151
  %1335 = vmatprep.subr.mxu0 %v216
  %1336 = vmatpush1.msra.mxu0 %v215
  %1337 = vmatprep.subr.mxu0 %v280
  %1338 = vmatpush1.msra.mxu0 %v279
  %1339 = vmatprep.subr.mxu0 %v344
  %1340 = vmatpush1.msra.mxu0 %v343
  %1341 = vmatprep.subr.mxu0 %v408
  %1342 = vmatpush1.msra.mxu0 %v407
  %1343 = vmatprep.subr.mxu0 %v472
  %1344 = vmatpush1.msra.mxu0 %v471
  %1345 = vmatprep.subr.mxu0 %v536
  %1346 = vmatpush1.msra.mxu0 %v535
  %1347 = vmatprep.subr.mxu0 %v600
  %1348 = vmatpush1.msra.mxu0 %v599
  %1349 = vmatprep.subr.mxu0 %v664
  %1350 = vmatpush1.msra.mxu0 %v663
  %1351 = vmatprep.subr.mxu0 %v728
  %1352 = vmatpush1.msra.mxu0 %v727
  %1353 = vmatprep.subr.mxu0 %v792
  %1354 = vmatpush1.msra.mxu0 %v791
  %1355 = vmatprep.subr.mxu0 %v856
  %1356 = vmatpush1.msra.mxu0 %v855
  %1357 = vmatprep.subr.mxu0 %v920
  %1358 = vmatpush1.msra.mxu0 %v919
  %1359 = vmatprep.subr.mxu0 %v984
  %1360 = vmatpush1.msra.mxu0 %v983
  %1361 = vmatprep.subr.mxu0 0.0
  %1362 = vmatpush1.msra.mxu0 0.0
  %1363 = vmatprep.subr.mxu0 0.0
  %1364 = vmatpush1.msra.mxu0 0.0
  %1365 = vmatprep.subr.mxu0 0.0
  %1366 = vmatpush1.msra.mxu0 0.0
  %1367 = vmatprep.subr.mxu0 0.0
  %1368 = vmatpush1.msra.mxu0 0.0
  %1369 = vmatprep.subr.mxu0 0.0
  %1370 = vmatpush1.msra.mxu0 0.0
  %1371 = vmatprep.subr.mxu0 0.0
  %1372 = vmatpush1.msra.mxu0 0.0
  %1373 = vmatprep.subr.mxu0 0.0
  %1374 = vmatpush1.msra.mxu0 0.0
  %1375 = vmatprep.subr.mxu0 0.0
  %1376 = vmatpush1.msra.mxu0 0.0
  %1377 = vmatprep.subr.mxu0 0.0
  %1378 = vmatpush1.msra.mxu0 0.0
  %1379 = vmatprep.subr.mxu0 0.0
  %1380 = vmatpush1.msra.mxu0 0.0
  %1381 = vmatprep.subr.mxu0 0.0
  %1382 = vmatpush1.msra.mxu0 0.0
  %1383 = vmatprep.subr.mxu0 0.0
  %1384 = vmatpush1.msra.mxu0 0.0
  %1385 = vmatprep.subr.mxu0 0.0
  %1386 = vmatpush1.msra.mxu0 0.0
  %1387 = vmatprep.subr.mxu0 0.0
  %1388 = vmatpush1.msra.mxu0 0.0
  %1389 = vmatprep.subr.mxu0 0.0
  %1390 = vmatpush1.msra.mxu0 0.0
  %1391 = vmatprep.subr.mxu0 0.0
  %1392 = vmatpush1.msra.mxu0 0.0
  %1393 = vmatprep.mubr.f32.mxu0 0.0
  %1394 = vmatmul.mubr.f32.gmra.mrb[0].mxu0 %v14
  %v1395 = vpop.f32.mrb[0].mxu0
  %v1396 = vadd.f32 %v1043, %v1395
  %v1397 = vpop.f32.mrb[0].mxu0
  %v1398 = vadd.f32 %v1043, %v1397
  %1399 = vdwg.mxu0
  %1400 = vmatprep.subr.mxu0 %v26
  %1401 = vmatpush1.msra.mxu0 %v25
  %1402 = vmatprep.subr.mxu0 %v90
  %1403 = vmatpush1.msra.mxu0 %v89
  %1404 = vmatprep.subr.mxu0 %v154
  %1405 = vmatpush1.msra.mxu0 %v153
  %1406 = vmatprep.subr.mxu0 %v218
  %1407 = vmatpush1.msra.mxu0 %v217
  %1408 = vmatprep.subr.mxu0 %v282
  %1409 = vmatpush1.msra.mxu0 %v281
  %1410 = vmatprep.subr.mxu0 %v346
  %1411 = vmatpush1.msra.mxu0 %v345
  %1412 = vmatprep.subr.mxu0 %v410
  %1413 = vmatpush1.msra.mxu0 %v409
  %1414 = vmatprep.subr.mxu0 %v474
  %1415 = vmatpush1.msra.mxu0 %v473
  %1416 = vmatprep.subr.mxu0 %v538
  %1417 = vmatpush1.msra.mxu0 %v537
  %1418 = vmatprep.subr.mxu0 %v602
  %1419 = vmatpush1.msra.mxu0 %v601
  %1420 = vmatprep.subr.mxu0 %v666
  %1421 = vmatpush1.msra.mxu0 %v665
  %1422 = vmatprep.subr.mxu0 %v730
  %1423 = vmatpush1.msra.mxu0 %v729
  %1424 = vmatprep.subr.mxu0 %v794
  %1425 = vmatpush1.msra.mxu0 %v793
  %1426 = vmatprep.subr.mxu0 %v858
  %1427 = vmatpush1.msra.mxu0 %v857
  %1428 = vmatprep.subr.mxu0 %v922
  %1429 = vmatpush1.msra.mxu0 %v921
  %1430 = vmatprep.subr.mxu0 %v986
  %1431 = vmatpush1.msra.mxu0 %v985
  %1432 = vmatprep.subr.mxu0 0.0
  %1433 = vmatpush1.msra.mxu0 0.0
  %1434 = vmatprep.subr.mxu0 0.0
  %1435 = vmatpush1.msra.mxu0 0.0
  %1436 = vmatprep.subr.mxu0 0.0
  %1437 = vmatpush1.msra.mxu0 0.0
  %1438 = vmatprep.subr.mxu0 0.0
  %1439 = vmatpush1.msra.mxu0 0.0
  %1440 = vmatprep.subr.mxu0 0.0
  %1441 = vmatpush1.msra.mxu0 0.0
  %1442 = vmatprep.subr.mxu0 0.0
  %1443 = vmatpush1.msra.mxu0 0.0
  %1444 = vmatprep.subr.mxu0 0.0
  %1445 = vmatpush1.msra.mxu0 0.0
  %1446 = vmatprep.subr.mxu0 0.0
  %1447 = vmatpush1.msra.mxu0 0.0
  %1448 = vmatprep.subr.mxu0 0.0
  %1449 = vmatpush1.msra.mxu0 0.0
  %1450 = vmatprep.subr.mxu0 0.0
  %1451 = vmatpush1.msra.mxu0 0.0
  %1452 = vmatprep.subr.mxu0 0.0
  %1453 = vmatpush1.msra.mxu0 0.0
  %1454 = vmatprep.subr.mxu0 0.0
  %1455 = vmatpush1.msra.mxu0 0.0
  %1456 = vmatprep.subr.mxu0 0.0
  %1457 = vmatpush1.msra.mxu0 0.0
  %1458 = vmatprep.subr.mxu0 0.0
  %1459 = vmatpush1.msra.mxu0 0.0
  %1460 = vmatprep.subr.mxu0 0.0
  %1461 = vmatpush1.msra.mxu0 0.0
  %1462 = vmatprep.subr.mxu0 0.0
  %1463 = vmatpush1.msra.mxu0 0.0
  %1464 = vmatprep.mubr.f32.mxu0 0.0
  %1465 = vmatmul.mubr.f32.gmra.mrb[0].mxu0 %v14
  %v1466 = vpop.f32.mrb[0].mxu0
  %v1467 = vadd.f32 %v1043, %v1466
  %v1468 = vpop.f32.mrb[0].mxu0
  %v1469 = vadd.f32 %v1043, %v1468
  %1470 = vdwg.mxu0
  %1471 = vmatprep.subr.mxu0 %v28
  %1472 = vmatpush1.msra.mxu0 %v27
  %1473 = vmatprep.subr.mxu0 %v92
  %1474 = vmatpush1.msra.mxu0 %v91
  %1475 = vmatprep.subr.mxu0 %v156
  %1476 = vmatpush1.msra.mxu0 %v155
  %1477 = vmatprep.subr.mxu0 %v220
  %1478 = vmatpush1.msra.mxu0 %v219
  %1479 = vmatprep.subr.mxu0 %v284
  %1480 = vmatpush1.msra.mxu0 %v283
  %1481 = vmatprep.subr.mxu0 %v348
  %1482 = vmatpush1.msra.mxu0 %v347
  %1483 = vmatprep.subr.mxu0 %v412
  %1484 = vmatpush1.msra.mxu0 %v411
  %1485 = vmatprep.subr.mxu0 %v476
  %1486 = vmatpush1.msra.mxu0 %v475
  %1487 = vmatprep.subr.mxu0 %v540
  %1488 = vmatpush1.msra.mxu0 %v539
  %1489 = vmatprep.subr.mxu0 %v604
  %1490 = vmatpush1.msra.mxu0 %v603
  %1491 = vmatprep.subr.mxu0 %v668
  %1492 = vmatpush1.msra.mxu0 %v667
  %1493 = vmatprep.subr.mxu0 %v732
  %1494 = vmatpush1.msra.mxu0 %v731
  %1495 = vmatprep.subr.mxu0 %v796
  %1496 = vmatpush1.msra.mxu0 %v795
  %1497 = vmatprep.subr.mxu0 %v860
  %1498 = vmatpush1.msra.mxu0 %v859
  %1499 = vmatprep.subr.mxu0 %v924
  %1500 = vmatpush1.msra.mxu0 %v923
  %1501 = vmatprep.subr.mxu0 %v988
  %1502 = vmatpush1.msra.mxu0 %v987
  %1503 = vmatprep.subr.mxu0 0.0
  %1504 = vmatpush1.msra.mxu0 0.0
  %1505 = vmatprep.subr.mxu0 0.0
  %1506 = vmatpush1.msra.mxu0 0.0
  %1507 = vmatprep.subr.mxu0 0.0
  %1508 = vmatpush1.msra.mxu0 0.0
  %1509 = vmatprep.subr.mxu0 0.0
  %1510 = vmatpush1.msra.mxu0 0.0
  %1511 = vmatprep.subr.mxu0 0.0
  %1512 = vmatpush1.msra.mxu0 0.0
  %1513 = vmatprep.subr.mxu0 0.0
  %1514 = vmatpush1.msra.mxu0 0.0
  %1515 = vmatprep.subr.mxu0 0.0
  %1516 = vmatpush1.msra.mxu0 0.0
  %1517 = vmatprep.subr.mxu0 0.0
  %1518 = vmatpush1.msra.mxu0 0.0
  %1519 = vmatprep.subr.mxu0 0.0
  %1520 = vmatpush1.msra.mxu0 0.0
  %1521 = vmatprep.subr.mxu0 0.0
  %1522 = vmatpush1.msra.mxu0 0.0
  %1523 = vmatprep.subr.mxu0 0.0
  %1524 = vmatpush1.msra.mxu0 0.0
  %1525 = vmatprep.subr.mxu0 0.0
  %1526 = vmatpush1.msra.mxu0 0.0
  %1527 = vmatprep.subr.mxu0 0.0
  %1528 = vmatpush1.msra.mxu0 0.0
  %1529 = vmatprep.subr.mxu0 0.0
  %1530 = vmatpush1.msra.mxu0 0.0
  %1531 = vmatprep.subr.mxu0 0.0
  %1532 = vmatpush1.msra.mxu0 0.0
  %1533 = vmatprep.subr.mxu0 0.0
  %1534 = vmatpush1.msra.mxu0 0.0
  %1535 = vmatprep.mubr.f32.mxu0 0.0
  %1536 = vmatmul.mubr.f32.gmra.mrb[0].mxu0 %v14
  %v1537 = vpop.f32.mrb[0].mxu0
  %v1538 = vadd.f32 %v1043, %v1537
  %v1539 = vpop.f32.mrb[0].mxu0
  %v1540 = vadd.f32 %v1043, %v1539
  %1541 = vdwg.mxu0
  %1542 = vmatprep.subr.mxu0 %v30
  %1543 = vmatpush1.msra.mxu0 %v29
  %1544 = vmatprep.subr.mxu0 %v94
  %1545 = vmatpush1.msra.mxu0 %v93
  %1546 = vmatprep.subr.mxu0 %v158
  %1547 = vmatpush1.msra.mxu0 %v157
  %1548 = vmatprep.subr.mxu0 %v222
  %1549 = vmatpush1.msra.mxu0 %v221
  %1550 = vmatprep.subr.mxu0 %v286
  %1551 = vmatpush1.msra.mxu0 %v285
  %1552 = vmatprep.subr.mxu0 %v350
  %1553 = vmatpush1.msra.mxu0 %v349
  %1554 = vmatprep.subr.mxu0 %v414
  %1555 = vmatpush1.msra.mxu0 %v413
  %1556 = vmatprep.subr.mxu0 %v478
  %1557 = vmatpush1.msra.mxu0 %v477
  %1558 = vmatprep.subr.mxu0 %v542
  %1559 = vmatpush1.msra.mxu0 %v541
  %1560 = vmatprep.subr.mxu0 %v606
  %1561 = vmatpush1.msra.mxu0 %v605
  %1562 = vmatprep.subr.mxu0 %v670
  %1563 = vmatpush1.msra.mxu0 %v669
  %1564 = vmatprep.subr.mxu0 %v734
  %1565 = vmatpush1.msra.mxu0 %v733
  %1566 = vmatprep.subr.mxu0 %v798
  %1567 = vmatpush1.msra.mxu0 %v797
  %1568 = vmatprep.subr.mxu0 %v862
  %1569 = vmatpush1.msra.mxu0 %v861
  %1570 = vmatprep.subr.mxu0 %v926
  %1571 = vmatpush1.msra.mxu0 %v925
  %1572 = vmatprep.subr.mxu0 %v990
  %1573 = vmatpush1.msra.mxu0 %v989
  %1574 = vmatprep.subr.mxu0 0.0
  %1575 = vmatpush1.msra.mxu0 0.0
  %1576 = vmatprep.subr.mxu0 0.0
  %1577 = vmatpush1.msra.mxu0 0.0
  %1578 = vmatprep.subr.mxu0 0.0
  %1579 = vmatpush1.msra.mxu0 0.0
  %1580 = vmatprep.subr.mxu0 0.0
  %1581 = vmatpush1.msra.mxu0 0.0
  %1582 = vmatprep.subr.mxu0 0.0
  %1583 = vmatpush1.msra.mxu0 0.0
  %1584 = vmatprep.subr.mxu0 0.0
  %1585 = vmatpush1.msra.mxu0 0.0
  %1586 = vmatprep.subr.mxu0 0.0
  %1587 = vmatpush1.msra.mxu0 0.0
  %1588 = vmatprep.subr.mxu0 0.0
  %1589 = vmatpush1.msra.mxu0 0.0
  %1590 = vmatprep.subr.mxu0 0.0
  %1591 = vmatpush1.msra.mxu0 0.0
  %1592 = vmatprep.subr.mxu0 0.0
  %1593 = vmatpush1.msra.mxu0 0.0
  %1594 = vmatprep.subr.mxu0 0.0
  %1595 = vmatpush1.msra.mxu0 0.0
  %1596 = vmatprep.subr.mxu0 0.0
  %1597 = vmatpush1.msra.mxu0 0.0
  %1598 = vmatprep.subr.mxu0 0.0
  %1599 = vmatpush1.msra.mxu0 0.0
  %1600 = vmatprep.subr.mxu0 0.0
  %1601 = vmatpush1.msra.mxu0 0.0
  %1602 = vmatprep.subr.mxu0 0.0
  %1603 = vmatpush1.msra.mxu0 0.0
  %1604 = vmatprep.subr.mxu0 0.0
  %1605 = vmatpush1.msra.mxu0 0.0
  %1606 = vmatprep.mubr.f32.mxu0 0.0
  %1607 = vmatmul.mubr.f32.gmra.mrb[0].mxu0 %v14
  %v1608 = vpop.f32.mrb[0].mxu0
  %v1609 = vadd.f32 %v1043, %v1608
  %v1610 = vpop.f32.mrb[0].mxu0
  %v1611 = vadd.f32 %v1043, %v1610
  %1612 = vdwg.mxu0
  %1613 = vmatprep.subr.mxu0 %v32
  %1614 = vmatpush1.msra.mxu0 %v31
  %1615 = vmatprep.subr.mxu0 %v96
  %1616 = vmatpush1.msra.mxu0 %v95
  %1617 = vmatprep.subr.mxu0 %v160
  %1618 = vmatpush1.msra.mxu0 %v159
  %1619 = vmatprep.subr.mxu0 %v224
  %1620 = vmatpush1.msra.mxu0 %v223
  %1621 = vmatprep.subr.mxu0 %v288
  %1622 = vmatpush1.msra.mxu0 %v287
  %1623 = vmatprep.subr.mxu0 %v352
  %1624 = vmatpush1.msra.mxu0 %v351
  %1625 = vmatprep.subr.mxu0 %v416
  %1626 = vmatpush1.msra.mxu0 %v415
  %1627 = vmatprep.subr.mxu0 %v480
  %1628 = vmatpush1.msra.mxu0 %v479
  %1629 = vmatprep.subr.mxu0 %v544
  %1630 = vmatpush1.msra.mxu0 %v543
  %1631 = vmatprep.subr.mxu0 %v608
  %1632 = vmatpush1.msra.mxu0 %v607
  %1633 = vmatprep.subr.mxu0 %v672
  %1634 = vmatpush1.msra.mxu0 %v671
  %1635 = vmatprep.subr.mxu0 %v736
  %1636 = vmatpush1.msra.mxu0 %v735
  %1637 = vmatprep.subr.mxu0 %v800
  %1638 = vmatpush1.msra.mxu0 %v799
  %1639 = vmatprep.subr.mxu0 %v864
  %1640 = vmatpush1.msra.mxu0 %v863
  %1641 = vmatprep.subr.mxu0 %v928
  %1642 = vmatpush1.msra.mxu0 %v927
  %1643 = vmatprep.subr.mxu0 %v992
  %1644 = vmatpush1.msra.mxu0 %v991
  %1645 = vmatprep.subr.mxu0 0.0
  %1646 = vmatpush1.msra.mxu0 0.0
  %1647 = vmatprep.subr.mxu0 0.0
  %1648 = vmatpush1.msra.mxu0 0.0
  %1649 = vmatprep.subr.mxu0 0.0
  %1650 = vmatpush1.msra.mxu0 0.0
  %1651 = vmatprep.subr.mxu0 0.0
  %1652 = vmatpush1.msra.mxu0 0.0
  %1653 = vmatprep.subr.mxu0 0.0
  %1654 = vmatpush1.msra.mxu0 0.0
  %1655 = vmatprep.subr.mxu0 0.0
  %1656 = vmatpush1.msra.mxu0 0.0
  %1657 = vmatprep.subr.mxu0 0.0
  %1658 = vmatpush1.msra.mxu0 0.0
  %1659 = vmatprep.subr.mxu0 0.0
  %1660 = vmatpush1.msra.mxu0 0.0
  %1661 = vmatprep.subr.mxu0 0.0
  %1662 = vmatpush1.msra.mxu0 0.0
  %1663 = vmatprep.subr.mxu0 0.0
  %1664 = vmatpush1.msra.mxu0 0.0
  %1665 = vmatprep.subr.mxu0 0.0
  %1666 = vmatpush1.msra.mxu0 0.0
  %1667 = vmatprep.subr.mxu0 0.0
  %1668 = vmatpush1.msra.mxu0 0.0
  %1669 = vmatprep.subr.mxu0 0.0
  %1670 = vmatpush1.msra.mxu0 0.0
  %1671 = vmatprep.subr.mxu0 0.0
  %1672 = vmatpush1.msra.mxu0 0.0
  %1673 = vmatprep.subr.mxu0 0.0
  %1674 = vmatpush1.msra.mxu0 0.0
  %1675 = vmatprep.subr.mxu0 0.0
  %1676 = vmatpush1.msra.mxu0 0.0
  %1677 = vmatprep.mubr.f32.mxu0 0.0
  %1678 = vmatmul.mubr.f32.gmra.mrb[0].mxu0 %v14
  %v1679 = vpop.f32.mrb[0].mxu0
  %v1680 = vadd.f32 %v1043, %v1679
  %v1681 = vpop.f32.mrb[0].mxu0
  %v1682 = vadd.f32 %v1043, %v1681
  %1683 = vdwg.mxu0
  %1684 = vmatprep.subr.mxu0 %v34
  %1685 = vmatpush1.msra.mxu0 %v33
  %1686 = vmatprep.subr.mxu0 %v98
  %1687 = vmatpush1.msra.mxu0 %v97
  %1688 = vmatprep.subr.mxu0 %v162
  %1689 = vmatpush1.msra.mxu0 %v161
  %1690 = vmatprep.subr.mxu0 %v226
  %1691 = vmatpush1.msra.mxu0 %v225
  %1692 = vmatprep.subr.mxu0 %v290
  %1693 = vmatpush1.msra.mxu0 %v289
  %1694 = vmatprep.subr.mxu0 %v354
  %1695 = vmatpush1.msra.mxu0 %v353
  %1696 = vmatprep.subr.mxu0 %v418
  %1697 = vmatpush1.msra.mxu0 %v417
  %1698 = vmatprep.subr.mxu0 %v482
  %1699 = vmatpush1.msra.mxu0 %v481
  %1700 = vmatprep.subr.mxu0 %v546
  %1701 = vmatpush1.msra.mxu0 %v545
  %1702 = vmatprep.subr.mxu0 %v610
  %1703 = vmatpush1.msra.mxu0 %v609
  %1704 = vmatprep.subr.mxu0 %v674
  %1705 = vmatpush1.msra.mxu0 %v673
  %1706 = vmatprep.subr.mxu0 %v738
  %1707 = vmatpush1.msra.mxu0 %v737
  %1708 = vmatprep.subr.mxu0 %v802
  %1709 = vmatpush1.msra.mxu0 %v801
  %1710 = vmatprep.subr.mxu0 %v866
  %1711 = vmatpush1.msra.mxu0 %v865
  %1712 = vmatprep.subr.mxu0 %v930
  %1713 = vmatpush1.msra.mxu0 %v929
  %1714 = vmatprep.subr.mxu0 %v994
  %1715 = vmatpush1.msra.mxu0 %v993
  %1716 = vmatprep.subr.mxu0 0.0
  %1717 = vmatpush1.msra.mxu0 0.0
  %1718 = vmatprep.subr.mxu0 0.0
  %1719 = vmatpush1.msra.mxu0 0.0
  %1720 = vmatprep.subr.mxu0 0.0
  %1721 = vmatpush1.msra.mxu0 0.0
  %1722 = vmatprep.subr.mxu0 0.0
  %1723 = vmatpush1.msra.mxu0 0.0
  %1724 = vmatprep.subr.mxu0 0.0
  %1725 = vmatpush1.msra.mxu0 0.0
  %1726 = vmatprep.subr.mxu0 0.0
  %1727 = vmatpush1.msra.mxu0 0.0
  %1728 = vmatprep.subr.mxu0 0.0
  %1729 = vmatpush1.msra.mxu0 0.0
  %1730 = vmatprep.subr.mxu0 0.0
  %1731 = vmatpush1.msra.mxu0 0.0
  %1732 = vmatprep.subr.mxu0 0.0
  %1733 = vmatpush1.msra.mxu0 0.0
  %1734 = vmatprep.subr.mxu0 0.0
  %1735 = vmatpush1.msra.mxu0 0.0
  %1736 = vmatprep.subr.mxu0 0.0
  %1737 = vmatpush1.msra.mxu0 0.0
  %1738 = vmatprep.subr.mxu0 0.0
  %1739 = vmatpush1.msra.mxu0 0.0
  %1740 = vmatprep.subr.mxu0 0.0
  %1741 = vmatpush1.msra.mxu0 0.0
  %1742 = vmatprep.subr.mxu0 0.0
  %1743 = vmatpush1.msra.mxu0 0.0
  %1744 = vmatprep.subr.mxu0 0.0
  %1745 = vmatpush1.msra.mxu0 0.0
  %1746 = vmatprep.subr.mxu0 0.0
  %1747 = vmatpush1.msra.mxu0 0.0
  %1748 = vmatprep.mubr.f32.mxu0 0.0
  %1749 = vmatmul.mubr.f32.gmra.mrb[0].mxu0 %v14
  %v1750 = vpop.f32.mrb[0].mxu0
  %v1751 = vadd.f32 %v1043, %v1750
  %v1752 = vpop.f32.mrb[0].mxu0
  %v1753 = vadd.f32 %v1043, %v1752
  %1754 = vdwg.mxu0
  %1755 = vmatprep.subr.mxu0 %v36
  %1756 = vmatpush1.msra.mxu0 %v35
  %1757 = vmatprep.subr.mxu0 %v100
  %1758 = vmatpush1.msra.mxu0 %v99
  %1759 = vmatprep.subr.mxu0 %v164
  %1760 = vmatpush1.msra.mxu0 %v163
  %1761 = vmatprep.subr.mxu0 %v228
  %1762 = vmatpush1.msra.mxu0 %v227
  %1763 = vmatprep.subr.mxu0 %v292
  %1764 = vmatpush1.msra.mxu0 %v291
  %1765 = vmatprep.subr.mxu0 %v356
  %1766 = vmatpush1.msra.mxu0 %v355
  %1767 = vmatprep.subr.mxu0 %v420
  %1768 = vmatpush1.msra.mxu0 %v419
  %1769 = vmatprep.subr.mxu0 %v484
  %1770 = vmatpush1.msra.mxu0 %v483
  %1771 = vmatprep.subr.mxu0 %v548
  %1772 = vmatpush1.msra.mxu0 %v547
  %1773 = vmatprep.subr.mxu0 %v612
  %1774 = vmatpush1.msra.mxu0 %v611
  %1775 = vmatprep.subr.mxu0 %v676
  %1776 = vmatpush1.msra.mxu0 %v675
  %1777 = vmatprep.subr.mxu0 %v740
  %1778 = vmatpush1.msra.mxu0 %v739
  %1779 = vmatprep.subr.mxu0 %v804
  %1780 = vmatpush1.msra.mxu0 %v803
  %1781 = vmatprep.subr.mxu0 %v868
  %1782 = vmatpush1.msra.mxu0 %v867
  %1783 = vmatprep.subr.mxu0 %v932
  %1784 = vmatpush1.msra.mxu0 %v931
  %1785 = vmatprep.subr.mxu0 %v996
  %1786 = vmatpush1.msra.mxu0 %v995
  %1787 = vmatprep.subr.mxu0 0.0
  %1788 = vmatpush1.msra.mxu0 0.0
  %1789 = vmatprep.subr.mxu0 0.0
  %1790 = vmatpush1.msra.mxu0 0.0
  %1791 = vmatprep.subr.mxu0 0.0
  %1792 = vmatpush1.msra.mxu0 0.0
  %1793 = vmatprep.subr.mxu0 0.0
  %1794 = vmatpush1.msra.mxu0 0.0
  %1795 = vmatprep.subr.mxu0 0.0
  %1796 = vmatpush1.msra.mxu0 0.0
  %1797 = vmatprep.subr.mxu0 0.0
  %1798 = vmatpush1.msra.mxu0 0.0
  %1799 = vmatprep.subr.mxu0 0.0
  %1800 = vmatpush1.msra.mxu0 0.0
  %1801 = vmatprep.subr.mxu0 0.0
  %1802 = vmatpush1.msra.mxu0 0.0
  %1803 = vmatprep.subr.mxu0 0.0
  %1804 = vmatpush1.msra.mxu0 0.0
  %1805 = vmatprep.subr.mxu0 0.0
  %1806 = vmatpush1.msra.mxu0 0.0
  %1807 = vmatprep.subr.mxu0 0.0
  %1808 = vmatpush1.msra.mxu0 0.0
  %1809 = vmatprep.subr.mxu0 0.0
  %1810 = vmatpush1.msra.mxu0 0.0
  %1811 = vmatprep.subr.mxu0 0.0
  %1812 = vmatpush1.msra.mxu0 0.0
  %1813 = vmatprep.subr.mxu0 0.0
  %1814 = vmatpush1.msra.mxu0 0.0
  %1815 = vmatprep.subr.mxu0 0.0
  %1816 = vmatpush1.msra.mxu0 0.0
  %1817 = vmatprep.subr.mxu0 0.0
  %1818 = vmatpush1.msra.mxu0 0.0
  %1819 = vmatprep.mubr.f32.mxu0 0.0
  %1820 = vmatmul.mubr.f32.gmra.mrb[0].mxu0 %v14
  %v1821 = vpop.f32.mrb[0].mxu0
  %v1822 = vadd.f32 %v1043, %v1821
  %v1823 = vpop.f32.mrb[0].mxu0
  %v1824 = vadd.f32 %v1043, %v1823
  %1825 = vdwg.mxu0
  %1826 = vmatprep.subr.mxu0 %v38
  %1827 = vmatpush1.msra.mxu0 %v37
  %1828 = vmatprep.subr.mxu0 %v102
  %1829 = vmatpush1.msra.mxu0 %v101
  %1830 = vmatprep.subr.mxu0 %v166
  %1831 = vmatpush1.msra.mxu0 %v165
  %1832 = vmatprep.subr.mxu0 %v230
  %1833 = vmatpush1.msra.mxu0 %v229
  %1834 = vmatprep.subr.mxu0 %v294
  %1835 = vmatpush1.msra.mxu0 %v293
  %1836 = vmatprep.subr.mxu0 %v358
  %1837 = vmatpush1.msra.mxu0 %v357
  %1838 = vmatprep.subr.mxu0 %v422
  %1839 = vmatpush1.msra.mxu0 %v421
  %1840 = vmatprep.subr.mxu0 %v486
  %1841 = vmatpush1.msra.mxu0 %v485
  %1842 = vmatprep.subr.mxu0 %v550
  %1843 = vmatpush1.msra.mxu0 %v549
  %1844 = vmatprep.subr.mxu0 %v614
  %1845 = vmatpush1.msra.mxu0 %v613
  %1846 = vmatprep.subr.mxu0 %v678
  %1847 = vmatpush1.msra.mxu0 %v677
  %1848 = vmatprep.subr.mxu0 %v742
  %1849 = vmatpush1.msra.mxu0 %v741
  %1850 = vmatprep.subr.mxu0 %v806
  %1851 = vmatpush1.msra.mxu0 %v805
  %1852 = vmatprep.subr.mxu0 %v870
  %1853 = vmatpush1.msra.mxu0 %v869
  %1854 = vmatprep.subr.mxu0 %v934
  %1855 = vmatpush1.msra.mxu0 %v933
  %1856 = vmatprep.subr.mxu0 %v998
  %1857 = vmatpush1.msra.mxu0 %v997
  %1858 = vmatprep.subr.mxu0 0.0
  %1859 = vmatpush1.msra.mxu0 0.0
  %1860 = vmatprep.subr.mxu0 0.0
  %1861 = vmatpush1.msra.mxu0 0.0
  %1862 = vmatprep.subr.mxu0 0.0
  %1863 = vmatpush1.msra.mxu0 0.0
  %1864 = vmatprep.subr.mxu0 0.0
  %1865 = vmatpush1.msra.mxu0 0.0
  %1866 = vmatprep.subr.mxu0 0.0
  %1867 = vmatpush1.msra.mxu0 0.0
  %1868 = vmatprep.subr.mxu0 0.0
  %1869 = vmatpush1.msra.mxu0 0.0
  %1870 = vmatprep.subr.mxu0 0.0
  %1871 = vmatpush1.msra.mxu0 0.0
  %1872 = vmatprep.subr.mxu0 0.0
  %1873 = vmatpush1.msra.mxu0 0.0
  %1874 = vmatprep.subr.mxu0 0.0
  %1875 = vmatpush1.msra.mxu0 0.0
  %1876 = vmatprep.subr.mxu0 0.0
  %1877 = vmatpush1.msra.mxu0 0.0
  %1878 = vmatprep.subr.mxu0 0.0
  %1879 = vmatpush1.msra.mxu0 0.0
  %1880 = vmatprep.subr.mxu0 0.0
  %1881 = vmatpush1.msra.mxu0 0.0
  %1882 = vmatprep.subr.mxu0 0.0
  %1883 = vmatpush1.msra.mxu0 0.0
  %1884 = vmatprep.subr.mxu0 0.0
  %1885 = vmatpush1.msra.mxu0 0.0
  %1886 = vmatprep.subr.mxu0 0.0
  %1887 = vmatpush1.msra.mxu0 0.0
  %1888 = vmatprep.subr.mxu0 0.0
  %1889 = vmatpush1.msra.mxu0 0.0
  %1890 = vmatprep.mubr.f32.mxu0 0.0
  %1891 = vmatmul.mubr.f32.gmra.mrb[0].mxu0 %v14
  %v1892 = vpop.f32.mrb[0].mxu0
  %v1893 = vadd.f32 %v1043, %v1892
  %v1894 = vpop.f32.mrb[0].mxu0
  %v1895 = vadd.f32 %v1043, %v1894
  %1896 = vdwg.mxu0
  %1897 = vmatprep.subr.mxu0 %v40
  %1898 = vmatpush1.msra.mxu0 %v39
  %1899 = vmatprep.subr.mxu0 %v104
  %1900 = vmatpush1.msra.mxu0 %v103
  %1901 = vmatprep.subr.mxu0 %v168
  %1902 = vmatpush1.msra.mxu0 %v167
  %1903 = vmatprep.subr.mxu0 %v232
  %1904 = vmatpush1.msra.mxu0 %v231
  %1905 = vmatprep.subr.mxu0 %v296
  %1906 = vmatpush1.msra.mxu0 %v295
  %1907 = vmatprep.subr.mxu0 %v360
  %1908 = vmatpush1.msra.mxu0 %v359
  %1909 = vmatprep.subr.mxu0 %v424
  %1910 = vmatpush1.msra.mxu0 %v423
  %1911 = vmatprep.subr.mxu0 %v488
  %1912 = vmatpush1.msra.mxu0 %v487
  %1913 = vmatprep.subr.mxu0 %v552
  %1914 = vmatpush1.msra.mxu0 %v551
  %1915 = vmatprep.subr.mxu0 %v616
  %1916 = vmatpush1.msra.mxu0 %v615
  %1917 = vmatprep.subr.mxu0 %v680
  %1918 = vmatpush1.msra.mxu0 %v679
  %1919 = vmatprep.subr.mxu0 %v744
  %1920 = vmatpush1.msra.mxu0 %v743
  %1921 = vmatprep.subr.mxu0 %v808
  %1922 = vmatpush1.msra.mxu0 %v807
  %1923 = vmatprep.subr.mxu0 %v872
  %1924 = vmatpush1.msra.mxu0 %v871
  %1925 = vmatprep.subr.mxu0 %v936
  %1926 = vmatpush1.msra.mxu0 %v935
  %1927 = vmatprep.subr.mxu0 %v1000
  %1928 = vmatpush1.msra.mxu0 %v999
  %1929 = vmatprep.subr.mxu0 0.0
  %1930 = vmatpush1.msra.mxu0 0.0
  %1931 = vmatprep.subr.mxu0 0.0
  %1932 = vmatpush1.msra.mxu0 0.0
  %1933 = vmatprep.subr.mxu0 0.0
  %1934 = vmatpush1.msra.mxu0 0.0
  %1935 = vmatprep.subr.mxu0 0.0
  %1936 = vmatpush1.msra.mxu0 0.0
  %1937 = vmatprep.subr.mxu0 0.0
  %1938 = vmatpush1.msra.mxu0 0.0
  %1939 = vmatprep.subr.mxu0 0.0
  %1940 = vmatpush1.msra.mxu0 0.0
  %1941 = vmatprep.subr.mxu0 0.0
  %1942 = vmatpush1.msra.mxu0 0.0
  %1943 = vmatprep.subr.mxu0 0.0
  %1944 = vmatpush1.msra.mxu0 0.0
  %1945 = vmatprep.subr.mxu0 0.0
  %1946 = vmatpush1.msra.mxu0 0.0
  %1947 = vmatprep.subr.mxu0 0.0
  %1948 = vmatpush1.msra.mxu0 0.0
  %1949 = vmatprep.subr.mxu0 0.0
  %1950 = vmatpush1.msra.mxu0 0.0
  %1951 = vmatprep.subr.mxu0 0.0
  %1952 = vmatpush1.msra.mxu0 0.0
  %1953 = vmatprep.subr.mxu0 0.0
  %1954 = vmatpush1.msra.mxu0 0.0
  %1955 = vmatprep.subr.mxu0 0.0
  %1956 = vmatpush1.msra.mxu0 0.0
  %1957 = vmatprep.subr.mxu0 0.0
  %1958 = vmatpush1.msra.mxu0 0.0
  %1959 = vmatprep.subr.mxu0 0.0
  %1960 = vmatpush1.msra.mxu0 0.0
  %1961 = vmatprep.mubr.f32.mxu0 0.0
  %1962 = vmatmul.mubr.f32.gmra.mrb[0].mxu0 %v14
  %v1963 = vpop.f32.mrb[0].mxu0
  %v1964 = vadd.f32 %v1043, %v1963
  %v1965 = vpop.f32.mrb[0].mxu0
  %v1966 = vadd.f32 %v1043, %v1965
  %1967 = vdwg.mxu0
  %1968 = vmatprep.subr.mxu0 %v42
  %1969 = vmatpush1.msra.mxu0 %v41
  %1970 = vmatprep.subr.mxu0 %v106
  %1971 = vmatpush1.msra.mxu0 %v105
  %1972 = vmatprep.subr.mxu0 %v170
  %1973 = vmatpush1.msra.mxu0 %v169
  %1974 = vmatprep.subr.mxu0 %v234
  %1975 = vmatpush1.msra.mxu0 %v233
  %1976 = vmatprep.subr.mxu0 %v298
  %1977 = vmatpush1.msra.mxu0 %v297
  %1978 = vmatprep.subr.mxu0 %v362
  %1979 = vmatpush1.msra.mxu0 %v361
  %1980 = vmatprep.subr.mxu0 %v426
  %1981 = vmatpush1.msra.mxu0 %v425
  %1982 = vmatprep.subr.mxu0 %v490
  %1983 = vmatpush1.msra.mxu0 %v489
  %1984 = vmatprep.subr.mxu0 %v554
  %1985 = vmatpush1.msra.mxu0 %v553
  %1986 = vmatprep.subr.mxu0 %v618
  %1987 = vmatpush1.msra.mxu0 %v617
  %1988 = vmatprep.subr.mxu0 %v682
  %1989 = vmatpush1.msra.mxu0 %v681
  %1990 = vmatprep.subr.mxu0 %v746
  %1991 = vmatpush1.msra.mxu0 %v745
  %1992 = vmatprep.subr.mxu0 %v810
  %1993 = vmatpush1.msra.mxu0 %v809
  %1994 = vmatprep.subr.mxu0 %v874
  %1995 = vmatpush1.msra.mxu0 %v873
  %1996 = vmatprep.subr.mxu0 %v938
  %1997 = vmatpush1.msra.mxu0 %v937
  %1998 = vmatprep.subr.mxu0 %v1002
  %1999 = vmatpush1.msra.mxu0 %v1001
  %2000 = vmatprep.subr.mxu0 0.0
  %2001 = vmatpush1.msra.mxu0 0.0
  %2002 = vmatprep.subr.mxu0 0.0
  %2003 = vmatpush1.msra.mxu0 0.0
  %2004 = vmatprep.subr.mxu0 0.0
  %2005 = vmatpush1.msra.mxu0 0.0
  %2006 = vmatprep.subr.mxu0 0.0
  %2007 = vmatpush1.msra.mxu0 0.0
  %2008 = vmatprep.subr.mxu0 0.0
  %2009 = vmatpush1.msra.mxu0 0.0
  %2010 = vmatprep.subr.mxu0 0.0
  %2011 = vmatpush1.msra.mxu0 0.0
  %2012 = vmatprep.subr.mxu0 0.0
  %2013 = vmatpush1.msra.mxu0 0.0
  %2014 = vmatprep.subr.mxu0 0.0
  %2015 = vmatpush1.msra.mxu0 0.0
  %2016 = vmatprep.subr.mxu0 0.0
  %2017 = vmatpush1.msra.mxu0 0.0
  %2018 = vmatprep.subr.mxu0 0.0
  %2019 = vmatpush1.msra.mxu0 0.0
  %2020 = vmatprep.subr.mxu0 0.0
  %2021 = vmatpush1.msra.mxu0 0.0
  %2022 = vmatprep.subr.mxu0 0.0
  %2023 = vmatpush1.msra.mxu0 0.0
  %2024 = vmatprep.subr.mxu0 0.0
  %2025 = vmatpush1.msra.mxu0 0.0
  %2026 = vmatprep.subr.mxu0 0.0
  %2027 = vmatpush1.msra.mxu0 0.0
  %2028 = vmatprep.subr.mxu0 0.0
  %2029 = vmatpush1.msra.mxu0 0.0
  %2030 = vmatprep.subr.mxu0 0.0
  %2031 = vmatpush1.msra.mxu0 0.0
  %2032 = vmatprep.mubr.f32.mxu0 0.0
  %2033 = vmatmul.mubr.f32.gmra.mrb[0].mxu0 %v14
  %v2034 = vpop.f32.mrb[0].mxu0
  %v2035 = vadd.f32 %v1043, %v2034
  %v2036 = vpop.f32.mrb[0].mxu0
  %v2037 = vadd.f32 %v1043, %v2036
  %2038 = vdwg.mxu0
  %2039 = vmatprep.subr.mxu0 %v44
  %2040 = vmatpush1.msra.mxu0 %v43
  %2041 = vmatprep.subr.mxu0 %v108
  %2042 = vmatpush1.msra.mxu0 %v107
  %2043 = vmatprep.subr.mxu0 %v172
  %2044 = vmatpush1.msra.mxu0 %v171
  %2045 = vmatprep.subr.mxu0 %v236
  %2046 = vmatpush1.msra.mxu0 %v235
  %2047 = vmatprep.subr.mxu0 %v300
  %2048 = vmatpush1.msra.mxu0 %v299
  %2049 = vmatprep.subr.mxu0 %v364
  %2050 = vmatpush1.msra.mxu0 %v363
  %2051 = vmatprep.subr.mxu0 %v428
  %2052 = vmatpush1.msra.mxu0 %v427
  %2053 = vmatprep.subr.mxu0 %v492
  %2054 = vmatpush1.msra.mxu0 %v491
  %2055 = vmatprep.subr.mxu0 %v556
  %2056 = vmatpush1.msra.mxu0 %v555
  %2057 = vmatprep.subr.mxu0 %v620
  %2058 = vmatpush1.msra.mxu0 %v619
  %2059 = vmatprep.subr.mxu0 %v684
  %2060 = vmatpush1.msra.mxu0 %v683
  %2061 = vmatprep.subr.mxu0 %v748
  %2062 = vmatpush1.msra.mxu0 %v747
  %2063 = vmatprep.subr.mxu0 %v812
  %2064 = vmatpush1.msra.mxu0 %v811
  %2065 = vmatprep.subr.mxu0 %v876
  %2066 = vmatpush1.msra.mxu0 %v875
  %2067 = vmatprep.subr.mxu0 %v940
  %2068 = vmatpush1.msra.mxu0 %v939
  %2069 = vmatprep.subr.mxu0 %v1004
  %2070 = vmatpush1.msra.mxu0 %v1003
  %2071 = vmatprep.subr.mxu0 0.0
  %2072 = vmatpush1.msra.mxu0 0.0
  %2073 = vmatprep.subr.mxu0 0.0
  %2074 = vmatpush1.msra.mxu0 0.0
  %2075 = vmatprep.subr.mxu0 0.0
  %2076 = vmatpush1.msra.mxu0 0.0
  %2077 = vmatprep.subr.mxu0 0.0
  %2078 = vmatpush1.msra.mxu0 0.0
  %2079 = vmatprep.subr.mxu0 0.0
  %2080 = vmatpush1.msra.mxu0 0.0
  %2081 = vmatprep.subr.mxu0 0.0
  %2082 = vmatpush1.msra.mxu0 0.0
  %2083 = vmatprep.subr.mxu0 0.0
  %2084 = vmatpush1.msra.mxu0 0.0
  %2085 = vmatprep.subr.mxu0 0.0
  %2086 = vmatpush1.msra.mxu0 0.0
  %2087 = vmatprep.subr.mxu0 0.0
  %2088 = vmatpush1.msra.mxu0 0.0
  %2089 = vmatprep.subr.mxu0 0.0
  %2090 = vmatpush1.msra.mxu0 0.0
  %2091 = vmatprep.subr.mxu0 0.0
  %2092 = vmatpush1.msra.mxu0 0.0
  %2093 = vmatprep.subr.mxu0 0.0
  %2094 = vmatpush1.msra.mxu0 0.0
  %2095 = vmatprep.subr.mxu0 0.0
  %2096 = vmatpush1.msra.mxu0 0.0
  %2097 = vmatprep.subr.mxu0 0.0
  %2098 = vmatpush1.msra.mxu0 0.0
  %2099 = vmatprep.subr.mxu0 0.0
  %2100 = vmatpush1.msra.mxu0 0.0
  %2101 = vmatprep.subr.mxu0 0.0
  %2102 = vmatpush1.msra.mxu0 0.0
  %2103 = vmatprep.mubr.f32.mxu0 0.0
  %2104 = vmatmul.mubr.f32.gmra.mrb[0].mxu0 %v14
  %v2105 = vpop.f32.mrb[0].mxu0
  %v2106 = vadd.f32 %v1043, %v2105
  %v2107 = vpop.f32.mrb[0].mxu0
  %v2108 = vadd.f32 %v1043, %v2107
  %2109 = vdwg.mxu0
  %2110 = vmatprep.subr.mxu0 %v46
  %2111 = vmatpush1.msra.mxu0 %v45
  %2112 = vmatprep.subr.mxu0 %v110
  %2113 = vmatpush1.msra.mxu0 %v109
  %2114 = vmatprep.subr.mxu0 %v174
  %2115 = vmatpush1.msra.mxu0 %v173
  %2116 = vmatprep.subr.mxu0 %v238
  %2117 = vmatpush1.msra.mxu0 %v237
  %2118 = vmatprep.subr.mxu0 %v302
  %2119 = vmatpush1.msra.mxu0 %v301
  %2120 = vmatprep.subr.mxu0 %v366
  %2121 = vmatpush1.msra.mxu0 %v365
  %2122 = vmatprep.subr.mxu0 %v430
  %2123 = vmatpush1.msra.mxu0 %v429
  %2124 = vmatprep.subr.mxu0 %v494
  %2125 = vmatpush1.msra.mxu0 %v493
  %2126 = vmatprep.subr.mxu0 %v558
  %2127 = vmatpush1.msra.mxu0 %v557
  %2128 = vmatprep.subr.mxu0 %v622
  %2129 = vmatpush1.msra.mxu0 %v621
  %2130 = vmatprep.subr.mxu0 %v686
  %2131 = vmatpush1.msra.mxu0 %v685
  %2132 = vmatprep.subr.mxu0 %v750
  %2133 = vmatpush1.msra.mxu0 %v749
  %2134 = vmatprep.subr.mxu0 %v814
  %2135 = vmatpush1.msra.mxu0 %v813
  %2136 = vmatprep.subr.mxu0 %v878
  %2137 = vmatpush1.msra.mxu0 %v877
  %2138 = vmatprep.subr.mxu0 %v942
  %2139 = vmatpush1.msra.mxu0 %v941
  %2140 = vmatprep.subr.mxu0 %v1006
  %2141 = vmatpush1.msra.mxu0 %v1005
  %2142 = vmatprep.subr.mxu0 0.0
  %2143 = vmatpush1.msra.mxu0 0.0
  %2144 = vmatprep.subr.mxu0 0.0
  %2145 = vmatpush1.msra.mxu0 0.0
  %2146 = vmatprep.subr.mxu0 0.0
  %2147 = vmatpush1.msra.mxu0 0.0
  %2148 = vmatprep.subr.mxu0 0.0
  %2149 = vmatpush1.msra.mxu0 0.0
  %2150 = vmatprep.subr.mxu0 0.0
  %2151 = vmatpush1.msra.mxu0 0.0
  %2152 = vmatprep.subr.mxu0 0.0
  %2153 = vmatpush1.msra.mxu0 0.0
  %2154 = vmatprep.subr.mxu0 0.0
  %2155 = vmatpush1.msra.mxu0 0.0
  %2156 = vmatprep.subr.mxu0 0.0
  %2157 = vmatpush1.msra.mxu0 0.0
  %2158 = vmatprep.subr.mxu0 0.0
  %2159 = vmatpush1.msra.mxu0 0.0
  %2160 = vmatprep.subr.mxu0 0.0
  %2161 = vmatpush1.msra.mxu0 0.0
  %2162 = vmatprep.subr.mxu0 0.0
  %2163 = vmatpush1.msra.mxu0 0.0
  %2164 = vmatprep.subr.mxu0 0.0
  %2165 = vmatpush1.msra.mxu0 0.0
  %2166 = vmatprep.subr.mxu0 0.0
  %2167 = vmatpush1.msra.mxu0 0.0
  %2168 = vmatprep.subr.mxu0 0.0
  %2169 = vmatpush1.msra.mxu0 0.0
  %2170 = vmatprep.subr.mxu0 0.0
  %2171 = vmatpush1.msra.mxu0 0.0
  %2172 = vmatprep.subr.mxu0 0.0
  %2173 = vmatpush1.msra.mxu0 0.0
  %2174 = vmatprep.mubr.f32.mxu0 0.0
  %2175 = vmatmul.mubr.f32.gmra.mrb[0].mxu0 %v14
  %v2176 = vpop.f32.mrb[0].mxu0
  %v2177 = vadd.f32 %v1043, %v2176
  %v2178 = vpop.f32.mrb[0].mxu0
  %v2179 = vadd.f32 %v1043, %v2178
  %2180 = vdwg.mxu0
  %2181 = vmatprep.subr.mxu0 %v48
  %2182 = vmatpush1.msra.mxu0 %v47
  %2183 = vmatprep.subr.mxu0 %v112
  %2184 = vmatpush1.msra.mxu0 %v111
  %2185 = vmatprep.subr.mxu0 %v176
  %2186 = vmatpush1.msra.mxu0 %v175
  %2187 = vmatprep.subr.mxu0 %v240
  %2188 = vmatpush1.msra.mxu0 %v239
  %2189 = vmatprep.subr.mxu0 %v304
  %2190 = vmatpush1.msra.mxu0 %v303
  %2191 = vmatprep.subr.mxu0 %v368
  %2192 = vmatpush1.msra.mxu0 %v367
  %2193 = vmatprep.subr.mxu0 %v432
  %2194 = vmatpush1.msra.mxu0 %v431
  %2195 = vmatprep.subr.mxu0 %v496
  %2196 = vmatpush1.msra.mxu0 %v495
  %2197 = vmatprep.subr.mxu0 %v560
  %2198 = vmatpush1.msra.mxu0 %v559
  %2199 = vmatprep.subr.mxu0 %v624
  %2200 = vmatpush1.msra.mxu0 %v623
  %2201 = vmatprep.subr.mxu0 %v688
  %2202 = vmatpush1.msra.mxu0 %v687
  %2203 = vmatprep.subr.mxu0 %v752
  %2204 = vmatpush1.msra.mxu0 %v751
  %2205 = vmatprep.subr.mxu0 %v816
  %2206 = vmatpush1.msra.mxu0 %v815
  %2207 = vmatprep.subr.mxu0 %v880
  %2208 = vmatpush1.msra.mxu0 %v879
  %2209 = vmatprep.subr.mxu0 %v944
  %2210 = vmatpush1.msra.mxu0 %v943
  %2211 = vmatprep.subr.mxu0 %v1008
  %2212 = vmatpush1.msra.mxu0 %v1007
  %2213 = vmatprep.subr.mxu0 0.0
  %2214 = vmatpush1.msra.mxu0 0.0
  %2215 = vmatprep.subr.mxu0 0.0
  %2216 = vmatpush1.msra.mxu0 0.0
  %2217 = vmatprep.subr.mxu0 0.0
  %2218 = vmatpush1.msra.mxu0 0.0
  %2219 = vmatprep.subr.mxu0 0.0
  %2220 = vmatpush1.msra.mxu0 0.0
  %2221 = vmatprep.subr.mxu0 0.0
  %2222 = vmatpush1.msra.mxu0 0.0
  %2223 = vmatprep.subr.mxu0 0.0
  %2224 = vmatpush1.msra.mxu0 0.0
  %2225 = vmatprep.subr.mxu0 0.0
  %2226 = vmatpush1.msra.mxu0 0.0
  %2227 = vmatprep.subr.mxu0 0.0
  %2228 = vmatpush1.msra.mxu0 0.0
  %2229 = vmatprep.subr.mxu0 0.0
  %2230 = vmatpush1.msra.mxu0 0.0
  %2231 = vmatprep.subr.mxu0 0.0
  %2232 = vmatpush1.msra.mxu0 0.0
  %2233 = vmatprep.subr.mxu0 0.0
  %2234 = vmatpush1.msra.mxu0 0.0
  %2235 = vmatprep.subr.mxu0 0.0
  %2236 = vmatpush1.msra.mxu0 0.0
  %2237 = vmatprep.subr.mxu0 0.0
  %2238 = vmatpush1.msra.mxu0 0.0
  %2239 = vmatprep.subr.mxu0 0.0
  %2240 = vmatpush1.msra.mxu0 0.0
  %2241 = vmatprep.subr.mxu0 0.0
  %2242 = vmatpush1.msra.mxu0 0.0
  %2243 = vmatprep.subr.mxu0 0.0
  %2244 = vmatpush1.msra.mxu0 0.0
  %2245 = vmatprep.mubr.f32.mxu0 0.0
  %2246 = vmatmul.mubr.f32.gmra.mrb[0].mxu0 %v14
  %v2247 = vpop.f32.mrb[0].mxu0
  %v2248 = vadd.f32 %v1043, %v2247
  %v2249 = vpop.f32.mrb[0].mxu0
  %v2250 = vadd.f32 %v1043, %v2249
  %2251 = vdwg.mxu0
  %2252 = vmatprep.subr.mxu0 %v50
  %2253 = vmatpush1.msra.mxu0 %v49
  %2254 = vmatprep.subr.mxu0 %v114
  %2255 = vmatpush1.msra.mxu0 %v113
  %2256 = vmatprep.subr.mxu0 %v178
  %2257 = vmatpush1.msra.mxu0 %v177
  %2258 = vmatprep.subr.mxu0 %v242
  %2259 = vmatpush1.msra.mxu0 %v241
  %2260 = vmatprep.subr.mxu0 %v306
  %2261 = vmatpush1.msra.mxu0 %v305
  %2262 = vmatprep.subr.mxu0 %v370
  %2263 = vmatpush1.msra.mxu0 %v369
  %2264 = vmatprep.subr.mxu0 %v434
  %2265 = vmatpush1.msra.mxu0 %v433
  %2266 = vmatprep.subr.mxu0 %v498
  %2267 = vmatpush1.msra.mxu0 %v497
  %2268 = vmatprep.subr.mxu0 %v562
  %2269 = vmatpush1.msra.mxu0 %v561
  %2270 = vmatprep.subr.mxu0 %v626
  %2271 = vmatpush1.msra.mxu0 %v625
  %2272 = vmatprep.subr.mxu0 %v690
  %2273 = vmatpush1.msra.mxu0 %v689
  %2274 = vmatprep.subr.mxu0 %v754
  %2275 = vmatpush1.msra.mxu0 %v753
  %2276 = vmatprep.subr.mxu0 %v818
  %2277 = vmatpush1.msra.mxu0 %v817
  %2278 = vmatprep.subr.mxu0 %v882
  %2279 = vmatpush1.msra.mxu0 %v881
  %2280 = vmatprep.subr.mxu0 %v946
  %2281 = vmatpush1.msra.mxu0 %v945
  %2282 = vmatprep.subr.mxu0 %v1010
  %2283 = vmatpush1.msra.mxu0 %v1009
  %2284 = vmatprep.subr.mxu0 0.0
  %2285 = vmatpush1.msra.mxu0 0.0
  %2286 = vmatprep.subr.mxu0 0.0
  %2287 = vmatpush1.msra.mxu0 0.0
  %2288 = vmatprep.subr.mxu0 0.0
  %2289 = vmatpush1.msra.mxu0 0.0
  %2290 = vmatprep.subr.mxu0 0.0
  %2291 = vmatpush1.msra.mxu0 0.0
  %2292 = vmatprep.subr.mxu0 0.0
  %2293 = vmatpush1.msra.mxu0 0.0
  %2294 = vmatprep.subr.mxu0 0.0
  %2295 = vmatpush1.msra.mxu0 0.0
  %2296 = vmatprep.subr.mxu0 0.0
  %2297 = vmatpush1.msra.mxu0 0.0
  %2298 = vmatprep.subr.mxu0 0.0
  %2299 = vmatpush1.msra.mxu0 0.0
  %2300 = vmatprep.subr.mxu0 0.0
  %2301 = vmatpush1.msra.mxu0 0.0
  %2302 = vmatprep.subr.mxu0 0.0
  %2303 = vmatpush1.msra.mxu0 0.0
  %2304 = vmatprep.subr.mxu0 0.0
  %2305 = vmatpush1.msra.mxu0 0.0
  %2306 = vmatprep.subr.mxu0 0.0
  %2307 = vmatpush1.msra.mxu0 0.0
  %2308 = vmatprep.subr.mxu0 0.0
  %2309 = vmatpush1.msra.mxu0 0.0
  %2310 = vmatprep.subr.mxu0 0.0
  %2311 = vmatpush1.msra.mxu0 0.0
  %2312 = vmatprep.subr.mxu0 0.0
  %2313 = vmatpush1.msra.mxu0 0.0
  %2314 = vmatprep.subr.mxu0 0.0
  %2315 = vmatpush1.msra.mxu0 0.0
  %2316 = vmatprep.mubr.f32.mxu0 0.0
  %2317 = vmatmul.mubr.f32.gmra.mrb[0].mxu0 %v14
  %v2318 = vpop.f32.mrb[0].mxu0
  %v2319 = vadd.f32 %v1043, %v2318
  %v2320 = vpop.f32.mrb[0].mxu0
  %v2321 = vadd.f32 %v1043, %v2320
  %2322 = vdwg.mxu0
  %2323 = vmatprep.subr.mxu0 %v52
  %2324 = vmatpush1.msra.mxu0 %v51
  %2325 = vmatprep.subr.mxu0 %v116
  %2326 = vmatpush1.msra.mxu0 %v115
  %2327 = vmatprep.subr.mxu0 %v180
  %2328 = vmatpush1.msra.mxu0 %v179
  %2329 = vmatprep.subr.mxu0 %v244
  %2330 = vmatpush1.msra.mxu0 %v243
  %2331 = vmatprep.subr.mxu0 %v308
  %2332 = vmatpush1.msra.mxu0 %v307
  %2333 = vmatprep.subr.mxu0 %v372
  %2334 = vmatpush1.msra.mxu0 %v371
  %2335 = vmatprep.subr.mxu0 %v436
  %2336 = vmatpush1.msra.mxu0 %v435
  %2337 = vmatprep.subr.mxu0 %v500
  %2338 = vmatpush1.msra.mxu0 %v499
  %2339 = vmatprep.subr.mxu0 %v564
  %2340 = vmatpush1.msra.mxu0 %v563
  %2341 = vmatprep.subr.mxu0 %v628
  %2342 = vmatpush1.msra.mxu0 %v627
  %2343 = vmatprep.subr.mxu0 %v692
  %2344 = vmatpush1.msra.mxu0 %v691
  %2345 = vmatprep.subr.mxu0 %v756
  %2346 = vmatpush1.msra.mxu0 %v755
  %2347 = vmatprep.subr.mxu0 %v820
  %2348 = vmatpush1.msra.mxu0 %v819
  %2349 = vmatprep.subr.mxu0 %v884
  %2350 = vmatpush1.msra.mxu0 %v883
  %2351 = vmatprep.subr.mxu0 %v948
  %2352 = vmatpush1.msra.mxu0 %v947
  %2353 = vmatprep.subr.mxu0 %v1012
  %2354 = vmatpush1.msra.mxu0 %v1011
  %2355 = vmatprep.subr.mxu0 0.0
  %2356 = vmatpush1.msra.mxu0 0.0
  %2357 = vmatprep.subr.mxu0 0.0
  %2358 = vmatpush1.msra.mxu0 0.0
  %2359 = vmatprep.subr.mxu0 0.0
  %2360 = vmatpush1.msra.mxu0 0.0
  %2361 = vmatprep.subr.mxu0 0.0
  %2362 = vmatpush1.msra.mxu0 0.0
  %2363 = vmatprep.subr.mxu0 0.0
  %2364 = vmatpush1.msra.mxu0 0.0
  %2365 = vmatprep.subr.mxu0 0.0
  %2366 = vmatpush1.msra.mxu0 0.0
  %2367 = vmatprep.subr.mxu0 0.0
  %2368 = vmatpush1.msra.mxu0 0.0
  %2369 = vmatprep.subr.mxu0 0.0
  %2370 = vmatpush1.msra.mxu0 0.0
  %2371 = vmatprep.subr.mxu0 0.0
  %2372 = vmatpush1.msra.mxu0 0.0
  %2373 = vmatprep.subr.mxu0 0.0
  %2374 = vmatpush1.msra.mxu0 0.0
  %2375 = vmatprep.subr.mxu0 0.0
  %2376 = vmatpush1.msra.mxu0 0.0
  %2377 = vmatprep.subr.mxu0 0.0
  %2378 = vmatpush1.msra.mxu0 0.0
  %2379 = vmatprep.subr.mxu0 0.0
  %2380 = vmatpush1.msra.mxu0 0.0
  %2381 = vmatprep.subr.mxu0 0.0
  %2382 = vmatpush1.msra.mxu0 0.0
  %2383 = vmatprep.subr.mxu0 0.0
  %2384 = vmatpush1.msra.mxu0 0.0
  %2385 = vmatprep.subr.mxu0 0.0
  %2386 = vmatpush1.msra.mxu0 0.0
  %2387 = vmatprep.mubr.f32.mxu0 0.0
  %2388 = vmatmul.mubr.f32.gmra.mrb[0].mxu0 %v14
  %v2389 = vpop.f32.mrb[0].mxu0
  %v2390 = vadd.f32 %v1043, %v2389
  %v2391 = vpop.f32.mrb[0].mxu0
  %v2392 = vadd.f32 %v1043, %v2391
  %2393 = vdwg.mxu0
  %2394 = vmatprep.subr.mxu0 %v54
  %2395 = vmatpush1.msra.mxu0 %v53
  %2396 = vmatprep.subr.mxu0 %v118
  %2397 = vmatpush1.msra.mxu0 %v117
  %2398 = vmatprep.subr.mxu0 %v182
  %2399 = vmatpush1.msra.mxu0 %v181
  %2400 = vmatprep.subr.mxu0 %v246
  %2401 = vmatpush1.msra.mxu0 %v245
  %2402 = vmatprep.subr.mxu0 %v310
  %2403 = vmatpush1.msra.mxu0 %v309
  %2404 = vmatprep.subr.mxu0 %v374
  %2405 = vmatpush1.msra.mxu0 %v373
  %2406 = vmatprep.subr.mxu0 %v438
  %2407 = vmatpush1.msra.mxu0 %v437
  %2408 = vmatprep.subr.mxu0 %v502
  %2409 = vmatpush1.msra.mxu0 %v501
  %2410 = vmatprep.subr.mxu0 %v566
  %2411 = vmatpush1.msra.mxu0 %v565
  %2412 = vmatprep.subr.mxu0 %v630
  %2413 = vmatpush1.msra.mxu0 %v629
  %2414 = vmatprep.subr.mxu0 %v694
  %2415 = vmatpush1.msra.mxu0 %v693
  %2416 = vmatprep.subr.mxu0 %v758
  %2417 = vmatpush1.msra.mxu0 %v757
  %2418 = vmatprep.subr.mxu0 %v822
  %2419 = vmatpush1.msra.mxu0 %v821
  %2420 = vmatprep.subr.mxu0 %v886
  %2421 = vmatpush1.msra.mxu0 %v885
  %2422 = vmatprep.subr.mxu0 %v950
  %2423 = vmatpush1.msra.mxu0 %v949
  %2424 = vmatprep.subr.mxu0 %v1014
  %2425 = vmatpush1.msra.mxu0 %v1013
  %2426 = vmatprep.subr.mxu0 0.0
  %2427 = vmatpush1.msra.mxu0 0.0
  %2428 = vmatprep.subr.mxu0 0.0
  %2429 = vmatpush1.msra.mxu0 0.0
  %2430 = vmatprep.subr.mxu0 0.0
  %2431 = vmatpush1.msra.mxu0 0.0
  %2432 = vmatprep.subr.mxu0 0.0
  %2433 = vmatpush1.msra.mxu0 0.0
  %2434 = vmatprep.subr.mxu0 0.0
  %2435 = vmatpush1.msra.mxu0 0.0
  %2436 = vmatprep.subr.mxu0 0.0
  %2437 = vmatpush1.msra.mxu0 0.0
  %2438 = vmatprep.subr.mxu0 0.0
  %2439 = vmatpush1.msra.mxu0 0.0
  %2440 = vmatprep.subr.mxu0 0.0
  %2441 = vmatpush1.msra.mxu0 0.0
  %2442 = vmatprep.subr.mxu0 0.0
  %2443 = vmatpush1.msra.mxu0 0.0
  %2444 = vmatprep.subr.mxu0 0.0
  %2445 = vmatpush1.msra.mxu0 0.0
  %2446 = vmatprep.subr.mxu0 0.0
  %2447 = vmatpush1.msra.mxu0 0.0
  %2448 = vmatprep.subr.mxu0 0.0
  %2449 = vmatpush1.msra.mxu0 0.0
  %2450 = vmatprep.subr.mxu0 0.0
  %2451 = vmatpush1.msra.mxu0 0.0
  %2452 = vmatprep.subr.mxu0 0.0
  %2453 = vmatpush1.msra.mxu0 0.0
  %2454 = vmatprep.subr.mxu0 0.0
  %2455 = vmatpush1.msra.mxu0 0.0
  %2456 = vmatprep.subr.mxu0 0.0
  %2457 = vmatpush1.msra.mxu0 0.0
  %2458 = vmatprep.mubr.f32.mxu0 0.0
  %2459 = vmatmul.mubr.f32.gmra.mrb[0].mxu0 %v14
  %v2460 = vpop.f32.mrb[0].mxu0
  %v2461 = vadd.f32 %v1043, %v2460
  %v2462 = vpop.f32.mrb[0].mxu0
  %v2463 = vadd.f32 %v1043, %v2462
  %2464 = vdwg.mxu0
  %2465 = vmatprep.subr.mxu0 %v56
  %2466 = vmatpush1.msra.mxu0 %v55
  %2467 = vmatprep.subr.mxu0 %v120
  %2468 = vmatpush1.msra.mxu0 %v119
  %2469 = vmatprep.subr.mxu0 %v184
  %2470 = vmatpush1.msra.mxu0 %v183
  %2471 = vmatprep.subr.mxu0 %v248
  %2472 = vmatpush1.msra.mxu0 %v247
  %2473 = vmatprep.subr.mxu0 %v312
  %2474 = vmatpush1.msra.mxu0 %v311
  %2475 = vmatprep.subr.mxu0 %v376
  %2476 = vmatpush1.msra.mxu0 %v375
  %2477 = vmatprep.subr.mxu0 %v440
  %2478 = vmatpush1.msra.mxu0 %v439
  %2479 = vmatprep.subr.mxu0 %v504
  %2480 = vmatpush1.msra.mxu0 %v503
  %2481 = vmatprep.subr.mxu0 %v568
  %2482 = vmatpush1.msra.mxu0 %v567
  %2483 = vmatprep.subr.mxu0 %v632
  %2484 = vmatpush1.msra.mxu0 %v631
  %2485 = vmatprep.subr.mxu0 %v696
  %2486 = vmatpush1.msra.mxu0 %v695
  %2487 = vmatprep.subr.mxu0 %v760
  %2488 = vmatpush1.msra.mxu0 %v759
  %2489 = vmatprep.subr.mxu0 %v824
  %2490 = vmatpush1.msra.mxu0 %v823
  %2491 = vmatprep.subr.mxu0 %v888
  %2492 = vmatpush1.msra.mxu0 %v887
  %2493 = vmatprep.subr.mxu0 %v952
  %2494 = vmatpush1.msra.mxu0 %v951
  %2495 = vmatprep.subr.mxu0 %v1016
  %2496 = vmatpush1.msra.mxu0 %v1015
  %2497 = vmatprep.subr.mxu0 0.0
  %2498 = vmatpush1.msra.mxu0 0.0
  %2499 = vmatprep.subr.mxu0 0.0
  %2500 = vmatpush1.msra.mxu0 0.0
  %2501 = vmatprep.subr.mxu0 0.0
  %2502 = vmatpush1.msra.mxu0 0.0
  %2503 = vmatprep.subr.mxu0 0.0
  %2504 = vmatpush1.msra.mxu0 0.0
  %2505 = vmatprep.subr.mxu0 0.0
  %2506 = vmatpush1.msra.mxu0 0.0
  %2507 = vmatprep.subr.mxu0 0.0
  %2508 = vmatpush1.msra.mxu0 0.0
  %2509 = vmatprep.subr.mxu0 0.0
  %2510 = vmatpush1.msra.mxu0 0.0
  %2511 = vmatprep.subr.mxu0 0.0
  %2512 = vmatpush1.msra.mxu0 0.0
  %2513 = vmatprep.subr.mxu0 0.0
  %2514 = vmatpush1.msra.mxu0 0.0
  %2515 = vmatprep.subr.mxu0 0.0
  %2516 = vmatpush1.msra.mxu0 0.0
  %2517 = vmatprep.subr.mxu0 0.0
  %2518 = vmatpush1.msra.mxu0 0.0
  %2519 = vmatprep.subr.mxu0 0.0
  %2520 = vmatpush1.msra.mxu0 0.0
  %2521 = vmatprep.subr.mxu0 0.0
  %2522 = vmatpush1.msra.mxu0 0.0
  %2523 = vmatprep.subr.mxu0 0.0
  %2524 = vmatpush1.msra.mxu0 0.0
  %2525 = vmatprep.subr.mxu0 0.0
  %2526 = vmatpush1.msra.mxu0 0.0
  %2527 = vmatprep.subr.mxu0 0.0
  %2528 = vmatpush1.msra.mxu0 0.0
  %2529 = vmatprep.mubr.f32.mxu0 0.0
  %2530 = vmatmul.mubr.f32.gmra.mrb[0].mxu0 %v14
  %v2531 = vpop.f32.mrb[0].mxu0
  %v2532 = vadd.f32 %v1043, %v2531
  %v2533 = vpop.f32.mrb[0].mxu0
  %v2534 = vadd.f32 %v1043, %v2533
  %2535 = vdwg.mxu0
  %2536 = vmatprep.subr.mxu0 %v58
  %2537 = vmatpush1.msra.mxu0 %v57
  %2538 = vmatprep.subr.mxu0 %v122
  %2539 = vmatpush1.msra.mxu0 %v121
  %2540 = vmatprep.subr.mxu0 %v186
  %2541 = vmatpush1.msra.mxu0 %v185
  %2542 = vmatprep.subr.mxu0 %v250
  %2543 = vmatpush1.msra.mxu0 %v249
  %2544 = vmatprep.subr.mxu0 %v314
  %2545 = vmatpush1.msra.mxu0 %v313
  %2546 = vmatprep.subr.mxu0 %v378
  %2547 = vmatpush1.msra.mxu0 %v377
  %2548 = vmatprep.subr.mxu0 %v442
  %2549 = vmatpush1.msra.mxu0 %v441
  %2550 = vmatprep.subr.mxu0 %v506
  %2551 = vmatpush1.msra.mxu0 %v505
  %2552 = vmatprep.subr.mxu0 %v570
  %2553 = vmatpush1.msra.mxu0 %v569
  %2554 = vmatprep.subr.mxu0 %v634
  %2555 = vmatpush1.msra.mxu0 %v633
  %2556 = vmatprep.subr.mxu0 %v698
  %2557 = vmatpush1.msra.mxu0 %v697
  %2558 = vmatprep.subr.mxu0 %v762
  %2559 = vmatpush1.msra.mxu0 %v761
  %2560 = vmatprep.subr.mxu0 %v826
  %2561 = vmatpush1.msra.mxu0 %v825
  %2562 = vmatprep.subr.mxu0 %v890
  %2563 = vmatpush1.msra.mxu0 %v889
  %2564 = vmatprep.subr.mxu0 %v954
  %2565 = vmatpush1.msra.mxu0 %v953
  %2566 = vmatprep.subr.mxu0 %v1018
  %2567 = vmatpush1.msra.mxu0 %v1017
  %2568 = vmatprep.subr.mxu0 0.0
  %2569 = vmatpush1.msra.mxu0 0.0
  %2570 = vmatprep.subr.mxu0 0.0
  %2571 = vmatpush1.msra.mxu0 0.0
  %2572 = vmatprep.subr.mxu0 0.0
  %2573 = vmatpush1.msra.mxu0 0.0
  %2574 = vmatprep.subr.mxu0 0.0
  %2575 = vmatpush1.msra.mxu0 0.0
  %2576 = vmatprep.subr.mxu0 0.0
  %2577 = vmatpush1.msra.mxu0 0.0
  %2578 = vmatprep.subr.mxu0 0.0
  %2579 = vmatpush1.msra.mxu0 0.0
  %2580 = vmatprep.subr.mxu0 0.0
  %2581 = vmatpush1.msra.mxu0 0.0
  %2582 = vmatprep.subr.mxu0 0.0
  %2583 = vmatpush1.msra.mxu0 0.0
  %2584 = vmatprep.subr.mxu0 0.0
  %2585 = vmatpush1.msra.mxu0 0.0
  %2586 = vmatprep.subr.mxu0 0.0
  %2587 = vmatpush1.msra.mxu0 0.0
  %2588 = vmatprep.subr.mxu0 0.0
  %2589 = vmatpush1.msra.mxu0 0.0
  %2590 = vmatprep.subr.mxu0 0.0
  %2591 = vmatpush1.msra.mxu0 0.0
  %2592 = vmatprep.subr.mxu0 0.0
  %2593 = vmatpush1.msra.mxu0 0.0
  %2594 = vmatprep.subr.mxu0 0.0
  %2595 = vmatpush1.msra.mxu0 0.0
  %2596 = vmatprep.subr.mxu0 0.0
  %2597 = vmatpush1.msra.mxu0 0.0
  %2598 = vmatprep.subr.mxu0 0.0
  %2599 = vmatpush1.msra.mxu0 0.0
  %2600 = vmatprep.mubr.f32.mxu0 0.0
  %2601 = vmatmul.mubr.f32.gmra.mrb[0].mxu0 %v14
  %v2602 = vpop.f32.mrb[0].mxu0
  %v2603 = vadd.f32 %v1043, %v2602
  %v2604 = vpop.f32.mrb[0].mxu0
  %v2605 = vadd.f32 %v1043, %v2604
  %2606 = vdwg.mxu0
  %2607 = vmatprep.subr.mxu0 %v60
  %2608 = vmatpush1.msra.mxu0 %v59
  %2609 = vmatprep.subr.mxu0 %v124
  %2610 = vmatpush1.msra.mxu0 %v123
  %2611 = vmatprep.subr.mxu0 %v188
  %2612 = vmatpush1.msra.mxu0 %v187
  %2613 = vmatprep.subr.mxu0 %v252
  %2614 = vmatpush1.msra.mxu0 %v251
  %2615 = vmatprep.subr.mxu0 %v316
  %2616 = vmatpush1.msra.mxu0 %v315
  %2617 = vmatprep.subr.mxu0 %v380
  %2618 = vmatpush1.msra.mxu0 %v379
  %2619 = vmatprep.subr.mxu0 %v444
  %2620 = vmatpush1.msra.mxu0 %v443
  %2621 = vmatprep.subr.mxu0 %v508
  %2622 = vmatpush1.msra.mxu0 %v507
  %2623 = vmatprep.subr.mxu0 %v572
  %2624 = vmatpush1.msra.mxu0 %v571
  %2625 = vmatprep.subr.mxu0 %v636
  %2626 = vmatpush1.msra.mxu0 %v635
  %2627 = vmatprep.subr.mxu0 %v700
  %2628 = vmatpush1.msra.mxu0 %v699
  %2629 = vmatprep.subr.mxu0 %v764
  %2630 = vmatpush1.msra.mxu0 %v763
  %2631 = vmatprep.subr.mxu0 %v828
  %2632 = vmatpush1.msra.mxu0 %v827
  %2633 = vmatprep.subr.mxu0 %v892
  %2634 = vmatpush1.msra.mxu0 %v891
  %2635 = vmatprep.subr.mxu0 %v956
  %2636 = vmatpush1.msra.mxu0 %v955
  %2637 = vmatprep.subr.mxu0 %v1020
  %2638 = vmatpush1.msra.mxu0 %v1019
  %2639 = vmatprep.subr.mxu0 0.0
  %2640 = vmatpush1.msra.mxu0 0.0
  %2641 = vmatprep.subr.mxu0 0.0
  %2642 = vmatpush1.msra.mxu0 0.0
  %2643 = vmatprep.subr.mxu0 0.0
  %2644 = vmatpush1.msra.mxu0 0.0
  %2645 = vmatprep.subr.mxu0 0.0
  %2646 = vmatpush1.msra.mxu0 0.0
  %2647 = vmatprep.subr.mxu0 0.0
  %2648 = vmatpush1.msra.mxu0 0.0
  %2649 = vmatprep.subr.mxu0 0.0
  %2650 = vmatpush1.msra.mxu0 0.0
  %2651 = vmatprep.subr.mxu0 0.0
  %2652 = vmatpush1.msra.mxu0 0.0
  %2653 = vmatprep.subr.mxu0 0.0
  %2654 = vmatpush1.msra.mxu0 0.0
  %2655 = vmatprep.subr.mxu0 0.0
  %2656 = vmatpush1.msra.mxu0 0.0
  %2657 = vmatprep.subr.mxu0 0.0
  %2658 = vmatpush1.msra.mxu0 0.0
  %2659 = vmatprep.subr.mxu0 0.0
  %2660 = vmatpush1.msra.mxu0 0.0
  %2661 = vmatprep.subr.mxu0 0.0
  %2662 = vmatpush1.msra.mxu0 0.0
  %2663 = vmatprep.subr.mxu0 0.0
  %2664 = vmatpush1.msra.mxu0 0.0
  %2665 = vmatprep.subr.mxu0 0.0
  %2666 = vmatpush1.msra.mxu0 0.0
  %2667 = vmatprep.subr.mxu0 0.0
  %2668 = vmatpush1.msra.mxu0 0.0
  %2669 = vmatprep.subr.mxu0 0.0
  %2670 = vmatpush1.msra.mxu0 0.0
  %2671 = vmatprep.mubr.f32.mxu0 0.0
  %2672 = vmatmul.mubr.f32.gmra.mrb[0].mxu0 %v14
  %v2673 = vpop.f32.mrb[0].mxu0
  %v2674 = vadd.f32 %v1043, %v2673
  %v2675 = vpop.f32.mrb[0].mxu0
  %v2676 = vadd.f32 %v1043, %v2675
  %2677 = vdwg.mxu0
  %2678 = vmatprep.subr.mxu0 %v62
  %2679 = vmatpush1.msra.mxu0 %v61
  %2680 = vmatprep.subr.mxu0 %v126
  %2681 = vmatpush1.msra.mxu0 %v125
  %2682 = vmatprep.subr.mxu0 %v190
  %2683 = vmatpush1.msra.mxu0 %v189
  %2684 = vmatprep.subr.mxu0 %v254
  %2685 = vmatpush1.msra.mxu0 %v253
  %2686 = vmatprep.subr.mxu0 %v318
  %2687 = vmatpush1.msra.mxu0 %v317
  %2688 = vmatprep.subr.mxu0 %v382
  %2689 = vmatpush1.msra.mxu0 %v381
  %2690 = vmatprep.subr.mxu0 %v446
  %2691 = vmatpush1.msra.mxu0 %v445
  %2692 = vmatprep.subr.mxu0 %v510
  %2693 = vmatpush1.msra.mxu0 %v509
  %2694 = vmatprep.subr.mxu0 %v574
  %2695 = vmatpush1.msra.mxu0 %v573
  %2696 = vmatprep.subr.mxu0 %v638
  %2697 = vmatpush1.msra.mxu0 %v637
  %2698 = vmatprep.subr.mxu0 %v702
  %2699 = vmatpush1.msra.mxu0 %v701
  %2700 = vmatprep.subr.mxu0 %v766
  %2701 = vmatpush1.msra.mxu0 %v765
  %2702 = vmatprep.subr.mxu0 %v830
  %2703 = vmatpush1.msra.mxu0 %v829
  %2704 = vmatprep.subr.mxu0 %v894
  %2705 = vmatpush1.msra.mxu0 %v893
  %2706 = vmatprep.subr.mxu0 %v958
  %2707 = vmatpush1.msra.mxu0 %v957
  %2708 = vmatprep.subr.mxu0 %v1022
  %2709 = vmatpush1.msra.mxu0 %v1021
  %2710 = vmatprep.subr.mxu0 0.0
  %2711 = vmatpush1.msra.mxu0 0.0
  %2712 = vmatprep.subr.mxu0 0.0
  %2713 = vmatpush1.msra.mxu0 0.0
  %2714 = vmatprep.subr.mxu0 0.0
  %2715 = vmatpush1.msra.mxu0 0.0
  %2716 = vmatprep.subr.mxu0 0.0
  %2717 = vmatpush1.msra.mxu0 0.0
  %2718 = vmatprep.subr.mxu0 0.0
  %2719 = vmatpush1.msra.mxu0 0.0
  %2720 = vmatprep.subr.mxu0 0.0
  %2721 = vmatpush1.msra.mxu0 0.0
  %2722 = vmatprep.subr.mxu0 0.0
  %2723 = vmatpush1.msra.mxu0 0.0
  %2724 = vmatprep.subr.mxu0 0.0
  %2725 = vmatpush1.msra.mxu0 0.0
  %2726 = vmatprep.subr.mxu0 0.0
  %2727 = vmatpush1.msra.mxu0 0.0
  %2728 = vmatprep.subr.mxu0 0.0
  %2729 = vmatpush1.msra.mxu0 0.0
  %2730 = vmatprep.subr.mxu0 0.0
  %2731 = vmatpush1.msra.mxu0 0.0
  %2732 = vmatprep.subr.mxu0 0.0
  %2733 = vmatpush1.msra.mxu0 0.0
  %2734 = vmatprep.subr.mxu0 0.0
  %2735 = vmatpush1.msra.mxu0 0.0
  %2736 = vmatprep.subr.mxu0 0.0
  %2737 = vmatpush1.msra.mxu0 0.0
  %2738 = vmatprep.subr.mxu0 0.0
  %2739 = vmatpush1.msra.mxu0 0.0
  %2740 = vmatprep.subr.mxu0 0.0
  %2741 = vmatpush1.msra.mxu0 0.0
  %2742 = vmatprep.mubr.f32.mxu0 0.0
  %2743 = vmatmul.mubr.f32.gmra.mrb[0].mxu0 %v14
  %v2744 = vpop.f32.mrb[0].mxu0
  %v2745 = vadd.f32 %v1043, %v2744
  %v2746 = vpop.f32.mrb[0].mxu0
  %v2747 = vadd.f32 %v1043, %v2746
  %2748 = vdwg.mxu0
  %2749 = vmatprep.subr.mxu0 %v64
  %2750 = vmatpush1.msra.mxu0 %v63
  %2751 = vmatprep.subr.mxu0 %v128
  %2752 = vmatpush1.msra.mxu0 %v127
  %2753 = vmatprep.subr.mxu0 %v192
  %2754 = vmatpush1.msra.mxu0 %v191
  %2755 = vmatprep.subr.mxu0 %v256
  %2756 = vmatpush1.msra.mxu0 %v255
  %2757 = vmatprep.subr.mxu0 %v320
  %2758 = vmatpush1.msra.mxu0 %v319
  %2759 = vmatprep.subr.mxu0 %v384
  %2760 = vmatpush1.msra.mxu0 %v383
  %2761 = vmatprep.subr.mxu0 %v448
  %2762 = vmatpush1.msra.mxu0 %v447
  %2763 = vmatprep.subr.mxu0 %v512
  %2764 = vmatpush1.msra.mxu0 %v511
  %2765 = vmatprep.subr.mxu0 %v576
  %2766 = vmatpush1.msra.mxu0 %v575
  %2767 = vmatprep.subr.mxu0 %v640
  %2768 = vmatpush1.msra.mxu0 %v639
  %2769 = vmatprep.subr.mxu0 %v704
  %2770 = vmatpush1.msra.mxu0 %v703
  %2771 = vmatprep.subr.mxu0 %v768
  %2772 = vmatpush1.msra.mxu0 %v767
  %2773 = vmatprep.subr.mxu0 %v832
  %2774 = vmatpush1.msra.mxu0 %v831
  %2775 = vmatprep.subr.mxu0 %v896
  %2776 = vmatpush1.msra.mxu0 %v895
  %2777 = vmatprep.subr.mxu0 %v960
  %2778 = vmatpush1.msra.mxu0 %v959
  %2779 = vmatprep.subr.mxu0 %v1024
  %2780 = vmatpush1.msra.mxu0 %v1023
  %2781 = vmatprep.subr.mxu0 0.0
  %2782 = vmatpush1.msra.mxu0 0.0
  %2783 = vmatprep.subr.mxu0 0.0
  %2784 = vmatpush1.msra.mxu0 0.0
  %2785 = vmatprep.subr.mxu0 0.0
  %2786 = vmatpush1.msra.mxu0 0.0
  %2787 = vmatprep.subr.mxu0 0.0
  %2788 = vmatpush1.msra.mxu0 0.0
  %2789 = vmatprep.subr.mxu0 0.0
  %2790 = vmatpush1.msra.mxu0 0.0
  %2791 = vmatprep.subr.mxu0 0.0
  %2792 = vmatpush1.msra.mxu0 0.0
  %2793 = vmatprep.subr.mxu0 0.0
  %2794 = vmatpush1.msra.mxu0 0.0
  %2795 = vmatprep.subr.mxu0 0.0
  %2796 = vmatpush1.msra.mxu0 0.0
  %2797 = vmatprep.subr.mxu0 0.0
  %2798 = vmatpush1.msra.mxu0 0.0
  %2799 = vmatprep.subr.mxu0 0.0
  %2800 = vmatpush1.msra.mxu0 0.0
  %2801 = vmatprep.subr.mxu0 0.0
  %2802 = vmatpush1.msra.mxu0 0.0
  %2803 = vmatprep.subr.mxu0 0.0
  %2804 = vmatpush1.msra.mxu0 0.0
  %2805 = vmatprep.subr.mxu0 0.0
  %2806 = vmatpush1.msra.mxu0 0.0
  %2807 = vmatprep.subr.mxu0 0.0
  %2808 = vmatpush1.msra.mxu0 0.0
  %2809 = vmatprep.subr.mxu0 0.0
  %2810 = vmatpush1.msra.mxu0 0.0
  %2811 = vmatprep.subr.mxu0 0.0
  %2812 = vmatpush1.msra.mxu0 0.0
  %2813 = vmatprep.mubr.f32.mxu0 0.0
  %2814 = vmatmul.mubr.f32.gmra.mrb[0].mxu0 %v14
  %v2815 = vpop.f32.mrb[0].mxu0
  %v2816 = vadd.f32 %v1043, %v2815
  %v2817 = vpop.f32.mrb[0].mxu0
  %v2818 = vadd.f32 %v1043, %v2817
  %2819 = vdwg.mxu0
  %2820 = vmatprep.subr.mxu0 %v66
  %2821 = vmatpush1.msra.mxu0 %v65
  %2822 = vmatprep.subr.mxu0 %v130
  %2823 = vmatpush1.msra.mxu0 %v129
  %2824 = vmatprep.subr.mxu0 %v194
  %2825 = vmatpush1.msra.mxu0 %v193
  %2826 = vmatprep.subr.mxu0 %v258
  %2827 = vmatpush1.msra.mxu0 %v257
  %2828 = vmatprep.subr.mxu0 %v322
  %2829 = vmatpush1.msra.mxu0 %v321
  %2830 = vmatprep.subr.mxu0 %v386
  %2831 = vmatpush1.msra.mxu0 %v385
  %2832 = vmatprep.subr.mxu0 %v450
  %2833 = vmatpush1.msra.mxu0 %v449
  %2834 = vmatprep.subr.mxu0 %v514
  %2835 = vmatpush1.msra.mxu0 %v513
  %2836 = vmatprep.subr.mxu0 %v578
  %2837 = vmatpush1.msra.mxu0 %v577
  %2838 = vmatprep.subr.mxu0 %v642
  %2839 = vmatpush1.msra.mxu0 %v641
  %2840 = vmatprep.subr.mxu0 %v706
  %2841 = vmatpush1.msra.mxu0 %v705
  %2842 = vmatprep.subr.mxu0 %v770
  %2843 = vmatpush1.msra.mxu0 %v769
  %2844 = vmatprep.subr.mxu0 %v834
  %2845 = vmatpush1.msra.mxu0 %v833
  %2846 = vmatprep.subr.mxu0 %v898
  %2847 = vmatpush1.msra.mxu0 %v897
  %2848 = vmatprep.subr.mxu0 %v962
  %2849 = vmatpush1.msra.mxu0 %v961
  %2850 = vmatprep.subr.mxu0 %v1026
  %2851 = vmatpush1.msra.mxu0 %v1025
  %2852 = vmatprep.subr.mxu0 0.0
  %2853 = vmatpush1.msra.mxu0 0.0
  %2854 = vmatprep.subr.mxu0 0.0
  %2855 = vmatpush1.msra.mxu0 0.0
  %2856 = vmatprep.subr.mxu0 0.0
  %2857 = vmatpush1.msra.mxu0 0.0
  %2858 = vmatprep.subr.mxu0 0.0
  %2859 = vmatpush1.msra.mxu0 0.0
  %2860 = vmatprep.subr.mxu0 0.0
  %2861 = vmatpush1.msra.mxu0 0.0
  %2862 = vmatprep.subr.mxu0 0.0
  %2863 = vmatpush1.msra.mxu0 0.0
  %2864 = vmatprep.subr.mxu0 0.0
  %2865 = vmatpush1.msra.mxu0 0.0
  %2866 = vmatprep.subr.mxu0 0.0
  %2867 = vmatpush1.msra.mxu0 0.0
  %2868 = vmatprep.subr.mxu0 0.0
  %2869 = vmatpush1.msra.mxu0 0.0
  %2870 = vmatprep.subr.mxu0 0.0
  %2871 = vmatpush1.msra.mxu0 0.0
  %2872 = vmatprep.subr.mxu0 0.0
  %2873 = vmatpush1.msra.mxu0 0.0
  %2874 = vmatprep.subr.mxu0 0.0
  %2875 = vmatpush1.msra.mxu0 0.0
  %2876 = vmatprep.subr.mxu0 0.0
  %2877 = vmatpush1.msra.mxu0 0.0
  %2878 = vmatprep.subr.mxu0 0.0
  %2879 = vmatpush1.msra.mxu0 0.0
  %2880 = vmatprep.subr.mxu0 0.0
  %2881 = vmatpush1.msra.mxu0 0.0
  %2882 = vmatprep.subr.mxu0 0.0
  %2883 = vmatpush1.msra.mxu0 0.0
  %2884 = vmatprep.mubr.f32.mxu0 0.0
  %2885 = vmatmul.mubr.f32.gmra.mrb[0].mxu0 %v14
  %v2886 = vpop.f32.mrb[0].mxu0
  %v2887 = vadd.f32 %v1043, %v2886
  %v2888 = vpop.f32.mrb[0].mxu0
  %v2889 = vadd.f32 %v1043, %v2888
  %2890 = vdwg.mxu0
  %2891 = vmatprep.subr.mxu0 %v68
  %2892 = vmatpush1.msra.mxu0 %v67
  %2893 = vmatprep.subr.mxu0 %v132
  %2894 = vmatpush1.msra.mxu0 %v131
  %2895 = vmatprep.subr.mxu0 %v196
  %2896 = vmatpush1.msra.mxu0 %v195
  %2897 = vmatprep.subr.mxu0 %v260
  %2898 = vmatpush1.msra.mxu0 %v259
  %2899 = vmatprep.subr.mxu0 %v324
  %2900 = vmatpush1.msra.mxu0 %v323
  %2901 = vmatprep.subr.mxu0 %v388
  %2902 = vmatpush1.msra.mxu0 %v387
  %2903 = vmatprep.subr.mxu0 %v452
  %2904 = vmatpush1.msra.mxu0 %v451
  %2905 = vmatprep.subr.mxu0 %v516
  %2906 = vmatpush1.msra.mxu0 %v515
  %2907 = vmatprep.subr.mxu0 %v580
  %2908 = vmatpush1.msra.mxu0 %v579
  %2909 = vmatprep.subr.mxu0 %v644
  %2910 = vmatpush1.msra.mxu0 %v643
  %2911 = vmatprep.subr.mxu0 %v708
  %2912 = vmatpush1.msra.mxu0 %v707
  %2913 = vmatprep.subr.mxu0 %v772
  %2914 = vmatpush1.msra.mxu0 %v771
  %2915 = vmatprep.subr.mxu0 %v836
  %2916 = vmatpush1.msra.mxu0 %v835
  %2917 = vmatprep.subr.mxu0 %v900
  %2918 = vmatpush1.msra.mxu0 %v899
  %2919 = vmatprep.subr.mxu0 %v964
  %2920 = vmatpush1.msra.mxu0 %v963
  %2921 = vmatprep.subr.mxu0 %v1028
  %2922 = vmatpush1.msra.mxu0 %v1027
  %2923 = vmatprep.subr.mxu0 0.0
  %2924 = vmatpush1.msra.mxu0 0.0
  %2925 = vmatprep.subr.mxu0 0.0
  %2926 = vmatpush1.msra.mxu0 0.0
  %2927 = vmatprep.subr.mxu0 0.0
  %2928 = vmatpush1.msra.mxu0 0.0
  %2929 = vmatprep.subr.mxu0 0.0
  %2930 = vmatpush1.msra.mxu0 0.0
  %2931 = vmatprep.subr.mxu0 0.0
  %2932 = vmatpush1.msra.mxu0 0.0
  %2933 = vmatprep.subr.mxu0 0.0
  %2934 = vmatpush1.msra.mxu0 0.0
  %2935 = vmatprep.subr.mxu0 0.0
  %2936 = vmatpush1.msra.mxu0 0.0
  %2937 = vmatprep.subr.mxu0 0.0
  %2938 = vmatpush1.msra.mxu0 0.0
  %2939 = vmatprep.subr.mxu0 0.0
  %2940 = vmatpush1.msra.mxu0 0.0
  %2941 = vmatprep.subr.mxu0 0.0
  %2942 = vmatpush1.msra.mxu0 0.0
  %2943 = vmatprep.subr.mxu0 0.0
  %2944 = vmatpush1.msra.mxu0 0.0
  %2945 = vmatprep.subr.mxu0 0.0
  %2946 = vmatpush1.msra.mxu0 0.0
  %2947 = vmatprep.subr.mxu0 0.0
  %2948 = vmatpush1.msra.mxu0 0.0
  %2949 = vmatprep.subr.mxu0 0.0
  %2950 = vmatpush1.msra.mxu0 0.0
  %2951 = vmatprep.subr.mxu0 0.0
  %2952 = vmatpush1.msra.mxu0 0.0
  %2953 = vmatprep.subr.mxu0 0.0
  %2954 = vmatpush1.msra.mxu0 0.0
  %2955 = vmatprep.mubr.f32.mxu0 0.0
  %2956 = vmatmul.mubr.f32.gmra.mrb[0].mxu0 %v14
  %v2957 = vpop.f32.mrb[0].mxu0
  %v2958 = vadd.f32 %v1043, %v2957
  %v2959 = vpop.f32.mrb[0].mxu0
  %v2960 = vadd.f32 %v1043, %v2959
  %2961 = vdwg.mxu0
  %2962 = vmatprep.subr.mxu0 %v70
  %2963 = vmatpush1.msra.mxu0 %v69
  %2964 = vmatprep.subr.mxu0 %v134
  %2965 = vmatpush1.msra.mxu0 %v133
  %2966 = vmatprep.subr.mxu0 %v198
  %2967 = vmatpush1.msra.mxu0 %v197
  %2968 = vmatprep.subr.mxu0 %v262
  %2969 = vmatpush1.msra.mxu0 %v261
  %2970 = vmatprep.subr.mxu0 %v326
  %2971 = vmatpush1.msra.mxu0 %v325
  %2972 = vmatprep.subr.mxu0 %v390
  %2973 = vmatpush1.msra.mxu0 %v389
  %2974 = vmatprep.subr.mxu0 %v454
  %2975 = vmatpush1.msra.mxu0 %v453
  %2976 = vmatprep.subr.mxu0 %v518
  %2977 = vmatpush1.msra.mxu0 %v517
  %2978 = vmatprep.subr.mxu0 %v582
  %2979 = vmatpush1.msra.mxu0 %v581
  %2980 = vmatprep.subr.mxu0 %v646
  %2981 = vmatpush1.msra.mxu0 %v645
  %2982 = vmatprep.subr.mxu0 %v710
  %2983 = vmatpush1.msra.mxu0 %v709
  %2984 = vmatprep.subr.mxu0 %v774
  %2985 = vmatpush1.msra.mxu0 %v773
  %2986 = vmatprep.subr.mxu0 %v838
  %2987 = vmatpush1.msra.mxu0 %v837
  %2988 = vmatprep.subr.mxu0 %v902
  %2989 = vmatpush1.msra.mxu0 %v901
  %2990 = vmatprep.subr.mxu0 %v966
  %2991 = vmatpush1.msra.mxu0 %v965
  %2992 = vmatprep.subr.mxu0 %v1030
  %2993 = vmatpush1.msra.mxu0 %v1029
  %2994 = vmatprep.subr.mxu0 0.0
  %2995 = vmatpush1.msra.mxu0 0.0
  %2996 = vmatprep.subr.mxu0 0.0
  %2997 = vmatpush1.msra.mxu0 0.0
  %2998 = vmatprep.subr.mxu0 0.0
  %2999 = vmatpush1.msra.mxu0 0.0
  %3000 = vmatprep.subr.mxu0 0.0
  %3001 = vmatpush1.msra.mxu0 0.0
  %3002 = vmatprep.subr.mxu0 0.0
  %3003 = vmatpush1.msra.mxu0 0.0
  %3004 = vmatprep.subr.mxu0 0.0
  %3005 = vmatpush1.msra.mxu0 0.0
  %3006 = vmatprep.subr.mxu0 0.0
  %3007 = vmatpush1.msra.mxu0 0.0
  %3008 = vmatprep.subr.mxu0 0.0
  %3009 = vmatpush1.msra.mxu0 0.0
  %3010 = vmatprep.subr.mxu0 0.0
  %3011 = vmatpush1.msra.mxu0 0.0
  %3012 = vmatprep.subr.mxu0 0.0
  %3013 = vmatpush1.msra.mxu0 0.0
  %3014 = vmatprep.subr.mxu0 0.0
  %3015 = vmatpush1.msra.mxu0 0.0
  %3016 = vmatprep.subr.mxu0 0.0
  %3017 = vmatpush1.msra.mxu0 0.0
  %3018 = vmatprep.subr.mxu0 0.0
  %3019 = vmatpush1.msra.mxu0 0.0
  %3020 = vmatprep.subr.mxu0 0.0
  %3021 = vmatpush1.msra.mxu0 0.0
  %3022 = vmatprep.subr.mxu0 0.0
  %3023 = vmatpush1.msra.mxu0 0.0
  %3024 = vmatprep.subr.mxu0 0.0
  %3025 = vmatpush1.msra.mxu0 0.0
  %3026 = vmatprep.mubr.f32.mxu0 0.0
  %3027 = vmatmul.mubr.f32.gmra.mrb[0].mxu0 %v14
  %v3028 = vpop.f32.mrb[0].mxu0
  %v3029 = vadd.f32 %v1043, %v3028
  %v3030 = vpop.f32.mrb[0].mxu0
  %v3031 = vadd.f32 %v1043, %v3030
  %3032 = vdwg.mxu0
  %3033 = vmatprep.subr.mxu0 %v72
  %3034 = vmatpush1.msra.mxu0 %v71
  %3035 = vmatprep.subr.mxu0 %v136
  %3036 = vmatpush1.msra.mxu0 %v135
  %3037 = vmatprep.subr.mxu0 %v200
  %3038 = vmatpush1.msra.mxu0 %v199
  %3039 = vmatprep.subr.mxu0 %v264
  %3040 = vmatpush1.msra.mxu0 %v263
  %3041 = vmatprep.subr.mxu0 %v328
  %3042 = vmatpush1.msra.mxu0 %v327
  %3043 = vmatprep.subr.mxu0 %v392
  %3044 = vmatpush1.msra.mxu0 %v391
  %3045 = vmatprep.subr.mxu0 %v456
  %3046 = vmatpush1.msra.mxu0 %v455
  %3047 = vmatprep.subr.mxu0 %v520
  %3048 = vmatpush1.msra.mxu0 %v519
  %3049 = vmatprep.subr.mxu0 %v584
  %3050 = vmatpush1.msra.mxu0 %v583
  %3051 = vmatprep.subr.mxu0 %v648
  %3052 = vmatpush1.msra.mxu0 %v647
  %3053 = vmatprep.subr.mxu0 %v712
  %3054 = vmatpush1.msra.mxu0 %v711
  %3055 = vmatprep.subr.mxu0 %v776
  %3056 = vmatpush1.msra.mxu0 %v775
  %3057 = vmatprep.subr.mxu0 %v840
  %3058 = vmatpush1.msra.mxu0 %v839
  %3059 = vmatprep.subr.mxu0 %v904
  %3060 = vmatpush1.msra.mxu0 %v903
  %3061 = vmatprep.subr.mxu0 %v968
  %3062 = vmatpush1.msra.mxu0 %v967
  %3063 = vmatprep.subr.mxu0 %v1032
  %3064 = vmatpush1.msra.mxu0 %v1031
  %3065 = vmatprep.subr.mxu0 0.0
  %3066 = vmatpush1.msra.mxu0 0.0
  %3067 = vmatprep.subr.mxu0 0.0
  %3068 = vmatpush1.msra.mxu0 0.0
  %3069 = vmatprep.subr.mxu0 0.0
  %3070 = vmatpush1.msra.mxu0 0.0
  %3071 = vmatprep.subr.mxu0 0.0
  %3072 = vmatpush1.msra.mxu0 0.0
  %3073 = vmatprep.subr.mxu0 0.0
  %3074 = vmatpush1.msra.mxu0 0.0
  %3075 = vmatprep.subr.mxu0 0.0
  %3076 = vmatpush1.msra.mxu0 0.0
  %3077 = vmatprep.subr.mxu0 0.0
  %3078 = vmatpush1.msra.mxu0 0.0
  %3079 = vmatprep.subr.mxu0 0.0
  %3080 = vmatpush1.msra.mxu0 0.0
  %3081 = vmatprep.subr.mxu0 0.0
  %3082 = vmatpush1.msra.mxu0 0.0
  %3083 = vmatprep.subr.mxu0 0.0
  %3084 = vmatpush1.msra.mxu0 0.0
  %3085 = vmatprep.subr.mxu0 0.0
  %3086 = vmatpush1.msra.mxu0 0.0
  %3087 = vmatprep.subr.mxu0 0.0
  %3088 = vmatpush1.msra.mxu0 0.0
  %3089 = vmatprep.subr.mxu0 0.0
  %3090 = vmatpush1.msra.mxu0 0.0
  %3091 = vmatprep.subr.mxu0 0.0
  %3092 = vmatpush1.msra.mxu0 0.0
  %3093 = vmatprep.subr.mxu0 0.0
  %3094 = vmatpush1.msra.mxu0 0.0
  %3095 = vmatprep.subr.mxu0 0.0
  %3096 = vmatpush1.msra.mxu0 0.0
  %3097 = vmatprep.mubr.f32.mxu0 0.0
  %3098 = vmatmul.mubr.f32.gmra.mrb[0].mxu0 %v14
  %v3099 = vpop.f32.mrb[0].mxu0
  %v3100 = vadd.f32 %v1043, %v3099
  %v3101 = vpop.f32.mrb[0].mxu0
  %v3102 = vadd.f32 %v1043, %v3101
  %3103 = vdwg.mxu0
  %3104 = vmatprep.subr.mxu0 %v74
  %3105 = vmatpush1.msra.mxu0 %v73
  %3106 = vmatprep.subr.mxu0 %v138
  %3107 = vmatpush1.msra.mxu0 %v137
  %3108 = vmatprep.subr.mxu0 %v202
  %3109 = vmatpush1.msra.mxu0 %v201
  %3110 = vmatprep.subr.mxu0 %v266
  %3111 = vmatpush1.msra.mxu0 %v265
  %3112 = vmatprep.subr.mxu0 %v330
  %3113 = vmatpush1.msra.mxu0 %v329
  %3114 = vmatprep.subr.mxu0 %v394
  %3115 = vmatpush1.msra.mxu0 %v393
  %3116 = vmatprep.subr.mxu0 %v458
  %3117 = vmatpush1.msra.mxu0 %v457
  %3118 = vmatprep.subr.mxu0 %v522
  %3119 = vmatpush1.msra.mxu0 %v521
  %3120 = vmatprep.subr.mxu0 %v586
  %3121 = vmatpush1.msra.mxu0 %v585
  %3122 = vmatprep.subr.mxu0 %v650
  %3123 = vmatpush1.msra.mxu0 %v649
  %3124 = vmatprep.subr.mxu0 %v714
  %3125 = vmatpush1.msra.mxu0 %v713
  %3126 = vmatprep.subr.mxu0 %v778
  %3127 = vmatpush1.msra.mxu0 %v777
  %3128 = vmatprep.subr.mxu0 %v842
  %3129 = vmatpush1.msra.mxu0 %v841
  %3130 = vmatprep.subr.mxu0 %v906
  %3131 = vmatpush1.msra.mxu0 %v905
  %3132 = vmatprep.subr.mxu0 %v970
  %3133 = vmatpush1.msra.mxu0 %v969
  %3134 = vmatprep.subr.mxu0 %v1034
  %3135 = vmatpush1.msra.mxu0 %v1033
  %3136 = vmatprep.subr.mxu0 0.0
  %3137 = vmatpush1.msra.mxu0 0.0
  %3138 = vmatprep.subr.mxu0 0.0
  %3139 = vmatpush1.msra.mxu0 0.0
  %3140 = vmatprep.subr.mxu0 0.0
  %3141 = vmatpush1.msra.mxu0 0.0
  %3142 = vmatprep.subr.mxu0 0.0
  %3143 = vmatpush1.msra.mxu0 0.0
  %3144 = vmatprep.subr.mxu0 0.0
  %3145 = vmatpush1.msra.mxu0 0.0
  %3146 = vmatprep.subr.mxu0 0.0
  %3147 = vmatpush1.msra.mxu0 0.0
  %3148 = vmatprep.subr.mxu0 0.0
  %3149 = vmatpush1.msra.mxu0 0.0
  %3150 = vmatprep.subr.mxu0 0.0
  %3151 = vmatpush1.msra.mxu0 0.0
  %3152 = vmatprep.subr.mxu0 0.0
  %3153 = vmatpush1.msra.mxu0 0.0
  %3154 = vmatprep.subr.mxu0 0.0
  %3155 = vmatpush1.msra.mxu0 0.0
  %3156 = vmatprep.subr.mxu0 0.0
  %3157 = vmatpush1.msra.mxu0 0.0
  %3158 = vmatprep.subr.mxu0 0.0
  %3159 = vmatpush1.msra.mxu0 0.0
  %3160 = vmatprep.subr.mxu0 0.0
  %3161 = vmatpush1.msra.mxu0 0.0
  %3162 = vmatprep.subr.mxu0 0.0
  %3163 = vmatpush1.msra.mxu0 0.0
  %3164 = vmatprep.subr.mxu0 0.0
  %3165 = vmatpush1.msra.mxu0 0.0
  %3166 = vmatprep.subr.mxu0 0.0
  %3167 = vmatpush1.msra.mxu0 0.0
  %3168 = vmatprep.mubr.f32.mxu0 0.0
  %3169 = vmatmul.mubr.f32.gmra.mrb[0].mxu0 %v14
  %v3170 = vpop.f32.mrb[0].mxu0
  %v3171 = vadd.f32 %v1043, %v3170
  %v3172 = vpop.f32.mrb[0].mxu0
  %v3173 = vadd.f32 %v1043, %v3172
  %3174 = vdwg.mxu0
  %3175 = vmatprep.subr.mxu0 %v76
  %3176 = vmatpush1.msra.mxu0 %v75
  %3177 = vmatprep.subr.mxu0 %v140
  %3178 = vmatpush1.msra.mxu0 %v139
  %3179 = vmatprep.subr.mxu0 %v204
  %3180 = vmatpush1.msra.mxu0 %v203
  %3181 = vmatprep.subr.mxu0 %v268
  %3182 = vmatpush1.msra.mxu0 %v267
  %3183 = vmatprep.subr.mxu0 %v332
  %3184 = vmatpush1.msra.mxu0 %v331
  %3185 = vmatprep.subr.mxu0 %v396
  %3186 = vmatpush1.msra.mxu0 %v395
  %3187 = vmatprep.subr.mxu0 %v460
  %3188 = vmatpush1.msra.mxu0 %v459
  %3189 = vmatprep.subr.mxu0 %v524
  %3190 = vmatpush1.msra.mxu0 %v523
  %3191 = vmatprep.subr.mxu0 %v588
  %3192 = vmatpush1.msra.mxu0 %v587
  %3193 = vmatprep.subr.mxu0 %v652
  %3194 = vmatpush1.msra.mxu0 %v651
  %3195 = vmatprep.subr.mxu0 %v716
  %3196 = vmatpush1.msra.mxu0 %v715
  %3197 = vmatprep.subr.mxu0 %v780
  %3198 = vmatpush1.msra.mxu0 %v779
  %3199 = vmatprep.subr.mxu0 %v844
  %3200 = vmatpush1.msra.mxu0 %v843
  %3201 = vmatprep.subr.mxu0 %v908
  %3202 = vmatpush1.msra.mxu0 %v907
  %3203 = vmatprep.subr.mxu0 %v972
  %3204 = vmatpush1.msra.mxu0 %v971
  %3205 = vmatprep.subr.mxu0 %v1036
  %3206 = vmatpush1.msra.mxu0 %v1035
  %3207 = vmatprep.subr.mxu0 0.0
  %3208 = vmatpush1.msra.mxu0 0.0
  %3209 = vmatprep.subr.mxu0 0.0
  %3210 = vmatpush1.msra.mxu0 0.0
  %3211 = vmatprep.subr.mxu0 0.0
  %3212 = vmatpush1.msra.mxu0 0.0
  %3213 = vmatprep.subr.mxu0 0.0
  %3214 = vmatpush1.msra.mxu0 0.0
  %3215 = vmatprep.subr.mxu0 0.0
  %3216 = vmatpush1.msra.mxu0 0.0
  %3217 = vmatprep.subr.mxu0 0.0
  %3218 = vmatpush1.msra.mxu0 0.0
  %3219 = vmatprep.subr.mxu0 0.0
  %3220 = vmatpush1.msra.mxu0 0.0
  %3221 = vmatprep.subr.mxu0 0.0
  %3222 = vmatpush1.msra.mxu0 0.0
  %3223 = vmatprep.subr.mxu0 0.0
  %3224 = vmatpush1.msra.mxu0 0.0
  %3225 = vmatprep.subr.mxu0 0.0
  %3226 = vmatpush1.msra.mxu0 0.0
  %3227 = vmatprep.subr.mxu0 0.0
  %3228 = vmatpush1.msra.mxu0 0.0
  %3229 = vmatprep.subr.mxu0 0.0
  %3230 = vmatpush1.msra.mxu0 0.0
  %3231 = vmatprep.subr.mxu0 0.0
  %3232 = vmatpush1.msra.mxu0 0.0
  %3233 = vmatprep.subr.mxu0 0.0
  %3234 = vmatpush1.msra.mxu0 0.0
  %3235 = vmatprep.subr.mxu0 0.0
  %3236 = vmatpush1.msra.mxu0 0.0
  %3237 = vmatprep.subr.mxu0 0.0
  %3238 = vmatpush1.msra.mxu0 0.0
  %3239 = vmatprep.mubr.f32.mxu0 0.0
  %3240 = vmatmul.mubr.f32.gmra.mrb[0].mxu0 %v14
  %v3241 = vpop.f32.mrb[0].mxu0
  %v3242 = vadd.f32 %v1043, %v3241
  %v3243 = vpop.f32.mrb[0].mxu0
  %v3244 = vadd.f32 %v1043, %v3243
  %3245 = vdwg.mxu0
  %3246 = vmatprep.subr.mxu0 %v78
  %3247 = vmatpush1.msra.mxu0 %v77
  %3248 = vmatprep.subr.mxu0 %v142
  %3249 = vmatpush1.msra.mxu0 %v141
  %3250 = vmatprep.subr.mxu0 %v206
  %3251 = vmatpush1.msra.mxu0 %v205
  %3252 = vmatprep.subr.mxu0 %v270
  %3253 = vmatpush1.msra.mxu0 %v269
  %3254 = vmatprep.subr.mxu0 %v334
  %3255 = vmatpush1.msra.mxu0 %v333
  %3256 = vmatprep.subr.mxu0 %v398
  %3257 = vmatpush1.msra.mxu0 %v397
  %3258 = vmatprep.subr.mxu0 %v462
  %3259 = vmatpush1.msra.mxu0 %v461
  %3260 = vmatprep.subr.mxu0 %v526
  %3261 = vmatpush1.msra.mxu0 %v525
  %3262 = vmatprep.subr.mxu0 %v590
  %3263 = vmatpush1.msra.mxu0 %v589
  %3264 = vmatprep.subr.mxu0 %v654
  %3265 = vmatpush1.msra.mxu0 %v653
  %3266 = vmatprep.subr.mxu0 %v718
  %3267 = vmatpush1.msra.mxu0 %v717
  %3268 = vmatprep.subr.mxu0 %v782
  %3269 = vmatpush1.msra.mxu0 %v781
  %3270 = vmatprep.subr.mxu0 %v846
  %3271 = vmatpush1.msra.mxu0 %v845
  %3272 = vmatprep.subr.mxu0 %v910
  %3273 = vmatpush1.msra.mxu0 %v909
  %3274 = vmatprep.subr.mxu0 %v974
  %3275 = vmatpush1.msra.mxu0 %v973
  %3276 = vmatprep.subr.mxu0 %v1038
  %3277 = vmatpush1.msra.mxu0 %v1037
  %3278 = vmatprep.subr.mxu0 0.0
  %3279 = vmatpush1.msra.mxu0 0.0
  %3280 = vmatprep.subr.mxu0 0.0
  %3281 = vmatpush1.msra.mxu0 0.0
  %3282 = vmatprep.subr.mxu0 0.0
  %3283 = vmatpush1.msra.mxu0 0.0
  %3284 = vmatprep.subr.mxu0 0.0
  %3285 = vmatpush1.msra.mxu0 0.0
  %3286 = vmatprep.subr.mxu0 0.0
  %3287 = vmatpush1.msra.mxu0 0.0
  %3288 = vmatprep.subr.mxu0 0.0
  %3289 = vmatpush1.msra.mxu0 0.0
  %3290 = vmatprep.subr.mxu0 0.0
  %3291 = vmatpush1.msra.mxu0 0.0
  %3292 = vmatprep.subr.mxu0 0.0
  %3293 = vmatpush1.msra.mxu0 0.0
  %3294 = vmatprep.subr.mxu0 0.0
  %3295 = vmatpush1.msra.mxu0 0.0
  %3296 = vmatprep.subr.mxu0 0.0
  %3297 = vmatpush1.msra.mxu0 0.0
  %3298 = vmatprep.subr.mxu0 0.0
  %3299 = vmatpush1.msra.mxu0 0.0
  %3300 = vmatprep.subr.mxu0 0.0
  %3301 = vmatpush1.msra.mxu0 0.0
  %3302 = vmatprep.subr.mxu0 0.0
  %3303 = vmatpush1.msra.mxu0 0.0
  %3304 = vmatprep.subr.mxu0 0.0
  %3305 = vmatpush1.msra.mxu0 0.0
  %3306 = vmatprep.subr.mxu0 0.0
  %3307 = vmatpush1.msra.mxu0 0.0
  %3308 = vmatprep.subr.mxu0 0.0
  %3309 = vmatpush1.msra.mxu0 0.0
  %3310 = vmatprep.mubr.f32.mxu0 0.0
  %3311 = vmatmul.mubr.f32.gmra.mrb[0].mxu0 %v14
  %v3312 = vpop.f32.mrb[0].mxu0
  %v3313 = vadd.f32 %v1043, %v3312
  %v3314 = vpop.f32.mrb[0].mxu0
  %v3315 = vadd.f32 %v1043, %v3314
  %3316 = vdwg.mxu0
  %v3317 = vtanh.pop %v1112
  %v3318 = vtanh.pop %v1114
  %v3319 = vtanh.pop %v1183
  %v3320 = vtanh.pop %v1185
  %v3321 = vtanh.pop %v1254
  %v3322 = vtanh.pop %v1256
  %v3323 = vtanh.pop %v1325
  %v3324 = vtanh.pop %v1327
  %v3325 = vtanh.pop %v1396
  %v3326 = vtanh.pop %v1398
  %v3327 = vtanh.pop %v1467
  %v3328 = vtanh.pop %v1469
  %v3329 = vtanh.pop %v1538
  %v3330 = vtanh.pop %v1540
  %v3331 = vtanh.pop %v1609
  %v3332 = vtanh.pop %v1611
  %v3333 = vtanh.pop %v1680
  %v3334 = vtanh.pop %v1682
  %v3335 = vtanh.pop %v1751
  %v3336 = vtanh.pop %v1753
  %v3337 = vtanh.pop %v1822
  %v3338 = vtanh.pop %v1824
  %v3339 = vtanh.pop %v1893
  %v3340 = vtanh.pop %v1895
  %v3341 = vtanh.pop %v1964
  %v3342 = vtanh.pop %v1966
  %v3343 = vtanh.pop %v2035
  %v3344 = vtanh.pop %v2037
  %v3345 = vtanh.pop %v2106
  %v3346 = vtanh.pop %v2108
  %v3347 = vtanh.pop %v2177
  %v3348 = vtanh.pop %v2179
  %v3349 = vtanh.pop %v2248
  %v3350 = vtanh.pop %v2250
  %v3351 = vtanh.pop %v2319
  %v3352 = vtanh.pop %v2321
  %v3353 = vtanh.pop %v2390
  %v3354 = vtanh.pop %v2392
  %v3355 = vtanh.pop %v2461
  %v3356 = vtanh.pop %v2463
  %v3357 = vtanh.pop %v2532
  %v3358 = vtanh.pop %v2534
  %v3359 = vtanh.pop %v2603
  %v3360 = vtanh.pop %v2605
  %v3361 = vtanh.pop %v2674
  %v3362 = vtanh.pop %v2676
  %v3363 = vtanh.pop %v2745
  %v3364 = vtanh.pop %v2747
  %v3365 = vtanh.pop %v2816
  %v3366 = vtanh.pop %v2818
  %v3367 = vtanh.pop %v2887
  %v3368 = vtanh.pop %v2889
  %v3369 = vtanh.pop %v2958
  %v3370 = vtanh.pop %v2960
  %v3371 = vtanh.pop %v3029
  %v3372 = vtanh.pop %v3031
  %v3373 = vtanh.pop %v3100
  %v3374 = vtanh.pop %v3102
  %v3375 = vtanh.pop %v3171
  %v3376 = vtanh.pop %v3173
  %v3377 = vtanh.pop %v3242
  %v3378 = vtanh.pop %v3244
  %v3379 = vtanh.pop %v3313
  %v3380 = vtanh.pop %v3315
  %v3445 = vcombine.low %v3317, %v3318
  %v3446 = vcombine.low %v3319, %v3320
  %v3447 = vcombine.low %v3321, %v3322
  %v3448 = vcombine.low %v3323, %v3324
  %v3449 = vcombine.low %v3325, %v3326
  %v3450 = vcombine.low %v3327, %v3328
  %v3451 = vcombine.low %v3329, %v3330
  %v3452 = vcombine.low %v3331, %v3332
  %v3453 = vcombine.low %v3333, %v3334
  %v3454 = vcombine.low %v3335, %v3336
  %v3455 = vcombine.low %v3337, %v3338
  %v3456 = vcombine.low %v3339, %v3340
  %v3457 = vcombine.low %v3341, %v3342
  %v3458 = vcombine.low %v3343, %v3344
  %v3459 = vcombine.low %v3345, %v3346
  %v3460 = vcombine.low %v3347, %v3348
  %v3461 = vcombine.low %v3349, %v3350
  %v3462 = vcombine.low %v3351, %v3352
  %v3463 = vcombine.low %v3353, %v3354
  %v3464 = vcombine.low %v3355, %v3356
  %v3465 = vcombine.low %v3357, %v3358
  %v3466 = vcombine.low %v3359, %v3360
  %v3467 = vcombine.low %v3361, %v3362
  %v3468 = vcombine.low %v3363, %v3364
  %v3469 = vcombine.low %v3365, %v3366
  %v3470 = vcombine.low %v3367, %v3368
  %v3471 = vcombine.low %v3369, %v3370
  %v3472 = vcombine.low %v3371, %v3372
  %v3473 = vcombine.low %v3373, %v3374
  %v3474 = vcombine.low %v3375, %v3376
  %v3475 = vcombine.low %v3377, %v3378
  %v3476 = vcombine.low %v3379, %v3380
  %3509 = vst [vmem:[%s3] sm:$0x77] %v3445
  %3510 = vst [vmem:[%s3 + $0x8] sm:$0x77] %v3446
  %3511 = vst [vmem:[%s3 + $0x10] sm:$0x77] %v3447
  %3512 = vst [vmem:[%s3 + $0x18] sm:$0x77] %v3448
  %3513 = vst [vmem:[%s3 + $0x20] sm:$0x77] %v3449
  %3514 = vst [vmem:[%s3 + $0x28] sm:$0x77] %v3450
  %3515 = vst [vmem:[%s3 + $0x30] sm:$0x77] %v3451
  %3516 = vst [vmem:[%s3 + $0x38] sm:$0x77] %v3452
  %3517 = vst [vmem:[%s3 + $0x40] sm:$0x77] %v3453
  %3518 = vst [vmem:[%s3 + $0x48] sm:$0x77] %v3454
  %3519 = vst [vmem:[%s3 + $0x50] sm:$0x77] %v3455
  %3520 = vst [vmem:[%s3 + $0x58] sm:$0x77] %v3456
  %3521 = vst [vmem:[%s3 + $0x60] sm:$0x77] %v3457
  %3522 = vst [vmem:[%s3 + $0x68] sm:$0x77] %v3458
  %3523 = vst [vmem:[%s3 + $0x70] sm:$0x77] %v3459
  %3524 = vst [vmem:[%s3 + $0x78] sm:$0x77] %v3460
  %3525 = vst [vmem:[%s3 + $0x80] sm:$0x77] %v3461
  %3526 = vst [vmem:[%s3 + $0x88] sm:$0x77] %v3462
  %3527 = vst [vmem:[%s3 + $0x90] sm:$0x77] %v3463
  %3528 = vst [vmem:[%s3 + $0x98] sm:$0x77] %v3464
  %3529 = vst [vmem:[%s3 + $0xa0] sm:$0x77] %v3465
  %3530 = vst [vmem:[%s3 + $0xa8] sm:$0x77] %v3466
  %3531 = vst [vmem:[%s3 + $0xb0] sm:$0x77] %v3467
  %3532 = vst [vmem:[%s3 + $0xb8] sm:$0x77] %v3468
  %3533 = vst [vmem:[%s3 + $0xc0] sm:$0x77] %v3469
  %3534 = vst [vmem:[%s3 + $0xc8] sm:$0x77] %v3470
  %3535 = vst [vmem:[%s3 + $0xd0] sm:$0x77] %v3471
  %3536 = vst [vmem:[%s3 + $0xd8] sm:$0x77] %v3472
  %3537 = vst [vmem:[%s3 + $0xe0] sm:$0x77] %v3473
  %3538 = vst [vmem:[%s3 + $0xe8] sm:$0x77] %v3474
  %3539 = vst [vmem:[%s3 + $0xf0] sm:$0x77] %v3475
  %3540 = vst [vmem:[%s3 + $0xf8] sm:$0x77] %v3476
  // Predicated region
  $region14: #{_lambda_.9} parent=0 // pred_check
    _
  $region15: #{_lambda_.9} parent=0 // pred_check_branch
    %3542 = sbr.rel (0) target = $region17
  $region16: #{_lambda_.9} parent=0 // pred_region
    _
  $region17: #{_lambda_.9} parent=0 // pred_fallthru
    _
  // Predicated region
  $region18: #{_lambda_.9} parent=0 // pred_check
    _
  $region19: #{_lambda_.9} parent=0 // pred_check_branch
    %3544 = sbr.rel (0) target = $region21
  $region20: #{_lambda_.9} parent=0 // pred_region
    _
  $region21: #{_lambda_.9} parent=0 // pred_fallthru
    _

</llo_original>
